<compile_context>
chip_gen: v7x
topology: tpu7x:2x2x1
jax: 0.10.0
libtpu: 0.0.40
codegen_flags: <defaults>
</compile_context>

<pallas_src>
import functools

import jax
import jax.numpy as jnp
from jax.experimental import pallas as pl
from jax.experimental.pallas import tpu as pltpu


_EPS = 1e-5
_INV_SQRT2 = 0.7071067811865476


# ----------------------------------------------------------------------------
# In-kernel helpers (traced inside Pallas kernel bodies)
# ----------------------------------------------------------------------------

def _layer_norm(x, g, b, eps):
    """LayerNorm over the last (channel) axis. x: (..., C), g/b: (1, C)."""
    mu = jnp.mean(x, axis=-1, keepdims=True)
    var = jnp.mean((x - mu) ** 2, axis=-1, keepdims=True)
    return (x - mu) * jax.lax.rsqrt(var + eps) * g + b


def _bmm(a, b):
    """Batched matmul: a (J, R, K) @ b (J, K, S) -> (J, R, S), f32 accumulate."""
    return jax.lax.dot_general(a, b, (((2,), (1,)), ((0,), (0,))),
                               preferred_element_type=jnp.float32)


def _bcast_lead(a, n):
    """Replicate `a` along a new leading axis -> (n,) + a.shape."""
    return jnp.broadcast_to(a[None], (n,) + a.shape)


def _repeat_batch(x, g):
    """x: (B, N, C) -> (g*B, N, C); entry g_i*B + b holds x[b]."""
    bsz = x.shape[0]
    xb = jnp.broadcast_to(x[None], (g,) + x.shape)
    return xb.reshape((g * bsz,) + x.shape[1:])


def _bcast_per_head(w, bsz):
    """w: (G, P, Q) -> (G*B, P, Q); entry g*B + b holds w[g]."""
    g = w.shape[0]
    wb = jnp.broadcast_to(w[:, None], (g, bsz) + w.shape[1:])
    return wb.reshape((g * bsz,) + w.shape[1:])


def _project_heads(x, w):
    """Per-head projections as ONE batched MXU op.

    x: (B, N, C), w: (G, C, D) stacked per-head weights -> (G*B, N, D) with
    batch index j = g*B + b.
    """
    return _bmm(_repeat_batch(x, w.shape[0]), _bcast_per_head(w, x.shape[0]))


def _mha(q_hb, k_hb, v_hb, wo, bo, *, B, H, scale):
    """Multi-head attention core + output projection (bias included).

    q_hb: (H*B, N, D), k_hb/v_hb: (H*B, M, D), wo: (H, D, C), bo: (1, C).
    Returns (B, N, C) == concat_heads(softmax(q k^T * scale) v) @ Wo + bo.
    """
    s = jax.lax.dot_general(q_hb, k_hb, (((2,), (2,)), ((0,), (0,))),
                            preferred_element_type=jnp.float32) * scale
    s = s - jnp.max(s, axis=-1, keepdims=True)
    p = jnp.exp(s)
    p = p * pl.reciprocal(jnp.sum(p, axis=-1, keepdims=True), approx=False)
    o = _bmm(p, v_hb)                           # (H*B, N, D)
    # concat(heads) @ Wo  ==  sum_h o_h @ Wo_h  (accumulated head-by-head).
    y = _bmm(o, _bcast_per_head(wo, B))         # (H*B, N, C)
    acc = y[0:B]
    for h in range(1, H):
        acc = acc + y[h * B:(h + 1) * B]        # (B, N, C)
    return acc + bo


# ----------------------------------------------------------------------------
# Pallas kernels
# ----------------------------------------------------------------------------

def _ln_linear_kernel(x_ref, g_ref, b_ref, w_ref, wb_ref, o_ref, *, eps):
    """Fused LayerNorm + Linear.  x: (R, Din) -> (R, Dout)."""
    x = x_ref[...].astype(jnp.float32)
    xn = _layer_norm(x, g_ref[...], b_ref[...], eps)
    y = jnp.dot(xn, w_ref[...], preferred_element_type=jnp.float32) + wb_ref[...]
    o_ref[...] = y.astype(o_ref.dtype)


def _ln_linear_ln_kernel(x_ref, g1_ref, b1_ref, w_ref, wb_ref, g2_ref, b2_ref,
                         o_ref, *, eps):
    """Fused LayerNorm + Linear + LayerNorm (memory_proj)."""
    x = x_ref[...].astype(jnp.float32)
    xn = _layer_norm(x, g1_ref[...], b1_ref[...], eps)
    y = jnp.dot(xn, w_ref[...], preferred_element_type=jnp.float32) + wb_ref[...]
    o_ref[...] = _layer_norm(y, g2_ref[...], b2_ref[...], eps).astype(o_ref.dtype)


def _encoder_layer_kernel(
        x_ref, mem_ref,
        n1g_ref, n1b_ref, n2g_ref, n2b_ref, n3g_ref, n3b_ref,
        cwq_ref, cwkv_ref, cwo_ref, cbo_ref,
        swqkv_ref, swo_ref, sbo_ref,
        w1_ref, b1_ref, w2_ref, b2_ref,
        o_ref, *, num_heads, eps):
    """Entire TransformerEncoderLayer in one kernel (residual stream in VMEM)."""
    B = x_ref.shape[0]
    H = num_heads
    D = x_ref.shape[2] // H
    scale = float(D) ** -0.5

    x = x_ref[...].astype(jnp.float32)        # (B, N, C)
    mem = mem_ref[...].astype(jnp.float32)    # (B, M, C)

    # --- cross attention: x = x + Attn(LN1(x), mem, mem) --------------------
    qn = _layer_norm(x, n1g_ref[...], n1b_ref[...], eps)
    q_hb = _project_heads(qn, cwq_ref[...])       # (H*B,  N, D)
    kv_hb = _project_heads(mem, cwkv_ref[...])    # (2H*B, M, D) fused K/V
    x = x + _mha(q_hb, kv_hb[:H * B], kv_hb[H * B:],
                 cwo_ref[...], cbo_ref[...], B=B, H=H, scale=scale)

    # --- self attention: q = k = v = LN2(x), fused QKV projection -----------
    qn = _layer_norm(x, n2g_ref[...], n2b_ref[...], eps)
    qkv_hb = _project_heads(qn, swqkv_ref[...])   # (3H*B, N, D)
    x = x + _mha(qkv_hb[:H * B], qkv_hb[H * B:2 * H * B], qkv_hb[2 * H * B:],
                 swo_ref[...], sbo_ref[...], B=B, H=H, scale=scale)

    # --- MLP: x = x + W2 @ gelu(W1 @ LN3(x) + b1) + b2 -----------------------
    hn = _layer_norm(x, n3g_ref[...], n3b_ref[...], eps)
    h = _bmm(hn, _bcast_lead(w1_ref[...], B)) + b1_ref[...]
    h = 0.5 * h * (1.0 + jax.lax.erf(h * _INV_SQRT2))   # exact (erf) GELU
    h = _bmm(h, _bcast_lead(w2_ref[...], B)) + b2_ref[...]
    o_ref[...] = (x + h).astype(o_ref.dtype)


# ----------------------------------------------------------------------------
# pallas_call wrappers
# ----------------------------------------------------------------------------

def _vmem():
    return pl.BlockSpec(memory_space=pltpu.MemorySpace.VMEM)


def _ln_linear(x2, p):
    return pl.pallas_call(
        functools.partial(_ln_linear_kernel, eps=_EPS),
        in_specs=[_vmem() for _ in range(5)],
        out_specs=_vmem(),
        out_shape=jax.ShapeDtypeStruct((x2.shape[0], p["w"].shape[1]), x2.dtype),
    )(x2, p["ln_g"], p["ln_b"], p["w"], p["b"])


def _memory_proj(x2, p):
    return pl.pallas_call(
        functools.partial(_ln_linear_ln_kernel, eps=_EPS),
        in_specs=[_vmem() for _ in range(7)],
        out_specs=_vmem(),
        out_shape=jax.ShapeDtypeStruct((x2.shape[0], p["w"].shape[1]), x2.dtype),
    )(x2, p["ln1_g"], p["ln1_b"], p["w"], p["b"], p["ln2_g"], p["ln2_b"])


def _encoder_layer(p, x, mem, num_heads):
    args = (x, mem,
            p["norm1_g"], p["norm1_b"], p["norm2_g"], p["norm2_b"],
            p["norm3_g"], p["norm3_b"],
            p["cross"]["wq"], p["cross"]["wkv"], p["cross"]["wo"], p["cross"]["bo"],
            p["self"]["wqkv"], p["self"]["wo"], p["self"]["bo"],
            p["mlp_w1"], p["mlp_b1"], p["mlp_w2"], p["mlp_b2"])
    return pl.pallas_call(
        functools.partial(_encoder_layer_kernel, num_heads=num_heads, eps=_EPS),
        in_specs=[_vmem() for _ in range(len(args))],
        out_specs=_vmem(),
        out_shape=jax.ShapeDtypeStruct(x.shape, x.dtype),
    )(*args)


# ----------------------------------------------------------------------------
# Model forward
# ----------------------------------------------------------------------------

def xtransformer_forward(params, query, node, num_heads):
    """query: (B, N, visual_dim), node: (L, B, M, visual_dim) -> (B, L, N, visual_dim)."""
    B, N, Dv = query.shape
    L, _, M, _ = node.shape
    C = params["node_proj"]["w"].shape[1]

    # node_proj: one fused LN+Linear kernel over all B*N rows.
    q = _ln_linear(query.reshape(B * N, Dv), params["node_proj"]).reshape(B, N, C)

    # memory_proj shares weights across layers -> run once, batched over
    # (layer, batch, mem_token).  torch.repeat_interleave's result is
    # discarded in the reference, so it is intentionally omitted.
    mem_all = _memory_proj(node.reshape(L * B * M, Dv), params["memory_proj"])
    mem_all = mem_all.reshape(L, B, M, C)

    qs = []
    for idx in range(L):
        q = _encoder_layer(params["layers"][idx], q, mem_all[idx], num_heads)
        qs.append(q)

    # out_proj shares weights across layers -> one fused kernel on the stack.
    stacked = jnp.stack(qs, axis=0).reshape(L * B * N, C)
    out = _ln_linear(stacked, params["out_proj"])
    return out.reshape(L, B, N, Dv).transpose(1, 0, 2, 3)   # (B, L, N, Dv)


# ----------------------------------------------------------------------------
# Deterministic parameter initialization (mirrors _init_weights)
# ----------------------------------------------------------------------------

def init_params(key, width, heads, layers, visual_dim):
    C, H = width, heads
    D = C // H
    keys = iter(jax.random.split(key, 64 + 16 * layers))

    def trunc(shape):
        # trunc_normal(std=0.02); stored (in, out) / per-head stacked.
        return 0.02 * jax.random.truncated_normal(next(keys), -2.0, 2.0,
                                                  shape, jnp.float32)

    def ln(dim):
        return jnp.ones((1, dim), jnp.float32), jnp.zeros((1, dim), jnp.float32)

    def zeros(dim):
        return jnp.zeros((1, dim), jnp.float32)

    node_g, node_b = ln(visual_dim)
    mem_g1, mem_b1 = ln(visual_dim)
    mem_g2, mem_b2 = ln(width)
    out_g, out_b = ln(width)

    params = dict(
        node_proj=dict(ln_g=node_g, ln_b=node_b,
                       w=trunc((visual_dim, width)), b=zeros(width)),
        memory_proj=dict(ln1_g=mem_g1, ln1_b=mem_b1,
                         w=trunc((visual_dim, width)), b=zeros(width),
                         ln2_g=mem_g2, ln2_b=mem_b2),
        out_proj=dict(ln_g=out_g, ln_b=out_b,
                      w=trunc((width, visual_dim)), b=zeros(visual_dim)),
        layers=[],
    )
    for _ in range(layers):
        n1g, n1b = ln(width)
        n2g, n2b = ln(width)
        n3g, n3b = ln(width)
        params["layers"].append(dict(
            # Attention projections stored per head, stacked on the leading
            # axis (kernel-ready layout, == torch weight.T reshaped to
            # (C, H, D) and transposed to (H, C, D)); qkv_bias=False.
            cross=dict(wq=trunc((H, C, D)),            # Q heads
                       wkv=trunc((2 * H, C, D)),       # fused K|V heads
                       wo=trunc((H, D, C)), bo=zeros(C)),
            self=dict(wqkv=trunc((3 * H, C, D)),       # fused Q|K|V heads
                      wo=trunc((H, D, C)), bo=zeros(C)),
            norm1_g=n1g, norm1_b=n1b,
            norm2_g=n2g, norm2_b=n2b,
            norm3_g=n3g, norm3_b=n3b,
            mlp_w1=trunc((C, 4 * C)), mlp_b1=zeros(4 * C),
            mlp_w2=trunc((4 * C, C)), mlp_b2=zeros(C),
        ))
    return params


# ----------------------------------------------------------------------------
# Demo
# ----------------------------------------------------------------------------

if __name__ == "__main__":
    transformer_width = 32
    transformer_heads = 4
    transformer_layers = 2
    visual_dim = 48
    B, N, M = 2, 8, 8

    key = jax.random.PRNGKey(0)
    k_params, k_query, k_node = jax.random.split(key, 3)

    params = init_params(k_params, transformer_width, transformer_heads,
                         transformer_layers, visual_dim)
    query = jax.random.normal(k_query, (B, N, visual_dim), jnp.float32)
    node = jax.random.normal(k_node, (transformer_layers, B, M, visual_dim),
                             jnp.float32)

    fwd = jax.jit(xtransformer_forward, static_argnames=("num_heads",))
    out = fwd(params, query, node, num_heads=transformer_heads)
    out = jax.block_until_ready(out)

    assert out.shape == (B, transformer_layers, N, visual_dim), out.shape
    assert bool(jnp.all(jnp.isfinite(out)))
    print("KERNEL_OK")
</pallas_src>

<mosaic_0001>
module attributes {stable_mosaic.version = 11 : i64} {
  func.func @_ln_linear_kernel(%arg0: memref<16x48xf32, #tpu.memory_space<vmem>>, %arg1: memref<1x48xf32, #tpu.memory_space<vmem>>, %arg2: memref<1x48xf32, #tpu.memory_space<vmem>>, %arg3: memref<48x32xf32, #tpu.memory_space<vmem>>, %arg4: memref<1x32xf32, #tpu.memory_space<vmem>>, %arg5: memref<16x32xf32, #tpu.memory_space<vmem>>) attributes {dimension_semantics = [], scalar_prefetch = 0 : i64, scratch_operands = 0 : i64, tpu.core_type = #tpu.core_type<tc>} {
    %c0 = arith.constant 0 : index
    %c0_0 = arith.constant 0 : index
    %0 = vector.load %arg0[%c0, %c0_0] : memref<16x48xf32, #tpu.memory_space<vmem>>, vector<16x48xf32>
    %c0_1 = arith.constant 0 : index
    %c0_2 = arith.constant 0 : index
    %1 = vector.load %arg1[%c0_1, %c0_2] : memref<1x48xf32, #tpu.memory_space<vmem>>, vector<1x48xf32>
    %c0_3 = arith.constant 0 : index
    %c0_4 = arith.constant 0 : index
    %2 = vector.load %arg2[%c0_3, %c0_4] : memref<1x48xf32, #tpu.memory_space<vmem>>, vector<1x48xf32>
    %cst = arith.constant dense<0.000000e+00> : vector<16xf32>
    %3 = vector.multi_reduction <add>, %0, %cst [1] : vector<16x48xf32> to vector<16xf32>
    %4 = vector.shape_cast %3 : vector<16xf32> to vector<16x1xf32>
    %cst_5 = arith.constant 4.800000e+01 : f32
    %5 = vector.broadcast %cst_5 : f32 to vector<16x1xf32>
    %6 = arith.divf %4, %5 : vector<16x1xf32>
    %7 = vector.broadcast %6 : vector<16x1xf32> to vector<16x48xf32>
    %8 = arith.subf %0, %7 : vector<16x48xf32>
    %9 = arith.mulf %8, %8 : vector<16x48xf32>
    %cst_6 = arith.constant dense<0.000000e+00> : vector<16xf32>
    %10 = vector.multi_reduction <add>, %9, %cst_6 [1] : vector<16x48xf32> to vector<16xf32>
    %11 = vector.shape_cast %10 : vector<16xf32> to vector<16x1xf32>
    %cst_7 = arith.constant 4.800000e+01 : f32
    %12 = vector.broadcast %cst_7 : f32 to vector<16x1xf32>
    %13 = arith.divf %11, %12 : vector<16x1xf32>
    %14 = vector.broadcast %6 : vector<16x1xf32> to vector<16x48xf32>
    %15 = arith.subf %0, %14 : vector<16x48xf32>
    %cst_8 = arith.constant 9.99999974E-6 : f32
    %16 = vector.broadcast %cst_8 : f32 to vector<16x1xf32>
    %17 = arith.addf %13, %16 : vector<16x1xf32>
    %18 = math.rsqrt %17 : vector<16x1xf32>
    %19 = vector.broadcast %18 : vector<16x1xf32> to vector<16x48xf32>
    %20 = arith.mulf %15, %19 : vector<16x48xf32>
    %21 = vector.broadcast %1 : vector<1x48xf32> to vector<16x48xf32>
    %22 = arith.mulf %20, %21 : vector<16x48xf32>
    %23 = vector.broadcast %2 : vector<1x48xf32> to vector<16x48xf32>
    %24 = arith.addf %22, %23 : vector<16x48xf32>
    %c0_9 = arith.constant 0 : index
    %c0_10 = arith.constant 0 : index
    %25 = vector.load %arg3[%c0_9, %c0_10] : memref<48x32xf32, #tpu.memory_space<vmem>>, vector<48x32xf32>
    %cst_11 = arith.constant dense<0.000000e+00> : vector<16x32xf32>
    %26 = tpu.matmul %24, %25, %cst_11 {dimension_numbers = #tpu.dot_dimension_numbers<[1], [0], [0], [1], [0, 0, 1, 1], [], []>} : vector<16x48xf32>, vector<48x32xf32>, vector<16x32xf32> -> vector<16x32xf32>
    %c0_12 = arith.constant 0 : index
    %c0_13 = arith.constant 0 : index
    %27 = vector.load %arg4[%c0_12, %c0_13] : memref<1x32xf32, #tpu.memory_space<vmem>>, vector<1x32xf32>
    %28 = vector.broadcast %27 : vector<1x32xf32> to vector<16x32xf32>
    %29 = arith.addf %26, %28 : vector<16x32xf32>
    %c0_14 = arith.constant 0 : index
    %c0_15 = arith.constant 0 : index
    %30 = vector.load %arg5[%c0_14, %c0_15] : memref<16x32xf32, #tpu.memory_space<vmem>>, vector<16x32xf32>
    tpu.vector_store %arg5[%c0_14, %c0_15], %29 {strides = array<i32>} : memref<16x32xf32, #tpu.memory_space<vmem>>, vector<16x32xf32>,
    return
  }
}

module attributes {stable_mosaic.version = 11 : i64} {
  func.func @_ln_linear_ln_kernel(%arg0: memref<32x48xf32, #tpu.memory_space<vmem>>, %arg1: memref<1x48xf32, #tpu.memory_space<vmem>>, %arg2: memref<1x48xf32, #tpu.memory_space<vmem>>, %arg3: memref<48x32xf32, #tpu.memory_space<vmem>>, %arg4: memref<1x32xf32, #tpu.memory_space<vmem>>, %arg5: memref<1x32xf32, #tpu.memory_space<vmem>>, %arg6: memref<1x32xf32, #tpu.memory_space<vmem>>, %arg7: memref<32x32xf32, #tpu.memory_space<vmem>>) attributes {dimension_semantics = [], scalar_prefetch = 0 : i64, scratch_operands = 0 : i64, tpu.core_type = #tpu.core_type<tc>} {
    %c0 = arith.constant 0 : index
    %c0_0 = arith.constant 0 : index
    %0 = vector.load %arg0[%c0, %c0_0] : memref<32x48xf32, #tpu.memory_space<vmem>>, vector<32x48xf32>
    %c0_1 = arith.constant 0 : index
    %c0_2 = arith.constant 0 : index
    %1 = vector.load %arg1[%c0_1, %c0_2] : memref<1x48xf32, #tpu.memory_space<vmem>>, vector<1x48xf32>
    %c0_3 = arith.constant 0 : index
    %c0_4 = arith.constant 0 : index
    %2 = vector.load %arg2[%c0_3, %c0_4] : memref<1x48xf32, #tpu.memory_space<vmem>>, vector<1x48xf32>
    %cst = arith.constant dense<0.000000e+00> : vector<32xf32>
    %3 = vector.multi_reduction <add>, %0, %cst [1] : vector<32x48xf32> to vector<32xf32>
    %4 = vector.shape_cast %3 : vector<32xf32> to vector<32x1xf32>
    %cst_5 = arith.constant 4.800000e+01 : f32
    %5 = vector.broadcast %cst_5 : f32 to vector<32x1xf32>
    %6 = arith.divf %4, %5 : vector<32x1xf32>
    %7 = vector.broadcast %6 : vector<32x1xf32> to vector<32x48xf32>
    %8 = arith.subf %0, %7 : vector<32x48xf32>
    %9 = arith.mulf %8, %8 : vector<32x48xf32>
    %cst_6 = arith.constant dense<0.000000e+00> : vector<32xf32>
    %10 = vector.multi_reduction <add>, %9, %cst_6 [1] : vector<32x48xf32> to vector<32xf32>
    %11 = vector.shape_cast %10 : vector<32xf32> to vector<32x1xf32>
    %cst_7 = arith.constant 4.800000e+01 : f32
    %12 = vector.broadcast %cst_7 : f32 to vector<32x1xf32>
    %13 = arith.divf %11, %12 : vector<32x1xf32>
    %14 = vector.broadcast %6 : vector<32x1xf32> to vector<32x48xf32>
    %15 = arith.subf %0, %14 : vector<32x48xf32>
    %cst_8 = arith.constant 9.99999974E-6 : f32
    %16 = vector.broadcast %cst_8 : f32 to vector<32x1xf32>
    %17 = arith.addf %13, %16 : vector<32x1xf32>
    %18 = math.rsqrt %17 : vector<32x1xf32>
    %19 = vector.broadcast %18 : vector<32x1xf32> to vector<32x48xf32>
    %20 = arith.mulf %15, %19 : vector<32x48xf32>
    %21 = vector.broadcast %1 : vector<1x48xf32> to vector<32x48xf32>
    %22 = arith.mulf %20, %21 : vector<32x48xf32>
    %23 = vector.broadcast %2 : vector<1x48xf32> to vector<32x48xf32>
    %24 = arith.addf %22, %23 : vector<32x48xf32>
    %c0_9 = arith.constant 0 : index
    %c0_10 = arith.constant 0 : index
    %25 = vector.load %arg3[%c0_9, %c0_10] : memref<48x32xf32, #tpu.memory_space<vmem>>, vector<48x32xf32>
    %cst_11 = arith.constant dense<0.000000e+00> : vector<32x32xf32>
    %26 = tpu.matmul %24, %25, %cst_11 {dimension_numbers = #tpu.dot_dimension_numbers<[1], [0], [0], [1], [0, 0, 1, 1], [], []>} : vector<32x48xf32>, vector<48x32xf32>, vector<32x32xf32> -> vector<32x32xf32>
    %c0_12 = arith.constant 0 : index
    %c0_13 = arith.constant 0 : index
    %27 = vector.load %arg4[%c0_12, %c0_13] : memref<1x32xf32, #tpu.memory_space<vmem>>, vector<1x32xf32>
    %28 = vector.broadcast %27 : vector<1x32xf32> to vector<32x32xf32>
    %29 = arith.addf %26, %28 : vector<32x32xf32>
    %c0_14 = arith.constant 0 : index
    %c0_15 = arith.constant 0 : index
    %30 = vector.load %arg5[%c0_14, %c0_15] : memref<1x32xf32, #tpu.memory_space<vmem>>, vector<1x32xf32>
    %c0_16 = arith.constant 0 : index
    %c0_17 = arith.constant 0 : index
    %31 = vector.load %arg6[%c0_16, %c0_17] : memref<1x32xf32, #tpu.memory_space<vmem>>, vector<1x32xf32>
    %cst_18 = arith.constant dense<0.000000e+00> : vector<32xf32>
    %32 = vector.multi_reduction <add>, %29, %cst_18 [1] : vector<32x32xf32> to vector<32xf32>
    %33 = vector.shape_cast %32 : vector<32xf32> to vector<32x1xf32>
    %cst_19 = arith.constant 3.200000e+01 : f32
    %34 = vector.broadcast %cst_19 : f32 to vector<32x1xf32>
    %35 = arith.divf %33, %34 : vector<32x1xf32>
    %36 = vector.broadcast %35 : vector<32x1xf32> to vector<32x32xf32>
    %37 = arith.subf %29, %36 : vector<32x32xf32>
    %38 = arith.mulf %37, %37 : vector<32x32xf32>
    %cst_20 = arith.constant dense<0.000000e+00> : vector<32xf32>
    %39 = vector.multi_reduction <add>, %38, %cst_20 [1] : vector<32x32xf32> to vector<32xf32>
    %40 = vector.shape_cast %39 : vector<32xf32> to vector<32x1xf32>
    %cst_21 = arith.constant 3.200000e+01 : f32
    %41 = vector.broadcast %cst_21 : f32 to vector<32x1xf32>
    %42 = arith.divf %40, %41 : vector<32x1xf32>
    %43 = vector.broadcast %35 : vector<32x1xf32> to vector<32x32xf32>
    %44 = arith.subf %29, %43 : vector<32x32xf32>
    %cst_22 = arith.constant 9.99999974E-6 : f32
    %45 = vector.broadcast %cst_22 : f32 to vector<32x1xf32>
    %46 = arith.addf %42, %45 : vector<32x1xf32>
    %47 = math.rsqrt %46 : vector<32x1xf32>
    %48 = vector.broadcast %47 : vector<32x1xf32> to vector<32x32xf32>
    %49 = arith.mulf %44, %48 : vector<32x32xf32>
    %50 = vector.broadcast %30 : vector<1x32xf32> to vector<32x32xf32>
    %51 = arith.mulf %49, %50 : vector<32x32xf32>
    %52 = vector.broadcast %31 : vector<1x32xf32> to vector<32x32xf32>
    %53 = arith.addf %51, %52 : vector<32x32xf32>
    %c0_23 = arith.constant 0 : index
    %c0_24 = arith.constant 0 : index
    %54 = vector.load %arg7[%c0_23, %c0_24] : memref<32x32xf32, #tpu.memory_space<vmem>>, vector<32x32xf32>
    tpu.vector_store %arg7[%c0_23, %c0_24], %53 {strides = array<i32>} : memref<32x32xf32, #tpu.memory_space<vmem>>, vector<32x32xf32>,
    return
  }
}

module attributes {stable_mosaic.version = 11 : i64} {
  func.func @_encoder_layer_kernel(%arg0: memref<2x8x32xf32, #tpu.memory_space<vmem>>, %arg1: memref<2x8x32xf32, #tpu.memory_space<vmem>>, %arg2: memref<1x32xf32, #tpu.memory_space<vmem>>, %arg3: memref<1x32xf32, #tpu.memory_space<vmem>>, %arg4: memref<1x32xf32, #tpu.memory_space<vmem>>, %arg5: memref<1x32xf32, #tpu.memory_space<vmem>>, %arg6: memref<1x32xf32, #tpu.memory_space<vmem>>, %arg7: memref<1x32xf32, #tpu.memory_space<vmem>>, %arg8: memref<4x32x8xf32, #tpu.memory_space<vmem>>, %arg9: memref<8x32x8xf32, #tpu.memory_space<vmem>>, %arg10: memref<4x8x32xf32, #tpu.memory_space<vmem>>, %arg11: memref<1x32xf32, #tpu.memory_space<vmem>>, %arg12: memref<12x32x8xf32, #tpu.memory_space<vmem>>, %arg13: memref<4x8x32xf32, #tpu.memory_space<vmem>>, %arg14: memref<1x32xf32, #tpu.memory_space<vmem>>, %arg15: memref<32x128xf32, #tpu.memory_space<vmem>>, %arg16: memref<1x128xf32, #tpu.memory_space<vmem>>, %arg17: memref<128x32xf32, #tpu.memory_space<vmem>>, %arg18: memref<1x32xf32, #tpu.memory_space<vmem>>, %arg19: memref<2x8x32xf32, #tpu.memory_space<vmem>>) attributes {dimension_semantics = [], scalar_prefetch = 0 : i64, scratch_operands = 0 : i64, tpu.core_type = #tpu.core_type<tc>} {
    %c0 = arith.constant 0 : index
    %c0_0 = arith.constant 0 : index
    %c0_1 = arith.constant 0 : index
    %0 = vector.load %arg0[%c0, %c0_0, %c0_1] : memref<2x8x32xf32, #tpu.memory_space<vmem>>, vector<2x8x32xf32>
    %c0_2 = arith.constant 0 : index
    %c0_3 = arith.constant 0 : index
    %c0_4 = arith.constant 0 : index
    %1 = vector.load %arg1[%c0_2, %c0_3, %c0_4] : memref<2x8x32xf32, #tpu.memory_space<vmem>>, vector<2x8x32xf32>
    %c0_5 = arith.constant 0 : index
    %c0_6 = arith.constant 0 : index
    %2 = vector.load %arg2[%c0_5, %c0_6] : memref<1x32xf32, #tpu.memory_space<vmem>>, vector<1x32xf32>
    %c0_7 = arith.constant 0 : index
    %c0_8 = arith.constant 0 : index
    %3 = vector.load %arg3[%c0_7, %c0_8] : memref<1x32xf32, #tpu.memory_space<vmem>>, vector<1x32xf32>
    %cst = arith.constant dense<0.000000e+00> : vector<2x8xf32>
    %4 = vector.multi_reduction <add>, %0, %cst [2] : vector<2x8x32xf32> to vector<2x8xf32>
    %5 = vector.shape_cast %4 : vector<2x8xf32> to vector<2x8x1xf32>
    %cst_9 = arith.constant 3.200000e+01 : f32
    %6 = vector.broadcast %cst_9 : f32 to vector<2x8x1xf32>
    %7 = arith.divf %5, %6 : vector<2x8x1xf32>
    %8 = vector.broadcast %7 : vector<2x8x1xf32> to vector<2x8x32xf32>
    %9 = arith.subf %0, %8 : vector<2x8x32xf32>
    %10 = arith.mulf %9, %9 : vector<2x8x32xf32>
    %cst_10 = arith.constant dense<0.000000e+00> : vector<2x8xf32>
    %11 = vector.multi_reduction <add>, %10, %cst_10 [2] : vector<2x8x32xf32> to vector<2x8xf32>
    %12 = vector.shape_cast %11 : vector<2x8xf32> to vector<2x8x1xf32>
    %cst_11 = arith.constant 3.200000e+01 : f32
    %13 = vector.broadcast %cst_11 : f32 to vector<2x8x1xf32>
    %14 = arith.divf %12, %13 : vector<2x8x1xf32>
    %15 = vector.broadcast %7 : vector<2x8x1xf32> to vector<2x8x32xf32>
    %16 = arith.subf %0, %15 : vector<2x8x32xf32>
    %cst_12 = arith.constant 9.99999974E-6 : f32
    %17 = vector.broadcast %cst_12 : f32 to vector<2x8x1xf32>
    %18 = arith.addf %14, %17 : vector<2x8x1xf32>
    %19 = math.rsqrt %18 : vector<2x8x1xf32>
    %20 = vector.broadcast %19 : vector<2x8x1xf32> to vector<2x8x32xf32>
    %21 = arith.mulf %16, %20 : vector<2x8x32xf32>
    %22 = vector.shape_cast %2 : vector<1x32xf32> to vector<1x1x32xf32>
    %23 = vector.broadcast %22 : vector<1x1x32xf32> to vector<2x8x32xf32>
    %24 = arith.mulf %21, %23 : vector<2x8x32xf32>
    %25 = vector.shape_cast %3 : vector<1x32xf32> to vector<1x1x32xf32>
    %26 = vector.broadcast %25 : vector<1x1x32xf32> to vector<2x8x32xf32>
    %27 = arith.addf %24, %26 : vector<2x8x32xf32>
    %c0_13 = arith.constant 0 : index
    %c0_14 = arith.constant 0 : index
    %c0_15 = arith.constant 0 : index
    %28 = vector.load %arg8[%c0_13, %c0_14, %c0_15] : memref<4x32x8xf32, #tpu.memory_space<vmem>>, vector<4x32x8xf32>
    %29 = vector.shape_cast %27 : vector<2x8x32xf32> to vector<1x2x8x32xf32>
    %30 = vector.shape_cast %29 : vector<1x2x8x32xf32> to vector<1x2x8x32xf32>
    %31 = vector.broadcast %30 : vector<1x2x8x32xf32> to vector<4x2x8x32xf32>
    %32 = vector.shape_cast %31 : vector<4x2x8x32xf32> to vector<8x8x32xf32>
    %33 = vector.shape_cast %28 : vector<4x32x8xf32> to vector<4x1x32x8xf32>
    %34 = vector.shape_cast %33 : vector<4x1x32x8xf32> to vector<4x1x32x8xf32>
    %35 = vector.broadcast %34 : vector<4x1x32x8xf32> to vector<4x2x32x8xf32>
    %36 = vector.shape_cast %35 : vector<4x2x32x8xf32> to vector<8x32x8xf32>
    %cst_16 = arith.constant dense<0.000000e+00> : vector<8x8x8xf32>
    %37 = tpu.matmul %32, %36, %cst_16 {dimension_numbers = #tpu.dot_dimension_numbers<[2], [1], [1], [2], [0, 0, 0, 1, 1, 2], [0], [0]>} : vector<8x8x32xf32>, vector<8x32x8xf32>, vector<8x8x8xf32> -> vector<8x8x8xf32>
    %c0_17 = arith.constant 0 : index
    %c0_18 = arith.constant 0 : index
    %c0_19 = arith.constant 0 : index
    %38 = vector.load %arg9[%c0_17, %c0_18, %c0_19] : memref<8x32x8xf32, #tpu.memory_space<vmem>>, vector<8x32x8xf32>
    %39 = vector.shape_cast %1 : vector<2x8x32xf32> to vector<1x2x8x32xf32>
    %40 = vector.shape_cast %39 : vector<1x2x8x32xf32> to vector<1x2x8x32xf32>
    %41 = vector.broadcast %40 : vector<1x2x8x32xf32> to vector<8x2x8x32xf32>
    %42 = vector.shape_cast %41 : vector<8x2x8x32xf32> to vector<16x8x32xf32>
    %43 = vector.shape_cast %38 : vector<8x32x8xf32> to vector<8x1x32x8xf32>
    %44 = vector.shape_cast %43 : vector<8x1x32x8xf32> to vector<8x1x32x8xf32>
    %45 = vector.broadcast %44 : vector<8x1x32x8xf32> to vector<8x2x32x8xf32>
    %46 = vector.shape_cast %45 : vector<8x2x32x8xf32> to vector<16x32x8xf32>
    %cst_20 = arith.constant dense<0.000000e+00> : vector<16x8x8xf32>
    %47 = tpu.matmul %42, %46, %cst_20 {dimension_numbers = #tpu.dot_dimension_numbers<[2], [1], [1], [2], [0, 0, 0, 1, 1, 2], [0], [0]>} : vector<16x8x32xf32>, vector<16x32x8xf32>, vector<16x8x8xf32> -> vector<16x8x8xf32>
    %48 = vector.extract_strided_slice %47 {offsets = [0, 0, 0], sizes = [8, 8, 8], strides = [1, 1, 1]} : vector<16x8x8xf32> to vector<8x8x8xf32>
    %49 = vector.extract_strided_slice %47 {offsets = [8, 0, 0], sizes = [8, 8, 8], strides = [1, 1, 1]} : vector<16x8x8xf32> to vector<8x8x8xf32>
    %c0_21 = arith.constant 0 : index
    %c0_22 = arith.constant 0 : index
    %c0_23 = arith.constant 0 : index
    %50 = vector.load %arg10[%c0_21, %c0_22, %c0_23] : memref<4x8x32xf32, #tpu.memory_space<vmem>>, vector<4x8x32xf32>
    %c0_24 = arith.constant 0 : index
    %c0_25 = arith.constant 0 : index
    %51 = vector.load %arg11[%c0_24, %c0_25] : memref<1x32xf32, #tpu.memory_space<vmem>>, vector<1x32xf32>
    %cst_26 = arith.constant dense<0.000000e+00> : vector<8x8x8xf32>
    %52 = tpu.matmul %37, %48, %cst_26 {dimension_numbers = #tpu.dot_dimension_numbers<[2], [2], [1], [1], [0, 0, 0, 1, 1, 1], [0], [0]>} : vector<8x8x8xf32>, vector<8x8x8xf32>, vector<8x8x8xf32> -> vector<8x8x8xf32>
    %cst_27 = arith.constant 0.353553385 : f32
    %53 = vector.broadcast %cst_27 : f32 to vector<8x8x8xf32>
    %54 = arith.mulf %52, %53 : vector<8x8x8xf32>
    %cst_28 = arith.constant dense<0xFF800000> : vector<8x8xf32>
    %55 = vector.multi_reduction <maximumf>, %54, %cst_28 [2] : vector<8x8x8xf32> to vector<8x8xf32>
    %56 = vector.shape_cast %55 : vector<8x8xf32> to vector<8x8x1xf32>
    %57 = vector.broadcast %56 : vector<8x8x1xf32> to vector<8x8x8xf32>
    %58 = arith.subf %54, %57 : vector<8x8x8xf32>
    %59 = math.exp %58 : vector<8x8x8xf32>
    %cst_29 = arith.constant dense<0.000000e+00> : vector<8x8xf32>
    %60 = vector.multi_reduction <add>, %59, %cst_29 [2] : vector<8x8x8xf32> to vector<8x8xf32>
    %61 = vector.shape_cast %60 : vector<8x8xf32> to vector<8x8x1xf32>
    %62 = tpu.reciprocal %61 : vector<8x8x1xf32> -> vector<8x8x1xf32>
    %63 = vector.broadcast %62 : vector<8x8x1xf32> to vector<8x8x8xf32>
    %64 = arith.mulf %59, %63 : vector<8x8x8xf32>
    %cst_30 = arith.constant dense<0.000000e+00> : vector<8x8x8xf32>
    %65 = tpu.matmul %64, %49, %cst_30 {dimension_numbers = #tpu.dot_dimension_numbers<[2], [1], [1], [2], [0, 0, 0, 1, 1, 2], [0], [0]>} : vector<8x8x8xf32>, vector<8x8x8xf32>, vector<8x8x8xf32> -> vector<8x8x8xf32>
    %66 = vector.shape_cast %50 : vector<4x8x32xf32> to vector<4x1x8x32xf32>
    %67 = vector.shape_cast %66 : vector<4x1x8x32xf32> to vector<4x1x8x32xf32>
    %68 = vector.broadcast %67 : vector<4x1x8x32xf32> to vector<4x2x8x32xf32>
    %69 = vector.shape_cast %68 : vector<4x2x8x32xf32> to vector<8x8x32xf32>
    %cst_31 = arith.constant dense<0.000000e+00> : vector<8x8x32xf32>
    %70 = tpu.matmul %65, %69, %cst_31 {dimension_numbers = #tpu.dot_dimension_numbers<[2], [1], [1], [2], [0, 0, 0, 1, 1, 2], [0], [0]>} : vector<8x8x8xf32>, vector<8x8x32xf32>, vector<8x8x32xf32> -> vector<8x8x32xf32>
    %71 = vector.extract_strided_slice %70 {offsets = [0, 0, 0], sizes = [2, 8, 32], strides = [1, 1, 1]} : vector<8x8x32xf32> to vector<2x8x32xf32>
    %72 = vector.extract_strided_slice %70 {offsets = [2, 0, 0], sizes = [2, 8, 32], strides = [1, 1, 1]} : vector<8x8x32xf32> to vector<2x8x32xf32>
    %73 = arith.addf %71, %72 : vector<2x8x32xf32>
    %74 = vector.extract_strided_slice %70 {offsets = [4, 0, 0], sizes = [2, 8, 32], strides = [1, 1, 1]} : vector<8x8x32xf32> to vector<2x8x32xf32>
    %75 = arith.addf %73, %74 : vector<2x8x32xf32>
    %76 = vector.extract_strided_slice %70 {offsets = [6, 0, 0], sizes = [2, 8, 32], strides = [1, 1, 1]} : vector<8x8x32xf32> to vector<2x8x32xf32>
    %77 = arith.addf %75, %76 : vector<2x8x32xf32>
    %78 = vector.shape_cast %51 : vector<1x32xf32> to vector<1x1x32xf32>
    %79 = vector.broadcast %78 : vector<1x1x32xf32> to vector<2x8x32xf32>
    %80 = arith.addf %77, %79 : vector<2x8x32xf32>
    %81 = arith.addf %0, %80 : vector<2x8x32xf32>
    %c0_32 = arith.constant 0 : index
    %c0_33 = arith.constant 0 : index
    %82 = vector.load %arg4[%c0_32, %c0_33] : memref<1x32xf32, #tpu.memory_space<vmem>>, vector<1x32xf32>
    %c0_34 = arith.constant 0 : index
    %c0_35 = arith.constant 0 : index
    %83 = vector.load %arg5[%c0_34, %c0_35] : memref<1x32xf32, #tpu.memory_space<vmem>>, vector<1x32xf32>
    %cst_36 = arith.constant dense<0.000000e+00> : vector<2x8xf32>
    %84 = vector.multi_reduction <add>, %81, %cst_36 [2] : vector<2x8x32xf32> to vector<2x8xf32>
    %85 = vector.shape_cast %84 : vector<2x8xf32> to vector<2x8x1xf32>
    %cst_37 = arith.constant 3.200000e+01 : f32
    %86 = vector.broadcast %cst_37 : f32 to vector<2x8x1xf32>
    %87 = arith.divf %85, %86 : vector<2x8x1xf32>
    %88 = vector.broadcast %87 : vector<2x8x1xf32> to vector<2x8x32xf32>
    %89 = arith.subf %81, %88 : vector<2x8x32xf32>
    %90 = arith.mulf %89, %89 : vector<2x8x32xf32>
    %cst_38 = arith.constant dense<0.000000e+00> : vector<2x8xf32>
    %91 = vector.multi_reduction <add>, %90, %cst_38 [2] : vector<2x8x32xf32> to vector<2x8xf32>
    %92 = vector.shape_cast %91 : vector<2x8xf32> to vector<2x8x1xf32>
    %cst_39 = arith.constant 3.200000e+01 : f32
    %93 = vector.broadcast %cst_39 : f32 to vector<2x8x1xf32>
    %94 = arith.divf %92, %93 : vector<2x8x1xf32>
    %95 = vector.broadcast %87 : vector<2x8x1xf32> to vector<2x8x32xf32>
    %96 = arith.subf %81, %95 : vector<2x8x32xf32>
    %cst_40 = arith.constant 9.99999974E-6 : f32
    %97 = vector.broadcast %cst_40 : f32 to vector<2x8x1xf32>
    %98 = arith.addf %94, %97 : vector<2x8x1xf32>
    %99 = math.rsqrt %98 : vector<2x8x1xf32>
    %100 = vector.broadcast %99 : vector<2x8x1xf32> to vector<2x8x32xf32>
    %101 = arith.mulf %96, %100 : vector<2x8x32xf32>
    %102 = vector.shape_cast %82 : vector<1x32xf32> to vector<1x1x32xf32>
    %103 = vector.broadcast %102 : vector<1x1x32xf32> to vector<2x8x32xf32>
    %104 = arith.mulf %101, %103 : vector<2x8x32xf32>
    %105 = vector.shape_cast %83 : vector<1x32xf32> to vector<1x1x32xf32>
    %106 = vector.broadcast %105 : vector<1x1x32xf32> to vector<2x8x32xf32>
    %107 = arith.addf %104, %106 : vector<2x8x32xf32>
    %c0_41 = arith.constant 0 : index
    %c0_42 = arith.constant 0 : index
    %c0_43 = arith.constant 0 : index
    %108 = vector.load %arg12[%c0_41, %c0_42, %c0_43] : memref<12x32x8xf32, #tpu.memory_space<vmem>>, vector<12x32x8xf32>
    %109 = vector.shape_cast %107 : vector<2x8x32xf32> to vector<1x2x8x32xf32>
    %110 = vector.shape_cast %109 : vector<1x2x8x32xf32> to vector<1x2x8x32xf32>
    %111 = vector.broadcast %110 : vector<1x2x8x32xf32> to vector<12x2x8x32xf32>
    %112 = vector.shape_cast %111 : vector<12x2x8x32xf32> to vector<24x8x32xf32>
    %113 = vector.shape_cast %108 : vector<12x32x8xf32> to vector<12x1x32x8xf32>
    %114 = vector.shape_cast %113 : vector<12x1x32x8xf32> to vector<12x1x32x8xf32>
    %115 = vector.broadcast %114 : vector<12x1x32x8xf32> to vector<12x2x32x8xf32>
    %116 = vector.shape_cast %115 : vector<12x2x32x8xf32> to vector<24x32x8xf32>
    %cst_44 = arith.constant dense<0.000000e+00> : vector<24x8x8xf32>
    %117 = tpu.matmul %112, %116, %cst_44 {dimension_numbers = #tpu.dot_dimension_numbers<[2], [1], [1], [2], [0, 0, 0, 1, 1, 2], [0], [0]>} : vector<24x8x32xf32>, vector<24x32x8xf32>, vector<24x8x8xf32> -> vector<24x8x8xf32>
    %118 = vector.extract_strided_slice %117 {offsets = [0, 0, 0], sizes = [8, 8, 8], strides = [1, 1, 1]} : vector<24x8x8xf32> to vector<8x8x8xf32>
    %119 = vector.extract_strided_slice %117 {offsets = [8, 0, 0], sizes = [8, 8, 8], strides = [1, 1, 1]} : vector<24x8x8xf32> to vector<8x8x8xf32>
    %120 = vector.extract_strided_slice %117 {offsets = [16, 0, 0], sizes = [8, 8, 8], strides = [1, 1, 1]} : vector<24x8x8xf32> to vector<8x8x8xf32>
    %c0_45 = arith.constant 0 : index
    %c0_46 = arith.constant 0 : index
    %c0_47 = arith.constant 0 : index
    %121 = vector.load %arg13[%c0_45, %c0_46, %c0_47] : memref<4x8x32xf32, #tpu.memory_space<vmem>>, vector<4x8x32xf32>
    %c0_48 = arith.constant 0 : index
    %c0_49 = arith.constant 0 : index
    %122 = vector.load %arg14[%c0_48, %c0_49] : memref<1x32xf32, #tpu.memory_space<vmem>>, vector<1x32xf32>
    %cst_50 = arith.constant dense<0.000000e+00> : vector<8x8x8xf32>
    %123 = tpu.matmul %118, %119, %cst_50 {dimension_numbers = #tpu.dot_dimension_numbers<[2], [2], [1], [1], [0, 0, 0, 1, 1, 1], [0], [0]>} : vector<8x8x8xf32>, vector<8x8x8xf32>, vector<8x8x8xf32> -> vector<8x8x8xf32>
    %cst_51 = arith.constant 0.353553385 : f32
    %124 = vector.broadcast %cst_51 : f32 to vector<8x8x8xf32>
    %125 = arith.mulf %123, %124 : vector<8x8x8xf32>
    %cst_52 = arith.constant dense<0xFF800000> : vector<8x8xf32>
    %126 = vector.multi_reduction <maximumf>, %125, %cst_52 [2] : vector<8x8x8xf32> to vector<8x8xf32>
    %127 = vector.shape_cast %126 : vector<8x8xf32> to vector<8x8x1xf32>
    %128 = vector.broadcast %127 : vector<8x8x1xf32> to vector<8x8x8xf32>
    %129 = arith.subf %125, %128 : vector<8x8x8xf32>
    %130 = math.exp %129 : vector<8x8x8xf32>
    %cst_53 = arith.constant dense<0.000000e+00> : vector<8x8xf32>
    %131 = vector.multi_reduction <add>, %130, %cst_53 [2] : vector<8x8x8xf32> to vector<8x8xf32>
    %132 = vector.shape_cast %131 : vector<8x8xf32> to vector<8x8x1xf32>
    %133 = tpu.reciprocal %132 : vector<8x8x1xf32> -> vector<8x8x1xf32>
    %134 = vector.broadcast %133 : vector<8x8x1xf32> to vector<8x8x8xf32>
    %135 = arith.mulf %130, %134 : vector<8x8x8xf32>
    %cst_54 = arith.constant dense<0.000000e+00> : vector<8x8x8xf32>
    %136 = tpu.matmul %135, %120, %cst_54 {dimension_numbers = #tpu.dot_dimension_numbers<[2], [1], [1], [2], [0, 0, 0, 1, 1, 2], [0], [0]>} : vector<8x8x8xf32>, vector<8x8x8xf32>, vector<8x8x8xf32> -> vector<8x8x8xf32>
    %137 = vector.shape_cast %121 : vector<4x8x32xf32> to vector<4x1x8x32xf32>
    %138 = vector.shape_cast %137 : vector<4x1x8x32xf32> to vector<4x1x8x32xf32>
    %139 = vector.broadcast %138 : vector<4x1x8x32xf32> to vector<4x2x8x32xf32>
    %140 = vector.shape_cast %139 : vector<4x2x8x32xf32> to vector<8x8x32xf32>
    %cst_55 = arith.constant dense<0.000000e+00> : vector<8x8x32xf32>
    %141 = tpu.matmul %136, %140, %cst_55 {dimension_numbers = #tpu.dot_dimension_numbers<[2], [1], [1], [2], [0, 0, 0, 1, 1, 2], [0], [0]>} : vector<8x8x8xf32>, vector<8x8x32xf32>, vector<8x8x32xf32> -> vector<8x8x32xf32>
    %142 = vector.extract_strided_slice %141 {offsets = [0, 0, 0], sizes = [2, 8, 32], strides = [1, 1, 1]} : vector<8x8x32xf32> to vector<2x8x32xf32>
    %143 = vector.extract_strided_slice %141 {offsets = [2, 0, 0], sizes = [2, 8, 32], strides = [1, 1, 1]} : vector<8x8x32xf32> to vector<2x8x32xf32>
    %144 = arith.addf %142, %143 : vector<2x8x32xf32>
    %145 = vector.extract_strided_slice %141 {offsets = [4, 0, 0], sizes = [2, 8, 32], strides = [1, 1, 1]} : vector<8x8x32xf32> to vector<2x8x32xf32>
    %146 = arith.addf %144, %145 : vector<2x8x32xf32>
    %147 = vector.extract_strided_slice %141 {offsets = [6, 0, 0], sizes = [2, 8, 32], strides = [1, 1, 1]} : vector<8x8x32xf32> to vector<2x8x32xf32>
    %148 = arith.addf %146, %147 : vector<2x8x32xf32>
    %149 = vector.shape_cast %122 : vector<1x32xf32> to vector<1x1x32xf32>
    %150 = vector.broadcast %149 : vector<1x1x32xf32> to vector<2x8x32xf32>
    %151 = arith.addf %148, %150 : vector<2x8x32xf32>
    %152 = arith.addf %81, %151 : vector<2x8x32xf32>
    %c0_56 = arith.constant 0 : index
    %c0_57 = arith.constant 0 : index
    %153 = vector.load %arg6[%c0_56, %c0_57] : memref<1x32xf32, #tpu.memory_space<vmem>>, vector<1x32xf32>
    %c0_58 = arith.constant 0 : index
    %c0_59 = arith.constant 0 : index
    %154 = vector.load %arg7[%c0_58, %c0_59] : memref<1x32xf32, #tpu.memory_space<vmem>>, vector<1x32xf32>
    %cst_60 = arith.constant dense<0.000000e+00> : vector<2x8xf32>
    %155 = vector.multi_reduction <add>, %152, %cst_60 [2] : vector<2x8x32xf32> to vector<2x8xf32>
    %156 = vector.shape_cast %155 : vector<2x8xf32> to vector<2x8x1xf32>
    %cst_61 = arith.constant 3.200000e+01 : f32
    %157 = vector.broadcast %cst_61 : f32 to vector<2x8x1xf32>
    %158 = arith.divf %156, %157 : vector<2x8x1xf32>
    %159 = vector.broadcast %158 : vector<2x8x1xf32> to vector<2x8x32xf32>
    %160 = arith.subf %152, %159 : vector<2x8x32xf32>
    %161 = arith.mulf %160, %160 : vector<2x8x32xf32>
    %cst_62 = arith.constant dense<0.000000e+00> : vector<2x8xf32>
    %162 = vector.multi_reduction <add>, %161, %cst_62 [2] : vector<2x8x32xf32> to vector<2x8xf32>
    %163 = vector.shape_cast %162 : vector<2x8xf32> to vector<2x8x1xf32>
    %cst_63 = arith.constant 3.200000e+01 : f32
    %164 = vector.broadcast %cst_63 : f32 to vector<2x8x1xf32>
    %165 = arith.divf %163, %164 : vector<2x8x1xf32>
    %166 = vector.broadcast %158 : vector<2x8x1xf32> to vector<2x8x32xf32>
    %167 = arith.subf %152, %166 : vector<2x8x32xf32>
    %cst_64 = arith.constant 9.99999974E-6 : f32
    %168 = vector.broadcast %cst_64 : f32 to vector<2x8x1xf32>
    %169 = arith.addf %165, %168 : vector<2x8x1xf32>
    %170 = math.rsqrt %169 : vector<2x8x1xf32>
    %171 = vector.broadcast %170 : vector<2x8x1xf32> to vector<2x8x32xf32>
    %172 = arith.mulf %167, %171 : vector<2x8x32xf32>
    %173 = vector.shape_cast %153 : vector<1x32xf32> to vector<1x1x32xf32>
    %174 = vector.broadcast %173 : vector<1x1x32xf32> to vector<2x8x32xf32>
    %175 = arith.mulf %172, %174 : vector<2x8x32xf32>
    %176 = vector.shape_cast %154 : vector<1x32xf32> to vector<1x1x32xf32>
    %177 = vector.broadcast %176 : vector<1x1x32xf32> to vector<2x8x32xf32>
    %178 = arith.addf %175, %177 : vector<2x8x32xf32>
    %c0_65 = arith.constant 0 : index
    %c0_66 = arith.constant 0 : index
    %179 = vector.load %arg15[%c0_65, %c0_66] : memref<32x128xf32, #tpu.memory_space<vmem>>, vector<32x128xf32>
    %180 = vector.shape_cast %179 : vector<32x128xf32> to vector<1x32x128xf32>
    %181 = vector.shape_cast %180 : vector<1x32x128xf32> to vector<1x32x128xf32>
    %182 = vector.broadcast %181 : vector<1x32x128xf32> to vector<2x32x128xf32>
    %cst_67 = arith.constant dense<0.000000e+00> : vector<2x8x128xf32>
    %183 = tpu.matmul %178, %182, %cst_67 {dimension_numbers = #tpu.dot_dimension_numbers<[2], [1], [1], [2], [0, 0, 0, 1, 1, 2], [0], [0]>} : vector<2x8x32xf32>, vector<2x32x128xf32>, vector<2x8x128xf32> -> vector<2x8x128xf32>
    %c0_68 = arith.constant 0 : index
    %c0_69 = arith.constant 0 : index
    %184 = vector.load %arg16[%c0_68, %c0_69] : memref<1x128xf32, #tpu.memory_space<vmem>>, vector<1x128xf32>
    %185 = vector.shape_cast %184 : vector<1x128xf32> to vector<1x1x128xf32>
    %186 = vector.broadcast %185 : vector<1x1x128xf32> to vector<2x8x128xf32>
    %187 = arith.addf %183, %186 : vector<2x8x128xf32>
    %cst_70 = arith.constant 5.000000e-01 : f32
    %188 = vector.broadcast %cst_70 : f32 to vector<2x8x128xf32>
    %189 = arith.mulf %188, %187 : vector<2x8x128xf32>
    %cst_71 = arith.constant 0.707106769 : f32
    %190 = vector.broadcast %cst_71 : f32 to vector<2x8x128xf32>
    %191 = arith.mulf %187, %190 : vector<2x8x128xf32>
    %192 = math.erf %191 : vector<2x8x128xf32>
    %cst_72 = arith.constant 1.000000e+00 : f32
    %193 = vector.broadcast %cst_72 : f32 to vector<2x8x128xf32>
    %194 = arith.addf %193, %192 : vector<2x8x128xf32>
    %195 = arith.mulf %189, %194 : vector<2x8x128xf32>
    %c0_73 = arith.constant 0 : index
    %c0_74 = arith.constant 0 : index
    %196 = vector.load %arg17[%c0_73, %c0_74] : memref<128x32xf32, #tpu.memory_space<vmem>>, vector<128x32xf32>
    %197 = vector.shape_cast %196 : vector<128x32xf32> to vector<1x128x32xf32>
    %198 = vector.shape_cast %197 : vector<1x128x32xf32> to vector<1x128x32xf32>
    %199 = vector.broadcast %198 : vector<1x128x32xf32> to vector<2x128x32xf32>
    %cst_75 = arith.constant dense<0.000000e+00> : vector<2x8x32xf32>
    %200 = tpu.matmul %195, %199, %cst_75 {dimension_numbers = #tpu.dot_dimension_numbers<[2], [1], [1], [2], [0, 0, 0, 1, 1, 2], [0], [0]>} : vector<2x8x128xf32>, vector<2x128x32xf32>, vector<2x8x32xf32> -> vector<2x8x32xf32>
    %c0_76 = arith.constant 0 : index
    %c0_77 = arith.constant 0 : index
    %201 = vector.load %arg18[%c0_76, %c0_77] : memref<1x32xf32, #tpu.memory_space<vmem>>, vector<1x32xf32>
    %202 = vector.shape_cast %201 : vector<1x32xf32> to vector<1x1x32xf32>
    %203 = vector.broadcast %202 : vector<1x1x32xf32> to vector<2x8x32xf32>
    %204 = arith.addf %200, %203 : vector<2x8x32xf32>
    %205 = arith.addf %152, %204 : vector<2x8x32xf32>
    %c0_78 = arith.constant 0 : index
    %c0_79 = arith.constant 0 : index
    %c0_80 = arith.constant 0 : index
    %206 = vector.load %arg19[%c0_78, %c0_79, %c0_80] : memref<2x8x32xf32, #tpu.memory_space<vmem>>, vector<2x8x32xf32>
    tpu.vector_store %arg19[%c0_78, %c0_79, %c0_80], %205 {strides = array<i32>} : memref<2x8x32xf32, #tpu.memory_space<vmem>>, vector<2x8x32xf32>,
    return
  }
}

module attributes {stable_mosaic.version = 11 : i64} {
  func.func @_ln_linear_kernel(%arg0: memref<32x32xf32, #tpu.memory_space<vmem>>, %arg1: memref<1x32xf32, #tpu.memory_space<vmem>>, %arg2: memref<1x32xf32, #tpu.memory_space<vmem>>, %arg3: memref<32x48xf32, #tpu.memory_space<vmem>>, %arg4: memref<1x48xf32, #tpu.memory_space<vmem>>, %arg5: memref<32x48xf32, #tpu.memory_space<vmem>>) attributes {dimension_semantics = [], scalar_prefetch = 0 : i64, scratch_operands = 0 : i64, tpu.core_type = #tpu.core_type<tc>} {
    %c0 = arith.constant 0 : index
    %c0_0 = arith.constant 0 : index
    %0 = vector.load %arg0[%c0, %c0_0] : memref<32x32xf32, #tpu.memory_space<vmem>>, vector<32x32xf32>
    %c0_1 = arith.constant 0 : index
    %c0_2 = arith.constant 0 : index
    %1 = vector.load %arg1[%c0_1, %c0_2] : memref<1x32xf32, #tpu.memory_space<vmem>>, vector<1x32xf32>
    %c0_3 = arith.constant 0 : index
    %c0_4 = arith.constant 0 : index
    %2 = vector.load %arg2[%c0_3, %c0_4] : memref<1x32xf32, #tpu.memory_space<vmem>>, vector<1x32xf32>
    %cst = arith.constant dense<0.000000e+00> : vector<32xf32>
    %3 = vector.multi_reduction <add>, %0, %cst [1] : vector<32x32xf32> to vector<32xf32>
    %4 = vector.shape_cast %3 : vector<32xf32> to vector<32x1xf32>
    %cst_5 = arith.constant 3.200000e+01 : f32
    %5 = vector.broadcast %cst_5 : f32 to vector<32x1xf32>
    %6 = arith.divf %4, %5 : vector<32x1xf32>
    %7 = vector.broadcast %6 : vector<32x1xf32> to vector<32x32xf32>
    %8 = arith.subf %0, %7 : vector<32x32xf32>
    %9 = arith.mulf %8, %8 : vector<32x32xf32>
    %cst_6 = arith.constant dense<0.000000e+00> : vector<32xf32>
    %10 = vector.multi_reduction <add>, %9, %cst_6 [1] : vector<32x32xf32> to vector<32xf32>
    %11 = vector.shape_cast %10 : vector<32xf32> to vector<32x1xf32>
    %cst_7 = arith.constant 3.200000e+01 : f32
    %12 = vector.broadcast %cst_7 : f32 to vector<32x1xf32>
    %13 = arith.divf %11, %12 : vector<32x1xf32>
    %14 = vector.broadcast %6 : vector<32x1xf32> to vector<32x32xf32>
    %15 = arith.subf %0, %14 : vector<32x32xf32>
    %cst_8 = arith.constant 9.99999974E-6 : f32
    %16 = vector.broadcast %cst_8 : f32 to vector<32x1xf32>
    %17 = arith.addf %13, %16 : vector<32x1xf32>
    %18 = math.rsqrt %17 : vector<32x1xf32>
    %19 = vector.broadcast %18 : vector<32x1xf32> to vector<32x32xf32>
    %20 = arith.mulf %15, %19 : vector<32x32xf32>
    %21 = vector.broadcast %1 : vector<1x32xf32> to vector<32x32xf32>
    %22 = arith.mulf %20, %21 : vector<32x32xf32>
    %23 = vector.broadcast %2 : vector<1x32xf32> to vector<32x32xf32>
    %24 = arith.addf %22, %23 : vector<32x32xf32>
    %c0_9 = arith.constant 0 : index
    %c0_10 = arith.constant 0 : index
    %25 = vector.load %arg3[%c0_9, %c0_10] : memref<32x48xf32, #tpu.memory_space<vmem>>, vector<32x48xf32>
    %cst_11 = arith.constant dense<0.000000e+00> : vector<32x48xf32>
    %26 = tpu.matmul %24, %25, %cst_11 {dimension_numbers = #tpu.dot_dimension_numbers<[1], [0], [0], [1], [0, 0, 1, 1], [], []>} : vector<32x32xf32>, vector<32x48xf32>, vector<32x48xf32> -> vector<32x48xf32>
    %c0_12 = arith.constant 0 : index
    %c0_13 = arith.constant 0 : index
    %27 = vector.load %arg4[%c0_12, %c0_13] : memref<1x48xf32, #tpu.memory_space<vmem>>, vector<1x48xf32>
    %28 = vector.broadcast %27 : vector<1x48xf32> to vector<32x48xf32>
    %29 = arith.addf %26, %28 : vector<32x48xf32>
    %c0_14 = arith.constant 0 : index
    %c0_15 = arith.constant 0 : index
    %30 = vector.load %arg5[%c0_14, %c0_15] : memref<32x48xf32, #tpu.memory_space<vmem>>, vector<32x48xf32>
    tpu.vector_store %arg5[%c0_14, %c0_15], %29 {strides = array<i32>} : memref<32x48xf32, #tpu.memory_space<vmem>>, vector<32x48xf32>,
    return
  }
}

</mosaic_0001>

<llo_original>
// kernel: xtransformer_forward.5
$region0: #{xtransformer_forward.5}
  #allocation0 [shape = 'u32[]', space=smem, size = 0x4, offset = 0x4, fixed_abs, tag = 'smem constant byte address 0x4 - core index']
  #allocation1 [shape = 'u32[144,128]{1,0:T(1,128)}', space=vmem, size = 0x12000, scoped, tag = 'internal scratch']
  %s0 = inlined_call_operand.vmem [shape: f32[16,48], index: 0, kind: input, shape index: {}]
  %s1 = inlined_call_operand.vmem [shape: f32[1,48], index: 1, kind: input, shape index: {}]
  %s2 = inlined_call_operand.vmem [shape: f32[1,48], index: 2, kind: input, shape index: {}]
  %s3 = inlined_call_operand.vmem [shape: f32[48,32], index: 3, kind: input, shape index: {}]
  %s4 = inlined_call_operand.vmem [shape: f32[1,32], index: 4, kind: input, shape index: {}]
  %s5 = inlined_call_operand.vmem [shape: f32[16,32], index: 5, kind: output, shape index: {}]
  %s6 = sld [smem:[#allocation0]]
  $region30: #{xtransformer_forward.5} parent=0
    _
  %s8 = ssub.s32 1, %s6
  %s9 = scalar_select 0, %s8, %s6
  // Predicated region
  $region2: #{xtransformer_forward.5} parent=0 // pred_check
    _
  $region3: #{xtransformer_forward.5} parent=0 // pred_check_branch
    %11 = sbr.rel (0) target = $region5
  $region4: #{xtransformer_forward.5} parent=0 // pred_region
    _
  $region5: #{xtransformer_forward.5} parent=0 // pred_fallthru
    _
  // Predicated region
  $region6: #{xtransformer_forward.5} parent=0 // pred_check
    _
  $region7: #{xtransformer_forward.5} parent=0 // pred_check_branch
    %13 = sbr.rel (0) target = $region9
  $region8: #{xtransformer_forward.5} parent=0 // pred_region
    _
  $region9: #{xtransformer_forward.5} parent=0 // pred_fallthru
    _
  // Predicated region
  $region10: #{xtransformer_forward.5} parent=0 // pred_check
    _
  $region11: #{xtransformer_forward.5} parent=0 // pred_check_branch
    %15 = sbr.rel (0) target = $region13
  $region12: #{xtransformer_forward.5} parent=0 // pred_region
    _
  $region13: #{xtransformer_forward.5} parent=0 // pred_fallthru
    _
  // Predicated region
  $region14: #{xtransformer_forward.5} parent=0 // pred_check
    _
  $region15: #{xtransformer_forward.5} parent=0 // pred_check_branch
    %17 = sbr.rel (0) target = $region17
  $region16: #{xtransformer_forward.5} parent=0 // pred_region
    _
  $region17: #{xtransformer_forward.5} parent=0 // pred_fallthru
    _
  // Predicated region
  $region18: #{xtransformer_forward.5} parent=0 // pred_check
    _
  $region19: #{xtransformer_forward.5} parent=0 // pred_check_branch
    %19 = sbr.rel (0) target = $region21
  $region20: #{xtransformer_forward.5} parent=0 // pred_region
    _
  $region21: #{xtransformer_forward.5} parent=0 // pred_fallthru
    _
  %v20 = vld [vmem:[%s0] sm:$0xff]
  %v21 = vld [vmem:[%s0 + $0x8] sm:$0xff]
  %v22 = vld [vmem:[%s1] sm:$0x1]
  %v23 = vld [vmem:[%s2] sm:$0x1]
  %vm24 = vcmask 392192
  %v25 = vsel %vm24, %v20, 0.0
  %26 = vadd.xlane.f32.xlu0 %v25
  %v27 = vpop.xlane.xlu0 %26
  %v28 = vsel %vm24, %v21, 0.0
  %29 = vadd.xlane.f32.xlu0 %v28
  %v30 = vpop.xlane.xlu0 %29
  %v31 = vrcp.pop 48.0
  %v32 = vmul.f32 %v27, %v31
  %v33 = vmul.f32 %v30, %v31
  %v34 = vsub.f32 %v20, %v32
  %v35 = vsub.f32 %v21, %v33
  %v36 = vmul.f32 %v34, %v34
  %v37 = vmul.f32 %v35, %v35
  %v38 = vsel %vm24, %v36, 0.0
  %39 = vadd.xlane.f32.xlu0 %v38
  %v40 = vpop.xlane.xlu0 %39
  %v41 = vsel %vm24, %v37, 0.0
  %42 = vadd.xlane.f32.xlu0 %v41
  %v43 = vpop.xlane.xlu0 %42
  %v44 = vmul.f32 %v40, %v31
  %v45 = vmul.f32 %v43, %v31
  %v46 = vadd.f32 %v44, 1e-05
  %v47 = vadd.f32 %v45, 1e-05
  %v48 = vrsqrt.pop %v46
  %v49 = vrsqrt.pop %v47
  %v50 = vmul.f32 %v34, %v48
  %v51 = vmul.f32 %v35, %v49
  %v53 = vlaneseq
  %v54 = vshrl.u32 %v53, 7
  %v55 = vsub.s32 0, %v54
  %v56 = vrot.slane %v22, %v55
  %v58 = vmul.f32 %v50, %v56
  %v59 = vmul.f32 %v51, %v56
  %v61 = vlaneseq
  %v62 = vshrl.u32 %v61, 7
  %v63 = vsub.s32 0, %v62
  %v64 = vrot.slane %v23, %v63
  %v66 = vadd.f32 %v58, %v64
  %v67 = vadd.f32 %v59, %v64
  %v68 = vld [vmem:[%s3] sm:$0xff]
  %v69 = vld [vmem:[%s3 + $0x8] sm:$0xff]
  %v70 = vld [vmem:[%s3 + $0x10] sm:$0xff]
  %v71 = vld [vmem:[%s3 + $0x18] sm:$0xff]
  %v72 = vld [vmem:[%s3 + $0x20] sm:$0xff]
  %v73 = vld [vmem:[%s3 + $0x28] sm:$0xff]
  %v74 = vld [vmem:[%s4] sm:$0x1]
  %v76 = vlaneseq
  %v77 = vshrl.u32 %v76, 7
  %v78 = vsub.s32 0, %v77
  %v79 = vrot.slane %v74, %v78
  %v82 = vsel %vm24, %v66, 0
  %v85 = vsel %vm24, %v67, 0
  %87 = vmatprep.subr.mxu0 0.0
  %88 = vmatpush1.msra.mxu0 %v68
  %89 = vmatprep.subr.mxu0 0.0
  %90 = vmatpush1.msra.mxu0 %v69
  %91 = vmatprep.subr.mxu0 0.0
  %92 = vmatpush1.msra.mxu0 %v70
  %93 = vmatprep.subr.mxu0 0.0
  %94 = vmatpush1.msra.mxu0 %v71
  %95 = vmatprep.subr.mxu0 0.0
  %96 = vmatpush1.msra.mxu0 %v72
  %97 = vmatprep.subr.mxu0 0.0
  %98 = vmatpush1.msra.mxu0 %v73
  %99 = vmatprep.subr.mxu0 0.0
  %100 = vmatpush1.msra.mxu0 0.0
  %101 = vmatprep.subr.mxu0 0.0
  %102 = vmatpush1.msra.mxu0 0.0
  %103 = vmatprep.subr.mxu0 0.0
  %104 = vmatpush1.msra.mxu0 0.0
  %105 = vmatprep.subr.mxu0 0.0
  %106 = vmatpush1.msra.mxu0 0.0
  %107 = vmatprep.subr.mxu0 0.0
  %108 = vmatpush1.msra.mxu0 0.0
  %109 = vmatprep.subr.mxu0 0.0
  %110 = vmatpush1.msra.mxu0 0.0
  %111 = vmatprep.subr.mxu0 0.0
  %112 = vmatpush1.msra.mxu0 0.0
  %113 = vmatprep.subr.mxu0 0.0
  %114 = vmatpush1.msra.mxu0 0.0
  %115 = vmatprep.subr.mxu0 0.0
  %116 = vmatpush1.msra.mxu0 0.0
  %117 = vmatprep.subr.mxu0 0.0
  %118 = vmatpush1.msra.mxu0 0.0
  %119 = vmatprep.subr.mxu0 0.0
  %120 = vmatpush1.msra.mxu0 0.0
  %121 = vmatprep.subr.mxu0 0.0
  %122 = vmatpush1.msra.mxu0 0.0
  %123 = vmatprep.subr.mxu0 0.0
  %124 = vmatpush1.msra.mxu0 0.0
  %125 = vmatprep.subr.mxu0 0.0
  %126 = vmatpush1.msra.mxu0 0.0
  %127 = vmatprep.subr.mxu0 0.0
  %128 = vmatpush1.msra.mxu0 0.0
  %129 = vmatprep.subr.mxu0 0.0
  %130 = vmatpush1.msra.mxu0 0.0
  %131 = vmatprep.subr.mxu0 0.0
  %132 = vmatpush1.msra.mxu0 0.0
  %133 = vmatprep.subr.mxu0 0.0
  %134 = vmatpush1.msra.mxu0 0.0
  %135 = vmatprep.subr.mxu0 0.0
  %136 = vmatpush1.msra.mxu0 0.0
  %137 = vmatprep.subr.mxu0 0.0
  %138 = vmatpush1.msra.mxu0 0.0
  %139 = vmatprep.subr.mxu0 0.0
  %140 = vmatpush1.msra.mxu0 0.0
  %141 = vmatprep.subr.mxu0 0.0
  %142 = vmatpush1.msra.mxu0 0.0
  %143 = vmatprep.subr.mxu0 0.0
  %144 = vmatpush1.msra.mxu0 0.0
  %145 = vmatprep.subr.mxu0 0.0
  %146 = vmatpush1.msra.mxu0 0.0
  %147 = vmatprep.subr.mxu0 0.0
  %148 = vmatpush1.msra.mxu0 0.0
  %149 = vmatprep.subr.mxu0 0.0
  %150 = vmatpush1.msra.mxu0 0.0
  %151 = vmatprep.mubr.f32.mxu0 0.0
  %152 = vmatmul.mubr.f32.gmra.mrb[0].mxu0 %v82
  %v153 = vpop.f32.mrb[0].mxu0
  %v154 = vadd.f32 %v79, %v153
  %v155 = vpop.f32.mrb[0].mxu0
  %156 = vmatprep.mubr.f32.mxu0 0.0
  %157 = vmatmul.mubr.f32.gmra.mrb[0].mxu0 %v85
  %v158 = vpop.f32.mrb[0].mxu0
  %v159 = vadd.f32 %v79, %v158
  %v160 = vpop.f32.mrb[0].mxu0
  %161 = vdwg.mxu0
  %vm162 = vcmask 261120
  %163 = vst.msk [vmem:[%s5] sm:$0xff] %vm162, %v154
  %164 = vst.msk [vmem:[%s5 + $0x8] sm:$0xff] %vm162, %v159
  // Predicated region
  $region22: #{xtransformer_forward.5} parent=0 // pred_check
    _
  $region23: #{xtransformer_forward.5} parent=0 // pred_check_branch
    %166 = sbr.rel (0) target = $region25
  $region24: #{xtransformer_forward.5} parent=0 // pred_region
    _
  $region25: #{xtransformer_forward.5} parent=0 // pred_fallthru
    _
  // Predicated region
  $region26: #{xtransformer_forward.5} parent=0 // pred_check
    _
  $region27: #{xtransformer_forward.5} parent=0 // pred_check_branch
    %168 = sbr.rel (0) target = $region29
  $region28: #{xtransformer_forward.5} parent=0 // pred_region
    _
  $region29: #{xtransformer_forward.5} parent=0 // pred_fallthru
    _

// kernel: xtransformer_forward.6
$region0: #{xtransformer_forward.6}
  #allocation0 [shape = 'u32[]', space=smem, size = 0x4, offset = 0x4, fixed_abs, tag = 'smem constant byte address 0x4 - core index']
  #allocation1 [shape = 'u32[144,128]{1,0:T(1,128)}', space=vmem, size = 0x12000, scoped, tag = 'internal scratch']
  %s0 = inlined_call_operand.vmem [shape: f32[32,48], index: 0, kind: input, shape index: {}]
  %s1 = inlined_call_operand.vmem [shape: f32[1,48], index: 1, kind: input, shape index: {}]
  %s2 = inlined_call_operand.vmem [shape: f32[1,48], index: 2, kind: input, shape index: {}]
  %s3 = inlined_call_operand.vmem [shape: f32[48,32], index: 3, kind: input, shape index: {}]
  %s4 = inlined_call_operand.vmem [shape: f32[1,32], index: 4, kind: input, shape index: {}]
  %s5 = inlined_call_operand.vmem [shape: f32[1,32], index: 5, kind: input, shape index: {}]
  %s6 = inlined_call_operand.vmem [shape: f32[1,32], index: 6, kind: input, shape index: {}]
  %s7 = inlined_call_operand.vmem [shape: f32[32,32], index: 7, kind: output, shape index: {}]
  %s8 = sld [smem:[#allocation0]]
  $region38: #{xtransformer_forward.6} parent=0
    _
  %s10 = ssub.s32 1, %s8
  %s11 = scalar_select 0, %s10, %s8
  // Predicated region
  $region2: #{xtransformer_forward.6} parent=0 // pred_check
    _
  $region3: #{xtransformer_forward.6} parent=0 // pred_check_branch
    %13 = sbr.rel (0) target = $region5
  $region4: #{xtransformer_forward.6} parent=0 // pred_region
    _
  $region5: #{xtransformer_forward.6} parent=0 // pred_fallthru
    _
  // Predicated region
  $region6: #{xtransformer_forward.6} parent=0 // pred_check
    _
  $region7: #{xtransformer_forward.6} parent=0 // pred_check_branch
    %15 = sbr.rel (0) target = $region9
  $region8: #{xtransformer_forward.6} parent=0 // pred_region
    _
  $region9: #{xtransformer_forward.6} parent=0 // pred_fallthru
    _
  // Predicated region
  $region10: #{xtransformer_forward.6} parent=0 // pred_check
    _
  $region11: #{xtransformer_forward.6} parent=0 // pred_check_branch
    %17 = sbr.rel (0) target = $region13
  $region12: #{xtransformer_forward.6} parent=0 // pred_region
    _
  $region13: #{xtransformer_forward.6} parent=0 // pred_fallthru
    _
  // Predicated region
  $region14: #{xtransformer_forward.6} parent=0 // pred_check
    _
  $region15: #{xtransformer_forward.6} parent=0 // pred_check_branch
    %19 = sbr.rel (0) target = $region17
  $region16: #{xtransformer_forward.6} parent=0 // pred_region
    _
  $region17: #{xtransformer_forward.6} parent=0 // pred_fallthru
    _
  // Predicated region
  $region18: #{xtransformer_forward.6} parent=0 // pred_check
    _
  $region19: #{xtransformer_forward.6} parent=0 // pred_check_branch
    %21 = sbr.rel (0) target = $region21
  $region20: #{xtransformer_forward.6} parent=0 // pred_region
    _
  $region21: #{xtransformer_forward.6} parent=0 // pred_fallthru
    _
  // Predicated region
  $region22: #{xtransformer_forward.6} parent=0 // pred_check
    _
  $region23: #{xtransformer_forward.6} parent=0 // pred_check_branch
    %23 = sbr.rel (0) target = $region25
  $region24: #{xtransformer_forward.6} parent=0 // pred_region
    _
  $region25: #{xtransformer_forward.6} parent=0 // pred_fallthru
    _
  // Predicated region
  $region26: #{xtransformer_forward.6} parent=0 // pred_check
    _
  $region27: #{xtransformer_forward.6} parent=0 // pred_check_branch
    %25 = sbr.rel (0) target = $region29
  $region28: #{xtransformer_forward.6} parent=0 // pred_region
    _
  $region29: #{xtransformer_forward.6} parent=0 // pred_fallthru
    _
  %v26 = vld [vmem:[%s0] sm:$0xff]
  %v27 = vld [vmem:[%s0 + $0x8] sm:$0xff]
  %v28 = vld [vmem:[%s0 + $0x10] sm:$0xff]
  %v29 = vld [vmem:[%s0 + $0x18] sm:$0xff]
  %v30 = vld [vmem:[%s1] sm:$0x1]
  %v31 = vld [vmem:[%s2] sm:$0x1]
  %vm32 = vcmask 392192
  %v33 = vsel %vm32, %v26, 0.0
  %34 = vadd.xlane.f32.xlu0 %v33
  %v35 = vpop.xlane.xlu0 %34
  %v36 = vsel %vm32, %v27, 0.0
  %37 = vadd.xlane.f32.xlu0 %v36
  %v38 = vpop.xlane.xlu0 %37
  %v39 = vsel %vm32, %v28, 0.0
  %40 = vadd.xlane.f32.xlu0 %v39
  %v41 = vpop.xlane.xlu0 %40
  %v42 = vsel %vm32, %v29, 0.0
  %43 = vadd.xlane.f32.xlu0 %v42
  %v44 = vpop.xlane.xlu0 %43
  %v45 = vrcp.pop 48.0
  %v46 = vmul.f32 %v35, %v45
  %v47 = vmul.f32 %v38, %v45
  %v48 = vmul.f32 %v41, %v45
  %v49 = vmul.f32 %v44, %v45
  %v50 = vsub.f32 %v26, %v46
  %v51 = vsub.f32 %v27, %v47
  %v52 = vsub.f32 %v28, %v48
  %v53 = vsub.f32 %v29, %v49
  %v54 = vmul.f32 %v50, %v50
  %v55 = vmul.f32 %v51, %v51
  %v56 = vmul.f32 %v52, %v52
  %v57 = vmul.f32 %v53, %v53
  %v58 = vsel %vm32, %v54, 0.0
  %59 = vadd.xlane.f32.xlu0 %v58
  %v60 = vpop.xlane.xlu0 %59
  %v61 = vsel %vm32, %v55, 0.0
  %62 = vadd.xlane.f32.xlu0 %v61
  %v63 = vpop.xlane.xlu0 %62
  %v64 = vsel %vm32, %v56, 0.0
  %65 = vadd.xlane.f32.xlu0 %v64
  %v66 = vpop.xlane.xlu0 %65
  %v67 = vsel %vm32, %v57, 0.0
  %68 = vadd.xlane.f32.xlu0 %v67
  %v69 = vpop.xlane.xlu0 %68
  %v70 = vmul.f32 %v60, %v45
  %v71 = vmul.f32 %v63, %v45
  %v72 = vmul.f32 %v66, %v45
  %v73 = vmul.f32 %v69, %v45
  %v74 = vadd.f32 %v70, 1e-05
  %v75 = vadd.f32 %v71, 1e-05
  %v76 = vadd.f32 %v72, 1e-05
  %v77 = vadd.f32 %v73, 1e-05
  %v78 = vrsqrt.pop %v74
  %v79 = vrsqrt.pop %v75
  %v80 = vrsqrt.pop %v76
  %v81 = vrsqrt.pop %v77
  %v82 = vmul.f32 %v50, %v78
  %v83 = vmul.f32 %v51, %v79
  %v84 = vmul.f32 %v52, %v80
  %v85 = vmul.f32 %v53, %v81
  %v87 = vlaneseq
  %v88 = vshrl.u32 %v87, 7
  %v89 = vsub.s32 0, %v88
  %v90 = vrot.slane %v30, %v89
  %v92 = vmul.f32 %v82, %v90
  %v93 = vmul.f32 %v83, %v90
  %v94 = vmul.f32 %v84, %v90
  %v95 = vmul.f32 %v85, %v90
  %v97 = vlaneseq
  %v98 = vshrl.u32 %v97, 7
  %v99 = vsub.s32 0, %v98
  %v100 = vrot.slane %v31, %v99
  %v102 = vadd.f32 %v92, %v100
  %v103 = vadd.f32 %v93, %v100
  %v104 = vadd.f32 %v94, %v100
  %v105 = vadd.f32 %v95, %v100
  %v106 = vld [vmem:[%s3] sm:$0xff]
  %v107 = vld [vmem:[%s3 + $0x8] sm:$0xff]
  %v108 = vld [vmem:[%s3 + $0x10] sm:$0xff]
  %v109 = vld [vmem:[%s3 + $0x18] sm:$0xff]
  %v110 = vld [vmem:[%s3 + $0x20] sm:$0xff]
  %v111 = vld [vmem:[%s3 + $0x28] sm:$0xff]
  %v112 = vld [vmem:[%s4] sm:$0x1]
  %v114 = vlaneseq
  %v115 = vshrl.u32 %v114, 7
  %v116 = vsub.s32 0, %v115
  %v117 = vrot.slane %v112, %v116
  %v120 = vsel %vm32, %v102, 0
  %v123 = vsel %vm32, %v103, 0
  %v126 = vsel %vm32, %v104, 0
  %v129 = vsel %vm32, %v105, 0
  %131 = vmatprep.subr.mxu0 0.0
  %132 = vmatpush1.msra.mxu0 %v106
  %133 = vmatprep.subr.mxu0 0.0
  %134 = vmatpush1.msra.mxu0 %v107
  %135 = vmatprep.subr.mxu0 0.0
  %136 = vmatpush1.msra.mxu0 %v108
  %137 = vmatprep.subr.mxu0 0.0
  %138 = vmatpush1.msra.mxu0 %v109
  %139 = vmatprep.subr.mxu0 0.0
  %140 = vmatpush1.msra.mxu0 %v110
  %141 = vmatprep.subr.mxu0 0.0
  %142 = vmatpush1.msra.mxu0 %v111
  %143 = vmatprep.subr.mxu0 0.0
  %144 = vmatpush1.msra.mxu0 0.0
  %145 = vmatprep.subr.mxu0 0.0
  %146 = vmatpush1.msra.mxu0 0.0
  %147 = vmatprep.subr.mxu0 0.0
  %148 = vmatpush1.msra.mxu0 0.0
  %149 = vmatprep.subr.mxu0 0.0
  %150 = vmatpush1.msra.mxu0 0.0
  %151 = vmatprep.subr.mxu0 0.0
  %152 = vmatpush1.msra.mxu0 0.0
  %153 = vmatprep.subr.mxu0 0.0
  %154 = vmatpush1.msra.mxu0 0.0
  %155 = vmatprep.subr.mxu0 0.0
  %156 = vmatpush1.msra.mxu0 0.0
  %157 = vmatprep.subr.mxu0 0.0
  %158 = vmatpush1.msra.mxu0 0.0
  %159 = vmatprep.subr.mxu0 0.0
  %160 = vmatpush1.msra.mxu0 0.0
  %161 = vmatprep.subr.mxu0 0.0
  %162 = vmatpush1.msra.mxu0 0.0
  %163 = vmatprep.subr.mxu0 0.0
  %164 = vmatpush1.msra.mxu0 0.0
  %165 = vmatprep.subr.mxu0 0.0
  %166 = vmatpush1.msra.mxu0 0.0
  %167 = vmatprep.subr.mxu0 0.0
  %168 = vmatpush1.msra.mxu0 0.0
  %169 = vmatprep.subr.mxu0 0.0
  %170 = vmatpush1.msra.mxu0 0.0
  %171 = vmatprep.subr.mxu0 0.0
  %172 = vmatpush1.msra.mxu0 0.0
  %173 = vmatprep.subr.mxu0 0.0
  %174 = vmatpush1.msra.mxu0 0.0
  %175 = vmatprep.subr.mxu0 0.0
  %176 = vmatpush1.msra.mxu0 0.0
  %177 = vmatprep.subr.mxu0 0.0
  %178 = vmatpush1.msra.mxu0 0.0
  %179 = vmatprep.subr.mxu0 0.0
  %180 = vmatpush1.msra.mxu0 0.0
  %181 = vmatprep.subr.mxu0 0.0
  %182 = vmatpush1.msra.mxu0 0.0
  %183 = vmatprep.subr.mxu0 0.0
  %184 = vmatpush1.msra.mxu0 0.0
  %185 = vmatprep.subr.mxu0 0.0
  %186 = vmatpush1.msra.mxu0 0.0
  %187 = vmatprep.subr.mxu0 0.0
  %188 = vmatpush1.msra.mxu0 0.0
  %189 = vmatprep.subr.mxu0 0.0
  %190 = vmatpush1.msra.mxu0 0.0
  %191 = vmatprep.subr.mxu0 0.0
  %192 = vmatpush1.msra.mxu0 0.0
  %193 = vmatprep.subr.mxu0 0.0
  %194 = vmatpush1.msra.mxu0 0.0
  %195 = vmatprep.mubr.f32.mxu0 0.0
  %196 = vmatmul.mubr.f32.gmra.mrb[0].mxu0 %v120
  %v197 = vpop.f32.mrb[0].mxu0
  %v198 = vadd.f32 %v117, %v197
  %v199 = vpop.f32.mrb[0].mxu0
  %200 = vmatprep.mubr.f32.mxu0 0.0
  %201 = vmatmul.mubr.f32.gmra.mrb[0].mxu0 %v123
  %v202 = vpop.f32.mrb[0].mxu0
  %v203 = vadd.f32 %v117, %v202
  %v204 = vpop.f32.mrb[0].mxu0
  %205 = vmatprep.mubr.f32.mxu0 0.0
  %206 = vmatmul.mubr.f32.gmra.mrb[0].mxu0 %v126
  %v207 = vpop.f32.mrb[0].mxu0
  %v208 = vadd.f32 %v117, %v207
  %v209 = vpop.f32.mrb[0].mxu0
  %210 = vmatprep.mubr.f32.mxu0 0.0
  %211 = vmatmul.mubr.f32.gmra.mrb[0].mxu0 %v129
  %v212 = vpop.f32.mrb[0].mxu0
  %v213 = vadd.f32 %v117, %v212
  %v214 = vpop.f32.mrb[0].mxu0
  %215 = vdwg.mxu0
  %v216 = vld [vmem:[%s5] sm:$0x1]
  %v217 = vld [vmem:[%s6] sm:$0x1]
  %vm218 = vcmask 261120
  %v219 = vsel %vm218, %v198, 0.0
  %220 = vadd.xlane.f32.xlu0 %v219
  %v221 = vpop.xlane.xlu0 %220
  %v222 = vsel %vm218, %v203, 0.0
  %223 = vadd.xlane.f32.xlu0 %v222
  %v224 = vpop.xlane.xlu0 %223
  %v225 = vsel %vm218, %v208, 0.0
  %226 = vadd.xlane.f32.xlu0 %v225
  %v227 = vpop.xlane.xlu0 %226
  %v228 = vsel %vm218, %v213, 0.0
  %229 = vadd.xlane.f32.xlu0 %v228
  %v230 = vpop.xlane.xlu0 %229
  %v231 = vrcp.pop 32.0
  %v232 = vmul.f32 %v221, %v231
  %v233 = vmul.f32 %v224, %v231
  %v234 = vmul.f32 %v227, %v231
  %v235 = vmul.f32 %v230, %v231
  %v236 = vsub.f32 %v198, %v232
  %v237 = vsub.f32 %v203, %v233
  %v238 = vsub.f32 %v208, %v234
  %v239 = vsub.f32 %v213, %v235
  %v240 = vmul.f32 %v236, %v236
  %v241 = vmul.f32 %v237, %v237
  %v242 = vmul.f32 %v238, %v238
  %v243 = vmul.f32 %v239, %v239
  %v244 = vsel %vm218, %v240, 0.0
  %245 = vadd.xlane.f32.xlu0 %v244
  %v246 = vpop.xlane.xlu0 %245
  %v247 = vsel %vm218, %v241, 0.0
  %248 = vadd.xlane.f32.xlu0 %v247
  %v249 = vpop.xlane.xlu0 %248
  %v250 = vsel %vm218, %v242, 0.0
  %251 = vadd.xlane.f32.xlu0 %v250
  %v252 = vpop.xlane.xlu0 %251
  %v253 = vsel %vm218, %v243, 0.0
  %254 = vadd.xlane.f32.xlu0 %v253
  %v255 = vpop.xlane.xlu0 %254
  %v256 = vmul.f32 %v246, %v231
  %v257 = vmul.f32 %v249, %v231
  %v258 = vmul.f32 %v252, %v231
  %v259 = vmul.f32 %v255, %v231
  %v260 = vadd.f32 %v256, 1e-05
  %v261 = vadd.f32 %v257, 1e-05
  %v262 = vadd.f32 %v258, 1e-05
  %v263 = vadd.f32 %v259, 1e-05
  %v264 = vrsqrt.pop %v260
  %v265 = vrsqrt.pop %v261
  %v266 = vrsqrt.pop %v262
  %v267 = vrsqrt.pop %v263
  %v268 = vmul.f32 %v236, %v264
  %v269 = vmul.f32 %v237, %v265
  %v270 = vmul.f32 %v238, %v266
  %v271 = vmul.f32 %v239, %v267
  %v273 = vlaneseq
  %v274 = vshrl.u32 %v273, 7
  %v275 = vsub.s32 0, %v274
  %v276 = vrot.slane %v216, %v275
  %v278 = vmul.f32 %v268, %v276
  %v279 = vmul.f32 %v269, %v276
  %v280 = vmul.f32 %v270, %v276
  %v281 = vmul.f32 %v271, %v276
  %v283 = vlaneseq
  %v284 = vshrl.u32 %v283, 7
  %v285 = vsub.s32 0, %v284
  %v286 = vrot.slane %v217, %v285
  %v288 = vadd.f32 %v278, %v286
  %v289 = vadd.f32 %v279, %v286
  %v290 = vadd.f32 %v280, %v286
  %v291 = vadd.f32 %v281, %v286
  %292 = vst.msk [vmem:[%s7] sm:$0xff] %vm218, %v288
  %293 = vst.msk [vmem:[%s7 + $0x8] sm:$0xff] %vm218, %v289
  %294 = vst.msk [vmem:[%s7 + $0x10] sm:$0xff] %vm218, %v290
  %295 = vst.msk [vmem:[%s7 + $0x18] sm:$0xff] %vm218, %v291
  // Predicated region
  $region30: #{xtransformer_forward.6} parent=0 // pred_check
    _
  $region31: #{xtransformer_forward.6} parent=0 // pred_check_branch
    %297 = sbr.rel (0) target = $region33
  $region32: #{xtransformer_forward.6} parent=0 // pred_region
    _
  $region33: #{xtransformer_forward.6} parent=0 // pred_fallthru
    _
  // Predicated region
  $region34: #{xtransformer_forward.6} parent=0 // pred_check
    _
  $region35: #{xtransformer_forward.6} parent=0 // pred_check_branch
    %299 = sbr.rel (0) target = $region37
  $region36: #{xtransformer_forward.6} parent=0 // pred_region
    _
  $region37: #{xtransformer_forward.6} parent=0 // pred_fallthru
    _

// kernel: xtransformer_forward.9
$region0: #{xtransformer_forward.9}
  #allocation0 [shape = 'u32[]', space=smem, size = 0x4, offset = 0x4, fixed_abs, tag = 'smem constant byte address 0x4 - core index']
  #allocation1 [shape = 'u32[144,128]{1,0:T(1,128)}', space=vmem, size = 0x12000, scoped, tag = 'internal scratch']
  %s0 = inlined_call_operand.vmem [shape: f32[32,32], index: 0, kind: input, shape index: {}]
  %s1 = inlined_call_operand.vmem [shape: f32[1,32], index: 1, kind: input, shape index: {}]
  %s2 = inlined_call_operand.vmem [shape: f32[1,32], index: 2, kind: input, shape index: {}]
  %s3 = inlined_call_operand.vmem [shape: f32[32,48], index: 3, kind: input, shape index: {}]
  %s4 = inlined_call_operand.vmem [shape: f32[1,48], index: 4, kind: input, shape index: {}]
  %s5 = inlined_call_operand.vmem [shape: f32[32,48], index: 5, kind: output, shape index: {}]
  %s6 = sld [smem:[#allocation0]]
  $region30: #{xtransformer_forward.9} parent=0
    _
  %s8 = ssub.s32 1, %s6
  %s9 = scalar_select 0, %s8, %s6
  // Predicated region
  $region2: #{xtransformer_forward.9} parent=0 // pred_check
    _
  $region3: #{xtransformer_forward.9} parent=0 // pred_check_branch
    %11 = sbr.rel (0) target = $region5
  $region4: #{xtransformer_forward.9} parent=0 // pred_region
    _
  $region5: #{xtransformer_forward.9} parent=0 // pred_fallthru
    _
  // Predicated region
  $region6: #{xtransformer_forward.9} parent=0 // pred_check
    _
  $region7: #{xtransformer_forward.9} parent=0 // pred_check_branch
    %13 = sbr.rel (0) target = $region9
  $region8: #{xtransformer_forward.9} parent=0 // pred_region
    _
  $region9: #{xtransformer_forward.9} parent=0 // pred_fallthru
    _
  // Predicated region
  $region10: #{xtransformer_forward.9} parent=0 // pred_check
    _
  $region11: #{xtransformer_forward.9} parent=0 // pred_check_branch
    %15 = sbr.rel (0) target = $region13
  $region12: #{xtransformer_forward.9} parent=0 // pred_region
    _
  $region13: #{xtransformer_forward.9} parent=0 // pred_fallthru
    _
  // Predicated region
  $region14: #{xtransformer_forward.9} parent=0 // pred_check
    _
  $region15: #{xtransformer_forward.9} parent=0 // pred_check_branch
    %17 = sbr.rel (0) target = $region17
  $region16: #{xtransformer_forward.9} parent=0 // pred_region
    _
  $region17: #{xtransformer_forward.9} parent=0 // pred_fallthru
    _
  // Predicated region
  $region18: #{xtransformer_forward.9} parent=0 // pred_check
    _
  $region19: #{xtransformer_forward.9} parent=0 // pred_check_branch
    %19 = sbr.rel (0) target = $region21
  $region20: #{xtransformer_forward.9} parent=0 // pred_region
    _
  $region21: #{xtransformer_forward.9} parent=0 // pred_fallthru
    _
  %v20 = vld [vmem:[%s0] sm:$0xff]
  %v21 = vld [vmem:[%s0 + $0x8] sm:$0xff]
  %v22 = vld [vmem:[%s0 + $0x10] sm:$0xff]
  %v23 = vld [vmem:[%s0 + $0x18] sm:$0xff]
  %v24 = vld [vmem:[%s1] sm:$0x1]
  %v25 = vld [vmem:[%s2] sm:$0x1]
  %vm26 = vcmask 261120
  %v27 = vsel %vm26, %v20, 0.0
  %28 = vadd.xlane.f32.xlu0 %v27
  %v29 = vpop.xlane.xlu0 %28
  %v30 = vsel %vm26, %v21, 0.0
  %31 = vadd.xlane.f32.xlu0 %v30
  %v32 = vpop.xlane.xlu0 %31
  %v33 = vsel %vm26, %v22, 0.0
  %34 = vadd.xlane.f32.xlu0 %v33
  %v35 = vpop.xlane.xlu0 %34
  %v36 = vsel %vm26, %v23, 0.0
  %37 = vadd.xlane.f32.xlu0 %v36
  %v38 = vpop.xlane.xlu0 %37
  %v39 = vrcp.pop 32.0
  %v40 = vmul.f32 %v29, %v39
  %v41 = vmul.f32 %v32, %v39
  %v42 = vmul.f32 %v35, %v39
  %v43 = vmul.f32 %v38, %v39
  %v44 = vsub.f32 %v20, %v40
  %v45 = vsub.f32 %v21, %v41
  %v46 = vsub.f32 %v22, %v42
  %v47 = vsub.f32 %v23, %v43
  %v48 = vmul.f32 %v44, %v44
  %v49 = vmul.f32 %v45, %v45
  %v50 = vmul.f32 %v46, %v46
  %v51 = vmul.f32 %v47, %v47
  %v52 = vsel %vm26, %v48, 0.0
  %53 = vadd.xlane.f32.xlu0 %v52
  %v54 = vpop.xlane.xlu0 %53
  %v55 = vsel %vm26, %v49, 0.0
  %56 = vadd.xlane.f32.xlu0 %v55
  %v57 = vpop.xlane.xlu0 %56
  %v58 = vsel %vm26, %v50, 0.0
  %59 = vadd.xlane.f32.xlu0 %v58
  %v60 = vpop.xlane.xlu0 %59
  %v61 = vsel %vm26, %v51, 0.0
  %62 = vadd.xlane.f32.xlu0 %v61
  %v63 = vpop.xlane.xlu0 %62
  %v64 = vmul.f32 %v54, %v39
  %v65 = vmul.f32 %v57, %v39
  %v66 = vmul.f32 %v60, %v39
  %v67 = vmul.f32 %v63, %v39
  %v68 = vadd.f32 %v64, 1e-05
  %v69 = vadd.f32 %v65, 1e-05
  %v70 = vadd.f32 %v66, 1e-05
  %v71 = vadd.f32 %v67, 1e-05
  %v72 = vrsqrt.pop %v68
  %v73 = vrsqrt.pop %v69
  %v74 = vrsqrt.pop %v70
  %v75 = vrsqrt.pop %v71
  %v76 = vmul.f32 %v44, %v72
  %v77 = vmul.f32 %v45, %v73
  %v78 = vmul.f32 %v46, %v74
  %v79 = vmul.f32 %v47, %v75
  %v81 = vlaneseq
  %v82 = vshrl.u32 %v81, 7
  %v83 = vsub.s32 0, %v82
  %v84 = vrot.slane %v24, %v83
  %v86 = vmul.f32 %v76, %v84
  %v87 = vmul.f32 %v77, %v84
  %v88 = vmul.f32 %v78, %v84
  %v89 = vmul.f32 %v79, %v84
  %v91 = vlaneseq
  %v92 = vshrl.u32 %v91, 7
  %v93 = vsub.s32 0, %v92
  %v94 = vrot.slane %v25, %v93
  %v96 = vadd.f32 %v86, %v94
  %v97 = vadd.f32 %v87, %v94
  %v98 = vadd.f32 %v88, %v94
  %v99 = vadd.f32 %v89, %v94
  %v100 = vld [vmem:[%s3] sm:$0xff]
  %v101 = vld [vmem:[%s3 + $0x8] sm:$0xff]
  %v102 = vld [vmem:[%s3 + $0x10] sm:$0xff]
  %v103 = vld [vmem:[%s3 + $0x18] sm:$0xff]
  %v104 = vld [vmem:[%s4] sm:$0x1]
  %v106 = vlaneseq
  %v107 = vshrl.u32 %v106, 7
  %v108 = vsub.s32 0, %v107
  %v109 = vrot.slane %v104, %v108
  %v112 = vsel %vm26, %v96, 0
  %v115 = vsel %vm26, %v97, 0
  %v118 = vsel %vm26, %v98, 0
  %v121 = vsel %vm26, %v99, 0
  %123 = vmatprep.subr.mxu0 0.0
  %124 = vmatpush1.msra.mxu0 %v100
  %125 = vmatprep.subr.mxu0 0.0
  %126 = vmatpush1.msra.mxu0 %v101
  %127 = vmatprep.subr.mxu0 0.0
  %128 = vmatpush1.msra.mxu0 %v102
  %129 = vmatprep.subr.mxu0 0.0
  %130 = vmatpush1.msra.mxu0 %v103
  %131 = vmatprep.subr.mxu0 0.0
  %132 = vmatpush1.msra.mxu0 0.0
  %133 = vmatprep.subr.mxu0 0.0
  %134 = vmatpush1.msra.mxu0 0.0
  %135 = vmatprep.subr.mxu0 0.0
  %136 = vmatpush1.msra.mxu0 0.0
  %137 = vmatprep.subr.mxu0 0.0
  %138 = vmatpush1.msra.mxu0 0.0
  %139 = vmatprep.subr.mxu0 0.0
  %140 = vmatpush1.msra.mxu0 0.0
  %141 = vmatprep.subr.mxu0 0.0
  %142 = vmatpush1.msra.mxu0 0.0
  %143 = vmatprep.subr.mxu0 0.0
  %144 = vmatpush1.msra.mxu0 0.0
  %145 = vmatprep.subr.mxu0 0.0
  %146 = vmatpush1.msra.mxu0 0.0
  %147 = vmatprep.subr.mxu0 0.0
  %148 = vmatpush1.msra.mxu0 0.0
  %149 = vmatprep.subr.mxu0 0.0
  %150 = vmatpush1.msra.mxu0 0.0
  %151 = vmatprep.subr.mxu0 0.0
  %152 = vmatpush1.msra.mxu0 0.0
  %153 = vmatprep.subr.mxu0 0.0
  %154 = vmatpush1.msra.mxu0 0.0
  %155 = vmatprep.subr.mxu0 0.0
  %156 = vmatpush1.msra.mxu0 0.0
  %157 = vmatprep.subr.mxu0 0.0
  %158 = vmatpush1.msra.mxu0 0.0
  %159 = vmatprep.subr.mxu0 0.0
  %160 = vmatpush1.msra.mxu0 0.0
  %161 = vmatprep.subr.mxu0 0.0
  %162 = vmatpush1.msra.mxu0 0.0
  %163 = vmatprep.subr.mxu0 0.0
  %164 = vmatpush1.msra.mxu0 0.0
  %165 = vmatprep.subr.mxu0 0.0
  %166 = vmatpush1.msra.mxu0 0.0
  %167 = vmatprep.subr.mxu0 0.0
  %168 = vmatpush1.msra.mxu0 0.0
  %169 = vmatprep.subr.mxu0 0.0
  %170 = vmatpush1.msra.mxu0 0.0
  %171 = vmatprep.subr.mxu0 0.0
  %172 = vmatpush1.msra.mxu0 0.0
  %173 = vmatprep.subr.mxu0 0.0
  %174 = vmatpush1.msra.mxu0 0.0
  %175 = vmatprep.subr.mxu0 0.0
  %176 = vmatpush1.msra.mxu0 0.0
  %177 = vmatprep.subr.mxu0 0.0
  %178 = vmatpush1.msra.mxu0 0.0
  %179 = vmatprep.subr.mxu0 0.0
  %180 = vmatpush1.msra.mxu0 0.0
  %181 = vmatprep.subr.mxu0 0.0
  %182 = vmatpush1.msra.mxu0 0.0
  %183 = vmatprep.subr.mxu0 0.0
  %184 = vmatpush1.msra.mxu0 0.0
  %185 = vmatprep.subr.mxu0 0.0
  %186 = vmatpush1.msra.mxu0 0.0
  %187 = vmatprep.mubr.f32.mxu0 0.0
  %188 = vmatmul.mubr.f32.gmra.mrb[0].mxu0 %v112
  %v189 = vpop.f32.mrb[0].mxu0
  %v190 = vadd.f32 %v109, %v189
  %v191 = vpop.f32.mrb[0].mxu0
  %192 = vmatprep.mubr.f32.mxu0 0.0
  %193 = vmatmul.mubr.f32.gmra.mrb[0].mxu0 %v115
  %v194 = vpop.f32.mrb[0].mxu0
  %v195 = vadd.f32 %v109, %v194
  %v196 = vpop.f32.mrb[0].mxu0
  %197 = vmatprep.mubr.f32.mxu0 0.0
  %198 = vmatmul.mubr.f32.gmra.mrb[0].mxu0 %v118
  %v199 = vpop.f32.mrb[0].mxu0
  %v200 = vadd.f32 %v109, %v199
  %v201 = vpop.f32.mrb[0].mxu0
  %202 = vmatprep.mubr.f32.mxu0 0.0
  %203 = vmatmul.mubr.f32.gmra.mrb[0].mxu0 %v121
  %v204 = vpop.f32.mrb[0].mxu0
  %v205 = vadd.f32 %v109, %v204
  %v206 = vpop.f32.mrb[0].mxu0
  %207 = vdwg.mxu0
  %vm208 = vcmask 392192
  %209 = vst.msk [vmem:[%s5] sm:$0xff] %vm208, %v190
  %210 = vst.msk [vmem:[%s5 + $0x8] sm:$0xff] %vm208, %v195
  %211 = vst.msk [vmem:[%s5 + $0x10] sm:$0xff] %vm208, %v200
  %212 = vst.msk [vmem:[%s5 + $0x18] sm:$0xff] %vm208, %v205
  // Predicated region
  $region22: #{xtransformer_forward.9} parent=0 // pred_check
    _
  $region23: #{xtransformer_forward.9} parent=0 // pred_check_branch
    %214 = sbr.rel (0) target = $region25
  $region24: #{xtransformer_forward.9} parent=0 // pred_region
    _
  $region25: #{xtransformer_forward.9} parent=0 // pred_fallthru
    _
  // Predicated region
  $region26: #{xtransformer_forward.9} parent=0 // pred_check
    _
  $region27: #{xtransformer_forward.9} parent=0 // pred_check_branch
    %216 = sbr.rel (0) target = $region29
  $region28: #{xtransformer_forward.9} parent=0 // pred_region
    _
  $region29: #{xtransformer_forward.9} parent=0 // pred_fallthru
    _

// kernel: xtransformer_forward.7
$region0: #{xtransformer_forward.7}
  #allocation0 [shape = 'u32[]', space=smem, size = 0x4, offset = 0x4, fixed_abs, tag = 'smem constant byte address 0x4 - core index']
  #allocation1 [shape = 'u32[144,128]{1,0:T(1,128)}', space=vmem, size = 0x12000, scoped, tag = 'internal scratch']
  %s0 = inlined_call_operand.vmem [shape: f32[2,8,32], index: 0, kind: input, shape index: {}]
  %s1 = inlined_call_operand.vmem [shape: f32[2,8,32], index: 1, kind: input, shape index: {}]
  %s2 = inlined_call_operand.vmem [shape: f32[1,32], index: 2, kind: input, shape index: {}]
  %s3 = inlined_call_operand.vmem [shape: f32[1,32], index: 3, kind: input, shape index: {}]
  %s4 = inlined_call_operand.vmem [shape: f32[1,32], index: 4, kind: input, shape index: {}]
  %s5 = inlined_call_operand.vmem [shape: f32[1,32], index: 5, kind: input, shape index: {}]
  %s6 = inlined_call_operand.vmem [shape: f32[1,32], index: 6, kind: input, shape index: {}]
  %s7 = inlined_call_operand.vmem [shape: f32[1,32], index: 7, kind: input, shape index: {}]
  %s8 = inlined_call_operand.vmem [shape: f32[4,32,8], index: 8, kind: input, shape index: {}]
  %s9 = inlined_call_operand.vmem [shape: f32[8,32,8], index: 9, kind: input, shape index: {}]
  %s10 = inlined_call_operand.vmem [shape: f32[4,8,32], index: 10, kind: input, shape index: {}]
  %s11 = inlined_call_operand.vmem [shape: f32[1,32], index: 11, kind: input, shape index: {}]
  %s12 = inlined_call_operand.vmem [shape: f32[12,32,8], index: 12, kind: input, shape index: {}]
  %s13 = inlined_call_operand.vmem [shape: f32[4,8,32], index: 13, kind: input, shape index: {}]
  %s14 = inlined_call_operand.vmem [shape: f32[1,32], index: 14, kind: input, shape index: {}]
  %s15 = inlined_call_operand.vmem [shape: f32[32,128], index: 15, kind: input, shape index: {}]
  %s16 = inlined_call_operand.vmem [shape: f32[1,128], index: 16, kind: input, shape index: {}]
  %s17 = inlined_call_operand.vmem [shape: f32[128,32], index: 17, kind: input, shape index: {}]
  %s18 = inlined_call_operand.vmem [shape: f32[1,32], index: 18, kind: input, shape index: {}]
  %s19 = inlined_call_operand.vmem [shape: f32[2,8,32], index: 19, kind: output, shape index: {}]
  %s20 = sld [smem:[#allocation0]]
  $region86: #{xtransformer_forward.7} parent=0
    _
  %s22 = ssub.s32 1, %s20
  %s23 = scalar_select 0, %s22, %s20
  // Predicated region
  $region2: #{xtransformer_forward.7} parent=0 // pred_check
    _
  $region3: #{xtransformer_forward.7} parent=0 // pred_check_branch
    %25 = sbr.rel (0) target = $region5
  $region4: #{xtransformer_forward.7} parent=0 // pred_region
    _
  $region5: #{xtransformer_forward.7} parent=0 // pred_fallthru
    _
  // Predicated region
  $region6: #{xtransformer_forward.7} parent=0 // pred_check
    _
  $region7: #{xtransformer_forward.7} parent=0 // pred_check_branch
    %27 = sbr.rel (0) target = $region9
  $region8: #{xtransformer_forward.7} parent=0 // pred_region
    _
  $region9: #{xtransformer_forward.7} parent=0 // pred_fallthru
    _
  // Predicated region
  $region10: #{xtransformer_forward.7} parent=0 // pred_check
    _
  $region11: #{xtransformer_forward.7} parent=0 // pred_check_branch
    %29 = sbr.rel (0) target = $region13
  $region12: #{xtransformer_forward.7} parent=0 // pred_region
    _
  $region13: #{xtransformer_forward.7} parent=0 // pred_fallthru
    _
  // Predicated region
  $region14: #{xtransformer_forward.7} parent=0 // pred_check
    _
  $region15: #{xtransformer_forward.7} parent=0 // pred_check_branch
    %31 = sbr.rel (0) target = $region17
  $region16: #{xtransformer_forward.7} parent=0 // pred_region
    _
  $region17: #{xtransformer_forward.7} parent=0 // pred_fallthru
    _
  // Predicated region
  $region18: #{xtransformer_forward.7} parent=0 // pred_check
    _
  $region19: #{xtransformer_forward.7} parent=0 // pred_check_branch
    %33 = sbr.rel (0) target = $region21
  $region20: #{xtransformer_forward.7} parent=0 // pred_region
    _
  $region21: #{xtransformer_forward.7} parent=0 // pred_fallthru
    _
  // Predicated region
  $region22: #{xtransformer_forward.7} parent=0 // pred_check
    _
  $region23: #{xtransformer_forward.7} parent=0 // pred_check_branch
    %35 = sbr.rel (0) target = $region25
  $region24: #{xtransformer_forward.7} parent=0 // pred_region
    _
  $region25: #{xtransformer_forward.7} parent=0 // pred_fallthru
    _
  // Predicated region
  $region26: #{xtransformer_forward.7} parent=0 // pred_check
    _
  $region27: #{xtransformer_forward.7} parent=0 // pred_check_branch
    %37 = sbr.rel (0) target = $region29
  $region28: #{xtransformer_forward.7} parent=0 // pred_region
    _
  $region29: #{xtransformer_forward.7} parent=0 // pred_fallthru
    _
  // Predicated region
  $region30: #{xtransformer_forward.7} parent=0 // pred_check
    _
  $region31: #{xtransformer_forward.7} parent=0 // pred_check_branch
    %39 = sbr.rel (0) target = $region33
  $region32: #{xtransformer_forward.7} parent=0 // pred_region
    _
  $region33: #{xtransformer_forward.7} parent=0 // pred_fallthru
    _
  // Predicated region
  $region34: #{xtransformer_forward.7} parent=0 // pred_check
    _
  $region35: #{xtransformer_forward.7} parent=0 // pred_check_branch
    %41 = sbr.rel (0) target = $region37
  $region36: #{xtransformer_forward.7} parent=0 // pred_region
    _
  $region37: #{xtransformer_forward.7} parent=0 // pred_fallthru
    _
  // Predicated region
  $region38: #{xtransformer_forward.7} parent=0 // pred_check
    _
  $region39: #{xtransformer_forward.7} parent=0 // pred_check_branch
    %43 = sbr.rel (0) target = $region41
  $region40: #{xtransformer_forward.7} parent=0 // pred_region
    _
  $region41: #{xtransformer_forward.7} parent=0 // pred_fallthru
    _
  // Predicated region
  $region42: #{xtransformer_forward.7} parent=0 // pred_check
    _
  $region43: #{xtransformer_forward.7} parent=0 // pred_check_branch
    %45 = sbr.rel (0) target = $region45
  $region44: #{xtransformer_forward.7} parent=0 // pred_region
    _
  $region45: #{xtransformer_forward.7} parent=0 // pred_fallthru
    _
  // Predicated region
  $region46: #{xtransformer_forward.7} parent=0 // pred_check
    _
  $region47: #{xtransformer_forward.7} parent=0 // pred_check_branch
    %47 = sbr.rel (0) target = $region49
  $region48: #{xtransformer_forward.7} parent=0 // pred_region
    _
  $region49: #{xtransformer_forward.7} parent=0 // pred_fallthru
    _
  // Predicated region
  $region50: #{xtransformer_forward.7} parent=0 // pred_check
    _
  $region51: #{xtransformer_forward.7} parent=0 // pred_check_branch
    %49 = sbr.rel (0) target = $region53
  $region52: #{xtransformer_forward.7} parent=0 // pred_region
    _
  $region53: #{xtransformer_forward.7} parent=0 // pred_fallthru
    _
  // Predicated region
  $region54: #{xtransformer_forward.7} parent=0 // pred_check
    _
  $region55: #{xtransformer_forward.7} parent=0 // pred_check_branch
    %51 = sbr.rel (0) target = $region57
  $region56: #{xtransformer_forward.7} parent=0 // pred_region
    _
  $region57: #{xtransformer_forward.7} parent=0 // pred_fallthru
    _
  // Predicated region
  $region58: #{xtransformer_forward.7} parent=0 // pred_check
    _
  $region59: #{xtransformer_forward.7} parent=0 // pred_check_branch
    %53 = sbr.rel (0) target = $region61
  $region60: #{xtransformer_forward.7} parent=0 // pred_region
    _
  $region61: #{xtransformer_forward.7} parent=0 // pred_fallthru
    _
  // Predicated region
  $region62: #{xtransformer_forward.7} parent=0 // pred_check
    _
  $region63: #{xtransformer_forward.7} parent=0 // pred_check_branch
    %55 = sbr.rel (0) target = $region65
  $region64: #{xtransformer_forward.7} parent=0 // pred_region
    _
  $region65: #{xtransformer_forward.7} parent=0 // pred_fallthru
    _
  // Predicated region
  $region66: #{xtransformer_forward.7} parent=0 // pred_check
    _
  $region67: #{xtransformer_forward.7} parent=0 // pred_check_branch
    %57 = sbr.rel (0) target = $region69
  $region68: #{xtransformer_forward.7} parent=0 // pred_region
    _
  $region69: #{xtransformer_forward.7} parent=0 // pred_fallthru
    _
  // Predicated region
  $region70: #{xtransformer_forward.7} parent=0 // pred_check
    _
  $region71: #{xtransformer_forward.7} parent=0 // pred_check_branch
    %59 = sbr.rel (0) target = $region73
  $region72: #{xtransformer_forward.7} parent=0 // pred_region
    _
  $region73: #{xtransformer_forward.7} parent=0 // pred_fallthru
    _
  // Predicated region
  $region74: #{xtransformer_forward.7} parent=0 // pred_check
    _
  $region75: #{xtransformer_forward.7} parent=0 // pred_check_branch
    %61 = sbr.rel (0) target = $region77
  $region76: #{xtransformer_forward.7} parent=0 // pred_region
    _
  $region77: #{xtransformer_forward.7} parent=0 // pred_fallthru
    _
  %v62 = vld [vmem:[%s0] sm:$0xff]
  %v63 = vld [vmem:[%s0 + $0x8] sm:$0xff]
  %v64 = vld [vmem:[%s1] sm:$0xff]
  %v65 = vld [vmem:[%s1 + $0x8] sm:$0xff]
  %v66 = vld [vmem:[%s2] sm:$0x1]
  %v67 = vld [vmem:[%s3] sm:$0x1]
  %vm68 = vcmask 261120
  %v69 = vsel %vm68, %v62, 0.0
  %70 = vadd.xlane.f32.xlu0 %v69
  %v71 = vpop.xlane.xlu0 %70
  %v72 = vsel %vm68, %v63, 0.0
  %73 = vadd.xlane.f32.xlu0 %v72
  %v74 = vpop.xlane.xlu0 %73
  %v75 = vrcp.pop 32.0
  %v76 = vmul.f32 %v71, %v75
  %v77 = vmul.f32 %v74, %v75
  %v78 = vsub.f32 %v62, %v76
  %v79 = vsub.f32 %v63, %v77
  %v80 = vmul.f32 %v78, %v78
  %v81 = vmul.f32 %v79, %v79
  %v82 = vsel %vm68, %v80, 0.0
  %83 = vadd.xlane.f32.xlu0 %v82
  %v84 = vpop.xlane.xlu0 %83
  %v85 = vsel %vm68, %v81, 0.0
  %86 = vadd.xlane.f32.xlu0 %v85
  %v87 = vpop.xlane.xlu0 %86
  %v88 = vmul.f32 %v84, %v75
  %v89 = vmul.f32 %v87, %v75
  %v90 = vadd.f32 %v88, 1e-05
  %v91 = vadd.f32 %v89, 1e-05
  %v92 = vrsqrt.pop %v90
  %v93 = vrsqrt.pop %v91
  %v94 = vmul.f32 %v78, %v92
  %v95 = vmul.f32 %v79, %v93
  %v97 = vlaneseq
  %v98 = vshrl.u32 %v97, 7
  %v99 = vsub.s32 0, %v98
  %v100 = vrot.slane %v66, %v99
  %v102 = vmul.f32 %v94, %v100
  %v103 = vmul.f32 %v95, %v100
  %v105 = vlaneseq
  %v106 = vshrl.u32 %v105, 7
  %v107 = vsub.s32 0, %v106
  %v108 = vrot.slane %v67, %v107
  %v110 = vadd.f32 %v102, %v108
  %v111 = vadd.f32 %v103, %v108
  %v112 = vld [vmem:[%s8] sm:$0xff]
  %v113 = vld [vmem:[%s8 + $0x8] sm:$0xff]
  %v114 = vld [vmem:[%s8 + $0x10] sm:$0xff]
  %v115 = vld [vmem:[%s8 + $0x18] sm:$0xff]
  %v116 = vld [vmem:[%s8 + $0x20] sm:$0xff]
  %v117 = vld [vmem:[%s8 + $0x28] sm:$0xff]
  %v118 = vld [vmem:[%s8 + $0x30] sm:$0xff]
  %v119 = vld [vmem:[%s8 + $0x38] sm:$0xff]
  %v120 = vld [vmem:[%s8 + $0x40] sm:$0xff]
  %v121 = vld [vmem:[%s8 + $0x48] sm:$0xff]
  %v122 = vld [vmem:[%s8 + $0x50] sm:$0xff]
  %v123 = vld [vmem:[%s8 + $0x58] sm:$0xff]
  %v124 = vld [vmem:[%s8 + $0x60] sm:$0xff]
  %v125 = vld [vmem:[%s8 + $0x68] sm:$0xff]
  %v126 = vld [vmem:[%s8 + $0x70] sm:$0xff]
  %v127 = vld [vmem:[%s8 + $0x78] sm:$0xff]
  %v129 = vsel %vm68, %v110, 0
  %131 = vmatprep.subr.mxu0 0.0
  %132 = vmatpush1.msra.mxu0 %v112
  %133 = vmatprep.subr.mxu0 0.0
  %134 = vmatpush1.msra.mxu0 %v113
  %135 = vmatprep.subr.mxu0 0.0
  %136 = vmatpush1.msra.mxu0 %v114
  %137 = vmatprep.subr.mxu0 0.0
  %138 = vmatpush1.msra.mxu0 %v115
  %139 = vmatprep.subr.mxu0 0.0
  %140 = vmatpush1.msra.mxu0 0.0
  %141 = vmatprep.subr.mxu0 0.0
  %142 = vmatpush1.msra.mxu0 0.0
  %143 = vmatprep.subr.mxu0 0.0
  %144 = vmatpush1.msra.mxu0 0.0
  %145 = vmatprep.subr.mxu0 0.0
  %146 = vmatpush1.msra.mxu0 0.0
  %147 = vmatprep.subr.mxu0 0.0
  %148 = vmatpush1.msra.mxu0 0.0
  %149 = vmatprep.subr.mxu0 0.0
  %150 = vmatpush1.msra.mxu0 0.0
  %151 = vmatprep.subr.mxu0 0.0
  %152 = vmatpush1.msra.mxu0 0.0
  %153 = vmatprep.subr.mxu0 0.0
  %154 = vmatpush1.msra.mxu0 0.0
  %155 = vmatprep.subr.mxu0 0.0
  %156 = vmatpush1.msra.mxu0 0.0
  %157 = vmatprep.subr.mxu0 0.0
  %158 = vmatpush1.msra.mxu0 0.0
  %159 = vmatprep.subr.mxu0 0.0
  %160 = vmatpush1.msra.mxu0 0.0
  %161 = vmatprep.subr.mxu0 0.0
  %162 = vmatpush1.msra.mxu0 0.0
  %163 = vmatprep.subr.mxu0 0.0
  %164 = vmatpush1.msra.mxu0 0.0
  %165 = vmatprep.subr.mxu0 0.0
  %166 = vmatpush1.msra.mxu0 0.0
  %167 = vmatprep.subr.mxu0 0.0
  %168 = vmatpush1.msra.mxu0 0.0
  %169 = vmatprep.subr.mxu0 0.0
  %170 = vmatpush1.msra.mxu0 0.0
  %171 = vmatprep.subr.mxu0 0.0
  %172 = vmatpush1.msra.mxu0 0.0
  %173 = vmatprep.subr.mxu0 0.0
  %174 = vmatpush1.msra.mxu0 0.0
  %175 = vmatprep.subr.mxu0 0.0
  %176 = vmatpush1.msra.mxu0 0.0
  %177 = vmatprep.subr.mxu0 0.0
  %178 = vmatpush1.msra.mxu0 0.0
  %179 = vmatprep.subr.mxu0 0.0
  %180 = vmatpush1.msra.mxu0 0.0
  %181 = vmatprep.subr.mxu0 0.0
  %182 = vmatpush1.msra.mxu0 0.0
  %183 = vmatprep.subr.mxu0 0.0
  %184 = vmatpush1.msra.mxu0 0.0
  %185 = vmatprep.subr.mxu0 0.0
  %186 = vmatpush1.msra.mxu0 0.0
  %187 = vmatprep.subr.mxu0 0.0
  %188 = vmatpush1.msra.mxu0 0.0
  %189 = vmatprep.subr.mxu0 0.0
  %190 = vmatpush1.msra.mxu0 0.0
  %191 = vmatprep.subr.mxu0 0.0
  %192 = vmatpush1.msra.mxu0 0.0
  %193 = vmatprep.subr.mxu0 0.0
  %194 = vmatpush1.msra.mxu0 0.0
  %195 = vmatprep.mubr.f32.mxu0 0.0
  %196 = vmatmul.mubr.f32.gmra.mrb[0].mxu0 %v129
  %v197 = vpop.f32.mrb[0].mxu0
  %v198 = vadd.f32 0.0, %v197
  %v199 = vpop.f32.mrb[0].mxu0
  %200 = vdwg.mxu0
  %v202 = vsel %vm68, %v111, 0
  %204 = vmatprep.subr.mxu0 0.0
  %205 = vmatpush1.msra.mxu0 %v112
  %206 = vmatprep.subr.mxu0 0.0
  %207 = vmatpush1.msra.mxu0 %v113
  %208 = vmatprep.subr.mxu0 0.0
  %209 = vmatpush1.msra.mxu0 %v114
  %210 = vmatprep.subr.mxu0 0.0
  %211 = vmatpush1.msra.mxu0 %v115
  %212 = vmatprep.subr.mxu0 0.0
  %213 = vmatpush1.msra.mxu0 0.0
  %214 = vmatprep.subr.mxu0 0.0
  %215 = vmatpush1.msra.mxu0 0.0
  %216 = vmatprep.subr.mxu0 0.0
  %217 = vmatpush1.msra.mxu0 0.0
  %218 = vmatprep.subr.mxu0 0.0
  %219 = vmatpush1.msra.mxu0 0.0
  %220 = vmatprep.subr.mxu0 0.0
  %221 = vmatpush1.msra.mxu0 0.0
  %222 = vmatprep.subr.mxu0 0.0
  %223 = vmatpush1.msra.mxu0 0.0
  %224 = vmatprep.subr.mxu0 0.0
  %225 = vmatpush1.msra.mxu0 0.0
  %226 = vmatprep.subr.mxu0 0.0
  %227 = vmatpush1.msra.mxu0 0.0
  %228 = vmatprep.subr.mxu0 0.0
  %229 = vmatpush1.msra.mxu0 0.0
  %230 = vmatprep.subr.mxu0 0.0
  %231 = vmatpush1.msra.mxu0 0.0
  %232 = vmatprep.subr.mxu0 0.0
  %233 = vmatpush1.msra.mxu0 0.0
  %234 = vmatprep.subr.mxu0 0.0
  %235 = vmatpush1.msra.mxu0 0.0
  %236 = vmatprep.subr.mxu0 0.0
  %237 = vmatpush1.msra.mxu0 0.0
  %238 = vmatprep.subr.mxu0 0.0
  %239 = vmatpush1.msra.mxu0 0.0
  %240 = vmatprep.subr.mxu0 0.0
  %241 = vmatpush1.msra.mxu0 0.0
  %242 = vmatprep.subr.mxu0 0.0
  %243 = vmatpush1.msra.mxu0 0.0
  %244 = vmatprep.subr.mxu0 0.0
  %245 = vmatpush1.msra.mxu0 0.0
  %246 = vmatprep.subr.mxu0 0.0
  %247 = vmatpush1.msra.mxu0 0.0
  %248 = vmatprep.subr.mxu0 0.0
  %249 = vmatpush1.msra.mxu0 0.0
  %250 = vmatprep.subr.mxu0 0.0
  %251 = vmatpush1.msra.mxu0 0.0
  %252 = vmatprep.subr.mxu0 0.0
  %253 = vmatpush1.msra.mxu0 0.0
  %254 = vmatprep.subr.mxu0 0.0
  %255 = vmatpush1.msra.mxu0 0.0
  %256 = vmatprep.subr.mxu0 0.0
  %257 = vmatpush1.msra.mxu0 0.0
  %258 = vmatprep.subr.mxu0 0.0
  %259 = vmatpush1.msra.mxu0 0.0
  %260 = vmatprep.subr.mxu0 0.0
  %261 = vmatpush1.msra.mxu0 0.0
  %262 = vmatprep.subr.mxu0 0.0
  %263 = vmatpush1.msra.mxu0 0.0
  %264 = vmatprep.subr.mxu0 0.0
  %265 = vmatpush1.msra.mxu0 0.0
  %266 = vmatprep.subr.mxu0 0.0
  %267 = vmatpush1.msra.mxu0 0.0
  %268 = vmatprep.mubr.f32.mxu0 0.0
  %269 = vmatmul.mubr.f32.gmra.mrb[0].mxu0 %v202
  %v270 = vpop.f32.mrb[0].mxu0
  %v271 = vadd.f32 0.0, %v270
  %v272 = vpop.f32.mrb[0].mxu0
  %273 = vdwg.mxu0
  %274 = vmatprep.subr.mxu0 0.0
  %275 = vmatpush1.msra.mxu0 %v116
  %276 = vmatprep.subr.mxu0 0.0
  %277 = vmatpush1.msra.mxu0 %v117
  %278 = vmatprep.subr.mxu0 0.0
  %279 = vmatpush1.msra.mxu0 %v118
  %280 = vmatprep.subr.mxu0 0.0
  %281 = vmatpush1.msra.mxu0 %v119
  %282 = vmatprep.subr.mxu0 0.0
  %283 = vmatpush1.msra.mxu0 0.0
  %284 = vmatprep.subr.mxu0 0.0
  %285 = vmatpush1.msra.mxu0 0.0
  %286 = vmatprep.subr.mxu0 0.0
  %287 = vmatpush1.msra.mxu0 0.0
  %288 = vmatprep.subr.mxu0 0.0
  %289 = vmatpush1.msra.mxu0 0.0
  %290 = vmatprep.subr.mxu0 0.0
  %291 = vmatpush1.msra.mxu0 0.0
  %292 = vmatprep.subr.mxu0 0.0
  %293 = vmatpush1.msra.mxu0 0.0
  %294 = vmatprep.subr.mxu0 0.0
  %295 = vmatpush1.msra.mxu0 0.0
  %296 = vmatprep.subr.mxu0 0.0
  %297 = vmatpush1.msra.mxu0 0.0
  %298 = vmatprep.subr.mxu0 0.0
  %299 = vmatpush1.msra.mxu0 0.0
  %300 = vmatprep.subr.mxu0 0.0
  %301 = vmatpush1.msra.mxu0 0.0
  %302 = vmatprep.subr.mxu0 0.0
  %303 = vmatpush1.msra.mxu0 0.0
  %304 = vmatprep.subr.mxu0 0.0
  %305 = vmatpush1.msra.mxu0 0.0
  %306 = vmatprep.subr.mxu0 0.0
  %307 = vmatpush1.msra.mxu0 0.0
  %308 = vmatprep.subr.mxu0 0.0
  %309 = vmatpush1.msra.mxu0 0.0
  %310 = vmatprep.subr.mxu0 0.0
  %311 = vmatpush1.msra.mxu0 0.0
  %312 = vmatprep.subr.mxu0 0.0
  %313 = vmatpush1.msra.mxu0 0.0
  %314 = vmatprep.subr.mxu0 0.0
  %315 = vmatpush1.msra.mxu0 0.0
  %316 = vmatprep.subr.mxu0 0.0
  %317 = vmatpush1.msra.mxu0 0.0
  %318 = vmatprep.subr.mxu0 0.0
  %319 = vmatpush1.msra.mxu0 0.0
  %320 = vmatprep.subr.mxu0 0.0
  %321 = vmatpush1.msra.mxu0 0.0
  %322 = vmatprep.subr.mxu0 0.0
  %323 = vmatpush1.msra.mxu0 0.0
  %324 = vmatprep.subr.mxu0 0.0
  %325 = vmatpush1.msra.mxu0 0.0
  %326 = vmatprep.subr.mxu0 0.0
  %327 = vmatpush1.msra.mxu0 0.0
  %328 = vmatprep.subr.mxu0 0.0
  %329 = vmatpush1.msra.mxu0 0.0
  %330 = vmatprep.subr.mxu0 0.0
  %331 = vmatpush1.msra.mxu0 0.0
  %332 = vmatprep.subr.mxu0 0.0
  %333 = vmatpush1.msra.mxu0 0.0
  %334 = vmatprep.subr.mxu0 0.0
  %335 = vmatpush1.msra.mxu0 0.0
  %336 = vmatprep.subr.mxu0 0.0
  %337 = vmatpush1.msra.mxu0 0.0
  %338 = vmatprep.mubr.f32.mxu0 0.0
  %339 = vmatmul.mubr.f32.gmra.mrb[0].mxu0 %v129
  %v340 = vpop.f32.mrb[0].mxu0
  %v341 = vadd.f32 0.0, %v340
  %v342 = vpop.f32.mrb[0].mxu0
  %343 = vdwg.mxu0
  %344 = vmatprep.subr.mxu0 0.0
  %345 = vmatpush1.msra.mxu0 %v116
  %346 = vmatprep.subr.mxu0 0.0
  %347 = vmatpush1.msra.mxu0 %v117
  %348 = vmatprep.subr.mxu0 0.0
  %349 = vmatpush1.msra.mxu0 %v118
  %350 = vmatprep.subr.mxu0 0.0
  %351 = vmatpush1.msra.mxu0 %v119
  %352 = vmatprep.subr.mxu0 0.0
  %353 = vmatpush1.msra.mxu0 0.0
  %354 = vmatprep.subr.mxu0 0.0
  %355 = vmatpush1.msra.mxu0 0.0
  %356 = vmatprep.subr.mxu0 0.0
  %357 = vmatpush1.msra.mxu0 0.0
  %358 = vmatprep.subr.mxu0 0.0
  %359 = vmatpush1.msra.mxu0 0.0
  %360 = vmatprep.subr.mxu0 0.0
  %361 = vmatpush1.msra.mxu0 0.0
  %362 = vmatprep.subr.mxu0 0.0
  %363 = vmatpush1.msra.mxu0 0.0
  %364 = vmatprep.subr.mxu0 0.0
  %365 = vmatpush1.msra.mxu0 0.0
  %366 = vmatprep.subr.mxu0 0.0
  %367 = vmatpush1.msra.mxu0 0.0
  %368 = vmatprep.subr.mxu0 0.0
  %369 = vmatpush1.msra.mxu0 0.0
  %370 = vmatprep.subr.mxu0 0.0
  %371 = vmatpush1.msra.mxu0 0.0
  %372 = vmatprep.subr.mxu0 0.0
  %373 = vmatpush1.msra.mxu0 0.0
  %374 = vmatprep.subr.mxu0 0.0
  %375 = vmatpush1.msra.mxu0 0.0
  %376 = vmatprep.subr.mxu0 0.0
  %377 = vmatpush1.msra.mxu0 0.0
  %378 = vmatprep.subr.mxu0 0.0
  %379 = vmatpush1.msra.mxu0 0.0
  %380 = vmatprep.subr.mxu0 0.0
  %381 = vmatpush1.msra.mxu0 0.0
  %382 = vmatprep.subr.mxu0 0.0
  %383 = vmatpush1.msra.mxu0 0.0
  %384 = vmatprep.subr.mxu0 0.0
  %385 = vmatpush1.msra.mxu0 0.0
  %386 = vmatprep.subr.mxu0 0.0
  %387 = vmatpush1.msra.mxu0 0.0
  %388 = vmatprep.subr.mxu0 0.0
  %389 = vmatpush1.msra.mxu0 0.0
  %390 = vmatprep.subr.mxu0 0.0
  %391 = vmatpush1.msra.mxu0 0.0
  %392 = vmatprep.subr.mxu0 0.0
  %393 = vmatpush1.msra.mxu0 0.0
  %394 = vmatprep.subr.mxu0 0.0
  %395 = vmatpush1.msra.mxu0 0.0
  %396 = vmatprep.subr.mxu0 0.0
  %397 = vmatpush1.msra.mxu0 0.0
  %398 = vmatprep.subr.mxu0 0.0
  %399 = vmatpush1.msra.mxu0 0.0
  %400 = vmatprep.subr.mxu0 0.0
  %401 = vmatpush1.msra.mxu0 0.0
  %402 = vmatprep.subr.mxu0 0.0
  %403 = vmatpush1.msra.mxu0 0.0
  %404 = vmatprep.subr.mxu0 0.0
  %405 = vmatpush1.msra.mxu0 0.0
  %406 = vmatprep.subr.mxu0 0.0
  %407 = vmatpush1.msra.mxu0 0.0
  %408 = vmatprep.mubr.f32.mxu0 0.0
  %409 = vmatmul.mubr.f32.gmra.mrb[0].mxu0 %v202
  %v410 = vpop.f32.mrb[0].mxu0
  %v411 = vadd.f32 0.0, %v410
  %v412 = vpop.f32.mrb[0].mxu0
  %413 = vdwg.mxu0
  %414 = vmatprep.subr.mxu0 0.0
  %415 = vmatpush1.msra.mxu0 %v120
  %416 = vmatprep.subr.mxu0 0.0
  %417 = vmatpush1.msra.mxu0 %v121
  %418 = vmatprep.subr.mxu0 0.0
  %419 = vmatpush1.msra.mxu0 %v122
  %420 = vmatprep.subr.mxu0 0.0
  %421 = vmatpush1.msra.mxu0 %v123
  %422 = vmatprep.subr.mxu0 0.0
  %423 = vmatpush1.msra.mxu0 0.0
  %424 = vmatprep.subr.mxu0 0.0
  %425 = vmatpush1.msra.mxu0 0.0
  %426 = vmatprep.subr.mxu0 0.0
  %427 = vmatpush1.msra.mxu0 0.0
  %428 = vmatprep.subr.mxu0 0.0
  %429 = vmatpush1.msra.mxu0 0.0
  %430 = vmatprep.subr.mxu0 0.0
  %431 = vmatpush1.msra.mxu0 0.0
  %432 = vmatprep.subr.mxu0 0.0
  %433 = vmatpush1.msra.mxu0 0.0
  %434 = vmatprep.subr.mxu0 0.0
  %435 = vmatpush1.msra.mxu0 0.0
  %436 = vmatprep.subr.mxu0 0.0
  %437 = vmatpush1.msra.mxu0 0.0
  %438 = vmatprep.subr.mxu0 0.0
  %439 = vmatpush1.msra.mxu0 0.0
  %440 = vmatprep.subr.mxu0 0.0
  %441 = vmatpush1.msra.mxu0 0.0
  %442 = vmatprep.subr.mxu0 0.0
  %443 = vmatpush1.msra.mxu0 0.0
  %444 = vmatprep.subr.mxu0 0.0
  %445 = vmatpush1.msra.mxu0 0.0
  %446 = vmatprep.subr.mxu0 0.0
  %447 = vmatpush1.msra.mxu0 0.0
  %448 = vmatprep.subr.mxu0 0.0
  %449 = vmatpush1.msra.mxu0 0.0
  %450 = vmatprep.subr.mxu0 0.0
  %451 = vmatpush1.msra.mxu0 0.0
  %452 = vmatprep.subr.mxu0 0.0
  %453 = vmatpush1.msra.mxu0 0.0
  %454 = vmatprep.subr.mxu0 0.0
  %455 = vmatpush1.msra.mxu0 0.0
  %456 = vmatprep.subr.mxu0 0.0
  %457 = vmatpush1.msra.mxu0 0.0
  %458 = vmatprep.subr.mxu0 0.0
  %459 = vmatpush1.msra.mxu0 0.0
  %460 = vmatprep.subr.mxu0 0.0
  %461 = vmatpush1.msra.mxu0 0.0
  %462 = vmatprep.subr.mxu0 0.0
  %463 = vmatpush1.msra.mxu0 0.0
  %464 = vmatprep.subr.mxu0 0.0
  %465 = vmatpush1.msra.mxu0 0.0
  %466 = vmatprep.subr.mxu0 0.0
  %467 = vmatpush1.msra.mxu0 0.0
  %468 = vmatprep.subr.mxu0 0.0
  %469 = vmatpush1.msra.mxu0 0.0
  %470 = vmatprep.subr.mxu0 0.0
  %471 = vmatpush1.msra.mxu0 0.0
  %472 = vmatprep.subr.mxu0 0.0
  %473 = vmatpush1.msra.mxu0 0.0
  %474 = vmatprep.subr.mxu0 0.0
  %475 = vmatpush1.msra.mxu0 0.0
  %476 = vmatprep.subr.mxu0 0.0
  %477 = vmatpush1.msra.mxu0 0.0
  %478 = vmatprep.mubr.f32.mxu0 0.0
  %479 = vmatmul.mubr.f32.gmra.mrb[0].mxu0 %v129
  %v480 = vpop.f32.mrb[0].mxu0
  %v481 = vadd.f32 0.0, %v480
  %v482 = vpop.f32.mrb[0].mxu0
  %483 = vdwg.mxu0
  %484 = vmatprep.subr.mxu0 0.0
  %485 = vmatpush1.msra.mxu0 %v120
  %486 = vmatprep.subr.mxu0 0.0
  %487 = vmatpush1.msra.mxu0 %v121
  %488 = vmatprep.subr.mxu0 0.0
  %489 = vmatpush1.msra.mxu0 %v122
  %490 = vmatprep.subr.mxu0 0.0
  %491 = vmatpush1.msra.mxu0 %v123
  %492 = vmatprep.subr.mxu0 0.0
  %493 = vmatpush1.msra.mxu0 0.0
  %494 = vmatprep.subr.mxu0 0.0
  %495 = vmatpush1.msra.mxu0 0.0
  %496 = vmatprep.subr.mxu0 0.0
  %497 = vmatpush1.msra.mxu0 0.0
  %498 = vmatprep.subr.mxu0 0.0
  %499 = vmatpush1.msra.mxu0 0.0
  %500 = vmatprep.subr.mxu0 0.0
  %501 = vmatpush1.msra.mxu0 0.0
  %502 = vmatprep.subr.mxu0 0.0
  %503 = vmatpush1.msra.mxu0 0.0
  %504 = vmatprep.subr.mxu0 0.0
  %505 = vmatpush1.msra.mxu0 0.0
  %506 = vmatprep.subr.mxu0 0.0
  %507 = vmatpush1.msra.mxu0 0.0
  %508 = vmatprep.subr.mxu0 0.0
  %509 = vmatpush1.msra.mxu0 0.0
  %510 = vmatprep.subr.mxu0 0.0
  %511 = vmatpush1.msra.mxu0 0.0
  %512 = vmatprep.subr.mxu0 0.0
  %513 = vmatpush1.msra.mxu0 0.0
  %514 = vmatprep.subr.mxu0 0.0
  %515 = vmatpush1.msra.mxu0 0.0
  %516 = vmatprep.subr.mxu0 0.0
  %517 = vmatpush1.msra.mxu0 0.0
  %518 = vmatprep.subr.mxu0 0.0
  %519 = vmatpush1.msra.mxu0 0.0
  %520 = vmatprep.subr.mxu0 0.0
  %521 = vmatpush1.msra.mxu0 0.0
  %522 = vmatprep.subr.mxu0 0.0
  %523 = vmatpush1.msra.mxu0 0.0
  %524 = vmatprep.subr.mxu0 0.0
  %525 = vmatpush1.msra.mxu0 0.0
  %526 = vmatprep.subr.mxu0 0.0
  %527 = vmatpush1.msra.mxu0 0.0
  %528 = vmatprep.subr.mxu0 0.0
  %529 = vmatpush1.msra.mxu0 0.0
  %530 = vmatprep.subr.mxu0 0.0
  %531 = vmatpush1.msra.mxu0 0.0
  %532 = vmatprep.subr.mxu0 0.0
  %533 = vmatpush1.msra.mxu0 0.0
  %534 = vmatprep.subr.mxu0 0.0
  %535 = vmatpush1.msra.mxu0 0.0
  %536 = vmatprep.subr.mxu0 0.0
  %537 = vmatpush1.msra.mxu0 0.0
  %538 = vmatprep.subr.mxu0 0.0
  %539 = vmatpush1.msra.mxu0 0.0
  %540 = vmatprep.subr.mxu0 0.0
  %541 = vmatpush1.msra.mxu0 0.0
  %542 = vmatprep.subr.mxu0 0.0
  %543 = vmatpush1.msra.mxu0 0.0
  %544 = vmatprep.subr.mxu0 0.0
  %545 = vmatpush1.msra.mxu0 0.0
  %546 = vmatprep.subr.mxu0 0.0
  %547 = vmatpush1.msra.mxu0 0.0
  %548 = vmatprep.mubr.f32.mxu0 0.0
  %549 = vmatmul.mubr.f32.gmra.mrb[0].mxu0 %v202
  %v550 = vpop.f32.mrb[0].mxu0
  %v551 = vadd.f32 0.0, %v550
  %v552 = vpop.f32.mrb[0].mxu0
  %553 = vdwg.mxu0
  %554 = vmatprep.subr.mxu0 0.0
  %555 = vmatpush1.msra.mxu0 %v124
  %556 = vmatprep.subr.mxu0 0.0
  %557 = vmatpush1.msra.mxu0 %v125
  %558 = vmatprep.subr.mxu0 0.0
  %559 = vmatpush1.msra.mxu0 %v126
  %560 = vmatprep.subr.mxu0 0.0
  %561 = vmatpush1.msra.mxu0 %v127
  %562 = vmatprep.subr.mxu0 0.0
  %563 = vmatpush1.msra.mxu0 0.0
  %564 = vmatprep.subr.mxu0 0.0
  %565 = vmatpush1.msra.mxu0 0.0
  %566 = vmatprep.subr.mxu0 0.0
  %567 = vmatpush1.msra.mxu0 0.0
  %568 = vmatprep.subr.mxu0 0.0
  %569 = vmatpush1.msra.mxu0 0.0
  %570 = vmatprep.subr.mxu0 0.0
  %571 = vmatpush1.msra.mxu0 0.0
  %572 = vmatprep.subr.mxu0 0.0
  %573 = vmatpush1.msra.mxu0 0.0
  %574 = vmatprep.subr.mxu0 0.0
  %575 = vmatpush1.msra.mxu0 0.0
  %576 = vmatprep.subr.mxu0 0.0
  %577 = vmatpush1.msra.mxu0 0.0
  %578 = vmatprep.subr.mxu0 0.0
  %579 = vmatpush1.msra.mxu0 0.0
  %580 = vmatprep.subr.mxu0 0.0
  %581 = vmatpush1.msra.mxu0 0.0
  %582 = vmatprep.subr.mxu0 0.0
  %583 = vmatpush1.msra.mxu0 0.0
  %584 = vmatprep.subr.mxu0 0.0
  %585 = vmatpush1.msra.mxu0 0.0
  %586 = vmatprep.subr.mxu0 0.0
  %587 = vmatpush1.msra.mxu0 0.0
  %588 = vmatprep.subr.mxu0 0.0
  %589 = vmatpush1.msra.mxu0 0.0
  %590 = vmatprep.subr.mxu0 0.0
  %591 = vmatpush1.msra.mxu0 0.0
  %592 = vmatprep.subr.mxu0 0.0
  %593 = vmatpush1.msra.mxu0 0.0
  %594 = vmatprep.subr.mxu0 0.0
  %595 = vmatpush1.msra.mxu0 0.0
  %596 = vmatprep.subr.mxu0 0.0
  %597 = vmatpush1.msra.mxu0 0.0
  %598 = vmatprep.subr.mxu0 0.0
  %599 = vmatpush1.msra.mxu0 0.0
  %600 = vmatprep.subr.mxu0 0.0
  %601 = vmatpush1.msra.mxu0 0.0
  %602 = vmatprep.subr.mxu0 0.0
  %603 = vmatpush1.msra.mxu0 0.0
  %604 = vmatprep.subr.mxu0 0.0
  %605 = vmatpush1.msra.mxu0 0.0
  %606 = vmatprep.subr.mxu0 0.0
  %607 = vmatpush1.msra.mxu0 0.0
  %608 = vmatprep.subr.mxu0 0.0
  %609 = vmatpush1.msra.mxu0 0.0
  %610 = vmatprep.subr.mxu0 0.0
  %611 = vmatpush1.msra.mxu0 0.0
  %612 = vmatprep.subr.mxu0 0.0
  %613 = vmatpush1.msra.mxu0 0.0
  %614 = vmatprep.subr.mxu0 0.0
  %615 = vmatpush1.msra.mxu0 0.0
  %616 = vmatprep.subr.mxu0 0.0
  %617 = vmatpush1.msra.mxu0 0.0
  %618 = vmatprep.mubr.f32.mxu0 0.0
  %619 = vmatmul.mubr.f32.gmra.mrb[0].mxu0 %v129
  %v620 = vpop.f32.mrb[0].mxu0
  %v621 = vadd.f32 0.0, %v620
  %v622 = vpop.f32.mrb[0].mxu0
  %623 = vdwg.mxu0
  %624 = vmatprep.subr.mxu0 0.0
  %625 = vmatpush1.msra.mxu0 %v124
  %626 = vmatprep.subr.mxu0 0.0
  %627 = vmatpush1.msra.mxu0 %v125
  %628 = vmatprep.subr.mxu0 0.0
  %629 = vmatpush1.msra.mxu0 %v126
  %630 = vmatprep.subr.mxu0 0.0
  %631 = vmatpush1.msra.mxu0 %v127
  %632 = vmatprep.subr.mxu0 0.0
  %633 = vmatpush1.msra.mxu0 0.0
  %634 = vmatprep.subr.mxu0 0.0
  %635 = vmatpush1.msra.mxu0 0.0
  %636 = vmatprep.subr.mxu0 0.0
  %637 = vmatpush1.msra.mxu0 0.0
  %638 = vmatprep.subr.mxu0 0.0
  %639 = vmatpush1.msra.mxu0 0.0
  %640 = vmatprep.subr.mxu0 0.0
  %641 = vmatpush1.msra.mxu0 0.0
  %642 = vmatprep.subr.mxu0 0.0
  %643 = vmatpush1.msra.mxu0 0.0
  %644 = vmatprep.subr.mxu0 0.0
  %645 = vmatpush1.msra.mxu0 0.0
  %646 = vmatprep.subr.mxu0 0.0
  %647 = vmatpush1.msra.mxu0 0.0
  %648 = vmatprep.subr.mxu0 0.0
  %649 = vmatpush1.msra.mxu0 0.0
  %650 = vmatprep.subr.mxu0 0.0
  %651 = vmatpush1.msra.mxu0 0.0
  %652 = vmatprep.subr.mxu0 0.0
  %653 = vmatpush1.msra.mxu0 0.0
  %654 = vmatprep.subr.mxu0 0.0
  %655 = vmatpush1.msra.mxu0 0.0
  %656 = vmatprep.subr.mxu0 0.0
  %657 = vmatpush1.msra.mxu0 0.0
  %658 = vmatprep.subr.mxu0 0.0
  %659 = vmatpush1.msra.mxu0 0.0
  %660 = vmatprep.subr.mxu0 0.0
  %661 = vmatpush1.msra.mxu0 0.0
  %662 = vmatprep.subr.mxu0 0.0
  %663 = vmatpush1.msra.mxu0 0.0
  %664 = vmatprep.subr.mxu0 0.0
  %665 = vmatpush1.msra.mxu0 0.0
  %666 = vmatprep.subr.mxu0 0.0
  %667 = vmatpush1.msra.mxu0 0.0
  %668 = vmatprep.subr.mxu0 0.0
  %669 = vmatpush1.msra.mxu0 0.0
  %670 = vmatprep.subr.mxu0 0.0
  %671 = vmatpush1.msra.mxu0 0.0
  %672 = vmatprep.subr.mxu0 0.0
  %673 = vmatpush1.msra.mxu0 0.0
  %674 = vmatprep.subr.mxu0 0.0
  %675 = vmatpush1.msra.mxu0 0.0
  %676 = vmatprep.subr.mxu0 0.0
  %677 = vmatpush1.msra.mxu0 0.0
  %678 = vmatprep.subr.mxu0 0.0
  %679 = vmatpush1.msra.mxu0 0.0
  %680 = vmatprep.subr.mxu0 0.0
  %681 = vmatpush1.msra.mxu0 0.0
  %682 = vmatprep.subr.mxu0 0.0
  %683 = vmatpush1.msra.mxu0 0.0
  %684 = vmatprep.subr.mxu0 0.0
  %685 = vmatpush1.msra.mxu0 0.0
  %686 = vmatprep.subr.mxu0 0.0
  %687 = vmatpush1.msra.mxu0 0.0
  %688 = vmatprep.mubr.f32.mxu0 0.0
  %689 = vmatmul.mubr.f32.gmra.mrb[0].mxu0 %v202
  %v690 = vpop.f32.mrb[0].mxu0
  %v691 = vadd.f32 0.0, %v690
  %v692 = vpop.f32.mrb[0].mxu0
  %693 = vdwg.mxu0
  %v694 = vld [vmem:[%s9] sm:$0xff]
  %v695 = vld [vmem:[%s9 + $0x8] sm:$0xff]
  %v696 = vld [vmem:[%s9 + $0x10] sm:$0xff]
  %v697 = vld [vmem:[%s9 + $0x18] sm:$0xff]
  %v698 = vld [vmem:[%s9 + $0x20] sm:$0xff]
  %v699 = vld [vmem:[%s9 + $0x28] sm:$0xff]
  %v700 = vld [vmem:[%s9 + $0x30] sm:$0xff]
  %v701 = vld [vmem:[%s9 + $0x38] sm:$0xff]
  %v702 = vld [vmem:[%s9 + $0x40] sm:$0xff]
  %v703 = vld [vmem:[%s9 + $0x48] sm:$0xff]
  %v704 = vld [vmem:[%s9 + $0x50] sm:$0xff]
  %v705 = vld [vmem:[%s9 + $0x58] sm:$0xff]
  %v706 = vld [vmem:[%s9 + $0x60] sm:$0xff]
  %v707 = vld [vmem:[%s9 + $0x68] sm:$0xff]
  %v708 = vld [vmem:[%s9 + $0x70] sm:$0xff]
  %v709 = vld [vmem:[%s9 + $0x78] sm:$0xff]
  %v710 = vld [vmem:[%s9 + $0x80] sm:$0xff]
  %v711 = vld [vmem:[%s9 + $0x88] sm:$0xff]
  %v712 = vld [vmem:[%s9 + $0x90] sm:$0xff]
  %v713 = vld [vmem:[%s9 + $0x98] sm:$0xff]
  %v714 = vld [vmem:[%s9 + $0xa0] sm:$0xff]
  %v715 = vld [vmem:[%s9 + $0xa8] sm:$0xff]
  %v716 = vld [vmem:[%s9 + $0xb0] sm:$0xff]
  %v717 = vld [vmem:[%s9 + $0xb8] sm:$0xff]
  %v718 = vld [vmem:[%s9 + $0xc0] sm:$0xff]
  %v719 = vld [vmem:[%s9 + $0xc8] sm:$0xff]
  %v720 = vld [vmem:[%s9 + $0xd0] sm:$0xff]
  %v721 = vld [vmem:[%s9 + $0xd8] sm:$0xff]
  %v722 = vld [vmem:[%s9 + $0xe0] sm:$0xff]
  %v723 = vld [vmem:[%s9 + $0xe8] sm:$0xff]
  %v724 = vld [vmem:[%s9 + $0xf0] sm:$0xff]
  %v725 = vld [vmem:[%s9 + $0xf8] sm:$0xff]
  %v727 = vsel %vm68, %v64, 0
  %729 = vmatprep.subr.mxu0 0.0
  %730 = vmatpush1.msra.mxu0 %v694
  %731 = vmatprep.subr.mxu0 0.0
  %732 = vmatpush1.msra.mxu0 %v695
  %733 = vmatprep.subr.mxu0 0.0
  %734 = vmatpush1.msra.mxu0 %v696
  %735 = vmatprep.subr.mxu0 0.0
  %736 = vmatpush1.msra.mxu0 %v697
  %737 = vmatprep.subr.mxu0 0.0
  %738 = vmatpush1.msra.mxu0 0.0
  %739 = vmatprep.subr.mxu0 0.0
  %740 = vmatpush1.msra.mxu0 0.0
  %741 = vmatprep.subr.mxu0 0.0
  %742 = vmatpush1.msra.mxu0 0.0
  %743 = vmatprep.subr.mxu0 0.0
  %744 = vmatpush1.msra.mxu0 0.0
  %745 = vmatprep.subr.mxu0 0.0
  %746 = vmatpush1.msra.mxu0 0.0
  %747 = vmatprep.subr.mxu0 0.0
  %748 = vmatpush1.msra.mxu0 0.0
  %749 = vmatprep.subr.mxu0 0.0
  %750 = vmatpush1.msra.mxu0 0.0
  %751 = vmatprep.subr.mxu0 0.0
  %752 = vmatpush1.msra.mxu0 0.0
  %753 = vmatprep.subr.mxu0 0.0
  %754 = vmatpush1.msra.mxu0 0.0
  %755 = vmatprep.subr.mxu0 0.0
  %756 = vmatpush1.msra.mxu0 0.0
  %757 = vmatprep.subr.mxu0 0.0
  %758 = vmatpush1.msra.mxu0 0.0
  %759 = vmatprep.subr.mxu0 0.0
  %760 = vmatpush1.msra.mxu0 0.0
  %761 = vmatprep.subr.mxu0 0.0
  %762 = vmatpush1.msra.mxu0 0.0
  %763 = vmatprep.subr.mxu0 0.0
  %764 = vmatpush1.msra.mxu0 0.0
  %765 = vmatprep.subr.mxu0 0.0
  %766 = vmatpush1.msra.mxu0 0.0
  %767 = vmatprep.subr.mxu0 0.0
  %768 = vmatpush1.msra.mxu0 0.0
  %769 = vmatprep.subr.mxu0 0.0
  %770 = vmatpush1.msra.mxu0 0.0
  %771 = vmatprep.subr.mxu0 0.0
  %772 = vmatpush1.msra.mxu0 0.0
  %773 = vmatprep.subr.mxu0 0.0
  %774 = vmatpush1.msra.mxu0 0.0
  %775 = vmatprep.subr.mxu0 0.0
  %776 = vmatpush1.msra.mxu0 0.0
  %777 = vmatprep.subr.mxu0 0.0
  %778 = vmatpush1.msra.mxu0 0.0
  %779 = vmatprep.subr.mxu0 0.0
  %780 = vmatpush1.msra.mxu0 0.0
  %781 = vmatprep.subr.mxu0 0.0
  %782 = vmatpush1.msra.mxu0 0.0
  %783 = vmatprep.subr.mxu0 0.0
  %784 = vmatpush1.msra.mxu0 0.0
  %785 = vmatprep.subr.mxu0 0.0
  %786 = vmatpush1.msra.mxu0 0.0
  %787 = vmatprep.subr.mxu0 0.0
  %788 = vmatpush1.msra.mxu0 0.0
  %789 = vmatprep.subr.mxu0 0.0
  %790 = vmatpush1.msra.mxu0 0.0
  %791 = vmatprep.subr.mxu0 0.0
  %792 = vmatpush1.msra.mxu0 0.0
  %793 = vmatprep.mubr.f32.mxu0 0.0
  %794 = vmatmul.mubr.f32.gmra.mrb[0].mxu0 %v727
  %v795 = vpop.f32.mrb[0].mxu0
  %v796 = vadd.f32 0.0, %v795
  %v797 = vpop.f32.mrb[0].mxu0
  %798 = vdwg.mxu0
  %v800 = vsel %vm68, %v65, 0
  %802 = vmatprep.subr.mxu0 0.0
  %803 = vmatpush1.msra.mxu0 %v694
  %804 = vmatprep.subr.mxu0 0.0
  %805 = vmatpush1.msra.mxu0 %v695
  %806 = vmatprep.subr.mxu0 0.0
  %807 = vmatpush1.msra.mxu0 %v696
  %808 = vmatprep.subr.mxu0 0.0
  %809 = vmatpush1.msra.mxu0 %v697
  %810 = vmatprep.subr.mxu0 0.0
  %811 = vmatpush1.msra.mxu0 0.0
  %812 = vmatprep.subr.mxu0 0.0
  %813 = vmatpush1.msra.mxu0 0.0
  %814 = vmatprep.subr.mxu0 0.0
  %815 = vmatpush1.msra.mxu0 0.0
  %816 = vmatprep.subr.mxu0 0.0
  %817 = vmatpush1.msra.mxu0 0.0
  %818 = vmatprep.subr.mxu0 0.0
  %819 = vmatpush1.msra.mxu0 0.0
  %820 = vmatprep.subr.mxu0 0.0
  %821 = vmatpush1.msra.mxu0 0.0
  %822 = vmatprep.subr.mxu0 0.0
  %823 = vmatpush1.msra.mxu0 0.0
  %824 = vmatprep.subr.mxu0 0.0
  %825 = vmatpush1.msra.mxu0 0.0
  %826 = vmatprep.subr.mxu0 0.0
  %827 = vmatpush1.msra.mxu0 0.0
  %828 = vmatprep.subr.mxu0 0.0
  %829 = vmatpush1.msra.mxu0 0.0
  %830 = vmatprep.subr.mxu0 0.0
  %831 = vmatpush1.msra.mxu0 0.0
  %832 = vmatprep.subr.mxu0 0.0
  %833 = vmatpush1.msra.mxu0 0.0
  %834 = vmatprep.subr.mxu0 0.0
  %835 = vmatpush1.msra.mxu0 0.0
  %836 = vmatprep.subr.mxu0 0.0
  %837 = vmatpush1.msra.mxu0 0.0
  %838 = vmatprep.subr.mxu0 0.0
  %839 = vmatpush1.msra.mxu0 0.0
  %840 = vmatprep.subr.mxu0 0.0
  %841 = vmatpush1.msra.mxu0 0.0
  %842 = vmatprep.subr.mxu0 0.0
  %843 = vmatpush1.msra.mxu0 0.0
  %844 = vmatprep.subr.mxu0 0.0
  %845 = vmatpush1.msra.mxu0 0.0
  %846 = vmatprep.subr.mxu0 0.0
  %847 = vmatpush1.msra.mxu0 0.0
  %848 = vmatprep.subr.mxu0 0.0
  %849 = vmatpush1.msra.mxu0 0.0
  %850 = vmatprep.subr.mxu0 0.0
  %851 = vmatpush1.msra.mxu0 0.0
  %852 = vmatprep.subr.mxu0 0.0
  %853 = vmatpush1.msra.mxu0 0.0
  %854 = vmatprep.subr.mxu0 0.0
  %855 = vmatpush1.msra.mxu0 0.0
  %856 = vmatprep.subr.mxu0 0.0
  %857 = vmatpush1.msra.mxu0 0.0
  %858 = vmatprep.subr.mxu0 0.0
  %859 = vmatpush1.msra.mxu0 0.0
  %860 = vmatprep.subr.mxu0 0.0
  %861 = vmatpush1.msra.mxu0 0.0
  %862 = vmatprep.subr.mxu0 0.0
  %863 = vmatpush1.msra.mxu0 0.0
  %864 = vmatprep.subr.mxu0 0.0
  %865 = vmatpush1.msra.mxu0 0.0
  %866 = vmatprep.mubr.f32.mxu0 0.0
  %867 = vmatmul.mubr.f32.gmra.mrb[0].mxu0 %v800
  %v868 = vpop.f32.mrb[0].mxu0
  %v869 = vadd.f32 0.0, %v868
  %v870 = vpop.f32.mrb[0].mxu0
  %871 = vdwg.mxu0
  %872 = vmatprep.subr.mxu0 0.0
  %873 = vmatpush1.msra.mxu0 %v698
  %874 = vmatprep.subr.mxu0 0.0
  %875 = vmatpush1.msra.mxu0 %v699
  %876 = vmatprep.subr.mxu0 0.0
  %877 = vmatpush1.msra.mxu0 %v700
  %878 = vmatprep.subr.mxu0 0.0
  %879 = vmatpush1.msra.mxu0 %v701
  %880 = vmatprep.subr.mxu0 0.0
  %881 = vmatpush1.msra.mxu0 0.0
  %882 = vmatprep.subr.mxu0 0.0
  %883 = vmatpush1.msra.mxu0 0.0
  %884 = vmatprep.subr.mxu0 0.0
  %885 = vmatpush1.msra.mxu0 0.0
  %886 = vmatprep.subr.mxu0 0.0
  %887 = vmatpush1.msra.mxu0 0.0
  %888 = vmatprep.subr.mxu0 0.0
  %889 = vmatpush1.msra.mxu0 0.0
  %890 = vmatprep.subr.mxu0 0.0
  %891 = vmatpush1.msra.mxu0 0.0
  %892 = vmatprep.subr.mxu0 0.0
  %893 = vmatpush1.msra.mxu0 0.0
  %894 = vmatprep.subr.mxu0 0.0
  %895 = vmatpush1.msra.mxu0 0.0
  %896 = vmatprep.subr.mxu0 0.0
  %897 = vmatpush1.msra.mxu0 0.0
  %898 = vmatprep.subr.mxu0 0.0
  %899 = vmatpush1.msra.mxu0 0.0
  %900 = vmatprep.subr.mxu0 0.0
  %901 = vmatpush1.msra.mxu0 0.0
  %902 = vmatprep.subr.mxu0 0.0
  %903 = vmatpush1.msra.mxu0 0.0
  %904 = vmatprep.subr.mxu0 0.0
  %905 = vmatpush1.msra.mxu0 0.0
  %906 = vmatprep.subr.mxu0 0.0
  %907 = vmatpush1.msra.mxu0 0.0
  %908 = vmatprep.subr.mxu0 0.0
  %909 = vmatpush1.msra.mxu0 0.0
  %910 = vmatprep.subr.mxu0 0.0
  %911 = vmatpush1.msra.mxu0 0.0
  %912 = vmatprep.subr.mxu0 0.0
  %913 = vmatpush1.msra.mxu0 0.0
  %914 = vmatprep.subr.mxu0 0.0
  %915 = vmatpush1.msra.mxu0 0.0
  %916 = vmatprep.subr.mxu0 0.0
  %917 = vmatpush1.msra.mxu0 0.0
  %918 = vmatprep.subr.mxu0 0.0
  %919 = vmatpush1.msra.mxu0 0.0
  %920 = vmatprep.subr.mxu0 0.0
  %921 = vmatpush1.msra.mxu0 0.0
  %922 = vmatprep.subr.mxu0 0.0
  %923 = vmatpush1.msra.mxu0 0.0
  %924 = vmatprep.subr.mxu0 0.0
  %925 = vmatpush1.msra.mxu0 0.0
  %926 = vmatprep.subr.mxu0 0.0
  %927 = vmatpush1.msra.mxu0 0.0
  %928 = vmatprep.subr.mxu0 0.0
  %929 = vmatpush1.msra.mxu0 0.0
  %930 = vmatprep.subr.mxu0 0.0
  %931 = vmatpush1.msra.mxu0 0.0
  %932 = vmatprep.subr.mxu0 0.0
  %933 = vmatpush1.msra.mxu0 0.0
  %934 = vmatprep.subr.mxu0 0.0
  %935 = vmatpush1.msra.mxu0 0.0
  %936 = vmatprep.mubr.f32.mxu0 0.0
  %937 = vmatmul.mubr.f32.gmra.mrb[0].mxu0 %v727
  %v938 = vpop.f32.mrb[0].mxu0
  %v939 = vadd.f32 0.0, %v938
  %v940 = vpop.f32.mrb[0].mxu0
  %941 = vdwg.mxu0
  %942 = vmatprep.subr.mxu0 0.0
  %943 = vmatpush1.msra.mxu0 %v698
  %944 = vmatprep.subr.mxu0 0.0
  %945 = vmatpush1.msra.mxu0 %v699
  %946 = vmatprep.subr.mxu0 0.0
  %947 = vmatpush1.msra.mxu0 %v700
  %948 = vmatprep.subr.mxu0 0.0
  %949 = vmatpush1.msra.mxu0 %v701
  %950 = vmatprep.subr.mxu0 0.0
  %951 = vmatpush1.msra.mxu0 0.0
  %952 = vmatprep.subr.mxu0 0.0
  %953 = vmatpush1.msra.mxu0 0.0
  %954 = vmatprep.subr.mxu0 0.0
  %955 = vmatpush1.msra.mxu0 0.0
  %956 = vmatprep.subr.mxu0 0.0
  %957 = vmatpush1.msra.mxu0 0.0
  %958 = vmatprep.subr.mxu0 0.0
  %959 = vmatpush1.msra.mxu0 0.0
  %960 = vmatprep.subr.mxu0 0.0
  %961 = vmatpush1.msra.mxu0 0.0
  %962 = vmatprep.subr.mxu0 0.0
  %963 = vmatpush1.msra.mxu0 0.0
  %964 = vmatprep.subr.mxu0 0.0
  %965 = vmatpush1.msra.mxu0 0.0
  %966 = vmatprep.subr.mxu0 0.0
  %967 = vmatpush1.msra.mxu0 0.0
  %968 = vmatprep.subr.mxu0 0.0
  %969 = vmatpush1.msra.mxu0 0.0
  %970 = vmatprep.subr.mxu0 0.0
  %971 = vmatpush1.msra.mxu0 0.0
  %972 = vmatprep.subr.mxu0 0.0
  %973 = vmatpush1.msra.mxu0 0.0
  %974 = vmatprep.subr.mxu0 0.0
  %975 = vmatpush1.msra.mxu0 0.0
  %976 = vmatprep.subr.mxu0 0.0
  %977 = vmatpush1.msra.mxu0 0.0
  %978 = vmatprep.subr.mxu0 0.0
  %979 = vmatpush1.msra.mxu0 0.0
  %980 = vmatprep.subr.mxu0 0.0
  %981 = vmatpush1.msra.mxu0 0.0
  %982 = vmatprep.subr.mxu0 0.0
  %983 = vmatpush1.msra.mxu0 0.0
  %984 = vmatprep.subr.mxu0 0.0
  %985 = vmatpush1.msra.mxu0 0.0
  %986 = vmatprep.subr.mxu0 0.0
  %987 = vmatpush1.msra.mxu0 0.0
  %988 = vmatprep.subr.mxu0 0.0
  %989 = vmatpush1.msra.mxu0 0.0
  %990 = vmatprep.subr.mxu0 0.0
  %991 = vmatpush1.msra.mxu0 0.0
  %992 = vmatprep.subr.mxu0 0.0
  %993 = vmatpush1.msra.mxu0 0.0
  %994 = vmatprep.subr.mxu0 0.0
  %995 = vmatpush1.msra.mxu0 0.0
  %996 = vmatprep.subr.mxu0 0.0
  %997 = vmatpush1.msra.mxu0 0.0
  %998 = vmatprep.subr.mxu0 0.0
  %999 = vmatpush1.msra.mxu0 0.0
  %1000 = vmatprep.subr.mxu0 0.0
  %1001 = vmatpush1.msra.mxu0 0.0
  %1002 = vmatprep.subr.mxu0 0.0
  %1003 = vmatpush1.msra.mxu0 0.0
  %1004 = vmatprep.subr.mxu0 0.0
  %1005 = vmatpush1.msra.mxu0 0.0
  %1006 = vmatprep.mubr.f32.mxu0 0.0
  %1007 = vmatmul.mubr.f32.gmra.mrb[0].mxu0 %v800
  %v1008 = vpop.f32.mrb[0].mxu0
  %v1009 = vadd.f32 0.0, %v1008
  %v1010 = vpop.f32.mrb[0].mxu0
  %1011 = vdwg.mxu0
  %1012 = vmatprep.subr.mxu0 0.0
  %1013 = vmatpush1.msra.mxu0 %v702
  %1014 = vmatprep.subr.mxu0 0.0
  %1015 = vmatpush1.msra.mxu0 %v703
  %1016 = vmatprep.subr.mxu0 0.0
  %1017 = vmatpush1.msra.mxu0 %v704
  %1018 = vmatprep.subr.mxu0 0.0
  %1019 = vmatpush1.msra.mxu0 %v705
  %1020 = vmatprep.subr.mxu0 0.0
  %1021 = vmatpush1.msra.mxu0 0.0
  %1022 = vmatprep.subr.mxu0 0.0
  %1023 = vmatpush1.msra.mxu0 0.0
  %1024 = vmatprep.subr.mxu0 0.0
  %1025 = vmatpush1.msra.mxu0 0.0
  %1026 = vmatprep.subr.mxu0 0.0
  %1027 = vmatpush1.msra.mxu0 0.0
  %1028 = vmatprep.subr.mxu0 0.0
  %1029 = vmatpush1.msra.mxu0 0.0
  %1030 = vmatprep.subr.mxu0 0.0
  %1031 = vmatpush1.msra.mxu0 0.0
  %1032 = vmatprep.subr.mxu0 0.0
  %1033 = vmatpush1.msra.mxu0 0.0
  %1034 = vmatprep.subr.mxu0 0.0
  %1035 = vmatpush1.msra.mxu0 0.0
  %1036 = vmatprep.subr.mxu0 0.0
  %1037 = vmatpush1.msra.mxu0 0.0
  %1038 = vmatprep.subr.mxu0 0.0
  %1039 = vmatpush1.msra.mxu0 0.0
  %1040 = vmatprep.subr.mxu0 0.0
  %1041 = vmatpush1.msra.mxu0 0.0
  %1042 = vmatprep.subr.mxu0 0.0
  %1043 = vmatpush1.msra.mxu0 0.0
  %1044 = vmatprep.subr.mxu0 0.0
  %1045 = vmatpush1.msra.mxu0 0.0
  %1046 = vmatprep.subr.mxu0 0.0
  %1047 = vmatpush1.msra.mxu0 0.0
  %1048 = vmatprep.subr.mxu0 0.0
  %1049 = vmatpush1.msra.mxu0 0.0
  %1050 = vmatprep.subr.mxu0 0.0
  %1051 = vmatpush1.msra.mxu0 0.0
  %1052 = vmatprep.subr.mxu0 0.0
  %1053 = vmatpush1.msra.mxu0 0.0
  %1054 = vmatprep.subr.mxu0 0.0
  %1055 = vmatpush1.msra.mxu0 0.0
  %1056 = vmatprep.subr.mxu0 0.0
  %1057 = vmatpush1.msra.mxu0 0.0
  %1058 = vmatprep.subr.mxu0 0.0
  %1059 = vmatpush1.msra.mxu0 0.0
  %1060 = vmatprep.subr.mxu0 0.0
  %1061 = vmatpush1.msra.mxu0 0.0
  %1062 = vmatprep.subr.mxu0 0.0
  %1063 = vmatpush1.msra.mxu0 0.0
  %1064 = vmatprep.subr.mxu0 0.0
  %1065 = vmatpush1.msra.mxu0 0.0
  %1066 = vmatprep.subr.mxu0 0.0
  %1067 = vmatpush1.msra.mxu0 0.0
  %1068 = vmatprep.subr.mxu0 0.0
  %1069 = vmatpush1.msra.mxu0 0.0
  %1070 = vmatprep.subr.mxu0 0.0
  %1071 = vmatpush1.msra.mxu0 0.0
  %1072 = vmatprep.subr.mxu0 0.0
  %1073 = vmatpush1.msra.mxu0 0.0
  %1074 = vmatprep.subr.mxu0 0.0
  %1075 = vmatpush1.msra.mxu0 0.0
  %1076 = vmatprep.mubr.f32.mxu0 0.0
  %1077 = vmatmul.mubr.f32.gmra.mrb[0].mxu0 %v727
  %v1078 = vpop.f32.mrb[0].mxu0
  %v1079 = vadd.f32 0.0, %v1078
  %v1080 = vpop.f32.mrb[0].mxu0
  %1081 = vdwg.mxu0
  %1082 = vmatprep.subr.mxu0 0.0
  %1083 = vmatpush1.msra.mxu0 %v702
  %1084 = vmatprep.subr.mxu0 0.0
  %1085 = vmatpush1.msra.mxu0 %v703
  %1086 = vmatprep.subr.mxu0 0.0
  %1087 = vmatpush1.msra.mxu0 %v704
  %1088 = vmatprep.subr.mxu0 0.0
  %1089 = vmatpush1.msra.mxu0 %v705
  %1090 = vmatprep.subr.mxu0 0.0
  %1091 = vmatpush1.msra.mxu0 0.0
  %1092 = vmatprep.subr.mxu0 0.0
  %1093 = vmatpush1.msra.mxu0 0.0
  %1094 = vmatprep.subr.mxu0 0.0
  %1095 = vmatpush1.msra.mxu0 0.0
  %1096 = vmatprep.subr.mxu0 0.0
  %1097 = vmatpush1.msra.mxu0 0.0
  %1098 = vmatprep.subr.mxu0 0.0
  %1099 = vmatpush1.msra.mxu0 0.0
  %1100 = vmatprep.subr.mxu0 0.0
  %1101 = vmatpush1.msra.mxu0 0.0
  %1102 = vmatprep.subr.mxu0 0.0
  %1103 = vmatpush1.msra.mxu0 0.0
  %1104 = vmatprep.subr.mxu0 0.0
  %1105 = vmatpush1.msra.mxu0 0.0
  %1106 = vmatprep.subr.mxu0 0.0
  %1107 = vmatpush1.msra.mxu0 0.0
  %1108 = vmatprep.subr.mxu0 0.0
  %1109 = vmatpush1.msra.mxu0 0.0
  %1110 = vmatprep.subr.mxu0 0.0
  %1111 = vmatpush1.msra.mxu0 0.0
  %1112 = vmatprep.subr.mxu0 0.0
  %1113 = vmatpush1.msra.mxu0 0.0
  %1114 = vmatprep.subr.mxu0 0.0
  %1115 = vmatpush1.msra.mxu0 0.0
  %1116 = vmatprep.subr.mxu0 0.0
  %1117 = vmatpush1.msra.mxu0 0.0
  %1118 = vmatprep.subr.mxu0 0.0
  %1119 = vmatpush1.msra.mxu0 0.0
  %1120 = vmatprep.subr.mxu0 0.0
  %1121 = vmatpush1.msra.mxu0 0.0
  %1122 = vmatprep.subr.mxu0 0.0
  %1123 = vmatpush1.msra.mxu0 0.0
  %1124 = vmatprep.subr.mxu0 0.0
  %1125 = vmatpush1.msra.mxu0 0.0
  %1126 = vmatprep.subr.mxu0 0.0
  %1127 = vmatpush1.msra.mxu0 0.0
  %1128 = vmatprep.subr.mxu0 0.0
  %1129 = vmatpush1.msra.mxu0 0.0
  %1130 = vmatprep.subr.mxu0 0.0
  %1131 = vmatpush1.msra.mxu0 0.0
  %1132 = vmatprep.subr.mxu0 0.0
  %1133 = vmatpush1.msra.mxu0 0.0
  %1134 = vmatprep.subr.mxu0 0.0
  %1135 = vmatpush1.msra.mxu0 0.0
  %1136 = vmatprep.subr.mxu0 0.0
  %1137 = vmatpush1.msra.mxu0 0.0
  %1138 = vmatprep.subr.mxu0 0.0
  %1139 = vmatpush1.msra.mxu0 0.0
  %1140 = vmatprep.subr.mxu0 0.0
  %1141 = vmatpush1.msra.mxu0 0.0
  %1142 = vmatprep.subr.mxu0 0.0
  %1143 = vmatpush1.msra.mxu0 0.0
  %1144 = vmatprep.subr.mxu0 0.0
  %1145 = vmatpush1.msra.mxu0 0.0
  %1146 = vmatprep.mubr.f32.mxu0 0.0
  %1147 = vmatmul.mubr.f32.gmra.mrb[0].mxu0 %v800
  %v1148 = vpop.f32.mrb[0].mxu0
  %v1149 = vadd.f32 0.0, %v1148
  %v1150 = vpop.f32.mrb[0].mxu0
  %1151 = vdwg.mxu0
  %1152 = vmatprep.subr.mxu0 0.0
  %1153 = vmatpush1.msra.mxu0 %v706
  %1154 = vmatprep.subr.mxu0 0.0
  %1155 = vmatpush1.msra.mxu0 %v707
  %1156 = vmatprep.subr.mxu0 0.0
  %1157 = vmatpush1.msra.mxu0 %v708
  %1158 = vmatprep.subr.mxu0 0.0
  %1159 = vmatpush1.msra.mxu0 %v709
  %1160 = vmatprep.subr.mxu0 0.0
  %1161 = vmatpush1.msra.mxu0 0.0
  %1162 = vmatprep.subr.mxu0 0.0
  %1163 = vmatpush1.msra.mxu0 0.0
  %1164 = vmatprep.subr.mxu0 0.0
  %1165 = vmatpush1.msra.mxu0 0.0
  %1166 = vmatprep.subr.mxu0 0.0
  %1167 = vmatpush1.msra.mxu0 0.0
  %1168 = vmatprep.subr.mxu0 0.0
  %1169 = vmatpush1.msra.mxu0 0.0
  %1170 = vmatprep.subr.mxu0 0.0
  %1171 = vmatpush1.msra.mxu0 0.0
  %1172 = vmatprep.subr.mxu0 0.0
  %1173 = vmatpush1.msra.mxu0 0.0
  %1174 = vmatprep.subr.mxu0 0.0
  %1175 = vmatpush1.msra.mxu0 0.0
  %1176 = vmatprep.subr.mxu0 0.0
  %1177 = vmatpush1.msra.mxu0 0.0
  %1178 = vmatprep.subr.mxu0 0.0
  %1179 = vmatpush1.msra.mxu0 0.0
  %1180 = vmatprep.subr.mxu0 0.0
  %1181 = vmatpush1.msra.mxu0 0.0
  %1182 = vmatprep.subr.mxu0 0.0
  %1183 = vmatpush1.msra.mxu0 0.0
  %1184 = vmatprep.subr.mxu0 0.0
  %1185 = vmatpush1.msra.mxu0 0.0
  %1186 = vmatprep.subr.mxu0 0.0
  %1187 = vmatpush1.msra.mxu0 0.0
  %1188 = vmatprep.subr.mxu0 0.0
  %1189 = vmatpush1.msra.mxu0 0.0
  %1190 = vmatprep.subr.mxu0 0.0
  %1191 = vmatpush1.msra.mxu0 0.0
  %1192 = vmatprep.subr.mxu0 0.0
  %1193 = vmatpush1.msra.mxu0 0.0
  %1194 = vmatprep.subr.mxu0 0.0
  %1195 = vmatpush1.msra.mxu0 0.0
  %1196 = vmatprep.subr.mxu0 0.0
  %1197 = vmatpush1.msra.mxu0 0.0
  %1198 = vmatprep.subr.mxu0 0.0
  %1199 = vmatpush1.msra.mxu0 0.0
  %1200 = vmatprep.subr.mxu0 0.0
  %1201 = vmatpush1.msra.mxu0 0.0
  %1202 = vmatprep.subr.mxu0 0.0
  %1203 = vmatpush1.msra.mxu0 0.0
  %1204 = vmatprep.subr.mxu0 0.0
  %1205 = vmatpush1.msra.mxu0 0.0
  %1206 = vmatprep.subr.mxu0 0.0
  %1207 = vmatpush1.msra.mxu0 0.0
  %1208 = vmatprep.subr.mxu0 0.0
  %1209 = vmatpush1.msra.mxu0 0.0
  %1210 = vmatprep.subr.mxu0 0.0
  %1211 = vmatpush1.msra.mxu0 0.0
  %1212 = vmatprep.subr.mxu0 0.0
  %1213 = vmatpush1.msra.mxu0 0.0
  %1214 = vmatprep.subr.mxu0 0.0
  %1215 = vmatpush1.msra.mxu0 0.0
  %1216 = vmatprep.mubr.f32.mxu0 0.0
  %1217 = vmatmul.mubr.f32.gmra.mrb[0].mxu0 %v727
  %v1218 = vpop.f32.mrb[0].mxu0
  %v1219 = vadd.f32 0.0, %v1218
  %v1220 = vpop.f32.mrb[0].mxu0
  %1221 = vdwg.mxu0
  %1222 = vmatprep.subr.mxu0 0.0
  %1223 = vmatpush1.msra.mxu0 %v706
  %1224 = vmatprep.subr.mxu0 0.0
  %1225 = vmatpush1.msra.mxu0 %v707
  %1226 = vmatprep.subr.mxu0 0.0
  %1227 = vmatpush1.msra.mxu0 %v708
  %1228 = vmatprep.subr.mxu0 0.0
  %1229 = vmatpush1.msra.mxu0 %v709
  %1230 = vmatprep.subr.mxu0 0.0
  %1231 = vmatpush1.msra.mxu0 0.0
  %1232 = vmatprep.subr.mxu0 0.0
  %1233 = vmatpush1.msra.mxu0 0.0
  %1234 = vmatprep.subr.mxu0 0.0
  %1235 = vmatpush1.msra.mxu0 0.0
  %1236 = vmatprep.subr.mxu0 0.0
  %1237 = vmatpush1.msra.mxu0 0.0
  %1238 = vmatprep.subr.mxu0 0.0
  %1239 = vmatpush1.msra.mxu0 0.0
  %1240 = vmatprep.subr.mxu0 0.0
  %1241 = vmatpush1.msra.mxu0 0.0
  %1242 = vmatprep.subr.mxu0 0.0
  %1243 = vmatpush1.msra.mxu0 0.0
  %1244 = vmatprep.subr.mxu0 0.0
  %1245 = vmatpush1.msra.mxu0 0.0
  %1246 = vmatprep.subr.mxu0 0.0
  %1247 = vmatpush1.msra.mxu0 0.0
  %1248 = vmatprep.subr.mxu0 0.0
  %1249 = vmatpush1.msra.mxu0 0.0
  %1250 = vmatprep.subr.mxu0 0.0
  %1251 = vmatpush1.msra.mxu0 0.0
  %1252 = vmatprep.subr.mxu0 0.0
  %1253 = vmatpush1.msra.mxu0 0.0
  %1254 = vmatprep.subr.mxu0 0.0
  %1255 = vmatpush1.msra.mxu0 0.0
  %1256 = vmatprep.subr.mxu0 0.0
  %1257 = vmatpush1.msra.mxu0 0.0
  %1258 = vmatprep.subr.mxu0 0.0
  %1259 = vmatpush1.msra.mxu0 0.0
  %1260 = vmatprep.subr.mxu0 0.0
  %1261 = vmatpush1.msra.mxu0 0.0
  %1262 = vmatprep.subr.mxu0 0.0
  %1263 = vmatpush1.msra.mxu0 0.0
  %1264 = vmatprep.subr.mxu0 0.0
  %1265 = vmatpush1.msra.mxu0 0.0
  %1266 = vmatprep.subr.mxu0 0.0
  %1267 = vmatpush1.msra.mxu0 0.0
  %1268 = vmatprep.subr.mxu0 0.0
  %1269 = vmatpush1.msra.mxu0 0.0
  %1270 = vmatprep.subr.mxu0 0.0
  %1271 = vmatpush1.msra.mxu0 0.0
  %1272 = vmatprep.subr.mxu0 0.0
  %1273 = vmatpush1.msra.mxu0 0.0
  %1274 = vmatprep.subr.mxu0 0.0
  %1275 = vmatpush1.msra.mxu0 0.0
  %1276 = vmatprep.subr.mxu0 0.0
  %1277 = vmatpush1.msra.mxu0 0.0
  %1278 = vmatprep.subr.mxu0 0.0
  %1279 = vmatpush1.msra.mxu0 0.0
  %1280 = vmatprep.subr.mxu0 0.0
  %1281 = vmatpush1.msra.mxu0 0.0
  %1282 = vmatprep.subr.mxu0 0.0
  %1283 = vmatpush1.msra.mxu0 0.0
  %1284 = vmatprep.subr.mxu0 0.0
  %1285 = vmatpush1.msra.mxu0 0.0
  %1286 = vmatprep.mubr.f32.mxu0 0.0
  %1287 = vmatmul.mubr.f32.gmra.mrb[0].mxu0 %v800
  %v1288 = vpop.f32.mrb[0].mxu0
  %v1289 = vadd.f32 0.0, %v1288
  %v1290 = vpop.f32.mrb[0].mxu0
  %1291 = vdwg.mxu0
  %1292 = vmatprep.subr.mxu0 0.0
  %1293 = vmatpush1.msra.mxu0 %v710
  %1294 = vmatprep.subr.mxu0 0.0
  %1295 = vmatpush1.msra.mxu0 %v711
  %1296 = vmatprep.subr.mxu0 0.0
  %1297 = vmatpush1.msra.mxu0 %v712
  %1298 = vmatprep.subr.mxu0 0.0
  %1299 = vmatpush1.msra.mxu0 %v713
  %1300 = vmatprep.subr.mxu0 0.0
  %1301 = vmatpush1.msra.mxu0 0.0
  %1302 = vmatprep.subr.mxu0 0.0
  %1303 = vmatpush1.msra.mxu0 0.0
  %1304 = vmatprep.subr.mxu0 0.0
  %1305 = vmatpush1.msra.mxu0 0.0
  %1306 = vmatprep.subr.mxu0 0.0
  %1307 = vmatpush1.msra.mxu0 0.0
  %1308 = vmatprep.subr.mxu0 0.0
  %1309 = vmatpush1.msra.mxu0 0.0
  %1310 = vmatprep.subr.mxu0 0.0
  %1311 = vmatpush1.msra.mxu0 0.0
  %1312 = vmatprep.subr.mxu0 0.0
  %1313 = vmatpush1.msra.mxu0 0.0
  %1314 = vmatprep.subr.mxu0 0.0
  %1315 = vmatpush1.msra.mxu0 0.0
  %1316 = vmatprep.subr.mxu0 0.0
  %1317 = vmatpush1.msra.mxu0 0.0
  %1318 = vmatprep.subr.mxu0 0.0
  %1319 = vmatpush1.msra.mxu0 0.0
  %1320 = vmatprep.subr.mxu0 0.0
  %1321 = vmatpush1.msra.mxu0 0.0
  %1322 = vmatprep.subr.mxu0 0.0
  %1323 = vmatpush1.msra.mxu0 0.0
  %1324 = vmatprep.subr.mxu0 0.0
  %1325 = vmatpush1.msra.mxu0 0.0
  %1326 = vmatprep.subr.mxu0 0.0
  %1327 = vmatpush1.msra.mxu0 0.0
  %1328 = vmatprep.subr.mxu0 0.0
  %1329 = vmatpush1.msra.mxu0 0.0
  %1330 = vmatprep.subr.mxu0 0.0
  %1331 = vmatpush1.msra.mxu0 0.0
  %1332 = vmatprep.subr.mxu0 0.0
  %1333 = vmatpush1.msra.mxu0 0.0
  %1334 = vmatprep.subr.mxu0 0.0
  %1335 = vmatpush1.msra.mxu0 0.0
  %1336 = vmatprep.subr.mxu0 0.0
  %1337 = vmatpush1.msra.mxu0 0.0
  %1338 = vmatprep.subr.mxu0 0.0
  %1339 = vmatpush1.msra.mxu0 0.0
  %1340 = vmatprep.subr.mxu0 0.0
  %1341 = vmatpush1.msra.mxu0 0.0
  %1342 = vmatprep.subr.mxu0 0.0
  %1343 = vmatpush1.msra.mxu0 0.0
  %1344 = vmatprep.subr.mxu0 0.0
  %1345 = vmatpush1.msra.mxu0 0.0
  %1346 = vmatprep.subr.mxu0 0.0
  %1347 = vmatpush1.msra.mxu0 0.0
  %1348 = vmatprep.subr.mxu0 0.0
  %1349 = vmatpush1.msra.mxu0 0.0
  %1350 = vmatprep.subr.mxu0 0.0
  %1351 = vmatpush1.msra.mxu0 0.0
  %1352 = vmatprep.subr.mxu0 0.0
  %1353 = vmatpush1.msra.mxu0 0.0
  %1354 = vmatprep.subr.mxu0 0.0
  %1355 = vmatpush1.msra.mxu0 0.0
  %1356 = vmatprep.mubr.f32.mxu0 0.0
  %1357 = vmatmul.mubr.f32.gmra.mrb[0].mxu0 %v727
  %v1358 = vpop.f32.mrb[0].mxu0
  %v1359 = vadd.f32 0.0, %v1358
  %v1360 = vpop.f32.mrb[0].mxu0
  %1361 = vdwg.mxu0
  %1362 = vmatprep.subr.mxu0 0.0
  %1363 = vmatpush1.msra.mxu0 %v710
  %1364 = vmatprep.subr.mxu0 0.0
  %1365 = vmatpush1.msra.mxu0 %v711
  %1366 = vmatprep.subr.mxu0 0.0
  %1367 = vmatpush1.msra.mxu0 %v712
  %1368 = vmatprep.subr.mxu0 0.0
  %1369 = vmatpush1.msra.mxu0 %v713
  %1370 = vmatprep.subr.mxu0 0.0
  %1371 = vmatpush1.msra.mxu0 0.0
  %1372 = vmatprep.subr.mxu0 0.0
  %1373 = vmatpush1.msra.mxu0 0.0
  %1374 = vmatprep.subr.mxu0 0.0
  %1375 = vmatpush1.msra.mxu0 0.0
  %1376 = vmatprep.subr.mxu0 0.0
  %1377 = vmatpush1.msra.mxu0 0.0
  %1378 = vmatprep.subr.mxu0 0.0
  %1379 = vmatpush1.msra.mxu0 0.0
  %1380 = vmatprep.subr.mxu0 0.0
  %1381 = vmatpush1.msra.mxu0 0.0
  %1382 = vmatprep.subr.mxu0 0.0
  %1383 = vmatpush1.msra.mxu0 0.0
  %1384 = vmatprep.subr.mxu0 0.0
  %1385 = vmatpush1.msra.mxu0 0.0
  %1386 = vmatprep.subr.mxu0 0.0
  %1387 = vmatpush1.msra.mxu0 0.0
  %1388 = vmatprep.subr.mxu0 0.0
  %1389 = vmatpush1.msra.mxu0 0.0
  %1390 = vmatprep.subr.mxu0 0.0
  %1391 = vmatpush1.msra.mxu0 0.0
  %1392 = vmatprep.subr.mxu0 0.0
  %1393 = vmatpush1.msra.mxu0 0.0
  %1394 = vmatprep.subr.mxu0 0.0
  %1395 = vmatpush1.msra.mxu0 0.0
  %1396 = vmatprep.subr.mxu0 0.0
  %1397 = vmatpush1.msra.mxu0 0.0
  %1398 = vmatprep.subr.mxu0 0.0
  %1399 = vmatpush1.msra.mxu0 0.0
  %1400 = vmatprep.subr.mxu0 0.0
  %1401 = vmatpush1.msra.mxu0 0.0
  %1402 = vmatprep.subr.mxu0 0.0
  %1403 = vmatpush1.msra.mxu0 0.0
  %1404 = vmatprep.subr.mxu0 0.0
  %1405 = vmatpush1.msra.mxu0 0.0
  %1406 = vmatprep.subr.mxu0 0.0
  %1407 = vmatpush1.msra.mxu0 0.0
  %1408 = vmatprep.subr.mxu0 0.0
  %1409 = vmatpush1.msra.mxu0 0.0
  %1410 = vmatprep.subr.mxu0 0.0
  %1411 = vmatpush1.msra.mxu0 0.0
  %1412 = vmatprep.subr.mxu0 0.0
  %1413 = vmatpush1.msra.mxu0 0.0
  %1414 = vmatprep.subr.mxu0 0.0
  %1415 = vmatpush1.msra.mxu0 0.0
  %1416 = vmatprep.subr.mxu0 0.0
  %1417 = vmatpush1.msra.mxu0 0.0
  %1418 = vmatprep.subr.mxu0 0.0
  %1419 = vmatpush1.msra.mxu0 0.0
  %1420 = vmatprep.subr.mxu0 0.0
  %1421 = vmatpush1.msra.mxu0 0.0
  %1422 = vmatprep.subr.mxu0 0.0
  %1423 = vmatpush1.msra.mxu0 0.0
  %1424 = vmatprep.subr.mxu0 0.0
  %1425 = vmatpush1.msra.mxu0 0.0
  %1426 = vmatprep.mubr.f32.mxu0 0.0
  %1427 = vmatmul.mubr.f32.gmra.mrb[0].mxu0 %v800
  %v1428 = vpop.f32.mrb[0].mxu0
  %v1429 = vadd.f32 0.0, %v1428
  %v1430 = vpop.f32.mrb[0].mxu0
  %1431 = vdwg.mxu0
  %1432 = vmatprep.subr.mxu0 0.0
  %1433 = vmatpush1.msra.mxu0 %v714
  %1434 = vmatprep.subr.mxu0 0.0
  %1435 = vmatpush1.msra.mxu0 %v715
  %1436 = vmatprep.subr.mxu0 0.0
  %1437 = vmatpush1.msra.mxu0 %v716
  %1438 = vmatprep.subr.mxu0 0.0
  %1439 = vmatpush1.msra.mxu0 %v717
  %1440 = vmatprep.subr.mxu0 0.0
  %1441 = vmatpush1.msra.mxu0 0.0
  %1442 = vmatprep.subr.mxu0 0.0
  %1443 = vmatpush1.msra.mxu0 0.0
  %1444 = vmatprep.subr.mxu0 0.0
  %1445 = vmatpush1.msra.mxu0 0.0
  %1446 = vmatprep.subr.mxu0 0.0
  %1447 = vmatpush1.msra.mxu0 0.0
  %1448 = vmatprep.subr.mxu0 0.0
  %1449 = vmatpush1.msra.mxu0 0.0
  %1450 = vmatprep.subr.mxu0 0.0
  %1451 = vmatpush1.msra.mxu0 0.0
  %1452 = vmatprep.subr.mxu0 0.0
  %1453 = vmatpush1.msra.mxu0 0.0
  %1454 = vmatprep.subr.mxu0 0.0
  %1455 = vmatpush1.msra.mxu0 0.0
  %1456 = vmatprep.subr.mxu0 0.0
  %1457 = vmatpush1.msra.mxu0 0.0
  %1458 = vmatprep.subr.mxu0 0.0
  %1459 = vmatpush1.msra.mxu0 0.0
  %1460 = vmatprep.subr.mxu0 0.0
  %1461 = vmatpush1.msra.mxu0 0.0
  %1462 = vmatprep.subr.mxu0 0.0
  %1463 = vmatpush1.msra.mxu0 0.0
  %1464 = vmatprep.subr.mxu0 0.0
  %1465 = vmatpush1.msra.mxu0 0.0
  %1466 = vmatprep.subr.mxu0 0.0
  %1467 = vmatpush1.msra.mxu0 0.0
  %1468 = vmatprep.subr.mxu0 0.0
  %1469 = vmatpush1.msra.mxu0 0.0
  %1470 = vmatprep.subr.mxu0 0.0
  %1471 = vmatpush1.msra.mxu0 0.0
  %1472 = vmatprep.subr.mxu0 0.0
  %1473 = vmatpush1.msra.mxu0 0.0
  %1474 = vmatprep.subr.mxu0 0.0
  %1475 = vmatpush1.msra.mxu0 0.0
  %1476 = vmatprep.subr.mxu0 0.0
  %1477 = vmatpush1.msra.mxu0 0.0
  %1478 = vmatprep.subr.mxu0 0.0
  %1479 = vmatpush1.msra.mxu0 0.0
  %1480 = vmatprep.subr.mxu0 0.0
  %1481 = vmatpush1.msra.mxu0 0.0
  %1482 = vmatprep.subr.mxu0 0.0
  %1483 = vmatpush1.msra.mxu0 0.0
  %1484 = vmatprep.subr.mxu0 0.0
  %1485 = vmatpush1.msra.mxu0 0.0
  %1486 = vmatprep.subr.mxu0 0.0
  %1487 = vmatpush1.msra.mxu0 0.0
  %1488 = vmatprep.subr.mxu0 0.0
  %1489 = vmatpush1.msra.mxu0 0.0
  %1490 = vmatprep.subr.mxu0 0.0
  %1491 = vmatpush1.msra.mxu0 0.0
  %1492 = vmatprep.subr.mxu0 0.0
  %1493 = vmatpush1.msra.mxu0 0.0
  %1494 = vmatprep.subr.mxu0 0.0
  %1495 = vmatpush1.msra.mxu0 0.0
  %1496 = vmatprep.mubr.f32.mxu0 0.0
  %1497 = vmatmul.mubr.f32.gmra.mrb[0].mxu0 %v727
  %v1498 = vpop.f32.mrb[0].mxu0
  %v1499 = vadd.f32 0.0, %v1498
  %v1500 = vpop.f32.mrb[0].mxu0
  %1501 = vdwg.mxu0
  %1502 = vmatprep.subr.mxu0 0.0
  %1503 = vmatpush1.msra.mxu0 %v714
  %1504 = vmatprep.subr.mxu0 0.0
  %1505 = vmatpush1.msra.mxu0 %v715
  %1506 = vmatprep.subr.mxu0 0.0
  %1507 = vmatpush1.msra.mxu0 %v716
  %1508 = vmatprep.subr.mxu0 0.0
  %1509 = vmatpush1.msra.mxu0 %v717
  %1510 = vmatprep.subr.mxu0 0.0
  %1511 = vmatpush1.msra.mxu0 0.0
  %1512 = vmatprep.subr.mxu0 0.0
  %1513 = vmatpush1.msra.mxu0 0.0
  %1514 = vmatprep.subr.mxu0 0.0
  %1515 = vmatpush1.msra.mxu0 0.0
  %1516 = vmatprep.subr.mxu0 0.0
  %1517 = vmatpush1.msra.mxu0 0.0
  %1518 = vmatprep.subr.mxu0 0.0
  %1519 = vmatpush1.msra.mxu0 0.0
  %1520 = vmatprep.subr.mxu0 0.0
  %1521 = vmatpush1.msra.mxu0 0.0
  %1522 = vmatprep.subr.mxu0 0.0
  %1523 = vmatpush1.msra.mxu0 0.0
  %1524 = vmatprep.subr.mxu0 0.0
  %1525 = vmatpush1.msra.mxu0 0.0
  %1526 = vmatprep.subr.mxu0 0.0
  %1527 = vmatpush1.msra.mxu0 0.0
  %1528 = vmatprep.subr.mxu0 0.0
  %1529 = vmatpush1.msra.mxu0 0.0
  %1530 = vmatprep.subr.mxu0 0.0
  %1531 = vmatpush1.msra.mxu0 0.0
  %1532 = vmatprep.subr.mxu0 0.0
  %1533 = vmatpush1.msra.mxu0 0.0
  %1534 = vmatprep.subr.mxu0 0.0
  %1535 = vmatpush1.msra.mxu0 0.0
  %1536 = vmatprep.subr.mxu0 0.0
  %1537 = vmatpush1.msra.mxu0 0.0
  %1538 = vmatprep.subr.mxu0 0.0
  %1539 = vmatpush1.msra.mxu0 0.0
  %1540 = vmatprep.subr.mxu0 0.0
  %1541 = vmatpush1.msra.mxu0 0.0
  %1542 = vmatprep.subr.mxu0 0.0
  %1543 = vmatpush1.msra.mxu0 0.0
  %1544 = vmatprep.subr.mxu0 0.0
  %1545 = vmatpush1.msra.mxu0 0.0
  %1546 = vmatprep.subr.mxu0 0.0
  %1547 = vmatpush1.msra.mxu0 0.0
  %1548 = vmatprep.subr.mxu0 0.0
  %1549 = vmatpush1.msra.mxu0 0.0
  %1550 = vmatprep.subr.mxu0 0.0
  %1551 = vmatpush1.msra.mxu0 0.0
  %1552 = vmatprep.subr.mxu0 0.0
  %1553 = vmatpush1.msra.mxu0 0.0
  %1554 = vmatprep.subr.mxu0 0.0
  %1555 = vmatpush1.msra.mxu0 0.0
  %1556 = vmatprep.subr.mxu0 0.0
  %1557 = vmatpush1.msra.mxu0 0.0
  %1558 = vmatprep.subr.mxu0 0.0
  %1559 = vmatpush1.msra.mxu0 0.0
  %1560 = vmatprep.subr.mxu0 0.0
  %1561 = vmatpush1.msra.mxu0 0.0
  %1562 = vmatprep.subr.mxu0 0.0
  %1563 = vmatpush1.msra.mxu0 0.0
  %1564 = vmatprep.subr.mxu0 0.0
  %1565 = vmatpush1.msra.mxu0 0.0
  %1566 = vmatprep.mubr.f32.mxu0 0.0
  %1567 = vmatmul.mubr.f32.gmra.mrb[0].mxu0 %v800
  %v1568 = vpop.f32.mrb[0].mxu0
  %v1569 = vadd.f32 0.0, %v1568
  %v1570 = vpop.f32.mrb[0].mxu0
  %1571 = vdwg.mxu0
  %1572 = vmatprep.subr.mxu0 0.0
  %1573 = vmatpush1.msra.mxu0 %v718
  %1574 = vmatprep.subr.mxu0 0.0
  %1575 = vmatpush1.msra.mxu0 %v719
  %1576 = vmatprep.subr.mxu0 0.0
  %1577 = vmatpush1.msra.mxu0 %v720
  %1578 = vmatprep.subr.mxu0 0.0
  %1579 = vmatpush1.msra.mxu0 %v721
  %1580 = vmatprep.subr.mxu0 0.0
  %1581 = vmatpush1.msra.mxu0 0.0
  %1582 = vmatprep.subr.mxu0 0.0
  %1583 = vmatpush1.msra.mxu0 0.0
  %1584 = vmatprep.subr.mxu0 0.0
  %1585 = vmatpush1.msra.mxu0 0.0
  %1586 = vmatprep.subr.mxu0 0.0
  %1587 = vmatpush1.msra.mxu0 0.0
  %1588 = vmatprep.subr.mxu0 0.0
  %1589 = vmatpush1.msra.mxu0 0.0
  %1590 = vmatprep.subr.mxu0 0.0
  %1591 = vmatpush1.msra.mxu0 0.0
  %1592 = vmatprep.subr.mxu0 0.0
  %1593 = vmatpush1.msra.mxu0 0.0
  %1594 = vmatprep.subr.mxu0 0.0
  %1595 = vmatpush1.msra.mxu0 0.0
  %1596 = vmatprep.subr.mxu0 0.0
  %1597 = vmatpush1.msra.mxu0 0.0
  %1598 = vmatprep.subr.mxu0 0.0
  %1599 = vmatpush1.msra.mxu0 0.0
  %1600 = vmatprep.subr.mxu0 0.0
  %1601 = vmatpush1.msra.mxu0 0.0
  %1602 = vmatprep.subr.mxu0 0.0
  %1603 = vmatpush1.msra.mxu0 0.0
  %1604 = vmatprep.subr.mxu0 0.0
  %1605 = vmatpush1.msra.mxu0 0.0
  %1606 = vmatprep.subr.mxu0 0.0
  %1607 = vmatpush1.msra.mxu0 0.0
  %1608 = vmatprep.subr.mxu0 0.0
  %1609 = vmatpush1.msra.mxu0 0.0
  %1610 = vmatprep.subr.mxu0 0.0
  %1611 = vmatpush1.msra.mxu0 0.0
  %1612 = vmatprep.subr.mxu0 0.0
  %1613 = vmatpush1.msra.mxu0 0.0
  %1614 = vmatprep.subr.mxu0 0.0
  %1615 = vmatpush1.msra.mxu0 0.0
  %1616 = vmatprep.subr.mxu0 0.0
  %1617 = vmatpush1.msra.mxu0 0.0
  %1618 = vmatprep.subr.mxu0 0.0
  %1619 = vmatpush1.msra.mxu0 0.0
  %1620 = vmatprep.subr.mxu0 0.0
  %1621 = vmatpush1.msra.mxu0 0.0
  %1622 = vmatprep.subr.mxu0 0.0
  %1623 = vmatpush1.msra.mxu0 0.0
  %1624 = vmatprep.subr.mxu0 0.0
  %1625 = vmatpush1.msra.mxu0 0.0
  %1626 = vmatprep.subr.mxu0 0.0
  %1627 = vmatpush1.msra.mxu0 0.0
  %1628 = vmatprep.subr.mxu0 0.0
  %1629 = vmatpush1.msra.mxu0 0.0
  %1630 = vmatprep.subr.mxu0 0.0
  %1631 = vmatpush1.msra.mxu0 0.0
  %1632 = vmatprep.subr.mxu0 0.0
  %1633 = vmatpush1.msra.mxu0 0.0
  %1634 = vmatprep.subr.mxu0 0.0
  %1635 = vmatpush1.msra.mxu0 0.0
  %1636 = vmatprep.mubr.f32.mxu0 0.0
  %1637 = vmatmul.mubr.f32.gmra.mrb[0].mxu0 %v727
  %v1638 = vpop.f32.mrb[0].mxu0
  %v1639 = vadd.f32 0.0, %v1638
  %v1640 = vpop.f32.mrb[0].mxu0
  %1641 = vdwg.mxu0
  %1642 = vmatprep.subr.mxu0 0.0
  %1643 = vmatpush1.msra.mxu0 %v718
  %1644 = vmatprep.subr.mxu0 0.0
  %1645 = vmatpush1.msra.mxu0 %v719
  %1646 = vmatprep.subr.mxu0 0.0
  %1647 = vmatpush1.msra.mxu0 %v720
  %1648 = vmatprep.subr.mxu0 0.0
  %1649 = vmatpush1.msra.mxu0 %v721
  %1650 = vmatprep.subr.mxu0 0.0
  %1651 = vmatpush1.msra.mxu0 0.0
  %1652 = vmatprep.subr.mxu0 0.0
  %1653 = vmatpush1.msra.mxu0 0.0
  %1654 = vmatprep.subr.mxu0 0.0
  %1655 = vmatpush1.msra.mxu0 0.0
  %1656 = vmatprep.subr.mxu0 0.0
  %1657 = vmatpush1.msra.mxu0 0.0
  %1658 = vmatprep.subr.mxu0 0.0
  %1659 = vmatpush1.msra.mxu0 0.0
  %1660 = vmatprep.subr.mxu0 0.0
  %1661 = vmatpush1.msra.mxu0 0.0
  %1662 = vmatprep.subr.mxu0 0.0
  %1663 = vmatpush1.msra.mxu0 0.0
  %1664 = vmatprep.subr.mxu0 0.0
  %1665 = vmatpush1.msra.mxu0 0.0
  %1666 = vmatprep.subr.mxu0 0.0
  %1667 = vmatpush1.msra.mxu0 0.0
  %1668 = vmatprep.subr.mxu0 0.0
  %1669 = vmatpush1.msra.mxu0 0.0
  %1670 = vmatprep.subr.mxu0 0.0
  %1671 = vmatpush1.msra.mxu0 0.0
  %1672 = vmatprep.subr.mxu0 0.0
  %1673 = vmatpush1.msra.mxu0 0.0
  %1674 = vmatprep.subr.mxu0 0.0
  %1675 = vmatpush1.msra.mxu0 0.0
  %1676 = vmatprep.subr.mxu0 0.0
  %1677 = vmatpush1.msra.mxu0 0.0
  %1678 = vmatprep.subr.mxu0 0.0
  %1679 = vmatpush1.msra.mxu0 0.0
  %1680 = vmatprep.subr.mxu0 0.0
  %1681 = vmatpush1.msra.mxu0 0.0
  %1682 = vmatprep.subr.mxu0 0.0
  %1683 = vmatpush1.msra.mxu0 0.0
  %1684 = vmatprep.subr.mxu0 0.0
  %1685 = vmatpush1.msra.mxu0 0.0
  %1686 = vmatprep.subr.mxu0 0.0
  %1687 = vmatpush1.msra.mxu0 0.0
  %1688 = vmatprep.subr.mxu0 0.0
  %1689 = vmatpush1.msra.mxu0 0.0
  %1690 = vmatprep.subr.mxu0 0.0
  %1691 = vmatpush1.msra.mxu0 0.0
  %1692 = vmatprep.subr.mxu0 0.0
  %1693 = vmatpush1.msra.mxu0 0.0
  %1694 = vmatprep.subr.mxu0 0.0
  %1695 = vmatpush1.msra.mxu0 0.0
  %1696 = vmatprep.subr.mxu0 0.0
  %1697 = vmatpush1.msra.mxu0 0.0
  %1698 = vmatprep.subr.mxu0 0.0
  %1699 = vmatpush1.msra.mxu0 0.0
  %1700 = vmatprep.subr.mxu0 0.0
  %1701 = vmatpush1.msra.mxu0 0.0
  %1702 = vmatprep.subr.mxu0 0.0
  %1703 = vmatpush1.msra.mxu0 0.0
  %1704 = vmatprep.subr.mxu0 0.0
  %1705 = vmatpush1.msra.mxu0 0.0
  %1706 = vmatprep.mubr.f32.mxu0 0.0
  %1707 = vmatmul.mubr.f32.gmra.mrb[0].mxu0 %v800
  %v1708 = vpop.f32.mrb[0].mxu0
  %v1709 = vadd.f32 0.0, %v1708
  %v1710 = vpop.f32.mrb[0].mxu0
  %1711 = vdwg.mxu0
  %1712 = vmatprep.subr.mxu0 0.0
  %1713 = vmatpush1.msra.mxu0 %v722
  %1714 = vmatprep.subr.mxu0 0.0
  %1715 = vmatpush1.msra.mxu0 %v723
  %1716 = vmatprep.subr.mxu0 0.0
  %1717 = vmatpush1.msra.mxu0 %v724
  %1718 = vmatprep.subr.mxu0 0.0
  %1719 = vmatpush1.msra.mxu0 %v725
  %1720 = vmatprep.subr.mxu0 0.0
  %1721 = vmatpush1.msra.mxu0 0.0
  %1722 = vmatprep.subr.mxu0 0.0
  %1723 = vmatpush1.msra.mxu0 0.0
  %1724 = vmatprep.subr.mxu0 0.0
  %1725 = vmatpush1.msra.mxu0 0.0
  %1726 = vmatprep.subr.mxu0 0.0
  %1727 = vmatpush1.msra.mxu0 0.0
  %1728 = vmatprep.subr.mxu0 0.0
  %1729 = vmatpush1.msra.mxu0 0.0
  %1730 = vmatprep.subr.mxu0 0.0
  %1731 = vmatpush1.msra.mxu0 0.0
  %1732 = vmatprep.subr.mxu0 0.0
  %1733 = vmatpush1.msra.mxu0 0.0
  %1734 = vmatprep.subr.mxu0 0.0
  %1735 = vmatpush1.msra.mxu0 0.0
  %1736 = vmatprep.subr.mxu0 0.0
  %1737 = vmatpush1.msra.mxu0 0.0
  %1738 = vmatprep.subr.mxu0 0.0
  %1739 = vmatpush1.msra.mxu0 0.0
  %1740 = vmatprep.subr.mxu0 0.0
  %1741 = vmatpush1.msra.mxu0 0.0
  %1742 = vmatprep.subr.mxu0 0.0
  %1743 = vmatpush1.msra.mxu0 0.0
  %1744 = vmatprep.subr.mxu0 0.0
  %1745 = vmatpush1.msra.mxu0 0.0
  %1746 = vmatprep.subr.mxu0 0.0
  %1747 = vmatpush1.msra.mxu0 0.0
  %1748 = vmatprep.subr.mxu0 0.0
  %1749 = vmatpush1.msra.mxu0 0.0
  %1750 = vmatprep.subr.mxu0 0.0
  %1751 = vmatpush1.msra.mxu0 0.0
  %1752 = vmatprep.subr.mxu0 0.0
  %1753 = vmatpush1.msra.mxu0 0.0
  %1754 = vmatprep.subr.mxu0 0.0
  %1755 = vmatpush1.msra.mxu0 0.0
  %1756 = vmatprep.subr.mxu0 0.0
  %1757 = vmatpush1.msra.mxu0 0.0
  %1758 = vmatprep.subr.mxu0 0.0
  %1759 = vmatpush1.msra.mxu0 0.0
  %1760 = vmatprep.subr.mxu0 0.0
  %1761 = vmatpush1.msra.mxu0 0.0
  %1762 = vmatprep.subr.mxu0 0.0
  %1763 = vmatpush1.msra.mxu0 0.0
  %1764 = vmatprep.subr.mxu0 0.0
  %1765 = vmatpush1.msra.mxu0 0.0
  %1766 = vmatprep.subr.mxu0 0.0
  %1767 = vmatpush1.msra.mxu0 0.0
  %1768 = vmatprep.subr.mxu0 0.0
  %1769 = vmatpush1.msra.mxu0 0.0
  %1770 = vmatprep.subr.mxu0 0.0
  %1771 = vmatpush1.msra.mxu0 0.0
  %1772 = vmatprep.subr.mxu0 0.0
  %1773 = vmatpush1.msra.mxu0 0.0
  %1774 = vmatprep.subr.mxu0 0.0
  %1775 = vmatpush1.msra.mxu0 0.0
  %1776 = vmatprep.mubr.f32.mxu0 0.0
  %1777 = vmatmul.mubr.f32.gmra.mrb[0].mxu0 %v727
  %v1778 = vpop.f32.mrb[0].mxu0
  %v1779 = vadd.f32 0.0, %v1778
  %v1780 = vpop.f32.mrb[0].mxu0
  %1781 = vdwg.mxu0
  %1782 = vmatprep.subr.mxu0 0.0
  %1783 = vmatpush1.msra.mxu0 %v722
  %1784 = vmatprep.subr.mxu0 0.0
  %1785 = vmatpush1.msra.mxu0 %v723
  %1786 = vmatprep.subr.mxu0 0.0
  %1787 = vmatpush1.msra.mxu0 %v724
  %1788 = vmatprep.subr.mxu0 0.0
  %1789 = vmatpush1.msra.mxu0 %v725
  %1790 = vmatprep.subr.mxu0 0.0
  %1791 = vmatpush1.msra.mxu0 0.0
  %1792 = vmatprep.subr.mxu0 0.0
  %1793 = vmatpush1.msra.mxu0 0.0
  %1794 = vmatprep.subr.mxu0 0.0
  %1795 = vmatpush1.msra.mxu0 0.0
  %1796 = vmatprep.subr.mxu0 0.0
  %1797 = vmatpush1.msra.mxu0 0.0
  %1798 = vmatprep.subr.mxu0 0.0
  %1799 = vmatpush1.msra.mxu0 0.0
  %1800 = vmatprep.subr.mxu0 0.0
  %1801 = vmatpush1.msra.mxu0 0.0
  %1802 = vmatprep.subr.mxu0 0.0
  %1803 = vmatpush1.msra.mxu0 0.0
  %1804 = vmatprep.subr.mxu0 0.0
  %1805 = vmatpush1.msra.mxu0 0.0
  %1806 = vmatprep.subr.mxu0 0.0
  %1807 = vmatpush1.msra.mxu0 0.0
  %1808 = vmatprep.subr.mxu0 0.0
  %1809 = vmatpush1.msra.mxu0 0.0
  %1810 = vmatprep.subr.mxu0 0.0
  %1811 = vmatpush1.msra.mxu0 0.0
  %1812 = vmatprep.subr.mxu0 0.0
  %1813 = vmatpush1.msra.mxu0 0.0
  %1814 = vmatprep.subr.mxu0 0.0
  %1815 = vmatpush1.msra.mxu0 0.0
  %1816 = vmatprep.subr.mxu0 0.0
  %1817 = vmatpush1.msra.mxu0 0.0
  %1818 = vmatprep.subr.mxu0 0.0
  %1819 = vmatpush1.msra.mxu0 0.0
  %1820 = vmatprep.subr.mxu0 0.0
  %1821 = vmatpush1.msra.mxu0 0.0
  %1822 = vmatprep.subr.mxu0 0.0
  %1823 = vmatpush1.msra.mxu0 0.0
  %1824 = vmatprep.subr.mxu0 0.0
  %1825 = vmatpush1.msra.mxu0 0.0
  %1826 = vmatprep.subr.mxu0 0.0
  %1827 = vmatpush1.msra.mxu0 0.0
  %1828 = vmatprep.subr.mxu0 0.0
  %1829 = vmatpush1.msra.mxu0 0.0
  %1830 = vmatprep.subr.mxu0 0.0
  %1831 = vmatpush1.msra.mxu0 0.0
  %1832 = vmatprep.subr.mxu0 0.0
  %1833 = vmatpush1.msra.mxu0 0.0
  %1834 = vmatprep.subr.mxu0 0.0
  %1835 = vmatpush1.msra.mxu0 0.0
  %1836 = vmatprep.subr.mxu0 0.0
  %1837 = vmatpush1.msra.mxu0 0.0
  %1838 = vmatprep.subr.mxu0 0.0
  %1839 = vmatpush1.msra.mxu0 0.0
  %1840 = vmatprep.subr.mxu0 0.0
  %1841 = vmatpush1.msra.mxu0 0.0
  %1842 = vmatprep.subr.mxu0 0.0
  %1843 = vmatpush1.msra.mxu0 0.0
  %1844 = vmatprep.subr.mxu0 0.0
  %1845 = vmatpush1.msra.mxu0 0.0
  %1846 = vmatprep.mubr.f32.mxu0 0.0
  %1847 = vmatmul.mubr.f32.gmra.mrb[0].mxu0 %v800
  %v1848 = vpop.f32.mrb[0].mxu0
  %v1849 = vadd.f32 0.0, %v1848
  %v1850 = vpop.f32.mrb[0].mxu0
  %1851 = vdwg.mxu0
  %v1852 = vld [vmem:[%s10] sm:$0xff]
  %v1853 = vld [vmem:[%s10 + $0x8] sm:$0xff]
  %v1854 = vld [vmem:[%s10 + $0x10] sm:$0xff]
  %v1855 = vld [vmem:[%s10 + $0x18] sm:$0xff]
  %v1856 = vld [vmem:[%s11] sm:$0x1]
  %vm1857 = vcmask 64512
  %v1859 = vsel %vm1857, %v198, 0
  %v1862 = vsel %vm1857, %v796, 0
  %1864 = vmatprep.subr.mxu0 0.0
  %1865 = vmatpush1.xpose.msra.mxu0 %v1862
  %1866 = vmatprep.subr.mxu0 0.0
  %1867 = vmatpush1.xpose.msra.mxu0 0.0
  %1868 = vmatprep.subr.mxu0 0.0
  %1869 = vmatpush1.xpose.msra.mxu0 0.0
  %1870 = vmatprep.subr.mxu0 0.0
  %1871 = vmatpush1.xpose.msra.mxu0 0.0
  %1872 = vmatprep.subr.mxu0 0.0
  %1873 = vmatpush1.xpose.msra.mxu0 0.0
  %1874 = vmatprep.subr.mxu0 0.0
  %1875 = vmatpush1.xpose.msra.mxu0 0.0
  %1876 = vmatprep.subr.mxu0 0.0
  %1877 = vmatpush1.xpose.msra.mxu0 0.0
  %1878 = vmatprep.subr.mxu0 0.0
  %1879 = vmatpush1.xpose.msra.mxu0 0.0
  %1880 = vmatprep.subr.mxu0 0.0
  %1881 = vmatpush1.xpose.msra.mxu0 0.0
  %1882 = vmatprep.subr.mxu0 0.0
  %1883 = vmatpush1.xpose.msra.mxu0 0.0
  %1884 = vmatprep.subr.mxu0 0.0
  %1885 = vmatpush1.xpose.msra.mxu0 0.0
  %1886 = vmatprep.subr.mxu0 0.0
  %1887 = vmatpush1.xpose.msra.mxu0 0.0
  %1888 = vmatprep.subr.mxu0 0.0
  %1889 = vmatpush1.xpose.msra.mxu0 0.0
  %1890 = vmatprep.subr.mxu0 0.0
  %1891 = vmatpush1.xpose.msra.mxu0 0.0
  %1892 = vmatprep.subr.mxu0 0.0
  %1893 = vmatpush1.xpose.msra.mxu0 0.0
  %1894 = vmatprep.subr.mxu0 0.0
  %1895 = vmatpush1.xpose.msra.mxu0 0.0
  %1896 = vmatprep.subr.mxu0 0.0
  %1897 = vmatpush1.xpose.msra.mxu0 0.0
  %1898 = vmatprep.subr.mxu0 0.0
  %1899 = vmatpush1.xpose.msra.mxu0 0.0
  %1900 = vmatprep.subr.mxu0 0.0
  %1901 = vmatpush1.xpose.msra.mxu0 0.0
  %1902 = vmatprep.subr.mxu0 0.0
  %1903 = vmatpush1.xpose.msra.mxu0 0.0
  %1904 = vmatprep.subr.mxu0 0.0
  %1905 = vmatpush1.xpose.msra.mxu0 0.0
  %1906 = vmatprep.subr.mxu0 0.0
  %1907 = vmatpush1.xpose.msra.mxu0 0.0
  %1908 = vmatprep.subr.mxu0 0.0
  %1909 = vmatpush1.xpose.msra.mxu0 0.0
  %1910 = vmatprep.subr.mxu0 0.0
  %1911 = vmatpush1.xpose.msra.mxu0 0.0
  %1912 = vmatprep.subr.mxu0 0.0
  %1913 = vmatpush1.xpose.msra.mxu0 0.0
  %1914 = vmatprep.subr.mxu0 0.0
  %1915 = vmatpush1.xpose.msra.mxu0 0.0
  %1916 = vmatprep.subr.mxu0 0.0
  %1917 = vmatpush1.xpose.msra.mxu0 0.0
  %1918 = vmatprep.subr.mxu0 0.0
  %1919 = vmatpush1.xpose.msra.mxu0 0.0
  %1920 = vmatprep.subr.mxu0 0.0
  %1921 = vmatpush1.xpose.msra.mxu0 0.0
  %1922 = vmatprep.subr.mxu0 0.0
  %1923 = vmatpush1.xpose.msra.mxu0 0.0
  %1924 = vmatprep.subr.mxu0 0.0
  %1925 = vmatpush1.xpose.msra.mxu0 0.0
  %1926 = vmatprep.subr.mxu0 0.0
  %1927 = vmatpush1.xpose.msra.mxu0 0.0
  %1928 = vmatprep.mubr.f32.mxu0 0.0
  %1929 = vmatmul.mubr.f32.gmra.mrb[0].mxu0 %v1859
  %v1930 = vpop.f32.mrb[0].mxu0
  %v1931 = vadd.f32 0.0, %v1930
  %v1932 = vpop.f32.mrb[0].mxu0
  %1933 = vdwg.mxu0
  %v1935 = vsel %vm1857, %v271, 0
  %v1938 = vsel %vm1857, %v869, 0
  %1940 = vmatprep.subr.mxu0 0.0
  %1941 = vmatpush1.xpose.msra.mxu0 %v1938
  %1942 = vmatprep.subr.mxu0 0.0
  %1943 = vmatpush1.xpose.msra.mxu0 0.0
  %1944 = vmatprep.subr.mxu0 0.0
  %1945 = vmatpush1.xpose.msra.mxu0 0.0
  %1946 = vmatprep.subr.mxu0 0.0
  %1947 = vmatpush1.xpose.msra.mxu0 0.0
  %1948 = vmatprep.subr.mxu0 0.0
  %1949 = vmatpush1.xpose.msra.mxu0 0.0
  %1950 = vmatprep.subr.mxu0 0.0
  %1951 = vmatpush1.xpose.msra.mxu0 0.0
  %1952 = vmatprep.subr.mxu0 0.0
  %1953 = vmatpush1.xpose.msra.mxu0 0.0
  %1954 = vmatprep.subr.mxu0 0.0
  %1955 = vmatpush1.xpose.msra.mxu0 0.0
  %1956 = vmatprep.subr.mxu0 0.0
  %1957 = vmatpush1.xpose.msra.mxu0 0.0
  %1958 = vmatprep.subr.mxu0 0.0
  %1959 = vmatpush1.xpose.msra.mxu0 0.0
  %1960 = vmatprep.subr.mxu0 0.0
  %1961 = vmatpush1.xpose.msra.mxu0 0.0
  %1962 = vmatprep.subr.mxu0 0.0
  %1963 = vmatpush1.xpose.msra.mxu0 0.0
  %1964 = vmatprep.subr.mxu0 0.0
  %1965 = vmatpush1.xpose.msra.mxu0 0.0
  %1966 = vmatprep.subr.mxu0 0.0
  %1967 = vmatpush1.xpose.msra.mxu0 0.0
  %1968 = vmatprep.subr.mxu0 0.0
  %1969 = vmatpush1.xpose.msra.mxu0 0.0
  %1970 = vmatprep.subr.mxu0 0.0
  %1971 = vmatpush1.xpose.msra.mxu0 0.0
  %1972 = vmatprep.subr.mxu0 0.0
  %1973 = vmatpush1.xpose.msra.mxu0 0.0
  %1974 = vmatprep.subr.mxu0 0.0
  %1975 = vmatpush1.xpose.msra.mxu0 0.0
  %1976 = vmatprep.subr.mxu0 0.0
  %1977 = vmatpush1.xpose.msra.mxu0 0.0
  %1978 = vmatprep.subr.mxu0 0.0
  %1979 = vmatpush1.xpose.msra.mxu0 0.0
  %1980 = vmatprep.subr.mxu0 0.0
  %1981 = vmatpush1.xpose.msra.mxu0 0.0
  %1982 = vmatprep.subr.mxu0 0.0
  %1983 = vmatpush1.xpose.msra.mxu0 0.0
  %1984 = vmatprep.subr.mxu0 0.0
  %1985 = vmatpush1.xpose.msra.mxu0 0.0
  %1986 = vmatprep.subr.mxu0 0.0
  %1987 = vmatpush1.xpose.msra.mxu0 0.0
  %1988 = vmatprep.subr.mxu0 0.0
  %1989 = vmatpush1.xpose.msra.mxu0 0.0
  %1990 = vmatprep.subr.mxu0 0.0
  %1991 = vmatpush1.xpose.msra.mxu0 0.0
  %1992 = vmatprep.subr.mxu0 0.0
  %1993 = vmatpush1.xpose.msra.mxu0 0.0
  %1994 = vmatprep.subr.mxu0 0.0
  %1995 = vmatpush1.xpose.msra.mxu0 0.0
  %1996 = vmatprep.subr.mxu0 0.0
  %1997 = vmatpush1.xpose.msra.mxu0 0.0
  %1998 = vmatprep.subr.mxu0 0.0
  %1999 = vmatpush1.xpose.msra.mxu0 0.0
  %2000 = vmatprep.subr.mxu0 0.0
  %2001 = vmatpush1.xpose.msra.mxu0 0.0
  %2002 = vmatprep.subr.mxu0 0.0
  %2003 = vmatpush1.xpose.msra.mxu0 0.0
  %2004 = vmatprep.mubr.f32.mxu0 0.0
  %2005 = vmatmul.mubr.f32.gmra.mrb[0].mxu0 %v1935
  %v2006 = vpop.f32.mrb[0].mxu0
  %v2007 = vadd.f32 0.0, %v2006
  %v2008 = vpop.f32.mrb[0].mxu0
  %2009 = vdwg.mxu0
  %v2011 = vsel %vm1857, %v341, 0
  %v2014 = vsel %vm1857, %v939, 0
  %2016 = vmatprep.subr.mxu0 0.0
  %2017 = vmatpush1.xpose.msra.mxu0 %v2014
  %2018 = vmatprep.subr.mxu0 0.0
  %2019 = vmatpush1.xpose.msra.mxu0 0.0
  %2020 = vmatprep.subr.mxu0 0.0
  %2021 = vmatpush1.xpose.msra.mxu0 0.0
  %2022 = vmatprep.subr.mxu0 0.0
  %2023 = vmatpush1.xpose.msra.mxu0 0.0
  %2024 = vmatprep.subr.mxu0 0.0
  %2025 = vmatpush1.xpose.msra.mxu0 0.0
  %2026 = vmatprep.subr.mxu0 0.0
  %2027 = vmatpush1.xpose.msra.mxu0 0.0
  %2028 = vmatprep.subr.mxu0 0.0
  %2029 = vmatpush1.xpose.msra.mxu0 0.0
  %2030 = vmatprep.subr.mxu0 0.0
  %2031 = vmatpush1.xpose.msra.mxu0 0.0
  %2032 = vmatprep.subr.mxu0 0.0
  %2033 = vmatpush1.xpose.msra.mxu0 0.0
  %2034 = vmatprep.subr.mxu0 0.0
  %2035 = vmatpush1.xpose.msra.mxu0 0.0
  %2036 = vmatprep.subr.mxu0 0.0
  %2037 = vmatpush1.xpose.msra.mxu0 0.0
  %2038 = vmatprep.subr.mxu0 0.0
  %2039 = vmatpush1.xpose.msra.mxu0 0.0
  %2040 = vmatprep.subr.mxu0 0.0
  %2041 = vmatpush1.xpose.msra.mxu0 0.0
  %2042 = vmatprep.subr.mxu0 0.0
  %2043 = vmatpush1.xpose.msra.mxu0 0.0
  %2044 = vmatprep.subr.mxu0 0.0
  %2045 = vmatpush1.xpose.msra.mxu0 0.0
  %2046 = vmatprep.subr.mxu0 0.0
  %2047 = vmatpush1.xpose.msra.mxu0 0.0
  %2048 = vmatprep.subr.mxu0 0.0
  %2049 = vmatpush1.xpose.msra.mxu0 0.0
  %2050 = vmatprep.subr.mxu0 0.0
  %2051 = vmatpush1.xpose.msra.mxu0 0.0
  %2052 = vmatprep.subr.mxu0 0.0
  %2053 = vmatpush1.xpose.msra.mxu0 0.0
  %2054 = vmatprep.subr.mxu0 0.0
  %2055 = vmatpush1.xpose.msra.mxu0 0.0
  %2056 = vmatprep.subr.mxu0 0.0
  %2057 = vmatpush1.xpose.msra.mxu0 0.0
  %2058 = vmatprep.subr.mxu0 0.0
  %2059 = vmatpush1.xpose.msra.mxu0 0.0
  %2060 = vmatprep.subr.mxu0 0.0
  %2061 = vmatpush1.xpose.msra.mxu0 0.0
  %2062 = vmatprep.subr.mxu0 0.0
  %2063 = vmatpush1.xpose.msra.mxu0 0.0
  %2064 = vmatprep.subr.mxu0 0.0
  %2065 = vmatpush1.xpose.msra.mxu0 0.0
  %2066 = vmatprep.subr.mxu0 0.0
  %2067 = vmatpush1.xpose.msra.mxu0 0.0
  %2068 = vmatprep.subr.mxu0 0.0
  %2069 = vmatpush1.xpose.msra.mxu0 0.0
  %2070 = vmatprep.subr.mxu0 0.0
  %2071 = vmatpush1.xpose.msra.mxu0 0.0
  %2072 = vmatprep.subr.mxu0 0.0
  %2073 = vmatpush1.xpose.msra.mxu0 0.0
  %2074 = vmatprep.subr.mxu0 0.0
  %2075 = vmatpush1.xpose.msra.mxu0 0.0
  %2076 = vmatprep.subr.mxu0 0.0
  %2077 = vmatpush1.xpose.msra.mxu0 0.0
  %2078 = vmatprep.subr.mxu0 0.0
  %2079 = vmatpush1.xpose.msra.mxu0 0.0
  %2080 = vmatprep.mubr.f32.mxu0 0.0
  %2081 = vmatmul.mubr.f32.gmra.mrb[0].mxu0 %v2011
  %v2082 = vpop.f32.mrb[0].mxu0
  %v2083 = vadd.f32 0.0, %v2082
  %v2084 = vpop.f32.mrb[0].mxu0
  %2085 = vdwg.mxu0
  %v2087 = vsel %vm1857, %v411, 0
  %v2090 = vsel %vm1857, %v1009, 0
  %2092 = vmatprep.subr.mxu0 0.0
  %2093 = vmatpush1.xpose.msra.mxu0 %v2090
  %2094 = vmatprep.subr.mxu0 0.0
  %2095 = vmatpush1.xpose.msra.mxu0 0.0
  %2096 = vmatprep.subr.mxu0 0.0
  %2097 = vmatpush1.xpose.msra.mxu0 0.0
  %2098 = vmatprep.subr.mxu0 0.0
  %2099 = vmatpush1.xpose.msra.mxu0 0.0
  %2100 = vmatprep.subr.mxu0 0.0
  %2101 = vmatpush1.xpose.msra.mxu0 0.0
  %2102 = vmatprep.subr.mxu0 0.0
  %2103 = vmatpush1.xpose.msra.mxu0 0.0
  %2104 = vmatprep.subr.mxu0 0.0
  %2105 = vmatpush1.xpose.msra.mxu0 0.0
  %2106 = vmatprep.subr.mxu0 0.0
  %2107 = vmatpush1.xpose.msra.mxu0 0.0
  %2108 = vmatprep.subr.mxu0 0.0
  %2109 = vmatpush1.xpose.msra.mxu0 0.0
  %2110 = vmatprep.subr.mxu0 0.0
  %2111 = vmatpush1.xpose.msra.mxu0 0.0
  %2112 = vmatprep.subr.mxu0 0.0
  %2113 = vmatpush1.xpose.msra.mxu0 0.0
  %2114 = vmatprep.subr.mxu0 0.0
  %2115 = vmatpush1.xpose.msra.mxu0 0.0
  %2116 = vmatprep.subr.mxu0 0.0
  %2117 = vmatpush1.xpose.msra.mxu0 0.0
  %2118 = vmatprep.subr.mxu0 0.0
  %2119 = vmatpush1.xpose.msra.mxu0 0.0
  %2120 = vmatprep.subr.mxu0 0.0
  %2121 = vmatpush1.xpose.msra.mxu0 0.0
  %2122 = vmatprep.subr.mxu0 0.0
  %2123 = vmatpush1.xpose.msra.mxu0 0.0
  %2124 = vmatprep.subr.mxu0 0.0
  %2125 = vmatpush1.xpose.msra.mxu0 0.0
  %2126 = vmatprep.subr.mxu0 0.0
  %2127 = vmatpush1.xpose.msra.mxu0 0.0
  %2128 = vmatprep.subr.mxu0 0.0
  %2129 = vmatpush1.xpose.msra.mxu0 0.0
  %2130 = vmatprep.subr.mxu0 0.0
  %2131 = vmatpush1.xpose.msra.mxu0 0.0
  %2132 = vmatprep.subr.mxu0 0.0
  %2133 = vmatpush1.xpose.msra.mxu0 0.0
  %2134 = vmatprep.subr.mxu0 0.0
  %2135 = vmatpush1.xpose.msra.mxu0 0.0
  %2136 = vmatprep.subr.mxu0 0.0
  %2137 = vmatpush1.xpose.msra.mxu0 0.0
  %2138 = vmatprep.subr.mxu0 0.0
  %2139 = vmatpush1.xpose.msra.mxu0 0.0
  %2140 = vmatprep.subr.mxu0 0.0
  %2141 = vmatpush1.xpose.msra.mxu0 0.0
  %2142 = vmatprep.subr.mxu0 0.0
  %2143 = vmatpush1.xpose.msra.mxu0 0.0
  %2144 = vmatprep.subr.mxu0 0.0
  %2145 = vmatpush1.xpose.msra.mxu0 0.0
  %2146 = vmatprep.subr.mxu0 0.0
  %2147 = vmatpush1.xpose.msra.mxu0 0.0
  %2148 = vmatprep.subr.mxu0 0.0
  %2149 = vmatpush1.xpose.msra.mxu0 0.0
  %2150 = vmatprep.subr.mxu0 0.0
  %2151 = vmatpush1.xpose.msra.mxu0 0.0
  %2152 = vmatprep.subr.mxu0 0.0
  %2153 = vmatpush1.xpose.msra.mxu0 0.0
  %2154 = vmatprep.subr.mxu0 0.0
  %2155 = vmatpush1.xpose.msra.mxu0 0.0
  %2156 = vmatprep.mubr.f32.mxu0 0.0
  %2157 = vmatmul.mubr.f32.gmra.mrb[0].mxu0 %v2087
  %v2158 = vpop.f32.mrb[0].mxu0
  %v2159 = vadd.f32 0.0, %v2158
  %v2160 = vpop.f32.mrb[0].mxu0
  %2161 = vdwg.mxu0
  %v2163 = vsel %vm1857, %v481, 0
  %v2166 = vsel %vm1857, %v1079, 0
  %2168 = vmatprep.subr.mxu0 0.0
  %2169 = vmatpush1.xpose.msra.mxu0 %v2166
  %2170 = vmatprep.subr.mxu0 0.0
  %2171 = vmatpush1.xpose.msra.mxu0 0.0
  %2172 = vmatprep.subr.mxu0 0.0
  %2173 = vmatpush1.xpose.msra.mxu0 0.0
  %2174 = vmatprep.subr.mxu0 0.0
  %2175 = vmatpush1.xpose.msra.mxu0 0.0
  %2176 = vmatprep.subr.mxu0 0.0
  %2177 = vmatpush1.xpose.msra.mxu0 0.0
  %2178 = vmatprep.subr.mxu0 0.0
  %2179 = vmatpush1.xpose.msra.mxu0 0.0
  %2180 = vmatprep.subr.mxu0 0.0
  %2181 = vmatpush1.xpose.msra.mxu0 0.0
  %2182 = vmatprep.subr.mxu0 0.0
  %2183 = vmatpush1.xpose.msra.mxu0 0.0
  %2184 = vmatprep.subr.mxu0 0.0
  %2185 = vmatpush1.xpose.msra.mxu0 0.0
  %2186 = vmatprep.subr.mxu0 0.0
  %2187 = vmatpush1.xpose.msra.mxu0 0.0
  %2188 = vmatprep.subr.mxu0 0.0
  %2189 = vmatpush1.xpose.msra.mxu0 0.0
  %2190 = vmatprep.subr.mxu0 0.0
  %2191 = vmatpush1.xpose.msra.mxu0 0.0
  %2192 = vmatprep.subr.mxu0 0.0
  %2193 = vmatpush1.xpose.msra.mxu0 0.0
  %2194 = vmatprep.subr.mxu0 0.0
  %2195 = vmatpush1.xpose.msra.mxu0 0.0
  %2196 = vmatprep.subr.mxu0 0.0
  %2197 = vmatpush1.xpose.msra.mxu0 0.0
  %2198 = vmatprep.subr.mxu0 0.0
  %2199 = vmatpush1.xpose.msra.mxu0 0.0
  %2200 = vmatprep.subr.mxu0 0.0
  %2201 = vmatpush1.xpose.msra.mxu0 0.0
  %2202 = vmatprep.subr.mxu0 0.0
  %2203 = vmatpush1.xpose.msra.mxu0 0.0
  %2204 = vmatprep.subr.mxu0 0.0
  %2205 = vmatpush1.xpose.msra.mxu0 0.0
  %2206 = vmatprep.subr.mxu0 0.0
  %2207 = vmatpush1.xpose.msra.mxu0 0.0
  %2208 = vmatprep.subr.mxu0 0.0
  %2209 = vmatpush1.xpose.msra.mxu0 0.0
  %2210 = vmatprep.subr.mxu0 0.0
  %2211 = vmatpush1.xpose.msra.mxu0 0.0
  %2212 = vmatprep.subr.mxu0 0.0
  %2213 = vmatpush1.xpose.msra.mxu0 0.0
  %2214 = vmatprep.subr.mxu0 0.0
  %2215 = vmatpush1.xpose.msra.mxu0 0.0
  %2216 = vmatprep.subr.mxu0 0.0
  %2217 = vmatpush1.xpose.msra.mxu0 0.0
  %2218 = vmatprep.subr.mxu0 0.0
  %2219 = vmatpush1.xpose.msra.mxu0 0.0
  %2220 = vmatprep.subr.mxu0 0.0
  %2221 = vmatpush1.xpose.msra.mxu0 0.0
  %2222 = vmatprep.subr.mxu0 0.0
  %2223 = vmatpush1.xpose.msra.mxu0 0.0
  %2224 = vmatprep.subr.mxu0 0.0
  %2225 = vmatpush1.xpose.msra.mxu0 0.0
  %2226 = vmatprep.subr.mxu0 0.0
  %2227 = vmatpush1.xpose.msra.mxu0 0.0
  %2228 = vmatprep.subr.mxu0 0.0
  %2229 = vmatpush1.xpose.msra.mxu0 0.0
  %2230 = vmatprep.subr.mxu0 0.0
  %2231 = vmatpush1.xpose.msra.mxu0 0.0
  %2232 = vmatprep.mubr.f32.mxu0 0.0
  %2233 = vmatmul.mubr.f32.gmra.mrb[0].mxu0 %v2163
  %v2234 = vpop.f32.mrb[0].mxu0
  %v2235 = vadd.f32 0.0, %v2234
  %v2236 = vpop.f32.mrb[0].mxu0
  %2237 = vdwg.mxu0
  %v2239 = vsel %vm1857, %v551, 0
  %v2242 = vsel %vm1857, %v1149, 0
  %2244 = vmatprep.subr.mxu0 0.0
  %2245 = vmatpush1.xpose.msra.mxu0 %v2242
  %2246 = vmatprep.subr.mxu0 0.0
  %2247 = vmatpush1.xpose.msra.mxu0 0.0
  %2248 = vmatprep.subr.mxu0 0.0
  %2249 = vmatpush1.xpose.msra.mxu0 0.0
  %2250 = vmatprep.subr.mxu0 0.0
  %2251 = vmatpush1.xpose.msra.mxu0 0.0
  %2252 = vmatprep.subr.mxu0 0.0
  %2253 = vmatpush1.xpose.msra.mxu0 0.0
  %2254 = vmatprep.subr.mxu0 0.0
  %2255 = vmatpush1.xpose.msra.mxu0 0.0
  %2256 = vmatprep.subr.mxu0 0.0
  %2257 = vmatpush1.xpose.msra.mxu0 0.0
  %2258 = vmatprep.subr.mxu0 0.0
  %2259 = vmatpush1.xpose.msra.mxu0 0.0
  %2260 = vmatprep.subr.mxu0 0.0
  %2261 = vmatpush1.xpose.msra.mxu0 0.0
  %2262 = vmatprep.subr.mxu0 0.0
  %2263 = vmatpush1.xpose.msra.mxu0 0.0
  %2264 = vmatprep.subr.mxu0 0.0
  %2265 = vmatpush1.xpose.msra.mxu0 0.0
  %2266 = vmatprep.subr.mxu0 0.0
  %2267 = vmatpush1.xpose.msra.mxu0 0.0
  %2268 = vmatprep.subr.mxu0 0.0
  %2269 = vmatpush1.xpose.msra.mxu0 0.0
  %2270 = vmatprep.subr.mxu0 0.0
  %2271 = vmatpush1.xpose.msra.mxu0 0.0
  %2272 = vmatprep.subr.mxu0 0.0
  %2273 = vmatpush1.xpose.msra.mxu0 0.0
  %2274 = vmatprep.subr.mxu0 0.0
  %2275 = vmatpush1.xpose.msra.mxu0 0.0
  %2276 = vmatprep.subr.mxu0 0.0
  %2277 = vmatpush1.xpose.msra.mxu0 0.0
  %2278 = vmatprep.subr.mxu0 0.0
  %2279 = vmatpush1.xpose.msra.mxu0 0.0
  %2280 = vmatprep.subr.mxu0 0.0
  %2281 = vmatpush1.xpose.msra.mxu0 0.0
  %2282 = vmatprep.subr.mxu0 0.0
  %2283 = vmatpush1.xpose.msra.mxu0 0.0
  %2284 = vmatprep.subr.mxu0 0.0
  %2285 = vmatpush1.xpose.msra.mxu0 0.0
  %2286 = vmatprep.subr.mxu0 0.0
  %2287 = vmatpush1.xpose.msra.mxu0 0.0
  %2288 = vmatprep.subr.mxu0 0.0
  %2289 = vmatpush1.xpose.msra.mxu0 0.0
  %2290 = vmatprep.subr.mxu0 0.0
  %2291 = vmatpush1.xpose.msra.mxu0 0.0
  %2292 = vmatprep.subr.mxu0 0.0
  %2293 = vmatpush1.xpose.msra.mxu0 0.0
  %2294 = vmatprep.subr.mxu0 0.0
  %2295 = vmatpush1.xpose.msra.mxu0 0.0
  %2296 = vmatprep.subr.mxu0 0.0
  %2297 = vmatpush1.xpose.msra.mxu0 0.0
  %2298 = vmatprep.subr.mxu0 0.0
  %2299 = vmatpush1.xpose.msra.mxu0 0.0
  %2300 = vmatprep.subr.mxu0 0.0
  %2301 = vmatpush1.xpose.msra.mxu0 0.0
  %2302 = vmatprep.subr.mxu0 0.0
  %2303 = vmatpush1.xpose.msra.mxu0 0.0
  %2304 = vmatprep.subr.mxu0 0.0
  %2305 = vmatpush1.xpose.msra.mxu0 0.0
  %2306 = vmatprep.subr.mxu0 0.0
  %2307 = vmatpush1.xpose.msra.mxu0 0.0
  %2308 = vmatprep.mubr.f32.mxu0 0.0
  %2309 = vmatmul.mubr.f32.gmra.mrb[0].mxu0 %v2239
  %v2310 = vpop.f32.mrb[0].mxu0
  %v2311 = vadd.f32 0.0, %v2310
  %v2312 = vpop.f32.mrb[0].mxu0
  %2313 = vdwg.mxu0
  %v2315 = vsel %vm1857, %v621, 0
  %v2318 = vsel %vm1857, %v1219, 0
  %2320 = vmatprep.subr.mxu0 0.0
  %2321 = vmatpush1.xpose.msra.mxu0 %v2318
  %2322 = vmatprep.subr.mxu0 0.0
  %2323 = vmatpush1.xpose.msra.mxu0 0.0
  %2324 = vmatprep.subr.mxu0 0.0
  %2325 = vmatpush1.xpose.msra.mxu0 0.0
  %2326 = vmatprep.subr.mxu0 0.0
  %2327 = vmatpush1.xpose.msra.mxu0 0.0
  %2328 = vmatprep.subr.mxu0 0.0
  %2329 = vmatpush1.xpose.msra.mxu0 0.0
  %2330 = vmatprep.subr.mxu0 0.0
  %2331 = vmatpush1.xpose.msra.mxu0 0.0
  %2332 = vmatprep.subr.mxu0 0.0
  %2333 = vmatpush1.xpose.msra.mxu0 0.0
  %2334 = vmatprep.subr.mxu0 0.0
  %2335 = vmatpush1.xpose.msra.mxu0 0.0
  %2336 = vmatprep.subr.mxu0 0.0
  %2337 = vmatpush1.xpose.msra.mxu0 0.0
  %2338 = vmatprep.subr.mxu0 0.0
  %2339 = vmatpush1.xpose.msra.mxu0 0.0
  %2340 = vmatprep.subr.mxu0 0.0
  %2341 = vmatpush1.xpose.msra.mxu0 0.0
  %2342 = vmatprep.subr.mxu0 0.0
  %2343 = vmatpush1.xpose.msra.mxu0 0.0
  %2344 = vmatprep.subr.mxu0 0.0
  %2345 = vmatpush1.xpose.msra.mxu0 0.0
  %2346 = vmatprep.subr.mxu0 0.0
  %2347 = vmatpush1.xpose.msra.mxu0 0.0
  %2348 = vmatprep.subr.mxu0 0.0
  %2349 = vmatpush1.xpose.msra.mxu0 0.0
  %2350 = vmatprep.subr.mxu0 0.0
  %2351 = vmatpush1.xpose.msra.mxu0 0.0
  %2352 = vmatprep.subr.mxu0 0.0
  %2353 = vmatpush1.xpose.msra.mxu0 0.0
  %2354 = vmatprep.subr.mxu0 0.0
  %2355 = vmatpush1.xpose.msra.mxu0 0.0
  %2356 = vmatprep.subr.mxu0 0.0
  %2357 = vmatpush1.xpose.msra.mxu0 0.0
  %2358 = vmatprep.subr.mxu0 0.0
  %2359 = vmatpush1.xpose.msra.mxu0 0.0
  %2360 = vmatprep.subr.mxu0 0.0
  %2361 = vmatpush1.xpose.msra.mxu0 0.0
  %2362 = vmatprep.subr.mxu0 0.0
  %2363 = vmatpush1.xpose.msra.mxu0 0.0
  %2364 = vmatprep.subr.mxu0 0.0
  %2365 = vmatpush1.xpose.msra.mxu0 0.0
  %2366 = vmatprep.subr.mxu0 0.0
  %2367 = vmatpush1.xpose.msra.mxu0 0.0
  %2368 = vmatprep.subr.mxu0 0.0
  %2369 = vmatpush1.xpose.msra.mxu0 0.0
  %2370 = vmatprep.subr.mxu0 0.0
  %2371 = vmatpush1.xpose.msra.mxu0 0.0
  %2372 = vmatprep.subr.mxu0 0.0
  %2373 = vmatpush1.xpose.msra.mxu0 0.0
  %2374 = vmatprep.subr.mxu0 0.0
  %2375 = vmatpush1.xpose.msra.mxu0 0.0
  %2376 = vmatprep.subr.mxu0 0.0
  %2377 = vmatpush1.xpose.msra.mxu0 0.0
  %2378 = vmatprep.subr.mxu0 0.0
  %2379 = vmatpush1.xpose.msra.mxu0 0.0
  %2380 = vmatprep.subr.mxu0 0.0
  %2381 = vmatpush1.xpose.msra.mxu0 0.0
  %2382 = vmatprep.subr.mxu0 0.0
  %2383 = vmatpush1.xpose.msra.mxu0 0.0
  %2384 = vmatprep.mubr.f32.mxu0 0.0
  %2385 = vmatmul.mubr.f32.gmra.mrb[0].mxu0 %v2315
  %v2386 = vpop.f32.mrb[0].mxu0
  %v2387 = vadd.f32 0.0, %v2386
  %v2388 = vpop.f32.mrb[0].mxu0
  %2389 = vdwg.mxu0
  %v2391 = vsel %vm1857, %v691, 0
  %v2394 = vsel %vm1857, %v1289, 0
  %2396 = vmatprep.subr.mxu0 0.0
  %2397 = vmatpush1.xpose.msra.mxu0 %v2394
  %2398 = vmatprep.subr.mxu0 0.0
  %2399 = vmatpush1.xpose.msra.mxu0 0.0
  %2400 = vmatprep.subr.mxu0 0.0
  %2401 = vmatpush1.xpose.msra.mxu0 0.0
  %2402 = vmatprep.subr.mxu0 0.0
  %2403 = vmatpush1.xpose.msra.mxu0 0.0
  %2404 = vmatprep.subr.mxu0 0.0
  %2405 = vmatpush1.xpose.msra.mxu0 0.0
  %2406 = vmatprep.subr.mxu0 0.0
  %2407 = vmatpush1.xpose.msra.mxu0 0.0
  %2408 = vmatprep.subr.mxu0 0.0
  %2409 = vmatpush1.xpose.msra.mxu0 0.0
  %2410 = vmatprep.subr.mxu0 0.0
  %2411 = vmatpush1.xpose.msra.mxu0 0.0
  %2412 = vmatprep.subr.mxu0 0.0
  %2413 = vmatpush1.xpose.msra.mxu0 0.0
  %2414 = vmatprep.subr.mxu0 0.0
  %2415 = vmatpush1.xpose.msra.mxu0 0.0
  %2416 = vmatprep.subr.mxu0 0.0
  %2417 = vmatpush1.xpose.msra.mxu0 0.0
  %2418 = vmatprep.subr.mxu0 0.0
  %2419 = vmatpush1.xpose.msra.mxu0 0.0
  %2420 = vmatprep.subr.mxu0 0.0
  %2421 = vmatpush1.xpose.msra.mxu0 0.0
  %2422 = vmatprep.subr.mxu0 0.0
  %2423 = vmatpush1.xpose.msra.mxu0 0.0
  %2424 = vmatprep.subr.mxu0 0.0
  %2425 = vmatpush1.xpose.msra.mxu0 0.0
  %2426 = vmatprep.subr.mxu0 0.0
  %2427 = vmatpush1.xpose.msra.mxu0 0.0
  %2428 = vmatprep.subr.mxu0 0.0
  %2429 = vmatpush1.xpose.msra.mxu0 0.0
  %2430 = vmatprep.subr.mxu0 0.0
  %2431 = vmatpush1.xpose.msra.mxu0 0.0
  %2432 = vmatprep.subr.mxu0 0.0
  %2433 = vmatpush1.xpose.msra.mxu0 0.0
  %2434 = vmatprep.subr.mxu0 0.0
  %2435 = vmatpush1.xpose.msra.mxu0 0.0
  %2436 = vmatprep.subr.mxu0 0.0
  %2437 = vmatpush1.xpose.msra.mxu0 0.0
  %2438 = vmatprep.subr.mxu0 0.0
  %2439 = vmatpush1.xpose.msra.mxu0 0.0
  %2440 = vmatprep.subr.mxu0 0.0
  %2441 = vmatpush1.xpose.msra.mxu0 0.0
  %2442 = vmatprep.subr.mxu0 0.0
  %2443 = vmatpush1.xpose.msra.mxu0 0.0
  %2444 = vmatprep.subr.mxu0 0.0
  %2445 = vmatpush1.xpose.msra.mxu0 0.0
  %2446 = vmatprep.subr.mxu0 0.0
  %2447 = vmatpush1.xpose.msra.mxu0 0.0
  %2448 = vmatprep.subr.mxu0 0.0
  %2449 = vmatpush1.xpose.msra.mxu0 0.0
  %2450 = vmatprep.subr.mxu0 0.0
  %2451 = vmatpush1.xpose.msra.mxu0 0.0
  %2452 = vmatprep.subr.mxu0 0.0
  %2453 = vmatpush1.xpose.msra.mxu0 0.0
  %2454 = vmatprep.subr.mxu0 0.0
  %2455 = vmatpush1.xpose.msra.mxu0 0.0
  %2456 = vmatprep.subr.mxu0 0.0
  %2457 = vmatpush1.xpose.msra.mxu0 0.0
  %2458 = vmatprep.subr.mxu0 0.0
  %2459 = vmatpush1.xpose.msra.mxu0 0.0
  %2460 = vmatprep.mubr.f32.mxu0 0.0
  %2461 = vmatmul.mubr.f32.gmra.mrb[0].mxu0 %v2391
  %v2462 = vpop.f32.mrb[0].mxu0
  %v2463 = vadd.f32 0.0, %v2462
  %v2464 = vpop.f32.mrb[0].mxu0
  %2465 = vdwg.mxu0
  %v2466 = vmul.f32 %v1931, 0.35355338
  %v2467 = vmul.f32 %v2007, 0.35355338
  %v2468 = vmul.f32 %v2083, 0.35355338
  %v2469 = vmul.f32 %v2159, 0.35355338
  %v2470 = vmul.f32 %v2235, 0.35355338
  %v2471 = vmul.f32 %v2311, 0.35355338
  %v2472 = vmul.f32 %v2387, 0.35355338
  %v2473 = vmul.f32 %v2463, 0.35355338
  %v2474 = vsel %vm1857, %v2466, -inf
  %2475 = vmax.xlane.f32.xlu0 %v2474
  %v2476 = vpop.xlane.xlu0 %2475
  %v2477 = vsel %vm1857, %v2467, -inf
  %2478 = vmax.xlane.f32.xlu0 %v2477
  %v2479 = vpop.xlane.xlu0 %2478
  %v2480 = vsel %vm1857, %v2468, -inf
  %2481 = vmax.xlane.f32.xlu0 %v2480
  %v2482 = vpop.xlane.xlu0 %2481
  %v2483 = vsel %vm1857, %v2469, -inf
  %2484 = vmax.xlane.f32.xlu0 %v2483
  %v2485 = vpop.xlane.xlu0 %2484
  %v2486 = vsel %vm1857, %v2470, -inf
  %2487 = vmax.xlane.f32.xlu0 %v2486
  %v2488 = vpop.xlane.xlu0 %2487
  %v2489 = vsel %vm1857, %v2471, -inf
  %2490 = vmax.xlane.f32.xlu0 %v2489
  %v2491 = vpop.xlane.xlu0 %2490
  %v2492 = vsel %vm1857, %v2472, -inf
  %2493 = vmax.xlane.f32.xlu0 %v2492
  %v2494 = vpop.xlane.xlu0 %2493
  %v2495 = vsel %vm1857, %v2473, -inf
  %2496 = vmax.xlane.f32.xlu0 %v2495
  %v2497 = vpop.xlane.xlu0 %2496
  %v2498 = vsub.f32 %v2466, %v2476
  %v2499 = vsub.f32 %v2467, %v2479
  %v2500 = vsub.f32 %v2468, %v2482
  %v2501 = vsub.f32 %v2469, %v2485
  %v2502 = vsub.f32 %v2470, %v2488
  %v2503 = vsub.f32 %v2471, %v2491
  %v2504 = vsub.f32 %v2472, %v2494
  %v2505 = vsub.f32 %v2473, %v2497
  %v2506 = vmul.f32 %v2498, 1.442695
  %v2507 = vpow.pop %v2506
  %v2508 = vmul.f32 %v2499, 1.442695
  %v2509 = vpow.pop %v2508
  %v2510 = vmul.f32 %v2500, 1.442695
  %v2511 = vpow.pop %v2510
  %v2512 = vmul.f32 %v2501, 1.442695
  %v2513 = vpow.pop %v2512
  %v2514 = vmul.f32 %v2502, 1.442695
  %v2515 = vpow.pop %v2514
  %v2516 = vmul.f32 %v2503, 1.442695
  %v2517 = vpow.pop %v2516
  %v2518 = vmul.f32 %v2504, 1.442695
  %v2519 = vpow.pop %v2518
  %v2520 = vmul.f32 %v2505, 1.442695
  %v2521 = vpow.pop %v2520
  %v2522 = vsel %vm1857, %v2507, 0.0
  %2523 = vadd.xlane.f32.xlu0 %v2522
  %v2524 = vpop.xlane.xlu0 %2523
  %v2525 = vsel %vm1857, %v2509, 0.0
  %2526 = vadd.xlane.f32.xlu0 %v2525
  %v2527 = vpop.xlane.xlu0 %2526
  %v2528 = vsel %vm1857, %v2511, 0.0
  %2529 = vadd.xlane.f32.xlu0 %v2528
  %v2530 = vpop.xlane.xlu0 %2529
  %v2531 = vsel %vm1857, %v2513, 0.0
  %2532 = vadd.xlane.f32.xlu0 %v2531
  %v2533 = vpop.xlane.xlu0 %2532
  %v2534 = vsel %vm1857, %v2515, 0.0
  %2535 = vadd.xlane.f32.xlu0 %v2534
  %v2536 = vpop.xlane.xlu0 %2535
  %v2537 = vsel %vm1857, %v2517, 0.0
  %2538 = vadd.xlane.f32.xlu0 %v2537
  %v2539 = vpop.xlane.xlu0 %2538
  %v2540 = vsel %vm1857, %v2519, 0.0
  %2541 = vadd.xlane.f32.xlu0 %v2540
  %v2542 = vpop.xlane.xlu0 %2541
  %v2543 = vsel %vm1857, %v2521, 0.0
  %2544 = vadd.xlane.f32.xlu0 %v2543
  %v2545 = vpop.xlane.xlu0 %2544
  %v2546 = vrcp.pop %v2524
  %v2547 = vrcp.pop %v2527
  %v2548 = vrcp.pop %v2530
  %v2549 = vrcp.pop %v2533
  %v2550 = vrcp.pop %v2536
  %v2551 = vrcp.pop %v2539
  %v2552 = vrcp.pop %v2542
  %v2553 = vrcp.pop %v2545
  %v2554 = vmul.f32 %v2507, %v2546
  %v2555 = vmul.f32 %v2509, %v2547
  %v2556 = vmul.f32 %v2511, %v2548
  %v2557 = vmul.f32 %v2513, %v2549
  %v2558 = vmul.f32 %v2515, %v2550
  %v2559 = vmul.f32 %v2517, %v2551
  %v2560 = vmul.f32 %v2519, %v2552
  %v2561 = vmul.f32 %v2521, %v2553
  %v2563 = vsel %vm1857, %v2554, 0
  %2565 = vmatprep.subr.mxu0 0.0
  %2566 = vmatpush1.msra.mxu0 %v1359
  %2567 = vmatprep.subr.mxu0 0.0
  %2568 = vmatpush1.msra.mxu0 0.0
  %2569 = vmatprep.subr.mxu0 0.0
  %2570 = vmatpush1.msra.mxu0 0.0
  %2571 = vmatprep.subr.mxu0 0.0
  %2572 = vmatpush1.msra.mxu0 0.0
  %2573 = vmatprep.subr.mxu0 0.0
  %2574 = vmatpush1.msra.mxu0 0.0
  %2575 = vmatprep.subr.mxu0 0.0
  %2576 = vmatpush1.msra.mxu0 0.0
  %2577 = vmatprep.subr.mxu0 0.0
  %2578 = vmatpush1.msra.mxu0 0.0
  %2579 = vmatprep.subr.mxu0 0.0
  %2580 = vmatpush1.msra.mxu0 0.0
  %2581 = vmatprep.subr.mxu0 0.0
  %2582 = vmatpush1.msra.mxu0 0.0
  %2583 = vmatprep.subr.mxu0 0.0
  %2584 = vmatpush1.msra.mxu0 0.0
  %2585 = vmatprep.subr.mxu0 0.0
  %2586 = vmatpush1.msra.mxu0 0.0
  %2587 = vmatprep.subr.mxu0 0.0
  %2588 = vmatpush1.msra.mxu0 0.0
  %2589 = vmatprep.subr.mxu0 0.0
  %2590 = vmatpush1.msra.mxu0 0.0
  %2591 = vmatprep.subr.mxu0 0.0
  %2592 = vmatpush1.msra.mxu0 0.0
  %2593 = vmatprep.subr.mxu0 0.0
  %2594 = vmatpush1.msra.mxu0 0.0
  %2595 = vmatprep.subr.mxu0 0.0
  %2596 = vmatpush1.msra.mxu0 0.0
  %2597 = vmatprep.subr.mxu0 0.0
  %2598 = vmatpush1.msra.mxu0 0.0
  %2599 = vmatprep.subr.mxu0 0.0
  %2600 = vmatpush1.msra.mxu0 0.0
  %2601 = vmatprep.subr.mxu0 0.0
  %2602 = vmatpush1.msra.mxu0 0.0
  %2603 = vmatprep.subr.mxu0 0.0
  %2604 = vmatpush1.msra.mxu0 0.0
  %2605 = vmatprep.subr.mxu0 0.0
  %2606 = vmatpush1.msra.mxu0 0.0
  %2607 = vmatprep.subr.mxu0 0.0
  %2608 = vmatpush1.msra.mxu0 0.0
  %2609 = vmatprep.subr.mxu0 0.0
  %2610 = vmatpush1.msra.mxu0 0.0
  %2611 = vmatprep.subr.mxu0 0.0
  %2612 = vmatpush1.msra.mxu0 0.0
  %2613 = vmatprep.subr.mxu0 0.0
  %2614 = vmatpush1.msra.mxu0 0.0
  %2615 = vmatprep.subr.mxu0 0.0
  %2616 = vmatpush1.msra.mxu0 0.0
  %2617 = vmatprep.subr.mxu0 0.0
  %2618 = vmatpush1.msra.mxu0 0.0
  %2619 = vmatprep.subr.mxu0 0.0
  %2620 = vmatpush1.msra.mxu0 0.0
  %2621 = vmatprep.subr.mxu0 0.0
  %2622 = vmatpush1.msra.mxu0 0.0
  %2623 = vmatprep.subr.mxu0 0.0
  %2624 = vmatpush1.msra.mxu0 0.0
  %2625 = vmatprep.subr.mxu0 0.0
  %2626 = vmatpush1.msra.mxu0 0.0
  %2627 = vmatprep.subr.mxu0 0.0
  %2628 = vmatpush1.msra.mxu0 0.0
  %2629 = vmatprep.mubr.f32.mxu0 0.0
  %2630 = vmatmul.mubr.f32.gmra.mrb[0].mxu0 %v2563
  %v2631 = vpop.f32.mrb[0].mxu0
  %v2632 = vadd.f32 0.0, %v2631
  %v2633 = vpop.f32.mrb[0].mxu0
  %2634 = vdwg.mxu0
  %v2636 = vsel %vm1857, %v2555, 0
  %2638 = vmatprep.subr.mxu0 0.0
  %2639 = vmatpush1.msra.mxu0 %v1429
  %2640 = vmatprep.subr.mxu0 0.0
  %2641 = vmatpush1.msra.mxu0 0.0
  %2642 = vmatprep.subr.mxu0 0.0
  %2643 = vmatpush1.msra.mxu0 0.0
  %2644 = vmatprep.subr.mxu0 0.0
  %2645 = vmatpush1.msra.mxu0 0.0
  %2646 = vmatprep.subr.mxu0 0.0
  %2647 = vmatpush1.msra.mxu0 0.0
  %2648 = vmatprep.subr.mxu0 0.0
  %2649 = vmatpush1.msra.mxu0 0.0
  %2650 = vmatprep.subr.mxu0 0.0
  %2651 = vmatpush1.msra.mxu0 0.0
  %2652 = vmatprep.subr.mxu0 0.0
  %2653 = vmatpush1.msra.mxu0 0.0
  %2654 = vmatprep.subr.mxu0 0.0
  %2655 = vmatpush1.msra.mxu0 0.0
  %2656 = vmatprep.subr.mxu0 0.0
  %2657 = vmatpush1.msra.mxu0 0.0
  %2658 = vmatprep.subr.mxu0 0.0
  %2659 = vmatpush1.msra.mxu0 0.0
  %2660 = vmatprep.subr.mxu0 0.0
  %2661 = vmatpush1.msra.mxu0 0.0
  %2662 = vmatprep.subr.mxu0 0.0
  %2663 = vmatpush1.msra.mxu0 0.0
  %2664 = vmatprep.subr.mxu0 0.0
  %2665 = vmatpush1.msra.mxu0 0.0
  %2666 = vmatprep.subr.mxu0 0.0
  %2667 = vmatpush1.msra.mxu0 0.0
  %2668 = vmatprep.subr.mxu0 0.0
  %2669 = vmatpush1.msra.mxu0 0.0
  %2670 = vmatprep.subr.mxu0 0.0
  %2671 = vmatpush1.msra.mxu0 0.0
  %2672 = vmatprep.subr.mxu0 0.0
  %2673 = vmatpush1.msra.mxu0 0.0
  %2674 = vmatprep.subr.mxu0 0.0
  %2675 = vmatpush1.msra.mxu0 0.0
  %2676 = vmatprep.subr.mxu0 0.0
  %2677 = vmatpush1.msra.mxu0 0.0
  %2678 = vmatprep.subr.mxu0 0.0
  %2679 = vmatpush1.msra.mxu0 0.0
  %2680 = vmatprep.subr.mxu0 0.0
  %2681 = vmatpush1.msra.mxu0 0.0
  %2682 = vmatprep.subr.mxu0 0.0
  %2683 = vmatpush1.msra.mxu0 0.0
  %2684 = vmatprep.subr.mxu0 0.0
  %2685 = vmatpush1.msra.mxu0 0.0
  %2686 = vmatprep.subr.mxu0 0.0
  %2687 = vmatpush1.msra.mxu0 0.0
  %2688 = vmatprep.subr.mxu0 0.0
  %2689 = vmatpush1.msra.mxu0 0.0
  %2690 = vmatprep.subr.mxu0 0.0
  %2691 = vmatpush1.msra.mxu0 0.0
  %2692 = vmatprep.subr.mxu0 0.0
  %2693 = vmatpush1.msra.mxu0 0.0
  %2694 = vmatprep.subr.mxu0 0.0
  %2695 = vmatpush1.msra.mxu0 0.0
  %2696 = vmatprep.subr.mxu0 0.0
  %2697 = vmatpush1.msra.mxu0 0.0
  %2698 = vmatprep.subr.mxu0 0.0
  %2699 = vmatpush1.msra.mxu0 0.0
  %2700 = vmatprep.subr.mxu0 0.0
  %2701 = vmatpush1.msra.mxu0 0.0
  %2702 = vmatprep.mubr.f32.mxu0 0.0
  %2703 = vmatmul.mubr.f32.gmra.mrb[0].mxu0 %v2636
  %v2704 = vpop.f32.mrb[0].mxu0
  %v2705 = vadd.f32 0.0, %v2704
  %v2706 = vpop.f32.mrb[0].mxu0
  %2707 = vdwg.mxu0
  %v2709 = vsel %vm1857, %v2556, 0
  %2711 = vmatprep.subr.mxu0 0.0
  %2712 = vmatpush1.msra.mxu0 %v1499
  %2713 = vmatprep.subr.mxu0 0.0
  %2714 = vmatpush1.msra.mxu0 0.0
  %2715 = vmatprep.subr.mxu0 0.0
  %2716 = vmatpush1.msra.mxu0 0.0
  %2717 = vmatprep.subr.mxu0 0.0
  %2718 = vmatpush1.msra.mxu0 0.0
  %2719 = vmatprep.subr.mxu0 0.0
  %2720 = vmatpush1.msra.mxu0 0.0
  %2721 = vmatprep.subr.mxu0 0.0
  %2722 = vmatpush1.msra.mxu0 0.0
  %2723 = vmatprep.subr.mxu0 0.0
  %2724 = vmatpush1.msra.mxu0 0.0
  %2725 = vmatprep.subr.mxu0 0.0
  %2726 = vmatpush1.msra.mxu0 0.0
  %2727 = vmatprep.subr.mxu0 0.0
  %2728 = vmatpush1.msra.mxu0 0.0
  %2729 = vmatprep.subr.mxu0 0.0
  %2730 = vmatpush1.msra.mxu0 0.0
  %2731 = vmatprep.subr.mxu0 0.0
  %2732 = vmatpush1.msra.mxu0 0.0
  %2733 = vmatprep.subr.mxu0 0.0
  %2734 = vmatpush1.msra.mxu0 0.0
  %2735 = vmatprep.subr.mxu0 0.0
  %2736 = vmatpush1.msra.mxu0 0.0
  %2737 = vmatprep.subr.mxu0 0.0
  %2738 = vmatpush1.msra.mxu0 0.0
  %2739 = vmatprep.subr.mxu0 0.0
  %2740 = vmatpush1.msra.mxu0 0.0
  %2741 = vmatprep.subr.mxu0 0.0
  %2742 = vmatpush1.msra.mxu0 0.0
  %2743 = vmatprep.subr.mxu0 0.0
  %2744 = vmatpush1.msra.mxu0 0.0
  %2745 = vmatprep.subr.mxu0 0.0
  %2746 = vmatpush1.msra.mxu0 0.0
  %2747 = vmatprep.subr.mxu0 0.0
  %2748 = vmatpush1.msra.mxu0 0.0
  %2749 = vmatprep.subr.mxu0 0.0
  %2750 = vmatpush1.msra.mxu0 0.0
  %2751 = vmatprep.subr.mxu0 0.0
  %2752 = vmatpush1.msra.mxu0 0.0
  %2753 = vmatprep.subr.mxu0 0.0
  %2754 = vmatpush1.msra.mxu0 0.0
  %2755 = vmatprep.subr.mxu0 0.0
  %2756 = vmatpush1.msra.mxu0 0.0
  %2757 = vmatprep.subr.mxu0 0.0
  %2758 = vmatpush1.msra.mxu0 0.0
  %2759 = vmatprep.subr.mxu0 0.0
  %2760 = vmatpush1.msra.mxu0 0.0
  %2761 = vmatprep.subr.mxu0 0.0
  %2762 = vmatpush1.msra.mxu0 0.0
  %2763 = vmatprep.subr.mxu0 0.0
  %2764 = vmatpush1.msra.mxu0 0.0
  %2765 = vmatprep.subr.mxu0 0.0
  %2766 = vmatpush1.msra.mxu0 0.0
  %2767 = vmatprep.subr.mxu0 0.0
  %2768 = vmatpush1.msra.mxu0 0.0
  %2769 = vmatprep.subr.mxu0 0.0
  %2770 = vmatpush1.msra.mxu0 0.0
  %2771 = vmatprep.subr.mxu0 0.0
  %2772 = vmatpush1.msra.mxu0 0.0
  %2773 = vmatprep.subr.mxu0 0.0
  %2774 = vmatpush1.msra.mxu0 0.0
  %2775 = vmatprep.mubr.f32.mxu0 0.0
  %2776 = vmatmul.mubr.f32.gmra.mrb[0].mxu0 %v2709
  %v2777 = vpop.f32.mrb[0].mxu0
  %v2778 = vadd.f32 0.0, %v2777
  %v2779 = vpop.f32.mrb[0].mxu0
  %2780 = vdwg.mxu0
  %v2782 = vsel %vm1857, %v2557, 0
  %2784 = vmatprep.subr.mxu0 0.0
  %2785 = vmatpush1.msra.mxu0 %v1569
  %2786 = vmatprep.subr.mxu0 0.0
  %2787 = vmatpush1.msra.mxu0 0.0
  %2788 = vmatprep.subr.mxu0 0.0
  %2789 = vmatpush1.msra.mxu0 0.0
  %2790 = vmatprep.subr.mxu0 0.0
  %2791 = vmatpush1.msra.mxu0 0.0
  %2792 = vmatprep.subr.mxu0 0.0
  %2793 = vmatpush1.msra.mxu0 0.0
  %2794 = vmatprep.subr.mxu0 0.0
  %2795 = vmatpush1.msra.mxu0 0.0
  %2796 = vmatprep.subr.mxu0 0.0
  %2797 = vmatpush1.msra.mxu0 0.0
  %2798 = vmatprep.subr.mxu0 0.0
  %2799 = vmatpush1.msra.mxu0 0.0
  %2800 = vmatprep.subr.mxu0 0.0
  %2801 = vmatpush1.msra.mxu0 0.0
  %2802 = vmatprep.subr.mxu0 0.0
  %2803 = vmatpush1.msra.mxu0 0.0
  %2804 = vmatprep.subr.mxu0 0.0
  %2805 = vmatpush1.msra.mxu0 0.0
  %2806 = vmatprep.subr.mxu0 0.0
  %2807 = vmatpush1.msra.mxu0 0.0
  %2808 = vmatprep.subr.mxu0 0.0
  %2809 = vmatpush1.msra.mxu0 0.0
  %2810 = vmatprep.subr.mxu0 0.0
  %2811 = vmatpush1.msra.mxu0 0.0
  %2812 = vmatprep.subr.mxu0 0.0
  %2813 = vmatpush1.msra.mxu0 0.0
  %2814 = vmatprep.subr.mxu0 0.0
  %2815 = vmatpush1.msra.mxu0 0.0
  %2816 = vmatprep.subr.mxu0 0.0
  %2817 = vmatpush1.msra.mxu0 0.0
  %2818 = vmatprep.subr.mxu0 0.0
  %2819 = vmatpush1.msra.mxu0 0.0
  %2820 = vmatprep.subr.mxu0 0.0
  %2821 = vmatpush1.msra.mxu0 0.0
  %2822 = vmatprep.subr.mxu0 0.0
  %2823 = vmatpush1.msra.mxu0 0.0
  %2824 = vmatprep.subr.mxu0 0.0
  %2825 = vmatpush1.msra.mxu0 0.0
  %2826 = vmatprep.subr.mxu0 0.0
  %2827 = vmatpush1.msra.mxu0 0.0
  %2828 = vmatprep.subr.mxu0 0.0
  %2829 = vmatpush1.msra.mxu0 0.0
  %2830 = vmatprep.subr.mxu0 0.0
  %2831 = vmatpush1.msra.mxu0 0.0
  %2832 = vmatprep.subr.mxu0 0.0
  %2833 = vmatpush1.msra.mxu0 0.0
  %2834 = vmatprep.subr.mxu0 0.0
  %2835 = vmatpush1.msra.mxu0 0.0
  %2836 = vmatprep.subr.mxu0 0.0
  %2837 = vmatpush1.msra.mxu0 0.0
  %2838 = vmatprep.subr.mxu0 0.0
  %2839 = vmatpush1.msra.mxu0 0.0
  %2840 = vmatprep.subr.mxu0 0.0
  %2841 = vmatpush1.msra.mxu0 0.0
  %2842 = vmatprep.subr.mxu0 0.0
  %2843 = vmatpush1.msra.mxu0 0.0
  %2844 = vmatprep.subr.mxu0 0.0
  %2845 = vmatpush1.msra.mxu0 0.0
  %2846 = vmatprep.subr.mxu0 0.0
  %2847 = vmatpush1.msra.mxu0 0.0
  %2848 = vmatprep.mubr.f32.mxu0 0.0
  %2849 = vmatmul.mubr.f32.gmra.mrb[0].mxu0 %v2782
  %v2850 = vpop.f32.mrb[0].mxu0
  %v2851 = vadd.f32 0.0, %v2850
  %v2852 = vpop.f32.mrb[0].mxu0
  %2853 = vdwg.mxu0
  %v2855 = vsel %vm1857, %v2558, 0
  %2857 = vmatprep.subr.mxu0 0.0
  %2858 = vmatpush1.msra.mxu0 %v1639
  %2859 = vmatprep.subr.mxu0 0.0
  %2860 = vmatpush1.msra.mxu0 0.0
  %2861 = vmatprep.subr.mxu0 0.0
  %2862 = vmatpush1.msra.mxu0 0.0
  %2863 = vmatprep.subr.mxu0 0.0
  %2864 = vmatpush1.msra.mxu0 0.0
  %2865 = vmatprep.subr.mxu0 0.0
  %2866 = vmatpush1.msra.mxu0 0.0
  %2867 = vmatprep.subr.mxu0 0.0
  %2868 = vmatpush1.msra.mxu0 0.0
  %2869 = vmatprep.subr.mxu0 0.0
  %2870 = vmatpush1.msra.mxu0 0.0
  %2871 = vmatprep.subr.mxu0 0.0
  %2872 = vmatpush1.msra.mxu0 0.0
  %2873 = vmatprep.subr.mxu0 0.0
  %2874 = vmatpush1.msra.mxu0 0.0
  %2875 = vmatprep.subr.mxu0 0.0
  %2876 = vmatpush1.msra.mxu0 0.0
  %2877 = vmatprep.subr.mxu0 0.0
  %2878 = vmatpush1.msra.mxu0 0.0
  %2879 = vmatprep.subr.mxu0 0.0
  %2880 = vmatpush1.msra.mxu0 0.0
  %2881 = vmatprep.subr.mxu0 0.0
  %2882 = vmatpush1.msra.mxu0 0.0
  %2883 = vmatprep.subr.mxu0 0.0
  %2884 = vmatpush1.msra.mxu0 0.0
  %2885 = vmatprep.subr.mxu0 0.0
  %2886 = vmatpush1.msra.mxu0 0.0
  %2887 = vmatprep.subr.mxu0 0.0
  %2888 = vmatpush1.msra.mxu0 0.0
  %2889 = vmatprep.subr.mxu0 0.0
  %2890 = vmatpush1.msra.mxu0 0.0
  %2891 = vmatprep.subr.mxu0 0.0
  %2892 = vmatpush1.msra.mxu0 0.0
  %2893 = vmatprep.subr.mxu0 0.0
  %2894 = vmatpush1.msra.mxu0 0.0
  %2895 = vmatprep.subr.mxu0 0.0
  %2896 = vmatpush1.msra.mxu0 0.0
  %2897 = vmatprep.subr.mxu0 0.0
  %2898 = vmatpush1.msra.mxu0 0.0
  %2899 = vmatprep.subr.mxu0 0.0
  %2900 = vmatpush1.msra.mxu0 0.0
  %2901 = vmatprep.subr.mxu0 0.0
  %2902 = vmatpush1.msra.mxu0 0.0
  %2903 = vmatprep.subr.mxu0 0.0
  %2904 = vmatpush1.msra.mxu0 0.0
  %2905 = vmatprep.subr.mxu0 0.0
  %2906 = vmatpush1.msra.mxu0 0.0
  %2907 = vmatprep.subr.mxu0 0.0
  %2908 = vmatpush1.msra.mxu0 0.0
  %2909 = vmatprep.subr.mxu0 0.0
  %2910 = vmatpush1.msra.mxu0 0.0
  %2911 = vmatprep.subr.mxu0 0.0
  %2912 = vmatpush1.msra.mxu0 0.0
  %2913 = vmatprep.subr.mxu0 0.0
  %2914 = vmatpush1.msra.mxu0 0.0
  %2915 = vmatprep.subr.mxu0 0.0
  %2916 = vmatpush1.msra.mxu0 0.0
  %2917 = vmatprep.subr.mxu0 0.0
  %2918 = vmatpush1.msra.mxu0 0.0
  %2919 = vmatprep.subr.mxu0 0.0
  %2920 = vmatpush1.msra.mxu0 0.0
  %2921 = vmatprep.mubr.f32.mxu0 0.0
  %2922 = vmatmul.mubr.f32.gmra.mrb[0].mxu0 %v2855
  %v2923 = vpop.f32.mrb[0].mxu0
  %v2924 = vadd.f32 0.0, %v2923
  %v2925 = vpop.f32.mrb[0].mxu0
  %2926 = vdwg.mxu0
  %v2928 = vsel %vm1857, %v2559, 0
  %2930 = vmatprep.subr.mxu0 0.0
  %2931 = vmatpush1.msra.mxu0 %v1709
  %2932 = vmatprep.subr.mxu0 0.0
  %2933 = vmatpush1.msra.mxu0 0.0
  %2934 = vmatprep.subr.mxu0 0.0
  %2935 = vmatpush1.msra.mxu0 0.0
  %2936 = vmatprep.subr.mxu0 0.0
  %2937 = vmatpush1.msra.mxu0 0.0
  %2938 = vmatprep.subr.mxu0 0.0
  %2939 = vmatpush1.msra.mxu0 0.0
  %2940 = vmatprep.subr.mxu0 0.0
  %2941 = vmatpush1.msra.mxu0 0.0
  %2942 = vmatprep.subr.mxu0 0.0
  %2943 = vmatpush1.msra.mxu0 0.0
  %2944 = vmatprep.subr.mxu0 0.0
  %2945 = vmatpush1.msra.mxu0 0.0
  %2946 = vmatprep.subr.mxu0 0.0
  %2947 = vmatpush1.msra.mxu0 0.0
  %2948 = vmatprep.subr.mxu0 0.0
  %2949 = vmatpush1.msra.mxu0 0.0
  %2950 = vmatprep.subr.mxu0 0.0
  %2951 = vmatpush1.msra.mxu0 0.0
  %2952 = vmatprep.subr.mxu0 0.0
  %2953 = vmatpush1.msra.mxu0 0.0
  %2954 = vmatprep.subr.mxu0 0.0
  %2955 = vmatpush1.msra.mxu0 0.0
  %2956 = vmatprep.subr.mxu0 0.0
  %2957 = vmatpush1.msra.mxu0 0.0
  %2958 = vmatprep.subr.mxu0 0.0
  %2959 = vmatpush1.msra.mxu0 0.0
  %2960 = vmatprep.subr.mxu0 0.0
  %2961 = vmatpush1.msra.mxu0 0.0
  %2962 = vmatprep.subr.mxu0 0.0
  %2963 = vmatpush1.msra.mxu0 0.0
  %2964 = vmatprep.subr.mxu0 0.0
  %2965 = vmatpush1.msra.mxu0 0.0
  %2966 = vmatprep.subr.mxu0 0.0
  %2967 = vmatpush1.msra.mxu0 0.0
  %2968 = vmatprep.subr.mxu0 0.0
  %2969 = vmatpush1.msra.mxu0 0.0
  %2970 = vmatprep.subr.mxu0 0.0
  %2971 = vmatpush1.msra.mxu0 0.0
  %2972 = vmatprep.subr.mxu0 0.0
  %2973 = vmatpush1.msra.mxu0 0.0
  %2974 = vmatprep.subr.mxu0 0.0
  %2975 = vmatpush1.msra.mxu0 0.0
  %2976 = vmatprep.subr.mxu0 0.0
  %2977 = vmatpush1.msra.mxu0 0.0
  %2978 = vmatprep.subr.mxu0 0.0
  %2979 = vmatpush1.msra.mxu0 0.0
  %2980 = vmatprep.subr.mxu0 0.0
  %2981 = vmatpush1.msra.mxu0 0.0
  %2982 = vmatprep.subr.mxu0 0.0
  %2983 = vmatpush1.msra.mxu0 0.0
  %2984 = vmatprep.subr.mxu0 0.0
  %2985 = vmatpush1.msra.mxu0 0.0
  %2986 = vmatprep.subr.mxu0 0.0
  %2987 = vmatpush1.msra.mxu0 0.0
  %2988 = vmatprep.subr.mxu0 0.0
  %2989 = vmatpush1.msra.mxu0 0.0
  %2990 = vmatprep.subr.mxu0 0.0
  %2991 = vmatpush1.msra.mxu0 0.0
  %2992 = vmatprep.subr.mxu0 0.0
  %2993 = vmatpush1.msra.mxu0 0.0
  %2994 = vmatprep.mubr.f32.mxu0 0.0
  %2995 = vmatmul.mubr.f32.gmra.mrb[0].mxu0 %v2928
  %v2996 = vpop.f32.mrb[0].mxu0
  %v2997 = vadd.f32 0.0, %v2996
  %v2998 = vpop.f32.mrb[0].mxu0
  %2999 = vdwg.mxu0
  %v3001 = vsel %vm1857, %v2560, 0
  %3003 = vmatprep.subr.mxu0 0.0
  %3004 = vmatpush1.msra.mxu0 %v1779
  %3005 = vmatprep.subr.mxu0 0.0
  %3006 = vmatpush1.msra.mxu0 0.0
  %3007 = vmatprep.subr.mxu0 0.0
  %3008 = vmatpush1.msra.mxu0 0.0
  %3009 = vmatprep.subr.mxu0 0.0
  %3010 = vmatpush1.msra.mxu0 0.0
  %3011 = vmatprep.subr.mxu0 0.0
  %3012 = vmatpush1.msra.mxu0 0.0
  %3013 = vmatprep.subr.mxu0 0.0
  %3014 = vmatpush1.msra.mxu0 0.0
  %3015 = vmatprep.subr.mxu0 0.0
  %3016 = vmatpush1.msra.mxu0 0.0
  %3017 = vmatprep.subr.mxu0 0.0
  %3018 = vmatpush1.msra.mxu0 0.0
  %3019 = vmatprep.subr.mxu0 0.0
  %3020 = vmatpush1.msra.mxu0 0.0
  %3021 = vmatprep.subr.mxu0 0.0
  %3022 = vmatpush1.msra.mxu0 0.0
  %3023 = vmatprep.subr.mxu0 0.0
  %3024 = vmatpush1.msra.mxu0 0.0
  %3025 = vmatprep.subr.mxu0 0.0
  %3026 = vmatpush1.msra.mxu0 0.0
  %3027 = vmatprep.subr.mxu0 0.0
  %3028 = vmatpush1.msra.mxu0 0.0
  %3029 = vmatprep.subr.mxu0 0.0
  %3030 = vmatpush1.msra.mxu0 0.0
  %3031 = vmatprep.subr.mxu0 0.0
  %3032 = vmatpush1.msra.mxu0 0.0
  %3033 = vmatprep.subr.mxu0 0.0
  %3034 = vmatpush1.msra.mxu0 0.0
  %3035 = vmatprep.subr.mxu0 0.0
  %3036 = vmatpush1.msra.mxu0 0.0
  %3037 = vmatprep.subr.mxu0 0.0
  %3038 = vmatpush1.msra.mxu0 0.0
  %3039 = vmatprep.subr.mxu0 0.0
  %3040 = vmatpush1.msra.mxu0 0.0
  %3041 = vmatprep.subr.mxu0 0.0
  %3042 = vmatpush1.msra.mxu0 0.0
  %3043 = vmatprep.subr.mxu0 0.0
  %3044 = vmatpush1.msra.mxu0 0.0
  %3045 = vmatprep.subr.mxu0 0.0
  %3046 = vmatpush1.msra.mxu0 0.0
  %3047 = vmatprep.subr.mxu0 0.0
  %3048 = vmatpush1.msra.mxu0 0.0
  %3049 = vmatprep.subr.mxu0 0.0
  %3050 = vmatpush1.msra.mxu0 0.0
  %3051 = vmatprep.subr.mxu0 0.0
  %3052 = vmatpush1.msra.mxu0 0.0
  %3053 = vmatprep.subr.mxu0 0.0
  %3054 = vmatpush1.msra.mxu0 0.0
  %3055 = vmatprep.subr.mxu0 0.0
  %3056 = vmatpush1.msra.mxu0 0.0
  %3057 = vmatprep.subr.mxu0 0.0
  %3058 = vmatpush1.msra.mxu0 0.0
  %3059 = vmatprep.subr.mxu0 0.0
  %3060 = vmatpush1.msra.mxu0 0.0
  %3061 = vmatprep.subr.mxu0 0.0
  %3062 = vmatpush1.msra.mxu0 0.0
  %3063 = vmatprep.subr.mxu0 0.0
  %3064 = vmatpush1.msra.mxu0 0.0
  %3065 = vmatprep.subr.mxu0 0.0
  %3066 = vmatpush1.msra.mxu0 0.0
  %3067 = vmatprep.mubr.f32.mxu0 0.0
  %3068 = vmatmul.mubr.f32.gmra.mrb[0].mxu0 %v3001
  %v3069 = vpop.f32.mrb[0].mxu0
  %v3070 = vadd.f32 0.0, %v3069
  %v3071 = vpop.f32.mrb[0].mxu0
  %3072 = vdwg.mxu0
  %v3074 = vsel %vm1857, %v2561, 0
  %3076 = vmatprep.subr.mxu0 0.0
  %3077 = vmatpush1.msra.mxu0 %v1849
  %3078 = vmatprep.subr.mxu0 0.0
  %3079 = vmatpush1.msra.mxu0 0.0
  %3080 = vmatprep.subr.mxu0 0.0
  %3081 = vmatpush1.msra.mxu0 0.0
  %3082 = vmatprep.subr.mxu0 0.0
  %3083 = vmatpush1.msra.mxu0 0.0
  %3084 = vmatprep.subr.mxu0 0.0
  %3085 = vmatpush1.msra.mxu0 0.0
  %3086 = vmatprep.subr.mxu0 0.0
  %3087 = vmatpush1.msra.mxu0 0.0
  %3088 = vmatprep.subr.mxu0 0.0
  %3089 = vmatpush1.msra.mxu0 0.0
  %3090 = vmatprep.subr.mxu0 0.0
  %3091 = vmatpush1.msra.mxu0 0.0
  %3092 = vmatprep.subr.mxu0 0.0
  %3093 = vmatpush1.msra.mxu0 0.0
  %3094 = vmatprep.subr.mxu0 0.0
  %3095 = vmatpush1.msra.mxu0 0.0
  %3096 = vmatprep.subr.mxu0 0.0
  %3097 = vmatpush1.msra.mxu0 0.0
  %3098 = vmatprep.subr.mxu0 0.0
  %3099 = vmatpush1.msra.mxu0 0.0
  %3100 = vmatprep.subr.mxu0 0.0
  %3101 = vmatpush1.msra.mxu0 0.0
  %3102 = vmatprep.subr.mxu0 0.0
  %3103 = vmatpush1.msra.mxu0 0.0
  %3104 = vmatprep.subr.mxu0 0.0
  %3105 = vmatpush1.msra.mxu0 0.0
  %3106 = vmatprep.subr.mxu0 0.0
  %3107 = vmatpush1.msra.mxu0 0.0
  %3108 = vmatprep.subr.mxu0 0.0
  %3109 = vmatpush1.msra.mxu0 0.0
  %3110 = vmatprep.subr.mxu0 0.0
  %3111 = vmatpush1.msra.mxu0 0.0
  %3112 = vmatprep.subr.mxu0 0.0
  %3113 = vmatpush1.msra.mxu0 0.0
  %3114 = vmatprep.subr.mxu0 0.0
  %3115 = vmatpush1.msra.mxu0 0.0
  %3116 = vmatprep.subr.mxu0 0.0
  %3117 = vmatpush1.msra.mxu0 0.0
  %3118 = vmatprep.subr.mxu0 0.0
  %3119 = vmatpush1.msra.mxu0 0.0
  %3120 = vmatprep.subr.mxu0 0.0
  %3121 = vmatpush1.msra.mxu0 0.0
  %3122 = vmatprep.subr.mxu0 0.0
  %3123 = vmatpush1.msra.mxu0 0.0
  %3124 = vmatprep.subr.mxu0 0.0
  %3125 = vmatpush1.msra.mxu0 0.0
  %3126 = vmatprep.subr.mxu0 0.0
  %3127 = vmatpush1.msra.mxu0 0.0
  %3128 = vmatprep.subr.mxu0 0.0
  %3129 = vmatpush1.msra.mxu0 0.0
  %3130 = vmatprep.subr.mxu0 0.0
  %3131 = vmatpush1.msra.mxu0 0.0
  %3132 = vmatprep.subr.mxu0 0.0
  %3133 = vmatpush1.msra.mxu0 0.0
  %3134 = vmatprep.subr.mxu0 0.0
  %3135 = vmatpush1.msra.mxu0 0.0
  %3136 = vmatprep.subr.mxu0 0.0
  %3137 = vmatpush1.msra.mxu0 0.0
  %3138 = vmatprep.subr.mxu0 0.0
  %3139 = vmatpush1.msra.mxu0 0.0
  %3140 = vmatprep.mubr.f32.mxu0 0.0
  %3141 = vmatmul.mubr.f32.gmra.mrb[0].mxu0 %v3074
  %v3142 = vpop.f32.mrb[0].mxu0
  %v3143 = vadd.f32 0.0, %v3142
  %v3144 = vpop.f32.mrb[0].mxu0
  %3145 = vdwg.mxu0
  %v3147 = vsel %vm1857, %v2632, 0
  %3149 = vmatprep.subr.mxu0 0.0
  %3150 = vmatpush1.msra.mxu0 %v1852
  %3151 = vmatprep.subr.mxu0 0.0
  %3152 = vmatpush1.msra.mxu0 0.0
  %3153 = vmatprep.subr.mxu0 0.0
  %3154 = vmatpush1.msra.mxu0 0.0
  %3155 = vmatprep.subr.mxu0 0.0
  %3156 = vmatpush1.msra.mxu0 0.0
  %3157 = vmatprep.subr.mxu0 0.0
  %3158 = vmatpush1.msra.mxu0 0.0
  %3159 = vmatprep.subr.mxu0 0.0
  %3160 = vmatpush1.msra.mxu0 0.0
  %3161 = vmatprep.subr.mxu0 0.0
  %3162 = vmatpush1.msra.mxu0 0.0
  %3163 = vmatprep.subr.mxu0 0.0
  %3164 = vmatpush1.msra.mxu0 0.0
  %3165 = vmatprep.subr.mxu0 0.0
  %3166 = vmatpush1.msra.mxu0 0.0
  %3167 = vmatprep.subr.mxu0 0.0
  %3168 = vmatpush1.msra.mxu0 0.0
  %3169 = vmatprep.subr.mxu0 0.0
  %3170 = vmatpush1.msra.mxu0 0.0
  %3171 = vmatprep.subr.mxu0 0.0
  %3172 = vmatpush1.msra.mxu0 0.0
  %3173 = vmatprep.subr.mxu0 0.0
  %3174 = vmatpush1.msra.mxu0 0.0
  %3175 = vmatprep.subr.mxu0 0.0
  %3176 = vmatpush1.msra.mxu0 0.0
  %3177 = vmatprep.subr.mxu0 0.0
  %3178 = vmatpush1.msra.mxu0 0.0
  %3179 = vmatprep.subr.mxu0 0.0
  %3180 = vmatpush1.msra.mxu0 0.0
  %3181 = vmatprep.subr.mxu0 0.0
  %3182 = vmatpush1.msra.mxu0 0.0
  %3183 = vmatprep.subr.mxu0 0.0
  %3184 = vmatpush1.msra.mxu0 0.0
  %3185 = vmatprep.subr.mxu0 0.0
  %3186 = vmatpush1.msra.mxu0 0.0
  %3187 = vmatprep.subr.mxu0 0.0
  %3188 = vmatpush1.msra.mxu0 0.0
  %3189 = vmatprep.subr.mxu0 0.0
  %3190 = vmatpush1.msra.mxu0 0.0
  %3191 = vmatprep.subr.mxu0 0.0
  %3192 = vmatpush1.msra.mxu0 0.0
  %3193 = vmatprep.subr.mxu0 0.0
  %3194 = vmatpush1.msra.mxu0 0.0
  %3195 = vmatprep.subr.mxu0 0.0
  %3196 = vmatpush1.msra.mxu0 0.0
  %3197 = vmatprep.subr.mxu0 0.0
  %3198 = vmatpush1.msra.mxu0 0.0
  %3199 = vmatprep.subr.mxu0 0.0
  %3200 = vmatpush1.msra.mxu0 0.0
  %3201 = vmatprep.subr.mxu0 0.0
  %3202 = vmatpush1.msra.mxu0 0.0
  %3203 = vmatprep.subr.mxu0 0.0
  %3204 = vmatpush1.msra.mxu0 0.0
  %3205 = vmatprep.subr.mxu0 0.0
  %3206 = vmatpush1.msra.mxu0 0.0
  %3207 = vmatprep.subr.mxu0 0.0
  %3208 = vmatpush1.msra.mxu0 0.0
  %3209 = vmatprep.subr.mxu0 0.0
  %3210 = vmatpush1.msra.mxu0 0.0
  %3211 = vmatprep.subr.mxu0 0.0
  %3212 = vmatpush1.msra.mxu0 0.0
  %3213 = vmatprep.mubr.f32.mxu0 0.0
  %3214 = vmatmul.mubr.f32.gmra.mrb[0].mxu0 %v3147
  %v3215 = vpop.f32.mrb[0].mxu0
  %v3216 = vadd.f32 0.0, %v3215
  %v3217 = vpop.f32.mrb[0].mxu0
  %3218 = vdwg.mxu0
  %v3220 = vsel %vm1857, %v2705, 0
  %3222 = vmatprep.subr.mxu0 0.0
  %3223 = vmatpush1.msra.mxu0 %v1852
  %3224 = vmatprep.subr.mxu0 0.0
  %3225 = vmatpush1.msra.mxu0 0.0
  %3226 = vmatprep.subr.mxu0 0.0
  %3227 = vmatpush1.msra.mxu0 0.0
  %3228 = vmatprep.subr.mxu0 0.0
  %3229 = vmatpush1.msra.mxu0 0.0
  %3230 = vmatprep.subr.mxu0 0.0
  %3231 = vmatpush1.msra.mxu0 0.0
  %3232 = vmatprep.subr.mxu0 0.0
  %3233 = vmatpush1.msra.mxu0 0.0
  %3234 = vmatprep.subr.mxu0 0.0
  %3235 = vmatpush1.msra.mxu0 0.0
  %3236 = vmatprep.subr.mxu0 0.0
  %3237 = vmatpush1.msra.mxu0 0.0
  %3238 = vmatprep.subr.mxu0 0.0
  %3239 = vmatpush1.msra.mxu0 0.0
  %3240 = vmatprep.subr.mxu0 0.0
  %3241 = vmatpush1.msra.mxu0 0.0
  %3242 = vmatprep.subr.mxu0 0.0
  %3243 = vmatpush1.msra.mxu0 0.0
  %3244 = vmatprep.subr.mxu0 0.0
  %3245 = vmatpush1.msra.mxu0 0.0
  %3246 = vmatprep.subr.mxu0 0.0
  %3247 = vmatpush1.msra.mxu0 0.0
  %3248 = vmatprep.subr.mxu0 0.0
  %3249 = vmatpush1.msra.mxu0 0.0
  %3250 = vmatprep.subr.mxu0 0.0
  %3251 = vmatpush1.msra.mxu0 0.0
  %3252 = vmatprep.subr.mxu0 0.0
  %3253 = vmatpush1.msra.mxu0 0.0
  %3254 = vmatprep.subr.mxu0 0.0
  %3255 = vmatpush1.msra.mxu0 0.0
  %3256 = vmatprep.subr.mxu0 0.0
  %3257 = vmatpush1.msra.mxu0 0.0
  %3258 = vmatprep.subr.mxu0 0.0
  %3259 = vmatpush1.msra.mxu0 0.0
  %3260 = vmatprep.subr.mxu0 0.0
  %3261 = vmatpush1.msra.mxu0 0.0
  %3262 = vmatprep.subr.mxu0 0.0
  %3263 = vmatpush1.msra.mxu0 0.0
  %3264 = vmatprep.subr.mxu0 0.0
  %3265 = vmatpush1.msra.mxu0 0.0
  %3266 = vmatprep.subr.mxu0 0.0
  %3267 = vmatpush1.msra.mxu0 0.0
  %3268 = vmatprep.subr.mxu0 0.0
  %3269 = vmatpush1.msra.mxu0 0.0
  %3270 = vmatprep.subr.mxu0 0.0
  %3271 = vmatpush1.msra.mxu0 0.0
  %3272 = vmatprep.subr.mxu0 0.0
  %3273 = vmatpush1.msra.mxu0 0.0
  %3274 = vmatprep.subr.mxu0 0.0
  %3275 = vmatpush1.msra.mxu0 0.0
  %3276 = vmatprep.subr.mxu0 0.0
  %3277 = vmatpush1.msra.mxu0 0.0
  %3278 = vmatprep.subr.mxu0 0.0
  %3279 = vmatpush1.msra.mxu0 0.0
  %3280 = vmatprep.subr.mxu0 0.0
  %3281 = vmatpush1.msra.mxu0 0.0
  %3282 = vmatprep.subr.mxu0 0.0
  %3283 = vmatpush1.msra.mxu0 0.0
  %3284 = vmatprep.subr.mxu0 0.0
  %3285 = vmatpush1.msra.mxu0 0.0
  %3286 = vmatprep.mubr.f32.mxu0 0.0
  %3287 = vmatmul.mubr.f32.gmra.mrb[0].mxu0 %v3220
  %v3288 = vpop.f32.mrb[0].mxu0
  %v3289 = vadd.f32 0.0, %v3288
  %v3290 = vpop.f32.mrb[0].mxu0
  %3291 = vdwg.mxu0
  %v3293 = vsel %vm1857, %v2778, 0
  %3295 = vmatprep.subr.mxu0 0.0
  %3296 = vmatpush1.msra.mxu0 %v1853
  %3297 = vmatprep.subr.mxu0 0.0
  %3298 = vmatpush1.msra.mxu0 0.0
  %3299 = vmatprep.subr.mxu0 0.0
  %3300 = vmatpush1.msra.mxu0 0.0
  %3301 = vmatprep.subr.mxu0 0.0
  %3302 = vmatpush1.msra.mxu0 0.0
  %3303 = vmatprep.subr.mxu0 0.0
  %3304 = vmatpush1.msra.mxu0 0.0
  %3305 = vmatprep.subr.mxu0 0.0
  %3306 = vmatpush1.msra.mxu0 0.0
  %3307 = vmatprep.subr.mxu0 0.0
  %3308 = vmatpush1.msra.mxu0 0.0
  %3309 = vmatprep.subr.mxu0 0.0
  %3310 = vmatpush1.msra.mxu0 0.0
  %3311 = vmatprep.subr.mxu0 0.0
  %3312 = vmatpush1.msra.mxu0 0.0
  %3313 = vmatprep.subr.mxu0 0.0
  %3314 = vmatpush1.msra.mxu0 0.0
  %3315 = vmatprep.subr.mxu0 0.0
  %3316 = vmatpush1.msra.mxu0 0.0
  %3317 = vmatprep.subr.mxu0 0.0
  %3318 = vmatpush1.msra.mxu0 0.0
  %3319 = vmatprep.subr.mxu0 0.0
  %3320 = vmatpush1.msra.mxu0 0.0
  %3321 = vmatprep.subr.mxu0 0.0
  %3322 = vmatpush1.msra.mxu0 0.0
  %3323 = vmatprep.subr.mxu0 0.0
  %3324 = vmatpush1.msra.mxu0 0.0
  %3325 = vmatprep.subr.mxu0 0.0
  %3326 = vmatpush1.msra.mxu0 0.0
  %3327 = vmatprep.subr.mxu0 0.0
  %3328 = vmatpush1.msra.mxu0 0.0
  %3329 = vmatprep.subr.mxu0 0.0
  %3330 = vmatpush1.msra.mxu0 0.0
  %3331 = vmatprep.subr.mxu0 0.0
  %3332 = vmatpush1.msra.mxu0 0.0
  %3333 = vmatprep.subr.mxu0 0.0
  %3334 = vmatpush1.msra.mxu0 0.0
  %3335 = vmatprep.subr.mxu0 0.0
  %3336 = vmatpush1.msra.mxu0 0.0
  %3337 = vmatprep.subr.mxu0 0.0
  %3338 = vmatpush1.msra.mxu0 0.0
  %3339 = vmatprep.subr.mxu0 0.0
  %3340 = vmatpush1.msra.mxu0 0.0
  %3341 = vmatprep.subr.mxu0 0.0
  %3342 = vmatpush1.msra.mxu0 0.0
  %3343 = vmatprep.subr.mxu0 0.0
  %3344 = vmatpush1.msra.mxu0 0.0
  %3345 = vmatprep.subr.mxu0 0.0
  %3346 = vmatpush1.msra.mxu0 0.0
  %3347 = vmatprep.subr.mxu0 0.0
  %3348 = vmatpush1.msra.mxu0 0.0
  %3349 = vmatprep.subr.mxu0 0.0
  %3350 = vmatpush1.msra.mxu0 0.0
  %3351 = vmatprep.subr.mxu0 0.0
  %3352 = vmatpush1.msra.mxu0 0.0
  %3353 = vmatprep.subr.mxu0 0.0
  %3354 = vmatpush1.msra.mxu0 0.0
  %3355 = vmatprep.subr.mxu0 0.0
  %3356 = vmatpush1.msra.mxu0 0.0
  %3357 = vmatprep.subr.mxu0 0.0
  %3358 = vmatpush1.msra.mxu0 0.0
  %3359 = vmatprep.mubr.f32.mxu0 0.0
  %3360 = vmatmul.mubr.f32.gmra.mrb[0].mxu0 %v3293
  %v3361 = vpop.f32.mrb[0].mxu0
  %v3362 = vadd.f32 0.0, %v3361
  %v3363 = vpop.f32.mrb[0].mxu0
  %3364 = vdwg.mxu0
  %v3366 = vsel %vm1857, %v2851, 0
  %3368 = vmatprep.subr.mxu0 0.0
  %3369 = vmatpush1.msra.mxu0 %v1853
  %3370 = vmatprep.subr.mxu0 0.0
  %3371 = vmatpush1.msra.mxu0 0.0
  %3372 = vmatprep.subr.mxu0 0.0
  %3373 = vmatpush1.msra.mxu0 0.0
  %3374 = vmatprep.subr.mxu0 0.0
  %3375 = vmatpush1.msra.mxu0 0.0
  %3376 = vmatprep.subr.mxu0 0.0
  %3377 = vmatpush1.msra.mxu0 0.0
  %3378 = vmatprep.subr.mxu0 0.0
  %3379 = vmatpush1.msra.mxu0 0.0
  %3380 = vmatprep.subr.mxu0 0.0
  %3381 = vmatpush1.msra.mxu0 0.0
  %3382 = vmatprep.subr.mxu0 0.0
  %3383 = vmatpush1.msra.mxu0 0.0
  %3384 = vmatprep.subr.mxu0 0.0
  %3385 = vmatpush1.msra.mxu0 0.0
  %3386 = vmatprep.subr.mxu0 0.0
  %3387 = vmatpush1.msra.mxu0 0.0
  %3388 = vmatprep.subr.mxu0 0.0
  %3389 = vmatpush1.msra.mxu0 0.0
  %3390 = vmatprep.subr.mxu0 0.0
  %3391 = vmatpush1.msra.mxu0 0.0
  %3392 = vmatprep.subr.mxu0 0.0
  %3393 = vmatpush1.msra.mxu0 0.0
  %3394 = vmatprep.subr.mxu0 0.0
  %3395 = vmatpush1.msra.mxu0 0.0
  %3396 = vmatprep.subr.mxu0 0.0
  %3397 = vmatpush1.msra.mxu0 0.0
  %3398 = vmatprep.subr.mxu0 0.0
  %3399 = vmatpush1.msra.mxu0 0.0
  %3400 = vmatprep.subr.mxu0 0.0
  %3401 = vmatpush1.msra.mxu0 0.0
  %3402 = vmatprep.subr.mxu0 0.0
  %3403 = vmatpush1.msra.mxu0 0.0
  %3404 = vmatprep.subr.mxu0 0.0
  %3405 = vmatpush1.msra.mxu0 0.0
  %3406 = vmatprep.subr.mxu0 0.0
  %3407 = vmatpush1.msra.mxu0 0.0
  %3408 = vmatprep.subr.mxu0 0.0
  %3409 = vmatpush1.msra.mxu0 0.0
  %3410 = vmatprep.subr.mxu0 0.0
  %3411 = vmatpush1.msra.mxu0 0.0
  %3412 = vmatprep.subr.mxu0 0.0
  %3413 = vmatpush1.msra.mxu0 0.0
  %3414 = vmatprep.subr.mxu0 0.0
  %3415 = vmatpush1.msra.mxu0 0.0
  %3416 = vmatprep.subr.mxu0 0.0
  %3417 = vmatpush1.msra.mxu0 0.0
  %3418 = vmatprep.subr.mxu0 0.0
  %3419 = vmatpush1.msra.mxu0 0.0
  %3420 = vmatprep.subr.mxu0 0.0
  %3421 = vmatpush1.msra.mxu0 0.0
  %3422 = vmatprep.subr.mxu0 0.0
  %3423 = vmatpush1.msra.mxu0 0.0
  %3424 = vmatprep.subr.mxu0 0.0
  %3425 = vmatpush1.msra.mxu0 0.0
  %3426 = vmatprep.subr.mxu0 0.0
  %3427 = vmatpush1.msra.mxu0 0.0
  %3428 = vmatprep.subr.mxu0 0.0
  %3429 = vmatpush1.msra.mxu0 0.0
  %3430 = vmatprep.subr.mxu0 0.0
  %3431 = vmatpush1.msra.mxu0 0.0
  %3432 = vmatprep.mubr.f32.mxu0 0.0
  %3433 = vmatmul.mubr.f32.gmra.mrb[0].mxu0 %v3366
  %v3434 = vpop.f32.mrb[0].mxu0
  %v3435 = vadd.f32 0.0, %v3434
  %v3436 = vpop.f32.mrb[0].mxu0
  %3437 = vdwg.mxu0
  %v3439 = vsel %vm1857, %v2924, 0
  %3441 = vmatprep.subr.mxu0 0.0
  %3442 = vmatpush1.msra.mxu0 %v1854
  %3443 = vmatprep.subr.mxu0 0.0
  %3444 = vmatpush1.msra.mxu0 0.0
  %3445 = vmatprep.subr.mxu0 0.0
  %3446 = vmatpush1.msra.mxu0 0.0
  %3447 = vmatprep.subr.mxu0 0.0
  %3448 = vmatpush1.msra.mxu0 0.0
  %3449 = vmatprep.subr.mxu0 0.0
  %3450 = vmatpush1.msra.mxu0 0.0
  %3451 = vmatprep.subr.mxu0 0.0
  %3452 = vmatpush1.msra.mxu0 0.0
  %3453 = vmatprep.subr.mxu0 0.0
  %3454 = vmatpush1.msra.mxu0 0.0
  %3455 = vmatprep.subr.mxu0 0.0
  %3456 = vmatpush1.msra.mxu0 0.0
  %3457 = vmatprep.subr.mxu0 0.0
  %3458 = vmatpush1.msra.mxu0 0.0
  %3459 = vmatprep.subr.mxu0 0.0
  %3460 = vmatpush1.msra.mxu0 0.0
  %3461 = vmatprep.subr.mxu0 0.0
  %3462 = vmatpush1.msra.mxu0 0.0
  %3463 = vmatprep.subr.mxu0 0.0
  %3464 = vmatpush1.msra.mxu0 0.0
  %3465 = vmatprep.subr.mxu0 0.0
  %3466 = vmatpush1.msra.mxu0 0.0
  %3467 = vmatprep.subr.mxu0 0.0
  %3468 = vmatpush1.msra.mxu0 0.0
  %3469 = vmatprep.subr.mxu0 0.0
  %3470 = vmatpush1.msra.mxu0 0.0
  %3471 = vmatprep.subr.mxu0 0.0
  %3472 = vmatpush1.msra.mxu0 0.0
  %3473 = vmatprep.subr.mxu0 0.0
  %3474 = vmatpush1.msra.mxu0 0.0
  %3475 = vmatprep.subr.mxu0 0.0
  %3476 = vmatpush1.msra.mxu0 0.0
  %3477 = vmatprep.subr.mxu0 0.0
  %3478 = vmatpush1.msra.mxu0 0.0
  %3479 = vmatprep.subr.mxu0 0.0
  %3480 = vmatpush1.msra.mxu0 0.0
  %3481 = vmatprep.subr.mxu0 0.0
  %3482 = vmatpush1.msra.mxu0 0.0
  %3483 = vmatprep.subr.mxu0 0.0
  %3484 = vmatpush1.msra.mxu0 0.0
  %3485 = vmatprep.subr.mxu0 0.0
  %3486 = vmatpush1.msra.mxu0 0.0
  %3487 = vmatprep.subr.mxu0 0.0
  %3488 = vmatpush1.msra.mxu0 0.0
  %3489 = vmatprep.subr.mxu0 0.0
  %3490 = vmatpush1.msra.mxu0 0.0
  %3491 = vmatprep.subr.mxu0 0.0
  %3492 = vmatpush1.msra.mxu0 0.0
  %3493 = vmatprep.subr.mxu0 0.0
  %3494 = vmatpush1.msra.mxu0 0.0
  %3495 = vmatprep.subr.mxu0 0.0
  %3496 = vmatpush1.msra.mxu0 0.0
  %3497 = vmatprep.subr.mxu0 0.0
  %3498 = vmatpush1.msra.mxu0 0.0
  %3499 = vmatprep.subr.mxu0 0.0
  %3500 = vmatpush1.msra.mxu0 0.0
  %3501 = vmatprep.subr.mxu0 0.0
  %3502 = vmatpush1.msra.mxu0 0.0
  %3503 = vmatprep.subr.mxu0 0.0
  %3504 = vmatpush1.msra.mxu0 0.0
  %3505 = vmatprep.mubr.f32.mxu0 0.0
  %3506 = vmatmul.mubr.f32.gmra.mrb[0].mxu0 %v3439
  %v3507 = vpop.f32.mrb[0].mxu0
  %v3508 = vadd.f32 0.0, %v3507
  %v3509 = vpop.f32.mrb[0].mxu0
  %3510 = vdwg.mxu0
  %v3512 = vsel %vm1857, %v2997, 0
  %3514 = vmatprep.subr.mxu0 0.0
  %3515 = vmatpush1.msra.mxu0 %v1854
  %3516 = vmatprep.subr.mxu0 0.0
  %3517 = vmatpush1.msra.mxu0 0.0
  %3518 = vmatprep.subr.mxu0 0.0
  %3519 = vmatpush1.msra.mxu0 0.0
  %3520 = vmatprep.subr.mxu0 0.0
  %3521 = vmatpush1.msra.mxu0 0.0
  %3522 = vmatprep.subr.mxu0 0.0
  %3523 = vmatpush1.msra.mxu0 0.0
  %3524 = vmatprep.subr.mxu0 0.0
  %3525 = vmatpush1.msra.mxu0 0.0
  %3526 = vmatprep.subr.mxu0 0.0
  %3527 = vmatpush1.msra.mxu0 0.0
  %3528 = vmatprep.subr.mxu0 0.0
  %3529 = vmatpush1.msra.mxu0 0.0
  %3530 = vmatprep.subr.mxu0 0.0
  %3531 = vmatpush1.msra.mxu0 0.0
  %3532 = vmatprep.subr.mxu0 0.0
  %3533 = vmatpush1.msra.mxu0 0.0
  %3534 = vmatprep.subr.mxu0 0.0
  %3535 = vmatpush1.msra.mxu0 0.0
  %3536 = vmatprep.subr.mxu0 0.0
  %3537 = vmatpush1.msra.mxu0 0.0
  %3538 = vmatprep.subr.mxu0 0.0
  %3539 = vmatpush1.msra.mxu0 0.0
  %3540 = vmatprep.subr.mxu0 0.0
  %3541 = vmatpush1.msra.mxu0 0.0
  %3542 = vmatprep.subr.mxu0 0.0
  %3543 = vmatpush1.msra.mxu0 0.0
  %3544 = vmatprep.subr.mxu0 0.0
  %3545 = vmatpush1.msra.mxu0 0.0
  %3546 = vmatprep.subr.mxu0 0.0
  %3547 = vmatpush1.msra.mxu0 0.0
  %3548 = vmatprep.subr.mxu0 0.0
  %3549 = vmatpush1.msra.mxu0 0.0
  %3550 = vmatprep.subr.mxu0 0.0
  %3551 = vmatpush1.msra.mxu0 0.0
  %3552 = vmatprep.subr.mxu0 0.0
  %3553 = vmatpush1.msra.mxu0 0.0
  %3554 = vmatprep.subr.mxu0 0.0
  %3555 = vmatpush1.msra.mxu0 0.0
  %3556 = vmatprep.subr.mxu0 0.0
  %3557 = vmatpush1.msra.mxu0 0.0
  %3558 = vmatprep.subr.mxu0 0.0
  %3559 = vmatpush1.msra.mxu0 0.0
  %3560 = vmatprep.subr.mxu0 0.0
  %3561 = vmatpush1.msra.mxu0 0.0
  %3562 = vmatprep.subr.mxu0 0.0
  %3563 = vmatpush1.msra.mxu0 0.0
  %3564 = vmatprep.subr.mxu0 0.0
  %3565 = vmatpush1.msra.mxu0 0.0
  %3566 = vmatprep.subr.mxu0 0.0
  %3567 = vmatpush1.msra.mxu0 0.0
  %3568 = vmatprep.subr.mxu0 0.0
  %3569 = vmatpush1.msra.mxu0 0.0
  %3570 = vmatprep.subr.mxu0 0.0
  %3571 = vmatpush1.msra.mxu0 0.0
  %3572 = vmatprep.subr.mxu0 0.0
  %3573 = vmatpush1.msra.mxu0 0.0
  %3574 = vmatprep.subr.mxu0 0.0
  %3575 = vmatpush1.msra.mxu0 0.0
  %3576 = vmatprep.subr.mxu0 0.0
  %3577 = vmatpush1.msra.mxu0 0.0
  %3578 = vmatprep.mubr.f32.mxu0 0.0
  %3579 = vmatmul.mubr.f32.gmra.mrb[0].mxu0 %v3512
  %v3580 = vpop.f32.mrb[0].mxu0
  %v3581 = vadd.f32 0.0, %v3580
  %v3582 = vpop.f32.mrb[0].mxu0
  %3583 = vdwg.mxu0
  %v3585 = vsel %vm1857, %v3070, 0
  %3587 = vmatprep.subr.mxu0 0.0
  %3588 = vmatpush1.msra.mxu0 %v1855
  %3589 = vmatprep.subr.mxu0 0.0
  %3590 = vmatpush1.msra.mxu0 0.0
  %3591 = vmatprep.subr.mxu0 0.0
  %3592 = vmatpush1.msra.mxu0 0.0
  %3593 = vmatprep.subr.mxu0 0.0
  %3594 = vmatpush1.msra.mxu0 0.0
  %3595 = vmatprep.subr.mxu0 0.0
  %3596 = vmatpush1.msra.mxu0 0.0
  %3597 = vmatprep.subr.mxu0 0.0
  %3598 = vmatpush1.msra.mxu0 0.0
  %3599 = vmatprep.subr.mxu0 0.0
  %3600 = vmatpush1.msra.mxu0 0.0
  %3601 = vmatprep.subr.mxu0 0.0
  %3602 = vmatpush1.msra.mxu0 0.0
  %3603 = vmatprep.subr.mxu0 0.0
  %3604 = vmatpush1.msra.mxu0 0.0
  %3605 = vmatprep.subr.mxu0 0.0
  %3606 = vmatpush1.msra.mxu0 0.0
  %3607 = vmatprep.subr.mxu0 0.0
  %3608 = vmatpush1.msra.mxu0 0.0
  %3609 = vmatprep.subr.mxu0 0.0
  %3610 = vmatpush1.msra.mxu0 0.0
  %3611 = vmatprep.subr.mxu0 0.0
  %3612 = vmatpush1.msra.mxu0 0.0
  %3613 = vmatprep.subr.mxu0 0.0
  %3614 = vmatpush1.msra.mxu0 0.0
  %3615 = vmatprep.subr.mxu0 0.0
  %3616 = vmatpush1.msra.mxu0 0.0
  %3617 = vmatprep.subr.mxu0 0.0
  %3618 = vmatpush1.msra.mxu0 0.0
  %3619 = vmatprep.subr.mxu0 0.0
  %3620 = vmatpush1.msra.mxu0 0.0
  %3621 = vmatprep.subr.mxu0 0.0
  %3622 = vmatpush1.msra.mxu0 0.0
  %3623 = vmatprep.subr.mxu0 0.0
  %3624 = vmatpush1.msra.mxu0 0.0
  %3625 = vmatprep.subr.mxu0 0.0
  %3626 = vmatpush1.msra.mxu0 0.0
  %3627 = vmatprep.subr.mxu0 0.0
  %3628 = vmatpush1.msra.mxu0 0.0
  %3629 = vmatprep.subr.mxu0 0.0
  %3630 = vmatpush1.msra.mxu0 0.0
  %3631 = vmatprep.subr.mxu0 0.0
  %3632 = vmatpush1.msra.mxu0 0.0
  %3633 = vmatprep.subr.mxu0 0.0
  %3634 = vmatpush1.msra.mxu0 0.0
  %3635 = vmatprep.subr.mxu0 0.0
  %3636 = vmatpush1.msra.mxu0 0.0
  %3637 = vmatprep.subr.mxu0 0.0
  %3638 = vmatpush1.msra.mxu0 0.0
  %3639 = vmatprep.subr.mxu0 0.0
  %3640 = vmatpush1.msra.mxu0 0.0
  %3641 = vmatprep.subr.mxu0 0.0
  %3642 = vmatpush1.msra.mxu0 0.0
  %3643 = vmatprep.subr.mxu0 0.0
  %3644 = vmatpush1.msra.mxu0 0.0
  %3645 = vmatprep.subr.mxu0 0.0
  %3646 = vmatpush1.msra.mxu0 0.0
  %3647 = vmatprep.subr.mxu0 0.0
  %3648 = vmatpush1.msra.mxu0 0.0
  %3649 = vmatprep.subr.mxu0 0.0
  %3650 = vmatpush1.msra.mxu0 0.0
  %3651 = vmatprep.mubr.f32.mxu0 0.0
  %3652 = vmatmul.mubr.f32.gmra.mrb[0].mxu0 %v3585
  %v3653 = vpop.f32.mrb[0].mxu0
  %v3654 = vadd.f32 0.0, %v3653
  %v3655 = vpop.f32.mrb[0].mxu0
  %3656 = vdwg.mxu0
  %v3658 = vsel %vm1857, %v3143, 0
  %3660 = vmatprep.subr.mxu0 0.0
  %3661 = vmatpush1.msra.mxu0 %v1855
  %3662 = vmatprep.subr.mxu0 0.0
  %3663 = vmatpush1.msra.mxu0 0.0
  %3664 = vmatprep.subr.mxu0 0.0
  %3665 = vmatpush1.msra.mxu0 0.0
  %3666 = vmatprep.subr.mxu0 0.0
  %3667 = vmatpush1.msra.mxu0 0.0
  %3668 = vmatprep.subr.mxu0 0.0
  %3669 = vmatpush1.msra.mxu0 0.0
  %3670 = vmatprep.subr.mxu0 0.0
  %3671 = vmatpush1.msra.mxu0 0.0
  %3672 = vmatprep.subr.mxu0 0.0
  %3673 = vmatpush1.msra.mxu0 0.0
  %3674 = vmatprep.subr.mxu0 0.0
  %3675 = vmatpush1.msra.mxu0 0.0
  %3676 = vmatprep.subr.mxu0 0.0
  %3677 = vmatpush1.msra.mxu0 0.0
  %3678 = vmatprep.subr.mxu0 0.0
  %3679 = vmatpush1.msra.mxu0 0.0
  %3680 = vmatprep.subr.mxu0 0.0
  %3681 = vmatpush1.msra.mxu0 0.0
  %3682 = vmatprep.subr.mxu0 0.0
  %3683 = vmatpush1.msra.mxu0 0.0
  %3684 = vmatprep.subr.mxu0 0.0
  %3685 = vmatpush1.msra.mxu0 0.0
  %3686 = vmatprep.subr.mxu0 0.0
  %3687 = vmatpush1.msra.mxu0 0.0
  %3688 = vmatprep.subr.mxu0 0.0
  %3689 = vmatpush1.msra.mxu0 0.0
  %3690 = vmatprep.subr.mxu0 0.0
  %3691 = vmatpush1.msra.mxu0 0.0
  %3692 = vmatprep.subr.mxu0 0.0
  %3693 = vmatpush1.msra.mxu0 0.0
  %3694 = vmatprep.subr.mxu0 0.0
  %3695 = vmatpush1.msra.mxu0 0.0
  %3696 = vmatprep.subr.mxu0 0.0
  %3697 = vmatpush1.msra.mxu0 0.0
  %3698 = vmatprep.subr.mxu0 0.0
  %3699 = vmatpush1.msra.mxu0 0.0
  %3700 = vmatprep.subr.mxu0 0.0
  %3701 = vmatpush1.msra.mxu0 0.0
  %3702 = vmatprep.subr.mxu0 0.0
  %3703 = vmatpush1.msra.mxu0 0.0
  %3704 = vmatprep.subr.mxu0 0.0
  %3705 = vmatpush1.msra.mxu0 0.0
  %3706 = vmatprep.subr.mxu0 0.0
  %3707 = vmatpush1.msra.mxu0 0.0
  %3708 = vmatprep.subr.mxu0 0.0
  %3709 = vmatpush1.msra.mxu0 0.0
  %3710 = vmatprep.subr.mxu0 0.0
  %3711 = vmatpush1.msra.mxu0 0.0
  %3712 = vmatprep.subr.mxu0 0.0
  %3713 = vmatpush1.msra.mxu0 0.0
  %3714 = vmatprep.subr.mxu0 0.0
  %3715 = vmatpush1.msra.mxu0 0.0
  %3716 = vmatprep.subr.mxu0 0.0
  %3717 = vmatpush1.msra.mxu0 0.0
  %3718 = vmatprep.subr.mxu0 0.0
  %3719 = vmatpush1.msra.mxu0 0.0
  %3720 = vmatprep.subr.mxu0 0.0
  %3721 = vmatpush1.msra.mxu0 0.0
  %3722 = vmatprep.subr.mxu0 0.0
  %3723 = vmatpush1.msra.mxu0 0.0
  %3724 = vmatprep.mubr.f32.mxu0 0.0
  %3725 = vmatmul.mubr.f32.gmra.mrb[0].mxu0 %v3658
  %v3726 = vpop.f32.mrb[0].mxu0
  %v3727 = vadd.f32 0.0, %v3726
  %v3728 = vpop.f32.mrb[0].mxu0
  %3729 = vdwg.mxu0
  %v3730 = vadd.f32 %v3216, %v3362
  %v3731 = vadd.f32 %v3289, %v3435
  %v3732 = vadd.f32 %v3730, %v3508
  %v3733 = vadd.f32 %v3731, %v3581
  %v3734 = vadd.f32 %v3732, %v3654
  %v3735 = vadd.f32 %v3733, %v3727
  %v3737 = vlaneseq
  %v3738 = vshrl.u32 %v3737, 7
  %v3739 = vsub.s32 0, %v3738
  %v3740 = vrot.slane %v1856, %v3739
  %v3742 = vadd.f32 %v3734, %v3740
  %v3743 = vadd.f32 %v3735, %v3740
  %v3744 = vadd.f32 %v62, %v3742
  %v3745 = vadd.f32 %v63, %v3743
  %v3746 = vld [vmem:[%s4] sm:$0x1]
  %v3747 = vld [vmem:[%s5] sm:$0x1]
  %v3748 = vsel %vm68, %v3744, 0.0
  %3749 = vadd.xlane.f32.xlu0 %v3748
  %v3750 = vpop.xlane.xlu0 %3749
  %v3751 = vsel %vm68, %v3745, 0.0
  %3752 = vadd.xlane.f32.xlu0 %v3751
  %v3753 = vpop.xlane.xlu0 %3752
  %v3754 = vmul.f32 %v3750, %v75
  %v3755 = vmul.f32 %v3753, %v75
  %v3756 = vsub.f32 %v3744, %v3754
  %v3757 = vsub.f32 %v3745, %v3755
  %v3758 = vmul.f32 %v3756, %v3756
  %v3759 = vmul.f32 %v3757, %v3757
  %v3760 = vsel %vm68, %v3758, 0.0
  %3761 = vadd.xlane.f32.xlu0 %v3760
  %v3762 = vpop.xlane.xlu0 %3761
  %v3763 = vsel %vm68, %v3759, 0.0
  %3764 = vadd.xlane.f32.xlu0 %v3763
  %v3765 = vpop.xlane.xlu0 %3764
  %v3766 = vmul.f32 %v3762, %v75
  %v3767 = vmul.f32 %v3765, %v75
  %v3768 = vadd.f32 %v3766, 1e-05
  %v3769 = vadd.f32 %v3767, 1e-05
  %v3770 = vrsqrt.pop %v3768
  %v3771 = vrsqrt.pop %v3769
  %v3772 = vmul.f32 %v3756, %v3770
  %v3773 = vmul.f32 %v3757, %v3771
  %v3775 = vlaneseq
  %v3776 = vshrl.u32 %v3775, 7
  %v3777 = vsub.s32 0, %v3776
  %v3778 = vrot.slane %v3746, %v3777
  %v3780 = vmul.f32 %v3772, %v3778
  %v3781 = vmul.f32 %v3773, %v3778
  %v3783 = vlaneseq
  %v3784 = vshrl.u32 %v3783, 7
  %v3785 = vsub.s32 0, %v3784
  %v3786 = vrot.slane %v3747, %v3785
  %v3788 = vadd.f32 %v3780, %v3786
  %v3789 = vadd.f32 %v3781, %v3786
  %v3790 = vld [vmem:[%s12] sm:$0xff]
  %v3791 = vld [vmem:[%s12 + $0x8] sm:$0xff]
  %v3792 = vld [vmem:[%s12 + $0x10] sm:$0xff]
  %v3793 = vld [vmem:[%s12 + $0x18] sm:$0xff]
  %v3794 = vld [vmem:[%s12 + $0x20] sm:$0xff]
  %v3795 = vld [vmem:[%s12 + $0x28] sm:$0xff]
  %v3796 = vld [vmem:[%s12 + $0x30] sm:$0xff]
  %v3797 = vld [vmem:[%s12 + $0x38] sm:$0xff]
  %v3798 = vld [vmem:[%s12 + $0x40] sm:$0xff]
  %v3799 = vld [vmem:[%s12 + $0x48] sm:$0xff]
  %v3800 = vld [vmem:[%s12 + $0x50] sm:$0xff]
  %v3801 = vld [vmem:[%s12 + $0x58] sm:$0xff]
  %v3802 = vld [vmem:[%s12 + $0x60] sm:$0xff]
  %v3803 = vld [vmem:[%s12 + $0x68] sm:$0xff]
  %v3804 = vld [vmem:[%s12 + $0x70] sm:$0xff]
  %v3805 = vld [vmem:[%s12 + $0x78] sm:$0xff]
  %v3806 = vld [vmem:[%s12 + $0x80] sm:$0xff]
  %v3807 = vld [vmem:[%s12 + $0x88] sm:$0xff]
  %v3808 = vld [vmem:[%s12 + $0x90] sm:$0xff]
  %v3809 = vld [vmem:[%s12 + $0x98] sm:$0xff]
  %v3810 = vld [vmem:[%s12 + $0xa0] sm:$0xff]
  %v3811 = vld [vmem:[%s12 + $0xa8] sm:$0xff]
  %v3812 = vld [vmem:[%s12 + $0xb0] sm:$0xff]
  %v3813 = vld [vmem:[%s12 + $0xb8] sm:$0xff]
  %v3814 = vld [vmem:[%s12 + $0xc0] sm:$0xff]
  %v3815 = vld [vmem:[%s12 + $0xc8] sm:$0xff]
  %v3816 = vld [vmem:[%s12 + $0xd0] sm:$0xff]
  %v3817 = vld [vmem:[%s12 + $0xd8] sm:$0xff]
  %v3818 = vld [vmem:[%s12 + $0xe0] sm:$0xff]
  %v3819 = vld [vmem:[%s12 + $0xe8] sm:$0xff]
  %v3820 = vld [vmem:[%s12 + $0xf0] sm:$0xff]
  %v3821 = vld [vmem:[%s12 + $0xf8] sm:$0xff]
  %v3822 = vld [vmem:[%s12 + $0x100] sm:$0xff]
  %v3823 = vld [vmem:[%s12 + $0x108] sm:$0xff]
  %v3824 = vld [vmem:[%s12 + $0x110] sm:$0xff]
  %v3825 = vld [vmem:[%s12 + $0x118] sm:$0xff]
  %v3826 = vld [vmem:[%s12 + $0x120] sm:$0xff]
  %v3827 = vld [vmem:[%s12 + $0x128] sm:$0xff]
  %v3828 = vld [vmem:[%s12 + $0x130] sm:$0xff]
  %v3829 = vld [vmem:[%s12 + $0x138] sm:$0xff]
  %v3830 = vld [vmem:[%s12 + $0x140] sm:$0xff]
  %v3831 = vld [vmem:[%s12 + $0x148] sm:$0xff]
  %v3832 = vld [vmem:[%s12 + $0x150] sm:$0xff]
  %v3833 = vld [vmem:[%s12 + $0x158] sm:$0xff]
  %v3834 = vld [vmem:[%s12 + $0x160] sm:$0xff]
  %v3835 = vld [vmem:[%s12 + $0x168] sm:$0xff]
  %v3836 = vld [vmem:[%s12 + $0x170] sm:$0xff]
  %v3837 = vld [vmem:[%s12 + $0x178] sm:$0xff]
  %v3839 = vsel %vm68, %v3788, 0
  %3841 = vmatprep.subr.mxu0 0.0
  %3842 = vmatpush1.msra.mxu0 %v3790
  %3843 = vmatprep.subr.mxu0 0.0
  %3844 = vmatpush1.msra.mxu0 %v3791
  %3845 = vmatprep.subr.mxu0 0.0
  %3846 = vmatpush1.msra.mxu0 %v3792
  %3847 = vmatprep.subr.mxu0 0.0
  %3848 = vmatpush1.msra.mxu0 %v3793
  %3849 = vmatprep.subr.mxu0 0.0
  %3850 = vmatpush1.msra.mxu0 0.0
  %3851 = vmatprep.subr.mxu0 0.0
  %3852 = vmatpush1.msra.mxu0 0.0
  %3853 = vmatprep.subr.mxu0 0.0
  %3854 = vmatpush1.msra.mxu0 0.0
  %3855 = vmatprep.subr.mxu0 0.0
  %3856 = vmatpush1.msra.mxu0 0.0
  %3857 = vmatprep.subr.mxu0 0.0
  %3858 = vmatpush1.msra.mxu0 0.0
  %3859 = vmatprep.subr.mxu0 0.0
  %3860 = vmatpush1.msra.mxu0 0.0
  %3861 = vmatprep.subr.mxu0 0.0
  %3862 = vmatpush1.msra.mxu0 0.0
  %3863 = vmatprep.subr.mxu0 0.0
  %3864 = vmatpush1.msra.mxu0 0.0
  %3865 = vmatprep.subr.mxu0 0.0
  %3866 = vmatpush1.msra.mxu0 0.0
  %3867 = vmatprep.subr.mxu0 0.0
  %3868 = vmatpush1.msra.mxu0 0.0
  %3869 = vmatprep.subr.mxu0 0.0
  %3870 = vmatpush1.msra.mxu0 0.0
  %3871 = vmatprep.subr.mxu0 0.0
  %3872 = vmatpush1.msra.mxu0 0.0
  %3873 = vmatprep.subr.mxu0 0.0
  %3874 = vmatpush1.msra.mxu0 0.0
  %3875 = vmatprep.subr.mxu0 0.0
  %3876 = vmatpush1.msra.mxu0 0.0
  %3877 = vmatprep.subr.mxu0 0.0
  %3878 = vmatpush1.msra.mxu0 0.0
  %3879 = vmatprep.subr.mxu0 0.0
  %3880 = vmatpush1.msra.mxu0 0.0
  %3881 = vmatprep.subr.mxu0 0.0
  %3882 = vmatpush1.msra.mxu0 0.0
  %3883 = vmatprep.subr.mxu0 0.0
  %3884 = vmatpush1.msra.mxu0 0.0
  %3885 = vmatprep.subr.mxu0 0.0
  %3886 = vmatpush1.msra.mxu0 0.0
  %3887 = vmatprep.subr.mxu0 0.0
  %3888 = vmatpush1.msra.mxu0 0.0
  %3889 = vmatprep.subr.mxu0 0.0
  %3890 = vmatpush1.msra.mxu0 0.0
  %3891 = vmatprep.subr.mxu0 0.0
  %3892 = vmatpush1.msra.mxu0 0.0
  %3893 = vmatprep.subr.mxu0 0.0
  %3894 = vmatpush1.msra.mxu0 0.0
  %3895 = vmatprep.subr.mxu0 0.0
  %3896 = vmatpush1.msra.mxu0 0.0
  %3897 = vmatprep.subr.mxu0 0.0
  %3898 = vmatpush1.msra.mxu0 0.0
  %3899 = vmatprep.subr.mxu0 0.0
  %3900 = vmatpush1.msra.mxu0 0.0
  %3901 = vmatprep.subr.mxu0 0.0
  %3902 = vmatpush1.msra.mxu0 0.0
  %3903 = vmatprep.subr.mxu0 0.0
  %3904 = vmatpush1.msra.mxu0 0.0
  %3905 = vmatprep.mubr.f32.mxu0 0.0
  %3906 = vmatmul.mubr.f32.gmra.mrb[0].mxu0 %v3839
  %v3907 = vpop.f32.mrb[0].mxu0
  %v3908 = vadd.f32 0.0, %v3907
  %v3909 = vpop.f32.mrb[0].mxu0
  %3910 = vdwg.mxu0
  %v3912 = vsel %vm68, %v3789, 0
  %3914 = vmatprep.subr.mxu0 0.0
  %3915 = vmatpush1.msra.mxu0 %v3790
  %3916 = vmatprep.subr.mxu0 0.0
  %3917 = vmatpush1.msra.mxu0 %v3791
  %3918 = vmatprep.subr.mxu0 0.0
  %3919 = vmatpush1.msra.mxu0 %v3792
  %3920 = vmatprep.subr.mxu0 0.0
  %3921 = vmatpush1.msra.mxu0 %v3793
  %3922 = vmatprep.subr.mxu0 0.0
  %3923 = vmatpush1.msra.mxu0 0.0
  %3924 = vmatprep.subr.mxu0 0.0
  %3925 = vmatpush1.msra.mxu0 0.0
  %3926 = vmatprep.subr.mxu0 0.0
  %3927 = vmatpush1.msra.mxu0 0.0
  %3928 = vmatprep.subr.mxu0 0.0
  %3929 = vmatpush1.msra.mxu0 0.0
  %3930 = vmatprep.subr.mxu0 0.0
  %3931 = vmatpush1.msra.mxu0 0.0
  %3932 = vmatprep.subr.mxu0 0.0
  %3933 = vmatpush1.msra.mxu0 0.0
  %3934 = vmatprep.subr.mxu0 0.0
  %3935 = vmatpush1.msra.mxu0 0.0
  %3936 = vmatprep.subr.mxu0 0.0
  %3937 = vmatpush1.msra.mxu0 0.0
  %3938 = vmatprep.subr.mxu0 0.0
  %3939 = vmatpush1.msra.mxu0 0.0
  %3940 = vmatprep.subr.mxu0 0.0
  %3941 = vmatpush1.msra.mxu0 0.0
  %3942 = vmatprep.subr.mxu0 0.0
  %3943 = vmatpush1.msra.mxu0 0.0
  %3944 = vmatprep.subr.mxu0 0.0
  %3945 = vmatpush1.msra.mxu0 0.0
  %3946 = vmatprep.subr.mxu0 0.0
  %3947 = vmatpush1.msra.mxu0 0.0
  %3948 = vmatprep.subr.mxu0 0.0
  %3949 = vmatpush1.msra.mxu0 0.0
  %3950 = vmatprep.subr.mxu0 0.0
  %3951 = vmatpush1.msra.mxu0 0.0
  %3952 = vmatprep.subr.mxu0 0.0
  %3953 = vmatpush1.msra.mxu0 0.0
  %3954 = vmatprep.subr.mxu0 0.0
  %3955 = vmatpush1.msra.mxu0 0.0
  %3956 = vmatprep.subr.mxu0 0.0
  %3957 = vmatpush1.msra.mxu0 0.0
  %3958 = vmatprep.subr.mxu0 0.0
  %3959 = vmatpush1.msra.mxu0 0.0
  %3960 = vmatprep.subr.mxu0 0.0
  %3961 = vmatpush1.msra.mxu0 0.0
  %3962 = vmatprep.subr.mxu0 0.0
  %3963 = vmatpush1.msra.mxu0 0.0
  %3964 = vmatprep.subr.mxu0 0.0
  %3965 = vmatpush1.msra.mxu0 0.0
  %3966 = vmatprep.subr.mxu0 0.0
  %3967 = vmatpush1.msra.mxu0 0.0
  %3968 = vmatprep.subr.mxu0 0.0
  %3969 = vmatpush1.msra.mxu0 0.0
  %3970 = vmatprep.subr.mxu0 0.0
  %3971 = vmatpush1.msra.mxu0 0.0
  %3972 = vmatprep.subr.mxu0 0.0
  %3973 = vmatpush1.msra.mxu0 0.0
  %3974 = vmatprep.subr.mxu0 0.0
  %3975 = vmatpush1.msra.mxu0 0.0
  %3976 = vmatprep.subr.mxu0 0.0
  %3977 = vmatpush1.msra.mxu0 0.0
  %3978 = vmatprep.mubr.f32.mxu0 0.0
  %3979 = vmatmul.mubr.f32.gmra.mrb[0].mxu0 %v3912
  %v3980 = vpop.f32.mrb[0].mxu0
  %v3981 = vadd.f32 0.0, %v3980
  %v3982 = vpop.f32.mrb[0].mxu0
  %3983 = vdwg.mxu0
  %3984 = vmatprep.subr.mxu0 0.0
  %3985 = vmatpush1.msra.mxu0 %v3794
  %3986 = vmatprep.subr.mxu0 0.0
  %3987 = vmatpush1.msra.mxu0 %v3795
  %3988 = vmatprep.subr.mxu0 0.0
  %3989 = vmatpush1.msra.mxu0 %v3796
  %3990 = vmatprep.subr.mxu0 0.0
  %3991 = vmatpush1.msra.mxu0 %v3797
  %3992 = vmatprep.subr.mxu0 0.0
  %3993 = vmatpush1.msra.mxu0 0.0
  %3994 = vmatprep.subr.mxu0 0.0
  %3995 = vmatpush1.msra.mxu0 0.0
  %3996 = vmatprep.subr.mxu0 0.0
  %3997 = vmatpush1.msra.mxu0 0.0
  %3998 = vmatprep.subr.mxu0 0.0
  %3999 = vmatpush1.msra.mxu0 0.0
  %4000 = vmatprep.subr.mxu0 0.0
  %4001 = vmatpush1.msra.mxu0 0.0
  %4002 = vmatprep.subr.mxu0 0.0
  %4003 = vmatpush1.msra.mxu0 0.0
  %4004 = vmatprep.subr.mxu0 0.0
  %4005 = vmatpush1.msra.mxu0 0.0
  %4006 = vmatprep.subr.mxu0 0.0
  %4007 = vmatpush1.msra.mxu0 0.0
  %4008 = vmatprep.subr.mxu0 0.0
  %4009 = vmatpush1.msra.mxu0 0.0
  %4010 = vmatprep.subr.mxu0 0.0
  %4011 = vmatpush1.msra.mxu0 0.0
  %4012 = vmatprep.subr.mxu0 0.0
  %4013 = vmatpush1.msra.mxu0 0.0
  %4014 = vmatprep.subr.mxu0 0.0
  %4015 = vmatpush1.msra.mxu0 0.0
  %4016 = vmatprep.subr.mxu0 0.0
  %4017 = vmatpush1.msra.mxu0 0.0
  %4018 = vmatprep.subr.mxu0 0.0
  %4019 = vmatpush1.msra.mxu0 0.0
  %4020 = vmatprep.subr.mxu0 0.0
  %4021 = vmatpush1.msra.mxu0 0.0
  %4022 = vmatprep.subr.mxu0 0.0
  %4023 = vmatpush1.msra.mxu0 0.0
  %4024 = vmatprep.subr.mxu0 0.0
  %4025 = vmatpush1.msra.mxu0 0.0
  %4026 = vmatprep.subr.mxu0 0.0
  %4027 = vmatpush1.msra.mxu0 0.0
  %4028 = vmatprep.subr.mxu0 0.0
  %4029 = vmatpush1.msra.mxu0 0.0
  %4030 = vmatprep.subr.mxu0 0.0
  %4031 = vmatpush1.msra.mxu0 0.0
  %4032 = vmatprep.subr.mxu0 0.0
  %4033 = vmatpush1.msra.mxu0 0.0
  %4034 = vmatprep.subr.mxu0 0.0
  %4035 = vmatpush1.msra.mxu0 0.0
  %4036 = vmatprep.subr.mxu0 0.0
  %4037 = vmatpush1.msra.mxu0 0.0
  %4038 = vmatprep.subr.mxu0 0.0
  %4039 = vmatpush1.msra.mxu0 0.0
  %4040 = vmatprep.subr.mxu0 0.0
  %4041 = vmatpush1.msra.mxu0 0.0
  %4042 = vmatprep.subr.mxu0 0.0
  %4043 = vmatpush1.msra.mxu0 0.0
  %4044 = vmatprep.subr.mxu0 0.0
  %4045 = vmatpush1.msra.mxu0 0.0
  %4046 = vmatprep.subr.mxu0 0.0
  %4047 = vmatpush1.msra.mxu0 0.0
  %4048 = vmatprep.mubr.f32.mxu0 0.0
  %4049 = vmatmul.mubr.f32.gmra.mrb[0].mxu0 %v3839
  %v4050 = vpop.f32.mrb[0].mxu0
  %v4051 = vadd.f32 0.0, %v4050
  %v4052 = vpop.f32.mrb[0].mxu0
  %4053 = vdwg.mxu0
  %4054 = vmatprep.subr.mxu0 0.0
  %4055 = vmatpush1.msra.mxu0 %v3794
  %4056 = vmatprep.subr.mxu0 0.0
  %4057 = vmatpush1.msra.mxu0 %v3795
  %4058 = vmatprep.subr.mxu0 0.0
  %4059 = vmatpush1.msra.mxu0 %v3796
  %4060 = vmatprep.subr.mxu0 0.0
  %4061 = vmatpush1.msra.mxu0 %v3797
  %4062 = vmatprep.subr.mxu0 0.0
  %4063 = vmatpush1.msra.mxu0 0.0
  %4064 = vmatprep.subr.mxu0 0.0
  %4065 = vmatpush1.msra.mxu0 0.0
  %4066 = vmatprep.subr.mxu0 0.0
  %4067 = vmatpush1.msra.mxu0 0.0
  %4068 = vmatprep.subr.mxu0 0.0
  %4069 = vmatpush1.msra.mxu0 0.0
  %4070 = vmatprep.subr.mxu0 0.0
  %4071 = vmatpush1.msra.mxu0 0.0
  %4072 = vmatprep.subr.mxu0 0.0
  %4073 = vmatpush1.msra.mxu0 0.0
  %4074 = vmatprep.subr.mxu0 0.0
  %4075 = vmatpush1.msra.mxu0 0.0
  %4076 = vmatprep.subr.mxu0 0.0
  %4077 = vmatpush1.msra.mxu0 0.0
  %4078 = vmatprep.subr.mxu0 0.0
  %4079 = vmatpush1.msra.mxu0 0.0
  %4080 = vmatprep.subr.mxu0 0.0
  %4081 = vmatpush1.msra.mxu0 0.0
  %4082 = vmatprep.subr.mxu0 0.0
  %4083 = vmatpush1.msra.mxu0 0.0
  %4084 = vmatprep.subr.mxu0 0.0
  %4085 = vmatpush1.msra.mxu0 0.0
  %4086 = vmatprep.subr.mxu0 0.0
  %4087 = vmatpush1.msra.mxu0 0.0
  %4088 = vmatprep.subr.mxu0 0.0
  %4089 = vmatpush1.msra.mxu0 0.0
  %4090 = vmatprep.subr.mxu0 0.0
  %4091 = vmatpush1.msra.mxu0 0.0
  %4092 = vmatprep.subr.mxu0 0.0
  %4093 = vmatpush1.msra.mxu0 0.0
  %4094 = vmatprep.subr.mxu0 0.0
  %4095 = vmatpush1.msra.mxu0 0.0
  %4096 = vmatprep.subr.mxu0 0.0
  %4097 = vmatpush1.msra.mxu0 0.0
  %4098 = vmatprep.subr.mxu0 0.0
  %4099 = vmatpush1.msra.mxu0 0.0
  %4100 = vmatprep.subr.mxu0 0.0
  %4101 = vmatpush1.msra.mxu0 0.0
  %4102 = vmatprep.subr.mxu0 0.0
  %4103 = vmatpush1.msra.mxu0 0.0
  %4104 = vmatprep.subr.mxu0 0.0
  %4105 = vmatpush1.msra.mxu0 0.0
  %4106 = vmatprep.subr.mxu0 0.0
  %4107 = vmatpush1.msra.mxu0 0.0
  %4108 = vmatprep.subr.mxu0 0.0
  %4109 = vmatpush1.msra.mxu0 0.0
  %4110 = vmatprep.subr.mxu0 0.0
  %4111 = vmatpush1.msra.mxu0 0.0
  %4112 = vmatprep.subr.mxu0 0.0
  %4113 = vmatpush1.msra.mxu0 0.0
  %4114 = vmatprep.subr.mxu0 0.0
  %4115 = vmatpush1.msra.mxu0 0.0
  %4116 = vmatprep.subr.mxu0 0.0
  %4117 = vmatpush1.msra.mxu0 0.0
  %4118 = vmatprep.mubr.f32.mxu0 0.0
  %4119 = vmatmul.mubr.f32.gmra.mrb[0].mxu0 %v3912
  %v4120 = vpop.f32.mrb[0].mxu0
  %v4121 = vadd.f32 0.0, %v4120
  %v4122 = vpop.f32.mrb[0].mxu0
  %4123 = vdwg.mxu0
  %4124 = vmatprep.subr.mxu0 0.0
  %4125 = vmatpush1.msra.mxu0 %v3798
  %4126 = vmatprep.subr.mxu0 0.0
  %4127 = vmatpush1.msra.mxu0 %v3799
  %4128 = vmatprep.subr.mxu0 0.0
  %4129 = vmatpush1.msra.mxu0 %v3800
  %4130 = vmatprep.subr.mxu0 0.0
  %4131 = vmatpush1.msra.mxu0 %v3801
  %4132 = vmatprep.subr.mxu0 0.0
  %4133 = vmatpush1.msra.mxu0 0.0
  %4134 = vmatprep.subr.mxu0 0.0
  %4135 = vmatpush1.msra.mxu0 0.0
  %4136 = vmatprep.subr.mxu0 0.0
  %4137 = vmatpush1.msra.mxu0 0.0
  %4138 = vmatprep.subr.mxu0 0.0
  %4139 = vmatpush1.msra.mxu0 0.0
  %4140 = vmatprep.subr.mxu0 0.0
  %4141 = vmatpush1.msra.mxu0 0.0
  %4142 = vmatprep.subr.mxu0 0.0
  %4143 = vmatpush1.msra.mxu0 0.0
  %4144 = vmatprep.subr.mxu0 0.0
  %4145 = vmatpush1.msra.mxu0 0.0
  %4146 = vmatprep.subr.mxu0 0.0
  %4147 = vmatpush1.msra.mxu0 0.0
  %4148 = vmatprep.subr.mxu0 0.0
  %4149 = vmatpush1.msra.mxu0 0.0
  %4150 = vmatprep.subr.mxu0 0.0
  %4151 = vmatpush1.msra.mxu0 0.0
  %4152 = vmatprep.subr.mxu0 0.0
  %4153 = vmatpush1.msra.mxu0 0.0
  %4154 = vmatprep.subr.mxu0 0.0
  %4155 = vmatpush1.msra.mxu0 0.0
  %4156 = vmatprep.subr.mxu0 0.0
  %4157 = vmatpush1.msra.mxu0 0.0
  %4158 = vmatprep.subr.mxu0 0.0
  %4159 = vmatpush1.msra.mxu0 0.0
  %4160 = vmatprep.subr.mxu0 0.0
  %4161 = vmatpush1.msra.mxu0 0.0
  %4162 = vmatprep.subr.mxu0 0.0
  %4163 = vmatpush1.msra.mxu0 0.0
  %4164 = vmatprep.subr.mxu0 0.0
  %4165 = vmatpush1.msra.mxu0 0.0
  %4166 = vmatprep.subr.mxu0 0.0
  %4167 = vmatpush1.msra.mxu0 0.0
  %4168 = vmatprep.subr.mxu0 0.0
  %4169 = vmatpush1.msra.mxu0 0.0
  %4170 = vmatprep.subr.mxu0 0.0
  %4171 = vmatpush1.msra.mxu0 0.0
  %4172 = vmatprep.subr.mxu0 0.0
  %4173 = vmatpush1.msra.mxu0 0.0
  %4174 = vmatprep.subr.mxu0 0.0
  %4175 = vmatpush1.msra.mxu0 0.0
  %4176 = vmatprep.subr.mxu0 0.0
  %4177 = vmatpush1.msra.mxu0 0.0
  %4178 = vmatprep.subr.mxu0 0.0
  %4179 = vmatpush1.msra.mxu0 0.0
  %4180 = vmatprep.subr.mxu0 0.0
  %4181 = vmatpush1.msra.mxu0 0.0
  %4182 = vmatprep.subr.mxu0 0.0
  %4183 = vmatpush1.msra.mxu0 0.0
  %4184 = vmatprep.subr.mxu0 0.0
  %4185 = vmatpush1.msra.mxu0 0.0
  %4186 = vmatprep.subr.mxu0 0.0
  %4187 = vmatpush1.msra.mxu0 0.0
  %4188 = vmatprep.mubr.f32.mxu0 0.0
  %4189 = vmatmul.mubr.f32.gmra.mrb[0].mxu0 %v3839
  %v4190 = vpop.f32.mrb[0].mxu0
  %v4191 = vadd.f32 0.0, %v4190
  %v4192 = vpop.f32.mrb[0].mxu0
  %4193 = vdwg.mxu0
  %4194 = vmatprep.subr.mxu0 0.0
  %4195 = vmatpush1.msra.mxu0 %v3798
  %4196 = vmatprep.subr.mxu0 0.0
  %4197 = vmatpush1.msra.mxu0 %v3799
  %4198 = vmatprep.subr.mxu0 0.0
  %4199 = vmatpush1.msra.mxu0 %v3800
  %4200 = vmatprep.subr.mxu0 0.0
  %4201 = vmatpush1.msra.mxu0 %v3801
  %4202 = vmatprep.subr.mxu0 0.0
  %4203 = vmatpush1.msra.mxu0 0.0
  %4204 = vmatprep.subr.mxu0 0.0
  %4205 = vmatpush1.msra.mxu0 0.0
  %4206 = vmatprep.subr.mxu0 0.0
  %4207 = vmatpush1.msra.mxu0 0.0
  %4208 = vmatprep.subr.mxu0 0.0
  %4209 = vmatpush1.msra.mxu0 0.0
  %4210 = vmatprep.subr.mxu0 0.0
  %4211 = vmatpush1.msra.mxu0 0.0
  %4212 = vmatprep.subr.mxu0 0.0
  %4213 = vmatpush1.msra.mxu0 0.0
  %4214 = vmatprep.subr.mxu0 0.0
  %4215 = vmatpush1.msra.mxu0 0.0
  %4216 = vmatprep.subr.mxu0 0.0
  %4217 = vmatpush1.msra.mxu0 0.0
  %4218 = vmatprep.subr.mxu0 0.0
  %4219 = vmatpush1.msra.mxu0 0.0
  %4220 = vmatprep.subr.mxu0 0.0
  %4221 = vmatpush1.msra.mxu0 0.0
  %4222 = vmatprep.subr.mxu0 0.0
  %4223 = vmatpush1.msra.mxu0 0.0
  %4224 = vmatprep.subr.mxu0 0.0
  %4225 = vmatpush1.msra.mxu0 0.0
  %4226 = vmatprep.subr.mxu0 0.0
  %4227 = vmatpush1.msra.mxu0 0.0
  %4228 = vmatprep.subr.mxu0 0.0
  %4229 = vmatpush1.msra.mxu0 0.0
  %4230 = vmatprep.subr.mxu0 0.0
  %4231 = vmatpush1.msra.mxu0 0.0
  %4232 = vmatprep.subr.mxu0 0.0
  %4233 = vmatpush1.msra.mxu0 0.0
  %4234 = vmatprep.subr.mxu0 0.0
  %4235 = vmatpush1.msra.mxu0 0.0
  %4236 = vmatprep.subr.mxu0 0.0
  %4237 = vmatpush1.msra.mxu0 0.0
  %4238 = vmatprep.subr.mxu0 0.0
  %4239 = vmatpush1.msra.mxu0 0.0
  %4240 = vmatprep.subr.mxu0 0.0
  %4241 = vmatpush1.msra.mxu0 0.0
  %4242 = vmatprep.subr.mxu0 0.0
  %4243 = vmatpush1.msra.mxu0 0.0
  %4244 = vmatprep.subr.mxu0 0.0
  %4245 = vmatpush1.msra.mxu0 0.0
  %4246 = vmatprep.subr.mxu0 0.0
  %4247 = vmatpush1.msra.mxu0 0.0
  %4248 = vmatprep.subr.mxu0 0.0
  %4249 = vmatpush1.msra.mxu0 0.0
  %4250 = vmatprep.subr.mxu0 0.0
  %4251 = vmatpush1.msra.mxu0 0.0
  %4252 = vmatprep.subr.mxu0 0.0
  %4253 = vmatpush1.msra.mxu0 0.0
  %4254 = vmatprep.subr.mxu0 0.0
  %4255 = vmatpush1.msra.mxu0 0.0
  %4256 = vmatprep.subr.mxu0 0.0
  %4257 = vmatpush1.msra.mxu0 0.0
  %4258 = vmatprep.mubr.f32.mxu0 0.0
  %4259 = vmatmul.mubr.f32.gmra.mrb[0].mxu0 %v3912
  %v4260 = vpop.f32.mrb[0].mxu0
  %v4261 = vadd.f32 0.0, %v4260
  %v4262 = vpop.f32.mrb[0].mxu0
  %4263 = vdwg.mxu0
  %4264 = vmatprep.subr.mxu0 0.0
  %4265 = vmatpush1.msra.mxu0 %v3802
  %4266 = vmatprep.subr.mxu0 0.0
  %4267 = vmatpush1.msra.mxu0 %v3803
  %4268 = vmatprep.subr.mxu0 0.0
  %4269 = vmatpush1.msra.mxu0 %v3804
  %4270 = vmatprep.subr.mxu0 0.0
  %4271 = vmatpush1.msra.mxu0 %v3805
  %4272 = vmatprep.subr.mxu0 0.0
  %4273 = vmatpush1.msra.mxu0 0.0
  %4274 = vmatprep.subr.mxu0 0.0
  %4275 = vmatpush1.msra.mxu0 0.0
  %4276 = vmatprep.subr.mxu0 0.0
  %4277 = vmatpush1.msra.mxu0 0.0
  %4278 = vmatprep.subr.mxu0 0.0
  %4279 = vmatpush1.msra.mxu0 0.0
  %4280 = vmatprep.subr.mxu0 0.0
  %4281 = vmatpush1.msra.mxu0 0.0
  %4282 = vmatprep.subr.mxu0 0.0
  %4283 = vmatpush1.msra.mxu0 0.0
  %4284 = vmatprep.subr.mxu0 0.0
  %4285 = vmatpush1.msra.mxu0 0.0
  %4286 = vmatprep.subr.mxu0 0.0
  %4287 = vmatpush1.msra.mxu0 0.0
  %4288 = vmatprep.subr.mxu0 0.0
  %4289 = vmatpush1.msra.mxu0 0.0
  %4290 = vmatprep.subr.mxu0 0.0
  %4291 = vmatpush1.msra.mxu0 0.0
  %4292 = vmatprep.subr.mxu0 0.0
  %4293 = vmatpush1.msra.mxu0 0.0
  %4294 = vmatprep.subr.mxu0 0.0
  %4295 = vmatpush1.msra.mxu0 0.0
  %4296 = vmatprep.subr.mxu0 0.0
  %4297 = vmatpush1.msra.mxu0 0.0
  %4298 = vmatprep.subr.mxu0 0.0
  %4299 = vmatpush1.msra.mxu0 0.0
  %4300 = vmatprep.subr.mxu0 0.0
  %4301 = vmatpush1.msra.mxu0 0.0
  %4302 = vmatprep.subr.mxu0 0.0
  %4303 = vmatpush1.msra.mxu0 0.0
  %4304 = vmatprep.subr.mxu0 0.0
  %4305 = vmatpush1.msra.mxu0 0.0
  %4306 = vmatprep.subr.mxu0 0.0
  %4307 = vmatpush1.msra.mxu0 0.0
  %4308 = vmatprep.subr.mxu0 0.0
  %4309 = vmatpush1.msra.mxu0 0.0
  %4310 = vmatprep.subr.mxu0 0.0
  %4311 = vmatpush1.msra.mxu0 0.0
  %4312 = vmatprep.subr.mxu0 0.0
  %4313 = vmatpush1.msra.mxu0 0.0
  %4314 = vmatprep.subr.mxu0 0.0
  %4315 = vmatpush1.msra.mxu0 0.0
  %4316 = vmatprep.subr.mxu0 0.0
  %4317 = vmatpush1.msra.mxu0 0.0
  %4318 = vmatprep.subr.mxu0 0.0
  %4319 = vmatpush1.msra.mxu0 0.0
  %4320 = vmatprep.subr.mxu0 0.0
  %4321 = vmatpush1.msra.mxu0 0.0
  %4322 = vmatprep.subr.mxu0 0.0
  %4323 = vmatpush1.msra.mxu0 0.0
  %4324 = vmatprep.subr.mxu0 0.0
  %4325 = vmatpush1.msra.mxu0 0.0
  %4326 = vmatprep.subr.mxu0 0.0
  %4327 = vmatpush1.msra.mxu0 0.0
  %4328 = vmatprep.mubr.f32.mxu0 0.0
  %4329 = vmatmul.mubr.f32.gmra.mrb[0].mxu0 %v3839
  %v4330 = vpop.f32.mrb[0].mxu0
  %v4331 = vadd.f32 0.0, %v4330
  %v4332 = vpop.f32.mrb[0].mxu0
  %4333 = vdwg.mxu0
  %4334 = vmatprep.subr.mxu0 0.0
  %4335 = vmatpush1.msra.mxu0 %v3802
  %4336 = vmatprep.subr.mxu0 0.0
  %4337 = vmatpush1.msra.mxu0 %v3803
  %4338 = vmatprep.subr.mxu0 0.0
  %4339 = vmatpush1.msra.mxu0 %v3804
  %4340 = vmatprep.subr.mxu0 0.0
  %4341 = vmatpush1.msra.mxu0 %v3805
  %4342 = vmatprep.subr.mxu0 0.0
  %4343 = vmatpush1.msra.mxu0 0.0
  %4344 = vmatprep.subr.mxu0 0.0
  %4345 = vmatpush1.msra.mxu0 0.0
  %4346 = vmatprep.subr.mxu0 0.0
  %4347 = vmatpush1.msra.mxu0 0.0
  %4348 = vmatprep.subr.mxu0 0.0
  %4349 = vmatpush1.msra.mxu0 0.0
  %4350 = vmatprep.subr.mxu0 0.0
  %4351 = vmatpush1.msra.mxu0 0.0
  %4352 = vmatprep.subr.mxu0 0.0
  %4353 = vmatpush1.msra.mxu0 0.0
  %4354 = vmatprep.subr.mxu0 0.0
  %4355 = vmatpush1.msra.mxu0 0.0
  %4356 = vmatprep.subr.mxu0 0.0
  %4357 = vmatpush1.msra.mxu0 0.0
  %4358 = vmatprep.subr.mxu0 0.0
  %4359 = vmatpush1.msra.mxu0 0.0
  %4360 = vmatprep.subr.mxu0 0.0
  %4361 = vmatpush1.msra.mxu0 0.0
  %4362 = vmatprep.subr.mxu0 0.0
  %4363 = vmatpush1.msra.mxu0 0.0
  %4364 = vmatprep.subr.mxu0 0.0
  %4365 = vmatpush1.msra.mxu0 0.0
  %4366 = vmatprep.subr.mxu0 0.0
  %4367 = vmatpush1.msra.mxu0 0.0
  %4368 = vmatprep.subr.mxu0 0.0
  %4369 = vmatpush1.msra.mxu0 0.0
  %4370 = vmatprep.subr.mxu0 0.0
  %4371 = vmatpush1.msra.mxu0 0.0
  %4372 = vmatprep.subr.mxu0 0.0
  %4373 = vmatpush1.msra.mxu0 0.0
  %4374 = vmatprep.subr.mxu0 0.0
  %4375 = vmatpush1.msra.mxu0 0.0
  %4376 = vmatprep.subr.mxu0 0.0
  %4377 = vmatpush1.msra.mxu0 0.0
  %4378 = vmatprep.subr.mxu0 0.0
  %4379 = vmatpush1.msra.mxu0 0.0
  %4380 = vmatprep.subr.mxu0 0.0
  %4381 = vmatpush1.msra.mxu0 0.0
  %4382 = vmatprep.subr.mxu0 0.0
  %4383 = vmatpush1.msra.mxu0 0.0
  %4384 = vmatprep.subr.mxu0 0.0
  %4385 = vmatpush1.msra.mxu0 0.0
  %4386 = vmatprep.subr.mxu0 0.0
  %4387 = vmatpush1.msra.mxu0 0.0
  %4388 = vmatprep.subr.mxu0 0.0
  %4389 = vmatpush1.msra.mxu0 0.0
  %4390 = vmatprep.subr.mxu0 0.0
  %4391 = vmatpush1.msra.mxu0 0.0
  %4392 = vmatprep.subr.mxu0 0.0
  %4393 = vmatpush1.msra.mxu0 0.0
  %4394 = vmatprep.subr.mxu0 0.0
  %4395 = vmatpush1.msra.mxu0 0.0
  %4396 = vmatprep.subr.mxu0 0.0
  %4397 = vmatpush1.msra.mxu0 0.0
  %4398 = vmatprep.mubr.f32.mxu0 0.0
  %4399 = vmatmul.mubr.f32.gmra.mrb[0].mxu0 %v3912
  %v4400 = vpop.f32.mrb[0].mxu0
  %v4401 = vadd.f32 0.0, %v4400
  %v4402 = vpop.f32.mrb[0].mxu0
  %4403 = vdwg.mxu0
  %4404 = vmatprep.subr.mxu0 0.0
  %4405 = vmatpush1.msra.mxu0 %v3806
  %4406 = vmatprep.subr.mxu0 0.0
  %4407 = vmatpush1.msra.mxu0 %v3807
  %4408 = vmatprep.subr.mxu0 0.0
  %4409 = vmatpush1.msra.mxu0 %v3808
  %4410 = vmatprep.subr.mxu0 0.0
  %4411 = vmatpush1.msra.mxu0 %v3809
  %4412 = vmatprep.subr.mxu0 0.0
  %4413 = vmatpush1.msra.mxu0 0.0
  %4414 = vmatprep.subr.mxu0 0.0
  %4415 = vmatpush1.msra.mxu0 0.0
  %4416 = vmatprep.subr.mxu0 0.0
  %4417 = vmatpush1.msra.mxu0 0.0
  %4418 = vmatprep.subr.mxu0 0.0
  %4419 = vmatpush1.msra.mxu0 0.0
  %4420 = vmatprep.subr.mxu0 0.0
  %4421 = vmatpush1.msra.mxu0 0.0
  %4422 = vmatprep.subr.mxu0 0.0
  %4423 = vmatpush1.msra.mxu0 0.0
  %4424 = vmatprep.subr.mxu0 0.0
  %4425 = vmatpush1.msra.mxu0 0.0
  %4426 = vmatprep.subr.mxu0 0.0
  %4427 = vmatpush1.msra.mxu0 0.0
  %4428 = vmatprep.subr.mxu0 0.0
  %4429 = vmatpush1.msra.mxu0 0.0
  %4430 = vmatprep.subr.mxu0 0.0
  %4431 = vmatpush1.msra.mxu0 0.0
  %4432 = vmatprep.subr.mxu0 0.0
  %4433 = vmatpush1.msra.mxu0 0.0
  %4434 = vmatprep.subr.mxu0 0.0
  %4435 = vmatpush1.msra.mxu0 0.0
  %4436 = vmatprep.subr.mxu0 0.0
  %4437 = vmatpush1.msra.mxu0 0.0
  %4438 = vmatprep.subr.mxu0 0.0
  %4439 = vmatpush1.msra.mxu0 0.0
  %4440 = vmatprep.subr.mxu0 0.0
  %4441 = vmatpush1.msra.mxu0 0.0
  %4442 = vmatprep.subr.mxu0 0.0
  %4443 = vmatpush1.msra.mxu0 0.0
  %4444 = vmatprep.subr.mxu0 0.0
  %4445 = vmatpush1.msra.mxu0 0.0
  %4446 = vmatprep.subr.mxu0 0.0
  %4447 = vmatpush1.msra.mxu0 0.0
  %4448 = vmatprep.subr.mxu0 0.0
  %4449 = vmatpush1.msra.mxu0 0.0
  %4450 = vmatprep.subr.mxu0 0.0
  %4451 = vmatpush1.msra.mxu0 0.0
  %4452 = vmatprep.subr.mxu0 0.0
  %4453 = vmatpush1.msra.mxu0 0.0
  %4454 = vmatprep.subr.mxu0 0.0
  %4455 = vmatpush1.msra.mxu0 0.0
  %4456 = vmatprep.subr.mxu0 0.0
  %4457 = vmatpush1.msra.mxu0 0.0
  %4458 = vmatprep.subr.mxu0 0.0
  %4459 = vmatpush1.msra.mxu0 0.0
  %4460 = vmatprep.subr.mxu0 0.0
  %4461 = vmatpush1.msra.mxu0 0.0
  %4462 = vmatprep.subr.mxu0 0.0
  %4463 = vmatpush1.msra.mxu0 0.0
  %4464 = vmatprep.subr.mxu0 0.0
  %4465 = vmatpush1.msra.mxu0 0.0
  %4466 = vmatprep.subr.mxu0 0.0
  %4467 = vmatpush1.msra.mxu0 0.0
  %4468 = vmatprep.mubr.f32.mxu0 0.0
  %4469 = vmatmul.mubr.f32.gmra.mrb[0].mxu0 %v3839
  %v4470 = vpop.f32.mrb[0].mxu0
  %v4471 = vadd.f32 0.0, %v4470
  %v4472 = vpop.f32.mrb[0].mxu0
  %4473 = vdwg.mxu0
  %4474 = vmatprep.subr.mxu0 0.0
  %4475 = vmatpush1.msra.mxu0 %v3806
  %4476 = vmatprep.subr.mxu0 0.0
  %4477 = vmatpush1.msra.mxu0 %v3807
  %4478 = vmatprep.subr.mxu0 0.0
  %4479 = vmatpush1.msra.mxu0 %v3808
  %4480 = vmatprep.subr.mxu0 0.0
  %4481 = vmatpush1.msra.mxu0 %v3809
  %4482 = vmatprep.subr.mxu0 0.0
  %4483 = vmatpush1.msra.mxu0 0.0
  %4484 = vmatprep.subr.mxu0 0.0
  %4485 = vmatpush1.msra.mxu0 0.0
  %4486 = vmatprep.subr.mxu0 0.0
  %4487 = vmatpush1.msra.mxu0 0.0
  %4488 = vmatprep.subr.mxu0 0.0
  %4489 = vmatpush1.msra.mxu0 0.0
  %4490 = vmatprep.subr.mxu0 0.0
  %4491 = vmatpush1.msra.mxu0 0.0
  %4492 = vmatprep.subr.mxu0 0.0
  %4493 = vmatpush1.msra.mxu0 0.0
  %4494 = vmatprep.subr.mxu0 0.0
  %4495 = vmatpush1.msra.mxu0 0.0
  %4496 = vmatprep.subr.mxu0 0.0
  %4497 = vmatpush1.msra.mxu0 0.0
  %4498 = vmatprep.subr.mxu0 0.0
  %4499 = vmatpush1.msra.mxu0 0.0
  %4500 = vmatprep.subr.mxu0 0.0
  %4501 = vmatpush1.msra.mxu0 0.0
  %4502 = vmatprep.subr.mxu0 0.0
  %4503 = vmatpush1.msra.mxu0 0.0
  %4504 = vmatprep.subr.mxu0 0.0
  %4505 = vmatpush1.msra.mxu0 0.0
  %4506 = vmatprep.subr.mxu0 0.0
  %4507 = vmatpush1.msra.mxu0 0.0
  %4508 = vmatprep.subr.mxu0 0.0
  %4509 = vmatpush1.msra.mxu0 0.0
  %4510 = vmatprep.subr.mxu0 0.0
  %4511 = vmatpush1.msra.mxu0 0.0
  %4512 = vmatprep.subr.mxu0 0.0
  %4513 = vmatpush1.msra.mxu0 0.0
  %4514 = vmatprep.subr.mxu0 0.0
  %4515 = vmatpush1.msra.mxu0 0.0
  %4516 = vmatprep.subr.mxu0 0.0
  %4517 = vmatpush1.msra.mxu0 0.0
  %4518 = vmatprep.subr.mxu0 0.0
  %4519 = vmatpush1.msra.mxu0 0.0
  %4520 = vmatprep.subr.mxu0 0.0
  %4521 = vmatpush1.msra.mxu0 0.0
  %4522 = vmatprep.subr.mxu0 0.0
  %4523 = vmatpush1.msra.mxu0 0.0
  %4524 = vmatprep.subr.mxu0 0.0
  %4525 = vmatpush1.msra.mxu0 0.0
  %4526 = vmatprep.subr.mxu0 0.0
  %4527 = vmatpush1.msra.mxu0 0.0
  %4528 = vmatprep.subr.mxu0 0.0
  %4529 = vmatpush1.msra.mxu0 0.0
  %4530 = vmatprep.subr.mxu0 0.0
  %4531 = vmatpush1.msra.mxu0 0.0
  %4532 = vmatprep.subr.mxu0 0.0
  %4533 = vmatpush1.msra.mxu0 0.0
  %4534 = vmatprep.subr.mxu0 0.0
  %4535 = vmatpush1.msra.mxu0 0.0
  %4536 = vmatprep.subr.mxu0 0.0
  %4537 = vmatpush1.msra.mxu0 0.0
  %4538 = vmatprep.mubr.f32.mxu0 0.0
  %4539 = vmatmul.mubr.f32.gmra.mrb[0].mxu0 %v3912
  %v4540 = vpop.f32.mrb[0].mxu0
  %v4541 = vadd.f32 0.0, %v4540
  %v4542 = vpop.f32.mrb[0].mxu0
  %4543 = vdwg.mxu0
  %4544 = vmatprep.subr.mxu0 0.0
  %4545 = vmatpush1.msra.mxu0 %v3810
  %4546 = vmatprep.subr.mxu0 0.0
  %4547 = vmatpush1.msra.mxu0 %v3811
  %4548 = vmatprep.subr.mxu0 0.0
  %4549 = vmatpush1.msra.mxu0 %v3812
  %4550 = vmatprep.subr.mxu0 0.0
  %4551 = vmatpush1.msra.mxu0 %v3813
  %4552 = vmatprep.subr.mxu0 0.0
  %4553 = vmatpush1.msra.mxu0 0.0
  %4554 = vmatprep.subr.mxu0 0.0
  %4555 = vmatpush1.msra.mxu0 0.0
  %4556 = vmatprep.subr.mxu0 0.0
  %4557 = vmatpush1.msra.mxu0 0.0
  %4558 = vmatprep.subr.mxu0 0.0
  %4559 = vmatpush1.msra.mxu0 0.0
  %4560 = vmatprep.subr.mxu0 0.0
  %4561 = vmatpush1.msra.mxu0 0.0
  %4562 = vmatprep.subr.mxu0 0.0
  %4563 = vmatpush1.msra.mxu0 0.0
  %4564 = vmatprep.subr.mxu0 0.0
  %4565 = vmatpush1.msra.mxu0 0.0
  %4566 = vmatprep.subr.mxu0 0.0
  %4567 = vmatpush1.msra.mxu0 0.0
  %4568 = vmatprep.subr.mxu0 0.0
  %4569 = vmatpush1.msra.mxu0 0.0
  %4570 = vmatprep.subr.mxu0 0.0
  %4571 = vmatpush1.msra.mxu0 0.0
  %4572 = vmatprep.subr.mxu0 0.0
  %4573 = vmatpush1.msra.mxu0 0.0
  %4574 = vmatprep.subr.mxu0 0.0
  %4575 = vmatpush1.msra.mxu0 0.0
  %4576 = vmatprep.subr.mxu0 0.0
  %4577 = vmatpush1.msra.mxu0 0.0
  %4578 = vmatprep.subr.mxu0 0.0
  %4579 = vmatpush1.msra.mxu0 0.0
  %4580 = vmatprep.subr.mxu0 0.0
  %4581 = vmatpush1.msra.mxu0 0.0
  %4582 = vmatprep.subr.mxu0 0.0
  %4583 = vmatpush1.msra.mxu0 0.0
  %4584 = vmatprep.subr.mxu0 0.0
  %4585 = vmatpush1.msra.mxu0 0.0
  %4586 = vmatprep.subr.mxu0 0.0
  %4587 = vmatpush1.msra.mxu0 0.0
  %4588 = vmatprep.subr.mxu0 0.0
  %4589 = vmatpush1.msra.mxu0 0.0
  %4590 = vmatprep.subr.mxu0 0.0
  %4591 = vmatpush1.msra.mxu0 0.0
  %4592 = vmatprep.subr.mxu0 0.0
  %4593 = vmatpush1.msra.mxu0 0.0
  %4594 = vmatprep.subr.mxu0 0.0
  %4595 = vmatpush1.msra.mxu0 0.0
  %4596 = vmatprep.subr.mxu0 0.0
  %4597 = vmatpush1.msra.mxu0 0.0
  %4598 = vmatprep.subr.mxu0 0.0
  %4599 = vmatpush1.msra.mxu0 0.0
  %4600 = vmatprep.subr.mxu0 0.0
  %4601 = vmatpush1.msra.mxu0 0.0
  %4602 = vmatprep.subr.mxu0 0.0
  %4603 = vmatpush1.msra.mxu0 0.0
  %4604 = vmatprep.subr.mxu0 0.0
  %4605 = vmatpush1.msra.mxu0 0.0
  %4606 = vmatprep.subr.mxu0 0.0
  %4607 = vmatpush1.msra.mxu0 0.0
  %4608 = vmatprep.mubr.f32.mxu0 0.0
  %4609 = vmatmul.mubr.f32.gmra.mrb[0].mxu0 %v3839
  %v4610 = vpop.f32.mrb[0].mxu0
  %v4611 = vadd.f32 0.0, %v4610
  %v4612 = vpop.f32.mrb[0].mxu0
  %4613 = vdwg.mxu0
  %4614 = vmatprep.subr.mxu0 0.0
  %4615 = vmatpush1.msra.mxu0 %v3810
  %4616 = vmatprep.subr.mxu0 0.0
  %4617 = vmatpush1.msra.mxu0 %v3811
  %4618 = vmatprep.subr.mxu0 0.0
  %4619 = vmatpush1.msra.mxu0 %v3812
  %4620 = vmatprep.subr.mxu0 0.0
  %4621 = vmatpush1.msra.mxu0 %v3813
  %4622 = vmatprep.subr.mxu0 0.0
  %4623 = vmatpush1.msra.mxu0 0.0
  %4624 = vmatprep.subr.mxu0 0.0
  %4625 = vmatpush1.msra.mxu0 0.0
  %4626 = vmatprep.subr.mxu0 0.0
  %4627 = vmatpush1.msra.mxu0 0.0
  %4628 = vmatprep.subr.mxu0 0.0
  %4629 = vmatpush1.msra.mxu0 0.0
  %4630 = vmatprep.subr.mxu0 0.0
  %4631 = vmatpush1.msra.mxu0 0.0
  %4632 = vmatprep.subr.mxu0 0.0
  %4633 = vmatpush1.msra.mxu0 0.0
  %4634 = vmatprep.subr.mxu0 0.0
  %4635 = vmatpush1.msra.mxu0 0.0
  %4636 = vmatprep.subr.mxu0 0.0
  %4637 = vmatpush1.msra.mxu0 0.0
  %4638 = vmatprep.subr.mxu0 0.0
  %4639 = vmatpush1.msra.mxu0 0.0
  %4640 = vmatprep.subr.mxu0 0.0
  %4641 = vmatpush1.msra.mxu0 0.0
  %4642 = vmatprep.subr.mxu0 0.0
  %4643 = vmatpush1.msra.mxu0 0.0
  %4644 = vmatprep.subr.mxu0 0.0
  %4645 = vmatpush1.msra.mxu0 0.0
  %4646 = vmatprep.subr.mxu0 0.0
  %4647 = vmatpush1.msra.mxu0 0.0
  %4648 = vmatprep.subr.mxu0 0.0
  %4649 = vmatpush1.msra.mxu0 0.0
  %4650 = vmatprep.subr.mxu0 0.0
  %4651 = vmatpush1.msra.mxu0 0.0
  %4652 = vmatprep.subr.mxu0 0.0
  %4653 = vmatpush1.msra.mxu0 0.0
  %4654 = vmatprep.subr.mxu0 0.0
  %4655 = vmatpush1.msra.mxu0 0.0
  %4656 = vmatprep.subr.mxu0 0.0
  %4657 = vmatpush1.msra.mxu0 0.0
  %4658 = vmatprep.subr.mxu0 0.0
  %4659 = vmatpush1.msra.mxu0 0.0
  %4660 = vmatprep.subr.mxu0 0.0
  %4661 = vmatpush1.msra.mxu0 0.0
  %4662 = vmatprep.subr.mxu0 0.0
  %4663 = vmatpush1.msra.mxu0 0.0
  %4664 = vmatprep.subr.mxu0 0.0
  %4665 = vmatpush1.msra.mxu0 0.0
  %4666 = vmatprep.subr.mxu0 0.0
  %4667 = vmatpush1.msra.mxu0 0.0
  %4668 = vmatprep.subr.mxu0 0.0
  %4669 = vmatpush1.msra.mxu0 0.0
  %4670 = vmatprep.subr.mxu0 0.0
  %4671 = vmatpush1.msra.mxu0 0.0
  %4672 = vmatprep.subr.mxu0 0.0
  %4673 = vmatpush1.msra.mxu0 0.0
  %4674 = vmatprep.subr.mxu0 0.0
  %4675 = vmatpush1.msra.mxu0 0.0
  %4676 = vmatprep.subr.mxu0 0.0
  %4677 = vmatpush1.msra.mxu0 0.0
  %4678 = vmatprep.mubr.f32.mxu0 0.0
  %4679 = vmatmul.mubr.f32.gmra.mrb[0].mxu0 %v3912
  %v4680 = vpop.f32.mrb[0].mxu0
  %v4681 = vadd.f32 0.0, %v4680
  %v4682 = vpop.f32.mrb[0].mxu0
  %4683 = vdwg.mxu0
  %4684 = vmatprep.subr.mxu0 0.0
  %4685 = vmatpush1.msra.mxu0 %v3814
  %4686 = vmatprep.subr.mxu0 0.0
  %4687 = vmatpush1.msra.mxu0 %v3815
  %4688 = vmatprep.subr.mxu0 0.0
  %4689 = vmatpush1.msra.mxu0 %v3816
  %4690 = vmatprep.subr.mxu0 0.0
  %4691 = vmatpush1.msra.mxu0 %v3817
  %4692 = vmatprep.subr.mxu0 0.0
  %4693 = vmatpush1.msra.mxu0 0.0
  %4694 = vmatprep.subr.mxu0 0.0
  %4695 = vmatpush1.msra.mxu0 0.0
  %4696 = vmatprep.subr.mxu0 0.0
  %4697 = vmatpush1.msra.mxu0 0.0
  %4698 = vmatprep.subr.mxu0 0.0
  %4699 = vmatpush1.msra.mxu0 0.0
  %4700 = vmatprep.subr.mxu0 0.0
  %4701 = vmatpush1.msra.mxu0 0.0
  %4702 = vmatprep.subr.mxu0 0.0
  %4703 = vmatpush1.msra.mxu0 0.0
  %4704 = vmatprep.subr.mxu0 0.0
  %4705 = vmatpush1.msra.mxu0 0.0
  %4706 = vmatprep.subr.mxu0 0.0
  %4707 = vmatpush1.msra.mxu0 0.0
  %4708 = vmatprep.subr.mxu0 0.0
  %4709 = vmatpush1.msra.mxu0 0.0
  %4710 = vmatprep.subr.mxu0 0.0
  %4711 = vmatpush1.msra.mxu0 0.0
  %4712 = vmatprep.subr.mxu0 0.0
  %4713 = vmatpush1.msra.mxu0 0.0
  %4714 = vmatprep.subr.mxu0 0.0
  %4715 = vmatpush1.msra.mxu0 0.0
  %4716 = vmatprep.subr.mxu0 0.0
  %4717 = vmatpush1.msra.mxu0 0.0
  %4718 = vmatprep.subr.mxu0 0.0
  %4719 = vmatpush1.msra.mxu0 0.0
  %4720 = vmatprep.subr.mxu0 0.0
  %4721 = vmatpush1.msra.mxu0 0.0
  %4722 = vmatprep.subr.mxu0 0.0
  %4723 = vmatpush1.msra.mxu0 0.0
  %4724 = vmatprep.subr.mxu0 0.0
  %4725 = vmatpush1.msra.mxu0 0.0
  %4726 = vmatprep.subr.mxu0 0.0
  %4727 = vmatpush1.msra.mxu0 0.0
  %4728 = vmatprep.subr.mxu0 0.0
  %4729 = vmatpush1.msra.mxu0 0.0
  %4730 = vmatprep.subr.mxu0 0.0
  %4731 = vmatpush1.msra.mxu0 0.0
  %4732 = vmatprep.subr.mxu0 0.0
  %4733 = vmatpush1.msra.mxu0 0.0
  %4734 = vmatprep.subr.mxu0 0.0
  %4735 = vmatpush1.msra.mxu0 0.0
  %4736 = vmatprep.subr.mxu0 0.0
  %4737 = vmatpush1.msra.mxu0 0.0
  %4738 = vmatprep.subr.mxu0 0.0
  %4739 = vmatpush1.msra.mxu0 0.0
  %4740 = vmatprep.subr.mxu0 0.0
  %4741 = vmatpush1.msra.mxu0 0.0
  %4742 = vmatprep.subr.mxu0 0.0
  %4743 = vmatpush1.msra.mxu0 0.0
  %4744 = vmatprep.subr.mxu0 0.0
  %4745 = vmatpush1.msra.mxu0 0.0
  %4746 = vmatprep.subr.mxu0 0.0
  %4747 = vmatpush1.msra.mxu0 0.0
  %4748 = vmatprep.mubr.f32.mxu0 0.0
  %4749 = vmatmul.mubr.f32.gmra.mrb[0].mxu0 %v3839
  %v4750 = vpop.f32.mrb[0].mxu0
  %v4751 = vadd.f32 0.0, %v4750
  %v4752 = vpop.f32.mrb[0].mxu0
  %4753 = vdwg.mxu0
  %4754 = vmatprep.subr.mxu0 0.0
  %4755 = vmatpush1.msra.mxu0 %v3814
  %4756 = vmatprep.subr.mxu0 0.0
  %4757 = vmatpush1.msra.mxu0 %v3815
  %4758 = vmatprep.subr.mxu0 0.0
  %4759 = vmatpush1.msra.mxu0 %v3816
  %4760 = vmatprep.subr.mxu0 0.0
  %4761 = vmatpush1.msra.mxu0 %v3817
  %4762 = vmatprep.subr.mxu0 0.0
  %4763 = vmatpush1.msra.mxu0 0.0
  %4764 = vmatprep.subr.mxu0 0.0
  %4765 = vmatpush1.msra.mxu0 0.0
  %4766 = vmatprep.subr.mxu0 0.0
  %4767 = vmatpush1.msra.mxu0 0.0
  %4768 = vmatprep.subr.mxu0 0.0
  %4769 = vmatpush1.msra.mxu0 0.0
  %4770 = vmatprep.subr.mxu0 0.0
  %4771 = vmatpush1.msra.mxu0 0.0
  %4772 = vmatprep.subr.mxu0 0.0
  %4773 = vmatpush1.msra.mxu0 0.0
  %4774 = vmatprep.subr.mxu0 0.0
  %4775 = vmatpush1.msra.mxu0 0.0
  %4776 = vmatprep.subr.mxu0 0.0
  %4777 = vmatpush1.msra.mxu0 0.0
  %4778 = vmatprep.subr.mxu0 0.0
  %4779 = vmatpush1.msra.mxu0 0.0
  %4780 = vmatprep.subr.mxu0 0.0
  %4781 = vmatpush1.msra.mxu0 0.0
  %4782 = vmatprep.subr.mxu0 0.0
  %4783 = vmatpush1.msra.mxu0 0.0
  %4784 = vmatprep.subr.mxu0 0.0
  %4785 = vmatpush1.msra.mxu0 0.0
  %4786 = vmatprep.subr.mxu0 0.0
  %4787 = vmatpush1.msra.mxu0 0.0
  %4788 = vmatprep.subr.mxu0 0.0
  %4789 = vmatpush1.msra.mxu0 0.0
  %4790 = vmatprep.subr.mxu0 0.0
  %4791 = vmatpush1.msra.mxu0 0.0
  %4792 = vmatprep.subr.mxu0 0.0
  %4793 = vmatpush1.msra.mxu0 0.0
  %4794 = vmatprep.subr.mxu0 0.0
  %4795 = vmatpush1.msra.mxu0 0.0
  %4796 = vmatprep.subr.mxu0 0.0
  %4797 = vmatpush1.msra.mxu0 0.0
  %4798 = vmatprep.subr.mxu0 0.0
  %4799 = vmatpush1.msra.mxu0 0.0
  %4800 = vmatprep.subr.mxu0 0.0
  %4801 = vmatpush1.msra.mxu0 0.0
  %4802 = vmatprep.subr.mxu0 0.0
  %4803 = vmatpush1.msra.mxu0 0.0
  %4804 = vmatprep.subr.mxu0 0.0
  %4805 = vmatpush1.msra.mxu0 0.0
  %4806 = vmatprep.subr.mxu0 0.0
  %4807 = vmatpush1.msra.mxu0 0.0
  %4808 = vmatprep.subr.mxu0 0.0
  %4809 = vmatpush1.msra.mxu0 0.0
  %4810 = vmatprep.subr.mxu0 0.0
  %4811 = vmatpush1.msra.mxu0 0.0
  %4812 = vmatprep.subr.mxu0 0.0
  %4813 = vmatpush1.msra.mxu0 0.0
  %4814 = vmatprep.subr.mxu0 0.0
  %4815 = vmatpush1.msra.mxu0 0.0
  %4816 = vmatprep.subr.mxu0 0.0
  %4817 = vmatpush1.msra.mxu0 0.0
  %4818 = vmatprep.mubr.f32.mxu0 0.0
  %4819 = vmatmul.mubr.f32.gmra.mrb[0].mxu0 %v3912
  %v4820 = vpop.f32.mrb[0].mxu0
  %v4821 = vadd.f32 0.0, %v4820
  %v4822 = vpop.f32.mrb[0].mxu0
  %4823 = vdwg.mxu0
  %4824 = vmatprep.subr.mxu0 0.0
  %4825 = vmatpush1.msra.mxu0 %v3818
  %4826 = vmatprep.subr.mxu0 0.0
  %4827 = vmatpush1.msra.mxu0 %v3819
  %4828 = vmatprep.subr.mxu0 0.0
  %4829 = vmatpush1.msra.mxu0 %v3820
  %4830 = vmatprep.subr.mxu0 0.0
  %4831 = vmatpush1.msra.mxu0 %v3821
  %4832 = vmatprep.subr.mxu0 0.0
  %4833 = vmatpush1.msra.mxu0 0.0
  %4834 = vmatprep.subr.mxu0 0.0
  %4835 = vmatpush1.msra.mxu0 0.0
  %4836 = vmatprep.subr.mxu0 0.0
  %4837 = vmatpush1.msra.mxu0 0.0
  %4838 = vmatprep.subr.mxu0 0.0
  %4839 = vmatpush1.msra.mxu0 0.0
  %4840 = vmatprep.subr.mxu0 0.0
  %4841 = vmatpush1.msra.mxu0 0.0
  %4842 = vmatprep.subr.mxu0 0.0
  %4843 = vmatpush1.msra.mxu0 0.0
  %4844 = vmatprep.subr.mxu0 0.0
  %4845 = vmatpush1.msra.mxu0 0.0
  %4846 = vmatprep.subr.mxu0 0.0
  %4847 = vmatpush1.msra.mxu0 0.0
  %4848 = vmatprep.subr.mxu0 0.0
  %4849 = vmatpush1.msra.mxu0 0.0
  %4850 = vmatprep.subr.mxu0 0.0
  %4851 = vmatpush1.msra.mxu0 0.0
  %4852 = vmatprep.subr.mxu0 0.0
  %4853 = vmatpush1.msra.mxu0 0.0
  %4854 = vmatprep.subr.mxu0 0.0
  %4855 = vmatpush1.msra.mxu0 0.0
  %4856 = vmatprep.subr.mxu0 0.0
  %4857 = vmatpush1.msra.mxu0 0.0
  %4858 = vmatprep.subr.mxu0 0.0
  %4859 = vmatpush1.msra.mxu0 0.0
  %4860 = vmatprep.subr.mxu0 0.0
  %4861 = vmatpush1.msra.mxu0 0.0
  %4862 = vmatprep.subr.mxu0 0.0
  %4863 = vmatpush1.msra.mxu0 0.0
  %4864 = vmatprep.subr.mxu0 0.0
  %4865 = vmatpush1.msra.mxu0 0.0
  %4866 = vmatprep.subr.mxu0 0.0
  %4867 = vmatpush1.msra.mxu0 0.0
  %4868 = vmatprep.subr.mxu0 0.0
  %4869 = vmatpush1.msra.mxu0 0.0
  %4870 = vmatprep.subr.mxu0 0.0
  %4871 = vmatpush1.msra.mxu0 0.0
  %4872 = vmatprep.subr.mxu0 0.0
  %4873 = vmatpush1.msra.mxu0 0.0
  %4874 = vmatprep.subr.mxu0 0.0
  %4875 = vmatpush1.msra.mxu0 0.0
  %4876 = vmatprep.subr.mxu0 0.0
  %4877 = vmatpush1.msra.mxu0 0.0
  %4878 = vmatprep.subr.mxu0 0.0
  %4879 = vmatpush1.msra.mxu0 0.0
  %4880 = vmatprep.subr.mxu0 0.0
  %4881 = vmatpush1.msra.mxu0 0.0
  %4882 = vmatprep.subr.mxu0 0.0
  %4883 = vmatpush1.msra.mxu0 0.0
  %4884 = vmatprep.subr.mxu0 0.0
  %4885 = vmatpush1.msra.mxu0 0.0
  %4886 = vmatprep.subr.mxu0 0.0
  %4887 = vmatpush1.msra.mxu0 0.0
  %4888 = vmatprep.mubr.f32.mxu0 0.0
  %4889 = vmatmul.mubr.f32.gmra.mrb[0].mxu0 %v3839
  %v4890 = vpop.f32.mrb[0].mxu0
  %v4891 = vadd.f32 0.0, %v4890
  %v4892 = vpop.f32.mrb[0].mxu0
  %4893 = vdwg.mxu0
  %4894 = vmatprep.subr.mxu0 0.0
  %4895 = vmatpush1.msra.mxu0 %v3818
  %4896 = vmatprep.subr.mxu0 0.0
  %4897 = vmatpush1.msra.mxu0 %v3819
  %4898 = vmatprep.subr.mxu0 0.0
  %4899 = vmatpush1.msra.mxu0 %v3820
  %4900 = vmatprep.subr.mxu0 0.0
  %4901 = vmatpush1.msra.mxu0 %v3821
  %4902 = vmatprep.subr.mxu0 0.0
  %4903 = vmatpush1.msra.mxu0 0.0
  %4904 = vmatprep.subr.mxu0 0.0
  %4905 = vmatpush1.msra.mxu0 0.0
  %4906 = vmatprep.subr.mxu0 0.0
  %4907 = vmatpush1.msra.mxu0 0.0
  %4908 = vmatprep.subr.mxu0 0.0
  %4909 = vmatpush1.msra.mxu0 0.0
  %4910 = vmatprep.subr.mxu0 0.0
  %4911 = vmatpush1.msra.mxu0 0.0
  %4912 = vmatprep.subr.mxu0 0.0
  %4913 = vmatpush1.msra.mxu0 0.0
  %4914 = vmatprep.subr.mxu0 0.0
  %4915 = vmatpush1.msra.mxu0 0.0
  %4916 = vmatprep.subr.mxu0 0.0
  %4917 = vmatpush1.msra.mxu0 0.0
  %4918 = vmatprep.subr.mxu0 0.0
  %4919 = vmatpush1.msra.mxu0 0.0
  %4920 = vmatprep.subr.mxu0 0.0
  %4921 = vmatpush1.msra.mxu0 0.0
  %4922 = vmatprep.subr.mxu0 0.0
  %4923 = vmatpush1.msra.mxu0 0.0
  %4924 = vmatprep.subr.mxu0 0.0
  %4925 = vmatpush1.msra.mxu0 0.0
  %4926 = vmatprep.subr.mxu0 0.0
  %4927 = vmatpush1.msra.mxu0 0.0
  %4928 = vmatprep.subr.mxu0 0.0
  %4929 = vmatpush1.msra.mxu0 0.0
  %4930 = vmatprep.subr.mxu0 0.0
  %4931 = vmatpush1.msra.mxu0 0.0
  %4932 = vmatprep.subr.mxu0 0.0
  %4933 = vmatpush1.msra.mxu0 0.0
  %4934 = vmatprep.subr.mxu0 0.0
  %4935 = vmatpush1.msra.mxu0 0.0
  %4936 = vmatprep.subr.mxu0 0.0
  %4937 = vmatpush1.msra.mxu0 0.0
  %4938 = vmatprep.subr.mxu0 0.0
  %4939 = vmatpush1.msra.mxu0 0.0
  %4940 = vmatprep.subr.mxu0 0.0
  %4941 = vmatpush1.msra.mxu0 0.0
  %4942 = vmatprep.subr.mxu0 0.0
  %4943 = vmatpush1.msra.mxu0 0.0
  %4944 = vmatprep.subr.mxu0 0.0
  %4945 = vmatpush1.msra.mxu0 0.0
  %4946 = vmatprep.subr.mxu0 0.0
  %4947 = vmatpush1.msra.mxu0 0.0
  %4948 = vmatprep.subr.mxu0 0.0
  %4949 = vmatpush1.msra.mxu0 0.0
  %4950 = vmatprep.subr.mxu0 0.0
  %4951 = vmatpush1.msra.mxu0 0.0
  %4952 = vmatprep.subr.mxu0 0.0
  %4953 = vmatpush1.msra.mxu0 0.0
  %4954 = vmatprep.subr.mxu0 0.0
  %4955 = vmatpush1.msra.mxu0 0.0
  %4956 = vmatprep.subr.mxu0 0.0
  %4957 = vmatpush1.msra.mxu0 0.0
  %4958 = vmatprep.mubr.f32.mxu0 0.0
  %4959 = vmatmul.mubr.f32.gmra.mrb[0].mxu0 %v3912
  %v4960 = vpop.f32.mrb[0].mxu0
  %v4961 = vadd.f32 0.0, %v4960
  %v4962 = vpop.f32.mrb[0].mxu0
  %4963 = vdwg.mxu0
  %4964 = vmatprep.subr.mxu0 0.0
  %4965 = vmatpush1.msra.mxu0 %v3822
  %4966 = vmatprep.subr.mxu0 0.0
  %4967 = vmatpush1.msra.mxu0 %v3823
  %4968 = vmatprep.subr.mxu0 0.0
  %4969 = vmatpush1.msra.mxu0 %v3824
  %4970 = vmatprep.subr.mxu0 0.0
  %4971 = vmatpush1.msra.mxu0 %v3825
  %4972 = vmatprep.subr.mxu0 0.0
  %4973 = vmatpush1.msra.mxu0 0.0
  %4974 = vmatprep.subr.mxu0 0.0
  %4975 = vmatpush1.msra.mxu0 0.0
  %4976 = vmatprep.subr.mxu0 0.0
  %4977 = vmatpush1.msra.mxu0 0.0
  %4978 = vmatprep.subr.mxu0 0.0
  %4979 = vmatpush1.msra.mxu0 0.0
  %4980 = vmatprep.subr.mxu0 0.0
  %4981 = vmatpush1.msra.mxu0 0.0
  %4982 = vmatprep.subr.mxu0 0.0
  %4983 = vmatpush1.msra.mxu0 0.0
  %4984 = vmatprep.subr.mxu0 0.0
  %4985 = vmatpush1.msra.mxu0 0.0
  %4986 = vmatprep.subr.mxu0 0.0
  %4987 = vmatpush1.msra.mxu0 0.0
  %4988 = vmatprep.subr.mxu0 0.0
  %4989 = vmatpush1.msra.mxu0 0.0
  %4990 = vmatprep.subr.mxu0 0.0
  %4991 = vmatpush1.msra.mxu0 0.0
  %4992 = vmatprep.subr.mxu0 0.0
  %4993 = vmatpush1.msra.mxu0 0.0
  %4994 = vmatprep.subr.mxu0 0.0
  %4995 = vmatpush1.msra.mxu0 0.0
  %4996 = vmatprep.subr.mxu0 0.0
  %4997 = vmatpush1.msra.mxu0 0.0
  %4998 = vmatprep.subr.mxu0 0.0
  %4999 = vmatpush1.msra.mxu0 0.0
  %5000 = vmatprep.subr.mxu0 0.0
  %5001 = vmatpush1.msra.mxu0 0.0
  %5002 = vmatprep.subr.mxu0 0.0
  %5003 = vmatpush1.msra.mxu0 0.0
  %5004 = vmatprep.subr.mxu0 0.0
  %5005 = vmatpush1.msra.mxu0 0.0
  %5006 = vmatprep.subr.mxu0 0.0
  %5007 = vmatpush1.msra.mxu0 0.0
  %5008 = vmatprep.subr.mxu0 0.0
  %5009 = vmatpush1.msra.mxu0 0.0
  %5010 = vmatprep.subr.mxu0 0.0
  %5011 = vmatpush1.msra.mxu0 0.0
  %5012 = vmatprep.subr.mxu0 0.0
  %5013 = vmatpush1.msra.mxu0 0.0
  %5014 = vmatprep.subr.mxu0 0.0
  %5015 = vmatpush1.msra.mxu0 0.0
  %5016 = vmatprep.subr.mxu0 0.0
  %5017 = vmatpush1.msra.mxu0 0.0
  %5018 = vmatprep.subr.mxu0 0.0
  %5019 = vmatpush1.msra.mxu0 0.0
  %5020 = vmatprep.subr.mxu0 0.0
  %5021 = vmatpush1.msra.mxu0 0.0
  %5022 = vmatprep.subr.mxu0 0.0
  %5023 = vmatpush1.msra.mxu0 0.0
  %5024 = vmatprep.subr.mxu0 0.0
  %5025 = vmatpush1.msra.mxu0 0.0
  %5026 = vmatprep.subr.mxu0 0.0
  %5027 = vmatpush1.msra.mxu0 0.0
  %5028 = vmatprep.mubr.f32.mxu0 0.0
  %5029 = vmatmul.mubr.f32.gmra.mrb[0].mxu0 %v3839
  %v5030 = vpop.f32.mrb[0].mxu0
  %v5031 = vadd.f32 0.0, %v5030
  %v5032 = vpop.f32.mrb[0].mxu0
  %5033 = vdwg.mxu0
  %5034 = vmatprep.subr.mxu0 0.0
  %5035 = vmatpush1.msra.mxu0 %v3822
  %5036 = vmatprep.subr.mxu0 0.0
  %5037 = vmatpush1.msra.mxu0 %v3823
  %5038 = vmatprep.subr.mxu0 0.0
  %5039 = vmatpush1.msra.mxu0 %v3824
  %5040 = vmatprep.subr.mxu0 0.0
  %5041 = vmatpush1.msra.mxu0 %v3825
  %5042 = vmatprep.subr.mxu0 0.0
  %5043 = vmatpush1.msra.mxu0 0.0
  %5044 = vmatprep.subr.mxu0 0.0
  %5045 = vmatpush1.msra.mxu0 0.0
  %5046 = vmatprep.subr.mxu0 0.0
  %5047 = vmatpush1.msra.mxu0 0.0
  %5048 = vmatprep.subr.mxu0 0.0
  %5049 = vmatpush1.msra.mxu0 0.0
  %5050 = vmatprep.subr.mxu0 0.0
  %5051 = vmatpush1.msra.mxu0 0.0
  %5052 = vmatprep.subr.mxu0 0.0
  %5053 = vmatpush1.msra.mxu0 0.0
  %5054 = vmatprep.subr.mxu0 0.0
  %5055 = vmatpush1.msra.mxu0 0.0
  %5056 = vmatprep.subr.mxu0 0.0
  %5057 = vmatpush1.msra.mxu0 0.0
  %5058 = vmatprep.subr.mxu0 0.0
  %5059 = vmatpush1.msra.mxu0 0.0
  %5060 = vmatprep.subr.mxu0 0.0
  %5061 = vmatpush1.msra.mxu0 0.0
  %5062 = vmatprep.subr.mxu0 0.0
  %5063 = vmatpush1.msra.mxu0 0.0
  %5064 = vmatprep.subr.mxu0 0.0
  %5065 = vmatpush1.msra.mxu0 0.0
  %5066 = vmatprep.subr.mxu0 0.0
  %5067 = vmatpush1.msra.mxu0 0.0
  %5068 = vmatprep.subr.mxu0 0.0
  %5069 = vmatpush1.msra.mxu0 0.0
  %5070 = vmatprep.subr.mxu0 0.0
  %5071 = vmatpush1.msra.mxu0 0.0
  %5072 = vmatprep.subr.mxu0 0.0
  %5073 = vmatpush1.msra.mxu0 0.0
  %5074 = vmatprep.subr.mxu0 0.0
  %5075 = vmatpush1.msra.mxu0 0.0
  %5076 = vmatprep.subr.mxu0 0.0
  %5077 = vmatpush1.msra.mxu0 0.0
  %5078 = vmatprep.subr.mxu0 0.0
  %5079 = vmatpush1.msra.mxu0 0.0
  %5080 = vmatprep.subr.mxu0 0.0
  %5081 = vmatpush1.msra.mxu0 0.0
  %5082 = vmatprep.subr.mxu0 0.0
  %5083 = vmatpush1.msra.mxu0 0.0
  %5084 = vmatprep.subr.mxu0 0.0
  %5085 = vmatpush1.msra.mxu0 0.0
  %5086 = vmatprep.subr.mxu0 0.0
  %5087 = vmatpush1.msra.mxu0 0.0
  %5088 = vmatprep.subr.mxu0 0.0
  %5089 = vmatpush1.msra.mxu0 0.0
  %5090 = vmatprep.subr.mxu0 0.0
  %5091 = vmatpush1.msra.mxu0 0.0
  %5092 = vmatprep.subr.mxu0 0.0
  %5093 = vmatpush1.msra.mxu0 0.0
  %5094 = vmatprep.subr.mxu0 0.0
  %5095 = vmatpush1.msra.mxu0 0.0
  %5096 = vmatprep.subr.mxu0 0.0
  %5097 = vmatpush1.msra.mxu0 0.0
  %5098 = vmatprep.mubr.f32.mxu0 0.0
  %5099 = vmatmul.mubr.f32.gmra.mrb[0].mxu0 %v3912
  %v5100 = vpop.f32.mrb[0].mxu0
  %v5101 = vadd.f32 0.0, %v5100
  %v5102 = vpop.f32.mrb[0].mxu0
  %5103 = vdwg.mxu0
  %5104 = vmatprep.subr.mxu0 0.0
  %5105 = vmatpush1.msra.mxu0 %v3826
  %5106 = vmatprep.subr.mxu0 0.0
  %5107 = vmatpush1.msra.mxu0 %v3827
  %5108 = vmatprep.subr.mxu0 0.0
  %5109 = vmatpush1.msra.mxu0 %v3828
  %5110 = vmatprep.subr.mxu0 0.0
  %5111 = vmatpush1.msra.mxu0 %v3829
  %5112 = vmatprep.subr.mxu0 0.0
  %5113 = vmatpush1.msra.mxu0 0.0
  %5114 = vmatprep.subr.mxu0 0.0
  %5115 = vmatpush1.msra.mxu0 0.0
  %5116 = vmatprep.subr.mxu0 0.0
  %5117 = vmatpush1.msra.mxu0 0.0
  %5118 = vmatprep.subr.mxu0 0.0
  %5119 = vmatpush1.msra.mxu0 0.0
  %5120 = vmatprep.subr.mxu0 0.0
  %5121 = vmatpush1.msra.mxu0 0.0
  %5122 = vmatprep.subr.mxu0 0.0
  %5123 = vmatpush1.msra.mxu0 0.0
  %5124 = vmatprep.subr.mxu0 0.0
  %5125 = vmatpush1.msra.mxu0 0.0
  %5126 = vmatprep.subr.mxu0 0.0
  %5127 = vmatpush1.msra.mxu0 0.0
  %5128 = vmatprep.subr.mxu0 0.0
  %5129 = vmatpush1.msra.mxu0 0.0
  %5130 = vmatprep.subr.mxu0 0.0
  %5131 = vmatpush1.msra.mxu0 0.0
  %5132 = vmatprep.subr.mxu0 0.0
  %5133 = vmatpush1.msra.mxu0 0.0
  %5134 = vmatprep.subr.mxu0 0.0
  %5135 = vmatpush1.msra.mxu0 0.0
  %5136 = vmatprep.subr.mxu0 0.0
  %5137 = vmatpush1.msra.mxu0 0.0
  %5138 = vmatprep.subr.mxu0 0.0
  %5139 = vmatpush1.msra.mxu0 0.0
  %5140 = vmatprep.subr.mxu0 0.0
  %5141 = vmatpush1.msra.mxu0 0.0
  %5142 = vmatprep.subr.mxu0 0.0
  %5143 = vmatpush1.msra.mxu0 0.0
  %5144 = vmatprep.subr.mxu0 0.0
  %5145 = vmatpush1.msra.mxu0 0.0
  %5146 = vmatprep.subr.mxu0 0.0
  %5147 = vmatpush1.msra.mxu0 0.0
  %5148 = vmatprep.subr.mxu0 0.0
  %5149 = vmatpush1.msra.mxu0 0.0
  %5150 = vmatprep.subr.mxu0 0.0
  %5151 = vmatpush1.msra.mxu0 0.0
  %5152 = vmatprep.subr.mxu0 0.0
  %5153 = vmatpush1.msra.mxu0 0.0
  %5154 = vmatprep.subr.mxu0 0.0
  %5155 = vmatpush1.msra.mxu0 0.0
  %5156 = vmatprep.subr.mxu0 0.0
  %5157 = vmatpush1.msra.mxu0 0.0
  %5158 = vmatprep.subr.mxu0 0.0
  %5159 = vmatpush1.msra.mxu0 0.0
  %5160 = vmatprep.subr.mxu0 0.0
  %5161 = vmatpush1.msra.mxu0 0.0
  %5162 = vmatprep.subr.mxu0 0.0
  %5163 = vmatpush1.msra.mxu0 0.0
  %5164 = vmatprep.subr.mxu0 0.0
  %5165 = vmatpush1.msra.mxu0 0.0
  %5166 = vmatprep.subr.mxu0 0.0
  %5167 = vmatpush1.msra.mxu0 0.0
  %5168 = vmatprep.mubr.f32.mxu0 0.0
  %5169 = vmatmul.mubr.f32.gmra.mrb[0].mxu0 %v3839
  %v5170 = vpop.f32.mrb[0].mxu0
  %v5171 = vadd.f32 0.0, %v5170
  %v5172 = vpop.f32.mrb[0].mxu0
  %5173 = vdwg.mxu0
  %5174 = vmatprep.subr.mxu0 0.0
  %5175 = vmatpush1.msra.mxu0 %v3826
  %5176 = vmatprep.subr.mxu0 0.0
  %5177 = vmatpush1.msra.mxu0 %v3827
  %5178 = vmatprep.subr.mxu0 0.0
  %5179 = vmatpush1.msra.mxu0 %v3828
  %5180 = vmatprep.subr.mxu0 0.0
  %5181 = vmatpush1.msra.mxu0 %v3829
  %5182 = vmatprep.subr.mxu0 0.0
  %5183 = vmatpush1.msra.mxu0 0.0
  %5184 = vmatprep.subr.mxu0 0.0
  %5185 = vmatpush1.msra.mxu0 0.0
  %5186 = vmatprep.subr.mxu0 0.0
  %5187 = vmatpush1.msra.mxu0 0.0
  %5188 = vmatprep.subr.mxu0 0.0
  %5189 = vmatpush1.msra.mxu0 0.0
  %5190 = vmatprep.subr.mxu0 0.0
  %5191 = vmatpush1.msra.mxu0 0.0
  %5192 = vmatprep.subr.mxu0 0.0
  %5193 = vmatpush1.msra.mxu0 0.0
  %5194 = vmatprep.subr.mxu0 0.0
  %5195 = vmatpush1.msra.mxu0 0.0
  %5196 = vmatprep.subr.mxu0 0.0
  %5197 = vmatpush1.msra.mxu0 0.0
  %5198 = vmatprep.subr.mxu0 0.0
  %5199 = vmatpush1.msra.mxu0 0.0
  %5200 = vmatprep.subr.mxu0 0.0
  %5201 = vmatpush1.msra.mxu0 0.0
  %5202 = vmatprep.subr.mxu0 0.0
  %5203 = vmatpush1.msra.mxu0 0.0
  %5204 = vmatprep.subr.mxu0 0.0
  %5205 = vmatpush1.msra.mxu0 0.0
  %5206 = vmatprep.subr.mxu0 0.0
  %5207 = vmatpush1.msra.mxu0 0.0
  %5208 = vmatprep.subr.mxu0 0.0
  %5209 = vmatpush1.msra.mxu0 0.0
  %5210 = vmatprep.subr.mxu0 0.0
  %5211 = vmatpush1.msra.mxu0 0.0
  %5212 = vmatprep.subr.mxu0 0.0
  %5213 = vmatpush1.msra.mxu0 0.0
  %5214 = vmatprep.subr.mxu0 0.0
  %5215 = vmatpush1.msra.mxu0 0.0
  %5216 = vmatprep.subr.mxu0 0.0
  %5217 = vmatpush1.msra.mxu0 0.0
  %5218 = vmatprep.subr.mxu0 0.0
  %5219 = vmatpush1.msra.mxu0 0.0
  %5220 = vmatprep.subr.mxu0 0.0
  %5221 = vmatpush1.msra.mxu0 0.0
  %5222 = vmatprep.subr.mxu0 0.0
  %5223 = vmatpush1.msra.mxu0 0.0
  %5224 = vmatprep.subr.mxu0 0.0
  %5225 = vmatpush1.msra.mxu0 0.0
  %5226 = vmatprep.subr.mxu0 0.0
  %5227 = vmatpush1.msra.mxu0 0.0
  %5228 = vmatprep.subr.mxu0 0.0
  %5229 = vmatpush1.msra.mxu0 0.0
  %5230 = vmatprep.subr.mxu0 0.0
  %5231 = vmatpush1.msra.mxu0 0.0
  %5232 = vmatprep.subr.mxu0 0.0
  %5233 = vmatpush1.msra.mxu0 0.0
  %5234 = vmatprep.subr.mxu0 0.0
  %5235 = vmatpush1.msra.mxu0 0.0
  %5236 = vmatprep.subr.mxu0 0.0
  %5237 = vmatpush1.msra.mxu0 0.0
  %5238 = vmatprep.mubr.f32.mxu0 0.0
  %5239 = vmatmul.mubr.f32.gmra.mrb[0].mxu0 %v3912
  %v5240 = vpop.f32.mrb[0].mxu0
  %v5241 = vadd.f32 0.0, %v5240
  %v5242 = vpop.f32.mrb[0].mxu0
  %5243 = vdwg.mxu0
  %5244 = vmatprep.subr.mxu0 0.0
  %5245 = vmatpush1.msra.mxu0 %v3830
  %5246 = vmatprep.subr.mxu0 0.0
  %5247 = vmatpush1.msra.mxu0 %v3831
  %5248 = vmatprep.subr.mxu0 0.0
  %5249 = vmatpush1.msra.mxu0 %v3832
  %5250 = vmatprep.subr.mxu0 0.0
  %5251 = vmatpush1.msra.mxu0 %v3833
  %5252 = vmatprep.subr.mxu0 0.0
  %5253 = vmatpush1.msra.mxu0 0.0
  %5254 = vmatprep.subr.mxu0 0.0
  %5255 = vmatpush1.msra.mxu0 0.0
  %5256 = vmatprep.subr.mxu0 0.0
  %5257 = vmatpush1.msra.mxu0 0.0
  %5258 = vmatprep.subr.mxu0 0.0
  %5259 = vmatpush1.msra.mxu0 0.0
  %5260 = vmatprep.subr.mxu0 0.0
  %5261 = vmatpush1.msra.mxu0 0.0
  %5262 = vmatprep.subr.mxu0 0.0
  %5263 = vmatpush1.msra.mxu0 0.0
  %5264 = vmatprep.subr.mxu0 0.0
  %5265 = vmatpush1.msra.mxu0 0.0
  %5266 = vmatprep.subr.mxu0 0.0
  %5267 = vmatpush1.msra.mxu0 0.0
  %5268 = vmatprep.subr.mxu0 0.0
  %5269 = vmatpush1.msra.mxu0 0.0
  %5270 = vmatprep.subr.mxu0 0.0
  %5271 = vmatpush1.msra.mxu0 0.0
  %5272 = vmatprep.subr.mxu0 0.0
  %5273 = vmatpush1.msra.mxu0 0.0
  %5274 = vmatprep.subr.mxu0 0.0
  %5275 = vmatpush1.msra.mxu0 0.0
  %5276 = vmatprep.subr.mxu0 0.0
  %5277 = vmatpush1.msra.mxu0 0.0
  %5278 = vmatprep.subr.mxu0 0.0
  %5279 = vmatpush1.msra.mxu0 0.0
  %5280 = vmatprep.subr.mxu0 0.0
  %5281 = vmatpush1.msra.mxu0 0.0
  %5282 = vmatprep.subr.mxu0 0.0
  %5283 = vmatpush1.msra.mxu0 0.0
  %5284 = vmatprep.subr.mxu0 0.0
  %5285 = vmatpush1.msra.mxu0 0.0
  %5286 = vmatprep.subr.mxu0 0.0
  %5287 = vmatpush1.msra.mxu0 0.0
  %5288 = vmatprep.subr.mxu0 0.0
  %5289 = vmatpush1.msra.mxu0 0.0
  %5290 = vmatprep.subr.mxu0 0.0
  %5291 = vmatpush1.msra.mxu0 0.0
  %5292 = vmatprep.subr.mxu0 0.0
  %5293 = vmatpush1.msra.mxu0 0.0
  %5294 = vmatprep.subr.mxu0 0.0
  %5295 = vmatpush1.msra.mxu0 0.0
  %5296 = vmatprep.subr.mxu0 0.0
  %5297 = vmatpush1.msra.mxu0 0.0
  %5298 = vmatprep.subr.mxu0 0.0
  %5299 = vmatpush1.msra.mxu0 0.0
  %5300 = vmatprep.subr.mxu0 0.0
  %5301 = vmatpush1.msra.mxu0 0.0
  %5302 = vmatprep.subr.mxu0 0.0
  %5303 = vmatpush1.msra.mxu0 0.0
  %5304 = vmatprep.subr.mxu0 0.0
  %5305 = vmatpush1.msra.mxu0 0.0
  %5306 = vmatprep.subr.mxu0 0.0
  %5307 = vmatpush1.msra.mxu0 0.0
  %5308 = vmatprep.mubr.f32.mxu0 0.0
  %5309 = vmatmul.mubr.f32.gmra.mrb[0].mxu0 %v3839
  %v5310 = vpop.f32.mrb[0].mxu0
  %v5311 = vadd.f32 0.0, %v5310
  %v5312 = vpop.f32.mrb[0].mxu0
  %5313 = vdwg.mxu0
  %5314 = vmatprep.subr.mxu0 0.0
  %5315 = vmatpush1.msra.mxu0 %v3830
  %5316 = vmatprep.subr.mxu0 0.0
  %5317 = vmatpush1.msra.mxu0 %v3831
  %5318 = vmatprep.subr.mxu0 0.0
  %5319 = vmatpush1.msra.mxu0 %v3832
  %5320 = vmatprep.subr.mxu0 0.0
  %5321 = vmatpush1.msra.mxu0 %v3833
  %5322 = vmatprep.subr.mxu0 0.0
  %5323 = vmatpush1.msra.mxu0 0.0
  %5324 = vmatprep.subr.mxu0 0.0
  %5325 = vmatpush1.msra.mxu0 0.0
  %5326 = vmatprep.subr.mxu0 0.0
  %5327 = vmatpush1.msra.mxu0 0.0
  %5328 = vmatprep.subr.mxu0 0.0
  %5329 = vmatpush1.msra.mxu0 0.0
  %5330 = vmatprep.subr.mxu0 0.0
  %5331 = vmatpush1.msra.mxu0 0.0
  %5332 = vmatprep.subr.mxu0 0.0
  %5333 = vmatpush1.msra.mxu0 0.0
  %5334 = vmatprep.subr.mxu0 0.0
  %5335 = vmatpush1.msra.mxu0 0.0
  %5336 = vmatprep.subr.mxu0 0.0
  %5337 = vmatpush1.msra.mxu0 0.0
  %5338 = vmatprep.subr.mxu0 0.0
  %5339 = vmatpush1.msra.mxu0 0.0
  %5340 = vmatprep.subr.mxu0 0.0
  %5341 = vmatpush1.msra.mxu0 0.0
  %5342 = vmatprep.subr.mxu0 0.0
  %5343 = vmatpush1.msra.mxu0 0.0
  %5344 = vmatprep.subr.mxu0 0.0
  %5345 = vmatpush1.msra.mxu0 0.0
  %5346 = vmatprep.subr.mxu0 0.0
  %5347 = vmatpush1.msra.mxu0 0.0
  %5348 = vmatprep.subr.mxu0 0.0
  %5349 = vmatpush1.msra.mxu0 0.0
  %5350 = vmatprep.subr.mxu0 0.0
  %5351 = vmatpush1.msra.mxu0 0.0
  %5352 = vmatprep.subr.mxu0 0.0
  %5353 = vmatpush1.msra.mxu0 0.0
  %5354 = vmatprep.subr.mxu0 0.0
  %5355 = vmatpush1.msra.mxu0 0.0
  %5356 = vmatprep.subr.mxu0 0.0
  %5357 = vmatpush1.msra.mxu0 0.0
  %5358 = vmatprep.subr.mxu0 0.0
  %5359 = vmatpush1.msra.mxu0 0.0
  %5360 = vmatprep.subr.mxu0 0.0
  %5361 = vmatpush1.msra.mxu0 0.0
  %5362 = vmatprep.subr.mxu0 0.0
  %5363 = vmatpush1.msra.mxu0 0.0
  %5364 = vmatprep.subr.mxu0 0.0
  %5365 = vmatpush1.msra.mxu0 0.0
  %5366 = vmatprep.subr.mxu0 0.0
  %5367 = vmatpush1.msra.mxu0 0.0
  %5368 = vmatprep.subr.mxu0 0.0
  %5369 = vmatpush1.msra.mxu0 0.0
  %5370 = vmatprep.subr.mxu0 0.0
  %5371 = vmatpush1.msra.mxu0 0.0
  %5372 = vmatprep.subr.mxu0 0.0
  %5373 = vmatpush1.msra.mxu0 0.0
  %5374 = vmatprep.subr.mxu0 0.0
  %5375 = vmatpush1.msra.mxu0 0.0
  %5376 = vmatprep.subr.mxu0 0.0
  %5377 = vmatpush1.msra.mxu0 0.0
  %5378 = vmatprep.mubr.f32.mxu0 0.0
  %5379 = vmatmul.mubr.f32.gmra.mrb[0].mxu0 %v3912
  %v5380 = vpop.f32.mrb[0].mxu0
  %v5381 = vadd.f32 0.0, %v5380
  %v5382 = vpop.f32.mrb[0].mxu0
  %5383 = vdwg.mxu0
  %5384 = vmatprep.subr.mxu0 0.0
  %5385 = vmatpush1.msra.mxu0 %v3834
  %5386 = vmatprep.subr.mxu0 0.0
  %5387 = vmatpush1.msra.mxu0 %v3835
  %5388 = vmatprep.subr.mxu0 0.0
  %5389 = vmatpush1.msra.mxu0 %v3836
  %5390 = vmatprep.subr.mxu0 0.0
  %5391 = vmatpush1.msra.mxu0 %v3837
  %5392 = vmatprep.subr.mxu0 0.0
  %5393 = vmatpush1.msra.mxu0 0.0
  %5394 = vmatprep.subr.mxu0 0.0
  %5395 = vmatpush1.msra.mxu0 0.0
  %5396 = vmatprep.subr.mxu0 0.0
  %5397 = vmatpush1.msra.mxu0 0.0
  %5398 = vmatprep.subr.mxu0 0.0
  %5399 = vmatpush1.msra.mxu0 0.0
  %5400 = vmatprep.subr.mxu0 0.0
  %5401 = vmatpush1.msra.mxu0 0.0
  %5402 = vmatprep.subr.mxu0 0.0
  %5403 = vmatpush1.msra.mxu0 0.0
  %5404 = vmatprep.subr.mxu0 0.0
  %5405 = vmatpush1.msra.mxu0 0.0
  %5406 = vmatprep.subr.mxu0 0.0
  %5407 = vmatpush1.msra.mxu0 0.0
  %5408 = vmatprep.subr.mxu0 0.0
  %5409 = vmatpush1.msra.mxu0 0.0
  %5410 = vmatprep.subr.mxu0 0.0
  %5411 = vmatpush1.msra.mxu0 0.0
  %5412 = vmatprep.subr.mxu0 0.0
  %5413 = vmatpush1.msra.mxu0 0.0
  %5414 = vmatprep.subr.mxu0 0.0
  %5415 = vmatpush1.msra.mxu0 0.0
  %5416 = vmatprep.subr.mxu0 0.0
  %5417 = vmatpush1.msra.mxu0 0.0
  %5418 = vmatprep.subr.mxu0 0.0
  %5419 = vmatpush1.msra.mxu0 0.0
  %5420 = vmatprep.subr.mxu0 0.0
  %5421 = vmatpush1.msra.mxu0 0.0
  %5422 = vmatprep.subr.mxu0 0.0
  %5423 = vmatpush1.msra.mxu0 0.0
  %5424 = vmatprep.subr.mxu0 0.0
  %5425 = vmatpush1.msra.mxu0 0.0
  %5426 = vmatprep.subr.mxu0 0.0
  %5427 = vmatpush1.msra.mxu0 0.0
  %5428 = vmatprep.subr.mxu0 0.0
  %5429 = vmatpush1.msra.mxu0 0.0
  %5430 = vmatprep.subr.mxu0 0.0
  %5431 = vmatpush1.msra.mxu0 0.0
  %5432 = vmatprep.subr.mxu0 0.0
  %5433 = vmatpush1.msra.mxu0 0.0
  %5434 = vmatprep.subr.mxu0 0.0
  %5435 = vmatpush1.msra.mxu0 0.0
  %5436 = vmatprep.subr.mxu0 0.0
  %5437 = vmatpush1.msra.mxu0 0.0
  %5438 = vmatprep.subr.mxu0 0.0
  %5439 = vmatpush1.msra.mxu0 0.0
  %5440 = vmatprep.subr.mxu0 0.0
  %5441 = vmatpush1.msra.mxu0 0.0
  %5442 = vmatprep.subr.mxu0 0.0
  %5443 = vmatpush1.msra.mxu0 0.0
  %5444 = vmatprep.subr.mxu0 0.0
  %5445 = vmatpush1.msra.mxu0 0.0
  %5446 = vmatprep.subr.mxu0 0.0
  %5447 = vmatpush1.msra.mxu0 0.0
  %5448 = vmatprep.mubr.f32.mxu0 0.0
  %5449 = vmatmul.mubr.f32.gmra.mrb[0].mxu0 %v3839
  %v5450 = vpop.f32.mrb[0].mxu0
  %v5451 = vadd.f32 0.0, %v5450
  %v5452 = vpop.f32.mrb[0].mxu0
  %5453 = vdwg.mxu0
  %5454 = vmatprep.subr.mxu0 0.0
  %5455 = vmatpush1.msra.mxu0 %v3834
  %5456 = vmatprep.subr.mxu0 0.0
  %5457 = vmatpush1.msra.mxu0 %v3835
  %5458 = vmatprep.subr.mxu0 0.0
  %5459 = vmatpush1.msra.mxu0 %v3836
  %5460 = vmatprep.subr.mxu0 0.0
  %5461 = vmatpush1.msra.mxu0 %v3837
  %5462 = vmatprep.subr.mxu0 0.0
  %5463 = vmatpush1.msra.mxu0 0.0
  %5464 = vmatprep.subr.mxu0 0.0
  %5465 = vmatpush1.msra.mxu0 0.0
  %5466 = vmatprep.subr.mxu0 0.0
  %5467 = vmatpush1.msra.mxu0 0.0
  %5468 = vmatprep.subr.mxu0 0.0
  %5469 = vmatpush1.msra.mxu0 0.0
  %5470 = vmatprep.subr.mxu0 0.0
  %5471 = vmatpush1.msra.mxu0 0.0
  %5472 = vmatprep.subr.mxu0 0.0
  %5473 = vmatpush1.msra.mxu0 0.0
  %5474 = vmatprep.subr.mxu0 0.0
  %5475 = vmatpush1.msra.mxu0 0.0
  %5476 = vmatprep.subr.mxu0 0.0
  %5477 = vmatpush1.msra.mxu0 0.0
  %5478 = vmatprep.subr.mxu0 0.0
  %5479 = vmatpush1.msra.mxu0 0.0
  %5480 = vmatprep.subr.mxu0 0.0
  %5481 = vmatpush1.msra.mxu0 0.0
  %5482 = vmatprep.subr.mxu0 0.0
  %5483 = vmatpush1.msra.mxu0 0.0
  %5484 = vmatprep.subr.mxu0 0.0
  %5485 = vmatpush1.msra.mxu0 0.0
  %5486 = vmatprep.subr.mxu0 0.0
  %5487 = vmatpush1.msra.mxu0 0.0
  %5488 = vmatprep.subr.mxu0 0.0
  %5489 = vmatpush1.msra.mxu0 0.0
  %5490 = vmatprep.subr.mxu0 0.0
  %5491 = vmatpush1.msra.mxu0 0.0
  %5492 = vmatprep.subr.mxu0 0.0
  %5493 = vmatpush1.msra.mxu0 0.0
  %5494 = vmatprep.subr.mxu0 0.0
  %5495 = vmatpush1.msra.mxu0 0.0
  %5496 = vmatprep.subr.mxu0 0.0
  %5497 = vmatpush1.msra.mxu0 0.0
  %5498 = vmatprep.subr.mxu0 0.0
  %5499 = vmatpush1.msra.mxu0 0.0
  %5500 = vmatprep.subr.mxu0 0.0
  %5501 = vmatpush1.msra.mxu0 0.0
  %5502 = vmatprep.subr.mxu0 0.0
  %5503 = vmatpush1.msra.mxu0 0.0
  %5504 = vmatprep.subr.mxu0 0.0
  %5505 = vmatpush1.msra.mxu0 0.0
  %5506 = vmatprep.subr.mxu0 0.0
  %5507 = vmatpush1.msra.mxu0 0.0
  %5508 = vmatprep.subr.mxu0 0.0
  %5509 = vmatpush1.msra.mxu0 0.0
  %5510 = vmatprep.subr.mxu0 0.0
  %5511 = vmatpush1.msra.mxu0 0.0
  %5512 = vmatprep.subr.mxu0 0.0
  %5513 = vmatpush1.msra.mxu0 0.0
  %5514 = vmatprep.subr.mxu0 0.0
  %5515 = vmatpush1.msra.mxu0 0.0
  %5516 = vmatprep.subr.mxu0 0.0
  %5517 = vmatpush1.msra.mxu0 0.0
  %5518 = vmatprep.mubr.f32.mxu0 0.0
  %5519 = vmatmul.mubr.f32.gmra.mrb[0].mxu0 %v3912
  %v5520 = vpop.f32.mrb[0].mxu0
  %v5521 = vadd.f32 0.0, %v5520
  %v5522 = vpop.f32.mrb[0].mxu0
  %5523 = vdwg.mxu0
  %v5524 = vld [vmem:[%s13] sm:$0xff]
  %v5525 = vld [vmem:[%s13 + $0x8] sm:$0xff]
  %v5526 = vld [vmem:[%s13 + $0x10] sm:$0xff]
  %v5527 = vld [vmem:[%s13 + $0x18] sm:$0xff]
  %v5528 = vld [vmem:[%s14] sm:$0x1]
  %v5530 = vsel %vm1857, %v3908, 0
  %v5533 = vsel %vm1857, %v4471, 0
  %5535 = vmatprep.subr.mxu0 0.0
  %5536 = vmatpush1.xpose.msra.mxu0 %v5533
  %5537 = vmatprep.subr.mxu0 0.0
  %5538 = vmatpush1.xpose.msra.mxu0 0.0
  %5539 = vmatprep.subr.mxu0 0.0
  %5540 = vmatpush1.xpose.msra.mxu0 0.0
  %5541 = vmatprep.subr.mxu0 0.0
  %5542 = vmatpush1.xpose.msra.mxu0 0.0
  %5543 = vmatprep.subr.mxu0 0.0
  %5544 = vmatpush1.xpose.msra.mxu0 0.0
  %5545 = vmatprep.subr.mxu0 0.0
  %5546 = vmatpush1.xpose.msra.mxu0 0.0
  %5547 = vmatprep.subr.mxu0 0.0
  %5548 = vmatpush1.xpose.msra.mxu0 0.0
  %5549 = vmatprep.subr.mxu0 0.0
  %5550 = vmatpush1.xpose.msra.mxu0 0.0
  %5551 = vmatprep.subr.mxu0 0.0
  %5552 = vmatpush1.xpose.msra.mxu0 0.0
  %5553 = vmatprep.subr.mxu0 0.0
  %5554 = vmatpush1.xpose.msra.mxu0 0.0
  %5555 = vmatprep.subr.mxu0 0.0
  %5556 = vmatpush1.xpose.msra.mxu0 0.0
  %5557 = vmatprep.subr.mxu0 0.0
  %5558 = vmatpush1.xpose.msra.mxu0 0.0
  %5559 = vmatprep.subr.mxu0 0.0
  %5560 = vmatpush1.xpose.msra.mxu0 0.0
  %5561 = vmatprep.subr.mxu0 0.0
  %5562 = vmatpush1.xpose.msra.mxu0 0.0
  %5563 = vmatprep.subr.mxu0 0.0
  %5564 = vmatpush1.xpose.msra.mxu0 0.0
  %5565 = vmatprep.subr.mxu0 0.0
  %5566 = vmatpush1.xpose.msra.mxu0 0.0
  %5567 = vmatprep.subr.mxu0 0.0
  %5568 = vmatpush1.xpose.msra.mxu0 0.0
  %5569 = vmatprep.subr.mxu0 0.0
  %5570 = vmatpush1.xpose.msra.mxu0 0.0
  %5571 = vmatprep.subr.mxu0 0.0
  %5572 = vmatpush1.xpose.msra.mxu0 0.0
  %5573 = vmatprep.subr.mxu0 0.0
  %5574 = vmatpush1.xpose.msra.mxu0 0.0
  %5575 = vmatprep.subr.mxu0 0.0
  %5576 = vmatpush1.xpose.msra.mxu0 0.0
  %5577 = vmatprep.subr.mxu0 0.0
  %5578 = vmatpush1.xpose.msra.mxu0 0.0
  %5579 = vmatprep.subr.mxu0 0.0
  %5580 = vmatpush1.xpose.msra.mxu0 0.0
  %5581 = vmatprep.subr.mxu0 0.0
  %5582 = vmatpush1.xpose.msra.mxu0 0.0
  %5583 = vmatprep.subr.mxu0 0.0
  %5584 = vmatpush1.xpose.msra.mxu0 0.0
  %5585 = vmatprep.subr.mxu0 0.0
  %5586 = vmatpush1.xpose.msra.mxu0 0.0
  %5587 = vmatprep.subr.mxu0 0.0
  %5588 = vmatpush1.xpose.msra.mxu0 0.0
  %5589 = vmatprep.subr.mxu0 0.0
  %5590 = vmatpush1.xpose.msra.mxu0 0.0
  %5591 = vmatprep.subr.mxu0 0.0
  %5592 = vmatpush1.xpose.msra.mxu0 0.0
  %5593 = vmatprep.subr.mxu0 0.0
  %5594 = vmatpush1.xpose.msra.mxu0 0.0
  %5595 = vmatprep.subr.mxu0 0.0
  %5596 = vmatpush1.xpose.msra.mxu0 0.0
  %5597 = vmatprep.subr.mxu0 0.0
  %5598 = vmatpush1.xpose.msra.mxu0 0.0
  %5599 = vmatprep.mubr.f32.mxu0 0.0
  %5600 = vmatmul.mubr.f32.gmra.mrb[0].mxu0 %v5530
  %v5601 = vpop.f32.mrb[0].mxu0
  %v5602 = vadd.f32 0.0, %v5601
  %v5603 = vpop.f32.mrb[0].mxu0
  %5604 = vdwg.mxu0
  %v5606 = vsel %vm1857, %v3981, 0
  %v5609 = vsel %vm1857, %v4541, 0
  %5611 = vmatprep.subr.mxu0 0.0
  %5612 = vmatpush1.xpose.msra.mxu0 %v5609
  %5613 = vmatprep.subr.mxu0 0.0
  %5614 = vmatpush1.xpose.msra.mxu0 0.0
  %5615 = vmatprep.subr.mxu0 0.0
  %5616 = vmatpush1.xpose.msra.mxu0 0.0
  %5617 = vmatprep.subr.mxu0 0.0
  %5618 = vmatpush1.xpose.msra.mxu0 0.0
  %5619 = vmatprep.subr.mxu0 0.0
  %5620 = vmatpush1.xpose.msra.mxu0 0.0
  %5621 = vmatprep.subr.mxu0 0.0
  %5622 = vmatpush1.xpose.msra.mxu0 0.0
  %5623 = vmatprep.subr.mxu0 0.0
  %5624 = vmatpush1.xpose.msra.mxu0 0.0
  %5625 = vmatprep.subr.mxu0 0.0
  %5626 = vmatpush1.xpose.msra.mxu0 0.0
  %5627 = vmatprep.subr.mxu0 0.0
  %5628 = vmatpush1.xpose.msra.mxu0 0.0
  %5629 = vmatprep.subr.mxu0 0.0
  %5630 = vmatpush1.xpose.msra.mxu0 0.0
  %5631 = vmatprep.subr.mxu0 0.0
  %5632 = vmatpush1.xpose.msra.mxu0 0.0
  %5633 = vmatprep.subr.mxu0 0.0
  %5634 = vmatpush1.xpose.msra.mxu0 0.0
  %5635 = vmatprep.subr.mxu0 0.0
  %5636 = vmatpush1.xpose.msra.mxu0 0.0
  %5637 = vmatprep.subr.mxu0 0.0
  %5638 = vmatpush1.xpose.msra.mxu0 0.0
  %5639 = vmatprep.subr.mxu0 0.0
  %5640 = vmatpush1.xpose.msra.mxu0 0.0
  %5641 = vmatprep.subr.mxu0 0.0
  %5642 = vmatpush1.xpose.msra.mxu0 0.0
  %5643 = vmatprep.subr.mxu0 0.0
  %5644 = vmatpush1.xpose.msra.mxu0 0.0
  %5645 = vmatprep.subr.mxu0 0.0
  %5646 = vmatpush1.xpose.msra.mxu0 0.0
  %5647 = vmatprep.subr.mxu0 0.0
  %5648 = vmatpush1.xpose.msra.mxu0 0.0
  %5649 = vmatprep.subr.mxu0 0.0
  %5650 = vmatpush1.xpose.msra.mxu0 0.0
  %5651 = vmatprep.subr.mxu0 0.0
  %5652 = vmatpush1.xpose.msra.mxu0 0.0
  %5653 = vmatprep.subr.mxu0 0.0
  %5654 = vmatpush1.xpose.msra.mxu0 0.0
  %5655 = vmatprep.subr.mxu0 0.0
  %5656 = vmatpush1.xpose.msra.mxu0 0.0
  %5657 = vmatprep.subr.mxu0 0.0
  %5658 = vmatpush1.xpose.msra.mxu0 0.0
  %5659 = vmatprep.subr.mxu0 0.0
  %5660 = vmatpush1.xpose.msra.mxu0 0.0
  %5661 = vmatprep.subr.mxu0 0.0
  %5662 = vmatpush1.xpose.msra.mxu0 0.0
  %5663 = vmatprep.subr.mxu0 0.0
  %5664 = vmatpush1.xpose.msra.mxu0 0.0
  %5665 = vmatprep.subr.mxu0 0.0
  %5666 = vmatpush1.xpose.msra.mxu0 0.0
  %5667 = vmatprep.subr.mxu0 0.0
  %5668 = vmatpush1.xpose.msra.mxu0 0.0
  %5669 = vmatprep.subr.mxu0 0.0
  %5670 = vmatpush1.xpose.msra.mxu0 0.0
  %5671 = vmatprep.subr.mxu0 0.0
  %5672 = vmatpush1.xpose.msra.mxu0 0.0
  %5673 = vmatprep.subr.mxu0 0.0
  %5674 = vmatpush1.xpose.msra.mxu0 0.0
  %5675 = vmatprep.mubr.f32.mxu0 0.0
  %5676 = vmatmul.mubr.f32.gmra.mrb[0].mxu0 %v5606
  %v5677 = vpop.f32.mrb[0].mxu0
  %v5678 = vadd.f32 0.0, %v5677
  %v5679 = vpop.f32.mrb[0].mxu0
  %5680 = vdwg.mxu0
  %v5682 = vsel %vm1857, %v4051, 0
  %v5685 = vsel %vm1857, %v4611, 0
  %5687 = vmatprep.subr.mxu0 0.0
  %5688 = vmatpush1.xpose.msra.mxu0 %v5685
  %5689 = vmatprep.subr.mxu0 0.0
  %5690 = vmatpush1.xpose.msra.mxu0 0.0
  %5691 = vmatprep.subr.mxu0 0.0
  %5692 = vmatpush1.xpose.msra.mxu0 0.0
  %5693 = vmatprep.subr.mxu0 0.0
  %5694 = vmatpush1.xpose.msra.mxu0 0.0
  %5695 = vmatprep.subr.mxu0 0.0
  %5696 = vmatpush1.xpose.msra.mxu0 0.0
  %5697 = vmatprep.subr.mxu0 0.0
  %5698 = vmatpush1.xpose.msra.mxu0 0.0
  %5699 = vmatprep.subr.mxu0 0.0
  %5700 = vmatpush1.xpose.msra.mxu0 0.0
  %5701 = vmatprep.subr.mxu0 0.0
  %5702 = vmatpush1.xpose.msra.mxu0 0.0
  %5703 = vmatprep.subr.mxu0 0.0
  %5704 = vmatpush1.xpose.msra.mxu0 0.0
  %5705 = vmatprep.subr.mxu0 0.0
  %5706 = vmatpush1.xpose.msra.mxu0 0.0
  %5707 = vmatprep.subr.mxu0 0.0
  %5708 = vmatpush1.xpose.msra.mxu0 0.0
  %5709 = vmatprep.subr.mxu0 0.0
  %5710 = vmatpush1.xpose.msra.mxu0 0.0
  %5711 = vmatprep.subr.mxu0 0.0
  %5712 = vmatpush1.xpose.msra.mxu0 0.0
  %5713 = vmatprep.subr.mxu0 0.0
  %5714 = vmatpush1.xpose.msra.mxu0 0.0
  %5715 = vmatprep.subr.mxu0 0.0
  %5716 = vmatpush1.xpose.msra.mxu0 0.0
  %5717 = vmatprep.subr.mxu0 0.0
  %5718 = vmatpush1.xpose.msra.mxu0 0.0
  %5719 = vmatprep.subr.mxu0 0.0
  %5720 = vmatpush1.xpose.msra.mxu0 0.0
  %5721 = vmatprep.subr.mxu0 0.0
  %5722 = vmatpush1.xpose.msra.mxu0 0.0
  %5723 = vmatprep.subr.mxu0 0.0
  %5724 = vmatpush1.xpose.msra.mxu0 0.0
  %5725 = vmatprep.subr.mxu0 0.0
  %5726 = vmatpush1.xpose.msra.mxu0 0.0
  %5727 = vmatprep.subr.mxu0 0.0
  %5728 = vmatpush1.xpose.msra.mxu0 0.0
  %5729 = vmatprep.subr.mxu0 0.0
  %5730 = vmatpush1.xpose.msra.mxu0 0.0
  %5731 = vmatprep.subr.mxu0 0.0
  %5732 = vmatpush1.xpose.msra.mxu0 0.0
  %5733 = vmatprep.subr.mxu0 0.0
  %5734 = vmatpush1.xpose.msra.mxu0 0.0
  %5735 = vmatprep.subr.mxu0 0.0
  %5736 = vmatpush1.xpose.msra.mxu0 0.0
  %5737 = vmatprep.subr.mxu0 0.0
  %5738 = vmatpush1.xpose.msra.mxu0 0.0
  %5739 = vmatprep.subr.mxu0 0.0
  %5740 = vmatpush1.xpose.msra.mxu0 0.0
  %5741 = vmatprep.subr.mxu0 0.0
  %5742 = vmatpush1.xpose.msra.mxu0 0.0
  %5743 = vmatprep.subr.mxu0 0.0
  %5744 = vmatpush1.xpose.msra.mxu0 0.0
  %5745 = vmatprep.subr.mxu0 0.0
  %5746 = vmatpush1.xpose.msra.mxu0 0.0
  %5747 = vmatprep.subr.mxu0 0.0
  %5748 = vmatpush1.xpose.msra.mxu0 0.0
  %5749 = vmatprep.subr.mxu0 0.0
  %5750 = vmatpush1.xpose.msra.mxu0 0.0
  %5751 = vmatprep.mubr.f32.mxu0 0.0
  %5752 = vmatmul.mubr.f32.gmra.mrb[0].mxu0 %v5682
  %v5753 = vpop.f32.mrb[0].mxu0
  %v5754 = vadd.f32 0.0, %v5753
  %v5755 = vpop.f32.mrb[0].mxu0
  %5756 = vdwg.mxu0
  %v5758 = vsel %vm1857, %v4121, 0
  %v5761 = vsel %vm1857, %v4681, 0
  %5763 = vmatprep.subr.mxu0 0.0
  %5764 = vmatpush1.xpose.msra.mxu0 %v5761
  %5765 = vmatprep.subr.mxu0 0.0
  %5766 = vmatpush1.xpose.msra.mxu0 0.0
  %5767 = vmatprep.subr.mxu0 0.0
  %5768 = vmatpush1.xpose.msra.mxu0 0.0
  %5769 = vmatprep.subr.mxu0 0.0
  %5770 = vmatpush1.xpose.msra.mxu0 0.0
  %5771 = vmatprep.subr.mxu0 0.0
  %5772 = vmatpush1.xpose.msra.mxu0 0.0
  %5773 = vmatprep.subr.mxu0 0.0
  %5774 = vmatpush1.xpose.msra.mxu0 0.0
  %5775 = vmatprep.subr.mxu0 0.0
  %5776 = vmatpush1.xpose.msra.mxu0 0.0
  %5777 = vmatprep.subr.mxu0 0.0
  %5778 = vmatpush1.xpose.msra.mxu0 0.0
  %5779 = vmatprep.subr.mxu0 0.0
  %5780 = vmatpush1.xpose.msra.mxu0 0.0
  %5781 = vmatprep.subr.mxu0 0.0
  %5782 = vmatpush1.xpose.msra.mxu0 0.0
  %5783 = vmatprep.subr.mxu0 0.0
  %5784 = vmatpush1.xpose.msra.mxu0 0.0
  %5785 = vmatprep.subr.mxu0 0.0
  %5786 = vmatpush1.xpose.msra.mxu0 0.0
  %5787 = vmatprep.subr.mxu0 0.0
  %5788 = vmatpush1.xpose.msra.mxu0 0.0
  %5789 = vmatprep.subr.mxu0 0.0
  %5790 = vmatpush1.xpose.msra.mxu0 0.0
  %5791 = vmatprep.subr.mxu0 0.0
  %5792 = vmatpush1.xpose.msra.mxu0 0.0
  %5793 = vmatprep.subr.mxu0 0.0
  %5794 = vmatpush1.xpose.msra.mxu0 0.0
  %5795 = vmatprep.subr.mxu0 0.0
  %5796 = vmatpush1.xpose.msra.mxu0 0.0
  %5797 = vmatprep.subr.mxu0 0.0
  %5798 = vmatpush1.xpose.msra.mxu0 0.0
  %5799 = vmatprep.subr.mxu0 0.0
  %5800 = vmatpush1.xpose.msra.mxu0 0.0
  %5801 = vmatprep.subr.mxu0 0.0
  %5802 = vmatpush1.xpose.msra.mxu0 0.0
  %5803 = vmatprep.subr.mxu0 0.0
  %5804 = vmatpush1.xpose.msra.mxu0 0.0
  %5805 = vmatprep.subr.mxu0 0.0
  %5806 = vmatpush1.xpose.msra.mxu0 0.0
  %5807 = vmatprep.subr.mxu0 0.0
  %5808 = vmatpush1.xpose.msra.mxu0 0.0
  %5809 = vmatprep.subr.mxu0 0.0
  %5810 = vmatpush1.xpose.msra.mxu0 0.0
  %5811 = vmatprep.subr.mxu0 0.0
  %5812 = vmatpush1.xpose.msra.mxu0 0.0
  %5813 = vmatprep.subr.mxu0 0.0
  %5814 = vmatpush1.xpose.msra.mxu0 0.0
  %5815 = vmatprep.subr.mxu0 0.0
  %5816 = vmatpush1.xpose.msra.mxu0 0.0
  %5817 = vmatprep.subr.mxu0 0.0
  %5818 = vmatpush1.xpose.msra.mxu0 0.0
  %5819 = vmatprep.subr.mxu0 0.0
  %5820 = vmatpush1.xpose.msra.mxu0 0.0
  %5821 = vmatprep.subr.mxu0 0.0
  %5822 = vmatpush1.xpose.msra.mxu0 0.0
  %5823 = vmatprep.subr.mxu0 0.0
  %5824 = vmatpush1.xpose.msra.mxu0 0.0
  %5825 = vmatprep.subr.mxu0 0.0
  %5826 = vmatpush1.xpose.msra.mxu0 0.0
  %5827 = vmatprep.mubr.f32.mxu0 0.0
  %5828 = vmatmul.mubr.f32.gmra.mrb[0].mxu0 %v5758
  %v5829 = vpop.f32.mrb[0].mxu0
  %v5830 = vadd.f32 0.0, %v5829
  %v5831 = vpop.f32.mrb[0].mxu0
  %5832 = vdwg.mxu0
  %v5834 = vsel %vm1857, %v4191, 0
  %v5837 = vsel %vm1857, %v4751, 0
  %5839 = vmatprep.subr.mxu0 0.0
  %5840 = vmatpush1.xpose.msra.mxu0 %v5837
  %5841 = vmatprep.subr.mxu0 0.0
  %5842 = vmatpush1.xpose.msra.mxu0 0.0
  %5843 = vmatprep.subr.mxu0 0.0
  %5844 = vmatpush1.xpose.msra.mxu0 0.0
  %5845 = vmatprep.subr.mxu0 0.0
  %5846 = vmatpush1.xpose.msra.mxu0 0.0
  %5847 = vmatprep.subr.mxu0 0.0
  %5848 = vmatpush1.xpose.msra.mxu0 0.0
  %5849 = vmatprep.subr.mxu0 0.0
  %5850 = vmatpush1.xpose.msra.mxu0 0.0
  %5851 = vmatprep.subr.mxu0 0.0
  %5852 = vmatpush1.xpose.msra.mxu0 0.0
  %5853 = vmatprep.subr.mxu0 0.0
  %5854 = vmatpush1.xpose.msra.mxu0 0.0
  %5855 = vmatprep.subr.mxu0 0.0
  %5856 = vmatpush1.xpose.msra.mxu0 0.0
  %5857 = vmatprep.subr.mxu0 0.0
  %5858 = vmatpush1.xpose.msra.mxu0 0.0
  %5859 = vmatprep.subr.mxu0 0.0
  %5860 = vmatpush1.xpose.msra.mxu0 0.0
  %5861 = vmatprep.subr.mxu0 0.0
  %5862 = vmatpush1.xpose.msra.mxu0 0.0
  %5863 = vmatprep.subr.mxu0 0.0
  %5864 = vmatpush1.xpose.msra.mxu0 0.0
  %5865 = vmatprep.subr.mxu0 0.0
  %5866 = vmatpush1.xpose.msra.mxu0 0.0
  %5867 = vmatprep.subr.mxu0 0.0
  %5868 = vmatpush1.xpose.msra.mxu0 0.0
  %5869 = vmatprep.subr.mxu0 0.0
  %5870 = vmatpush1.xpose.msra.mxu0 0.0
  %5871 = vmatprep.subr.mxu0 0.0
  %5872 = vmatpush1.xpose.msra.mxu0 0.0
  %5873 = vmatprep.subr.mxu0 0.0
  %5874 = vmatpush1.xpose.msra.mxu0 0.0
  %5875 = vmatprep.subr.mxu0 0.0
  %5876 = vmatpush1.xpose.msra.mxu0 0.0
  %5877 = vmatprep.subr.mxu0 0.0
  %5878 = vmatpush1.xpose.msra.mxu0 0.0
  %5879 = vmatprep.subr.mxu0 0.0
  %5880 = vmatpush1.xpose.msra.mxu0 0.0
  %5881 = vmatprep.subr.mxu0 0.0
  %5882 = vmatpush1.xpose.msra.mxu0 0.0
  %5883 = vmatprep.subr.mxu0 0.0
  %5884 = vmatpush1.xpose.msra.mxu0 0.0
  %5885 = vmatprep.subr.mxu0 0.0
  %5886 = vmatpush1.xpose.msra.mxu0 0.0
  %5887 = vmatprep.subr.mxu0 0.0
  %5888 = vmatpush1.xpose.msra.mxu0 0.0
  %5889 = vmatprep.subr.mxu0 0.0
  %5890 = vmatpush1.xpose.msra.mxu0 0.0
  %5891 = vmatprep.subr.mxu0 0.0
  %5892 = vmatpush1.xpose.msra.mxu0 0.0
  %5893 = vmatprep.subr.mxu0 0.0
  %5894 = vmatpush1.xpose.msra.mxu0 0.0
  %5895 = vmatprep.subr.mxu0 0.0
  %5896 = vmatpush1.xpose.msra.mxu0 0.0
  %5897 = vmatprep.subr.mxu0 0.0
  %5898 = vmatpush1.xpose.msra.mxu0 0.0
  %5899 = vmatprep.subr.mxu0 0.0
  %5900 = vmatpush1.xpose.msra.mxu0 0.0
  %5901 = vmatprep.subr.mxu0 0.0
  %5902 = vmatpush1.xpose.msra.mxu0 0.0
  %5903 = vmatprep.mubr.f32.mxu0 0.0
  %5904 = vmatmul.mubr.f32.gmra.mrb[0].mxu0 %v5834
  %v5905 = vpop.f32.mrb[0].mxu0
  %v5906 = vadd.f32 0.0, %v5905
  %v5907 = vpop.f32.mrb[0].mxu0
  %5908 = vdwg.mxu0
  %v5910 = vsel %vm1857, %v4261, 0
  %v5913 = vsel %vm1857, %v4821, 0
  %5915 = vmatprep.subr.mxu0 0.0
  %5916 = vmatpush1.xpose.msra.mxu0 %v5913
  %5917 = vmatprep.subr.mxu0 0.0
  %5918 = vmatpush1.xpose.msra.mxu0 0.0
  %5919 = vmatprep.subr.mxu0 0.0
  %5920 = vmatpush1.xpose.msra.mxu0 0.0
  %5921 = vmatprep.subr.mxu0 0.0
  %5922 = vmatpush1.xpose.msra.mxu0 0.0
  %5923 = vmatprep.subr.mxu0 0.0
  %5924 = vmatpush1.xpose.msra.mxu0 0.0
  %5925 = vmatprep.subr.mxu0 0.0
  %5926 = vmatpush1.xpose.msra.mxu0 0.0
  %5927 = vmatprep.subr.mxu0 0.0
  %5928 = vmatpush1.xpose.msra.mxu0 0.0
  %5929 = vmatprep.subr.mxu0 0.0
  %5930 = vmatpush1.xpose.msra.mxu0 0.0
  %5931 = vmatprep.subr.mxu0 0.0
  %5932 = vmatpush1.xpose.msra.mxu0 0.0
  %5933 = vmatprep.subr.mxu0 0.0
  %5934 = vmatpush1.xpose.msra.mxu0 0.0
  %5935 = vmatprep.subr.mxu0 0.0
  %5936 = vmatpush1.xpose.msra.mxu0 0.0
  %5937 = vmatprep.subr.mxu0 0.0
  %5938 = vmatpush1.xpose.msra.mxu0 0.0
  %5939 = vmatprep.subr.mxu0 0.0
  %5940 = vmatpush1.xpose.msra.mxu0 0.0
  %5941 = vmatprep.subr.mxu0 0.0
  %5942 = vmatpush1.xpose.msra.mxu0 0.0
  %5943 = vmatprep.subr.mxu0 0.0
  %5944 = vmatpush1.xpose.msra.mxu0 0.0
  %5945 = vmatprep.subr.mxu0 0.0
  %5946 = vmatpush1.xpose.msra.mxu0 0.0
  %5947 = vmatprep.subr.mxu0 0.0
  %5948 = vmatpush1.xpose.msra.mxu0 0.0
  %5949 = vmatprep.subr.mxu0 0.0
  %5950 = vmatpush1.xpose.msra.mxu0 0.0
  %5951 = vmatprep.subr.mxu0 0.0
  %5952 = vmatpush1.xpose.msra.mxu0 0.0
  %5953 = vmatprep.subr.mxu0 0.0
  %5954 = vmatpush1.xpose.msra.mxu0 0.0
  %5955 = vmatprep.subr.mxu0 0.0
  %5956 = vmatpush1.xpose.msra.mxu0 0.0
  %5957 = vmatprep.subr.mxu0 0.0
  %5958 = vmatpush1.xpose.msra.mxu0 0.0
  %5959 = vmatprep.subr.mxu0 0.0
  %5960 = vmatpush1.xpose.msra.mxu0 0.0
  %5961 = vmatprep.subr.mxu0 0.0
  %5962 = vmatpush1.xpose.msra.mxu0 0.0
  %5963 = vmatprep.subr.mxu0 0.0
  %5964 = vmatpush1.xpose.msra.mxu0 0.0
  %5965 = vmatprep.subr.mxu0 0.0
  %5966 = vmatpush1.xpose.msra.mxu0 0.0
  %5967 = vmatprep.subr.mxu0 0.0
  %5968 = vmatpush1.xpose.msra.mxu0 0.0
  %5969 = vmatprep.subr.mxu0 0.0
  %5970 = vmatpush1.xpose.msra.mxu0 0.0
  %5971 = vmatprep.subr.mxu0 0.0
  %5972 = vmatpush1.xpose.msra.mxu0 0.0
  %5973 = vmatprep.subr.mxu0 0.0
  %5974 = vmatpush1.xpose.msra.mxu0 0.0
  %5975 = vmatprep.subr.mxu0 0.0
  %5976 = vmatpush1.xpose.msra.mxu0 0.0
  %5977 = vmatprep.subr.mxu0 0.0
  %5978 = vmatpush1.xpose.msra.mxu0 0.0
  %5979 = vmatprep.mubr.f32.mxu0 0.0
  %5980 = vmatmul.mubr.f32.gmra.mrb[0].mxu0 %v5910
  %v5981 = vpop.f32.mrb[0].mxu0
  %v5982 = vadd.f32 0.0, %v5981
  %v5983 = vpop.f32.mrb[0].mxu0
  %5984 = vdwg.mxu0
  %v5986 = vsel %vm1857, %v4331, 0
  %v5989 = vsel %vm1857, %v4891, 0
  %5991 = vmatprep.subr.mxu0 0.0
  %5992 = vmatpush1.xpose.msra.mxu0 %v5989
  %5993 = vmatprep.subr.mxu0 0.0
  %5994 = vmatpush1.xpose.msra.mxu0 0.0
  %5995 = vmatprep.subr.mxu0 0.0
  %5996 = vmatpush1.xpose.msra.mxu0 0.0
  %5997 = vmatprep.subr.mxu0 0.0
  %5998 = vmatpush1.xpose.msra.mxu0 0.0
  %5999 = vmatprep.subr.mxu0 0.0
  %6000 = vmatpush1.xpose.msra.mxu0 0.0
  %6001 = vmatprep.subr.mxu0 0.0
  %6002 = vmatpush1.xpose.msra.mxu0 0.0
  %6003 = vmatprep.subr.mxu0 0.0
  %6004 = vmatpush1.xpose.msra.mxu0 0.0
  %6005 = vmatprep.subr.mxu0 0.0
  %6006 = vmatpush1.xpose.msra.mxu0 0.0
  %6007 = vmatprep.subr.mxu0 0.0
  %6008 = vmatpush1.xpose.msra.mxu0 0.0
  %6009 = vmatprep.subr.mxu0 0.0
  %6010 = vmatpush1.xpose.msra.mxu0 0.0
  %6011 = vmatprep.subr.mxu0 0.0
  %6012 = vmatpush1.xpose.msra.mxu0 0.0
  %6013 = vmatprep.subr.mxu0 0.0
  %6014 = vmatpush1.xpose.msra.mxu0 0.0
  %6015 = vmatprep.subr.mxu0 0.0
  %6016 = vmatpush1.xpose.msra.mxu0 0.0
  %6017 = vmatprep.subr.mxu0 0.0
  %6018 = vmatpush1.xpose.msra.mxu0 0.0
  %6019 = vmatprep.subr.mxu0 0.0
  %6020 = vmatpush1.xpose.msra.mxu0 0.0
  %6021 = vmatprep.subr.mxu0 0.0
  %6022 = vmatpush1.xpose.msra.mxu0 0.0
  %6023 = vmatprep.subr.mxu0 0.0
  %6024 = vmatpush1.xpose.msra.mxu0 0.0
  %6025 = vmatprep.subr.mxu0 0.0
  %6026 = vmatpush1.xpose.msra.mxu0 0.0
  %6027 = vmatprep.subr.mxu0 0.0
  %6028 = vmatpush1.xpose.msra.mxu0 0.0
  %6029 = vmatprep.subr.mxu0 0.0
  %6030 = vmatpush1.xpose.msra.mxu0 0.0
  %6031 = vmatprep.subr.mxu0 0.0
  %6032 = vmatpush1.xpose.msra.mxu0 0.0
  %6033 = vmatprep.subr.mxu0 0.0
  %6034 = vmatpush1.xpose.msra.mxu0 0.0
  %6035 = vmatprep.subr.mxu0 0.0
  %6036 = vmatpush1.xpose.msra.mxu0 0.0
  %6037 = vmatprep.subr.mxu0 0.0
  %6038 = vmatpush1.xpose.msra.mxu0 0.0
  %6039 = vmatprep.subr.mxu0 0.0
  %6040 = vmatpush1.xpose.msra.mxu0 0.0
  %6041 = vmatprep.subr.mxu0 0.0
  %6042 = vmatpush1.xpose.msra.mxu0 0.0
  %6043 = vmatprep.subr.mxu0 0.0
  %6044 = vmatpush1.xpose.msra.mxu0 0.0
  %6045 = vmatprep.subr.mxu0 0.0
  %6046 = vmatpush1.xpose.msra.mxu0 0.0
  %6047 = vmatprep.subr.mxu0 0.0
  %6048 = vmatpush1.xpose.msra.mxu0 0.0
  %6049 = vmatprep.subr.mxu0 0.0
  %6050 = vmatpush1.xpose.msra.mxu0 0.0
  %6051 = vmatprep.subr.mxu0 0.0
  %6052 = vmatpush1.xpose.msra.mxu0 0.0
  %6053 = vmatprep.subr.mxu0 0.0
  %6054 = vmatpush1.xpose.msra.mxu0 0.0
  %6055 = vmatprep.mubr.f32.mxu0 0.0
  %6056 = vmatmul.mubr.f32.gmra.mrb[0].mxu0 %v5986
  %v6057 = vpop.f32.mrb[0].mxu0
  %v6058 = vadd.f32 0.0, %v6057
  %v6059 = vpop.f32.mrb[0].mxu0
  %6060 = vdwg.mxu0
  %v6062 = vsel %vm1857, %v4401, 0
  %v6065 = vsel %vm1857, %v4961, 0
  %6067 = vmatprep.subr.mxu0 0.0
  %6068 = vmatpush1.xpose.msra.mxu0 %v6065
  %6069 = vmatprep.subr.mxu0 0.0
  %6070 = vmatpush1.xpose.msra.mxu0 0.0
  %6071 = vmatprep.subr.mxu0 0.0
  %6072 = vmatpush1.xpose.msra.mxu0 0.0
  %6073 = vmatprep.subr.mxu0 0.0
  %6074 = vmatpush1.xpose.msra.mxu0 0.0
  %6075 = vmatprep.subr.mxu0 0.0
  %6076 = vmatpush1.xpose.msra.mxu0 0.0
  %6077 = vmatprep.subr.mxu0 0.0
  %6078 = vmatpush1.xpose.msra.mxu0 0.0
  %6079 = vmatprep.subr.mxu0 0.0
  %6080 = vmatpush1.xpose.msra.mxu0 0.0
  %6081 = vmatprep.subr.mxu0 0.0
  %6082 = vmatpush1.xpose.msra.mxu0 0.0
  %6083 = vmatprep.subr.mxu0 0.0
  %6084 = vmatpush1.xpose.msra.mxu0 0.0
  %6085 = vmatprep.subr.mxu0 0.0
  %6086 = vmatpush1.xpose.msra.mxu0 0.0
  %6087 = vmatprep.subr.mxu0 0.0
  %6088 = vmatpush1.xpose.msra.mxu0 0.0
  %6089 = vmatprep.subr.mxu0 0.0
  %6090 = vmatpush1.xpose.msra.mxu0 0.0
  %6091 = vmatprep.subr.mxu0 0.0
  %6092 = vmatpush1.xpose.msra.mxu0 0.0
  %6093 = vmatprep.subr.mxu0 0.0
  %6094 = vmatpush1.xpose.msra.mxu0 0.0
  %6095 = vmatprep.subr.mxu0 0.0
  %6096 = vmatpush1.xpose.msra.mxu0 0.0
  %6097 = vmatprep.subr.mxu0 0.0
  %6098 = vmatpush1.xpose.msra.mxu0 0.0
  %6099 = vmatprep.subr.mxu0 0.0
  %6100 = vmatpush1.xpose.msra.mxu0 0.0
  %6101 = vmatprep.subr.mxu0 0.0
  %6102 = vmatpush1.xpose.msra.mxu0 0.0
  %6103 = vmatprep.subr.mxu0 0.0
  %6104 = vmatpush1.xpose.msra.mxu0 0.0
  %6105 = vmatprep.subr.mxu0 0.0
  %6106 = vmatpush1.xpose.msra.mxu0 0.0
  %6107 = vmatprep.subr.mxu0 0.0
  %6108 = vmatpush1.xpose.msra.mxu0 0.0
  %6109 = vmatprep.subr.mxu0 0.0
  %6110 = vmatpush1.xpose.msra.mxu0 0.0
  %6111 = vmatprep.subr.mxu0 0.0
  %6112 = vmatpush1.xpose.msra.mxu0 0.0
  %6113 = vmatprep.subr.mxu0 0.0
  %6114 = vmatpush1.xpose.msra.mxu0 0.0
  %6115 = vmatprep.subr.mxu0 0.0
  %6116 = vmatpush1.xpose.msra.mxu0 0.0
  %6117 = vmatprep.subr.mxu0 0.0
  %6118 = vmatpush1.xpose.msra.mxu0 0.0
  %6119 = vmatprep.subr.mxu0 0.0
  %6120 = vmatpush1.xpose.msra.mxu0 0.0
  %6121 = vmatprep.subr.mxu0 0.0
  %6122 = vmatpush1.xpose.msra.mxu0 0.0
  %6123 = vmatprep.subr.mxu0 0.0
  %6124 = vmatpush1.xpose.msra.mxu0 0.0
  %6125 = vmatprep.subr.mxu0 0.0
  %6126 = vmatpush1.xpose.msra.mxu0 0.0
  %6127 = vmatprep.subr.mxu0 0.0
  %6128 = vmatpush1.xpose.msra.mxu0 0.0
  %6129 = vmatprep.subr.mxu0 0.0
  %6130 = vmatpush1.xpose.msra.mxu0 0.0
  %6131 = vmatprep.mubr.f32.mxu0 0.0
  %6132 = vmatmul.mubr.f32.gmra.mrb[0].mxu0 %v6062
  %v6133 = vpop.f32.mrb[0].mxu0
  %v6134 = vadd.f32 0.0, %v6133
  %v6135 = vpop.f32.mrb[0].mxu0
  %6136 = vdwg.mxu0
  %v6137 = vmul.f32 %v5602, 0.35355338
  %v6138 = vmul.f32 %v5678, 0.35355338
  %v6139 = vmul.f32 %v5754, 0.35355338
  %v6140 = vmul.f32 %v5830, 0.35355338
  %v6141 = vmul.f32 %v5906, 0.35355338
  %v6142 = vmul.f32 %v5982, 0.35355338
  %v6143 = vmul.f32 %v6058, 0.35355338
  %v6144 = vmul.f32 %v6134, 0.35355338
  %v6145 = vsel %vm1857, %v6137, -inf
  %6146 = vmax.xlane.f32.xlu0 %v6145
  %v6147 = vpop.xlane.xlu0 %6146
  %v6148 = vsel %vm1857, %v6138, -inf
  %6149 = vmax.xlane.f32.xlu0 %v6148
  %v6150 = vpop.xlane.xlu0 %6149
  %v6151 = vsel %vm1857, %v6139, -inf
  %6152 = vmax.xlane.f32.xlu0 %v6151
  %v6153 = vpop.xlane.xlu0 %6152
  %v6154 = vsel %vm1857, %v6140, -inf
  %6155 = vmax.xlane.f32.xlu0 %v6154
  %v6156 = vpop.xlane.xlu0 %6155
  %v6157 = vsel %vm1857, %v6141, -inf
  %6158 = vmax.xlane.f32.xlu0 %v6157
  %v6159 = vpop.xlane.xlu0 %6158
  %v6160 = vsel %vm1857, %v6142, -inf
  %6161 = vmax.xlane.f32.xlu0 %v6160
  %v6162 = vpop.xlane.xlu0 %6161
  %v6163 = vsel %vm1857, %v6143, -inf
  %6164 = vmax.xlane.f32.xlu0 %v6163
  %v6165 = vpop.xlane.xlu0 %6164
  %v6166 = vsel %vm1857, %v6144, -inf
  %6167 = vmax.xlane.f32.xlu0 %v6166
  %v6168 = vpop.xlane.xlu0 %6167
  %v6169 = vsub.f32 %v6137, %v6147
  %v6170 = vsub.f32 %v6138, %v6150
  %v6171 = vsub.f32 %v6139, %v6153
  %v6172 = vsub.f32 %v6140, %v6156
  %v6173 = vsub.f32 %v6141, %v6159
  %v6174 = vsub.f32 %v6142, %v6162
  %v6175 = vsub.f32 %v6143, %v6165
  %v6176 = vsub.f32 %v6144, %v6168
  %v6177 = vmul.f32 %v6169, 1.442695
  %v6178 = vpow.pop %v6177
  %v6179 = vmul.f32 %v6170, 1.442695
  %v6180 = vpow.pop %v6179
  %v6181 = vmul.f32 %v6171, 1.442695
  %v6182 = vpow.pop %v6181
  %v6183 = vmul.f32 %v6172, 1.442695
  %v6184 = vpow.pop %v6183
  %v6185 = vmul.f32 %v6173, 1.442695
  %v6186 = vpow.pop %v6185
  %v6187 = vmul.f32 %v6174, 1.442695
  %v6188 = vpow.pop %v6187
  %v6189 = vmul.f32 %v6175, 1.442695
  %v6190 = vpow.pop %v6189
  %v6191 = vmul.f32 %v6176, 1.442695
  %v6192 = vpow.pop %v6191
  %v6193 = vsel %vm1857, %v6178, 0.0
  %6194 = vadd.xlane.f32.xlu0 %v6193
  %v6195 = vpop.xlane.xlu0 %6194
  %v6196 = vsel %vm1857, %v6180, 0.0
  %6197 = vadd.xlane.f32.xlu0 %v6196
  %v6198 = vpop.xlane.xlu0 %6197
  %v6199 = vsel %vm1857, %v6182, 0.0
  %6200 = vadd.xlane.f32.xlu0 %v6199
  %v6201 = vpop.xlane.xlu0 %6200
  %v6202 = vsel %vm1857, %v6184, 0.0
  %6203 = vadd.xlane.f32.xlu0 %v6202
  %v6204 = vpop.xlane.xlu0 %6203
  %v6205 = vsel %vm1857, %v6186, 0.0
  %6206 = vadd.xlane.f32.xlu0 %v6205
  %v6207 = vpop.xlane.xlu0 %6206
  %v6208 = vsel %vm1857, %v6188, 0.0
  %6209 = vadd.xlane.f32.xlu0 %v6208
  %v6210 = vpop.xlane.xlu0 %6209
  %v6211 = vsel %vm1857, %v6190, 0.0
  %6212 = vadd.xlane.f32.xlu0 %v6211
  %v6213 = vpop.xlane.xlu0 %6212
  %v6214 = vsel %vm1857, %v6192, 0.0
  %6215 = vadd.xlane.f32.xlu0 %v6214
  %v6216 = vpop.xlane.xlu0 %6215
  %v6217 = vrcp.pop %v6195
  %v6218 = vrcp.pop %v6198
  %v6219 = vrcp.pop %v6201
  %v6220 = vrcp.pop %v6204
  %v6221 = vrcp.pop %v6207
  %v6222 = vrcp.pop %v6210
  %v6223 = vrcp.pop %v6213
  %v6224 = vrcp.pop %v6216
  %v6225 = vmul.f32 %v6178, %v6217
  %v6226 = vmul.f32 %v6180, %v6218
  %v6227 = vmul.f32 %v6182, %v6219
  %v6228 = vmul.f32 %v6184, %v6220
  %v6229 = vmul.f32 %v6186, %v6221
  %v6230 = vmul.f32 %v6188, %v6222
  %v6231 = vmul.f32 %v6190, %v6223
  %v6232 = vmul.f32 %v6192, %v6224
  %v6234 = vsel %vm1857, %v6225, 0
  %6236 = vmatprep.subr.mxu0 0.0
  %6237 = vmatpush1.msra.mxu0 %v5031
  %6238 = vmatprep.subr.mxu0 0.0
  %6239 = vmatpush1.msra.mxu0 0.0
  %6240 = vmatprep.subr.mxu0 0.0
  %6241 = vmatpush1.msra.mxu0 0.0
  %6242 = vmatprep.subr.mxu0 0.0
  %6243 = vmatpush1.msra.mxu0 0.0
  %6244 = vmatprep.subr.mxu0 0.0
  %6245 = vmatpush1.msra.mxu0 0.0
  %6246 = vmatprep.subr.mxu0 0.0
  %6247 = vmatpush1.msra.mxu0 0.0
  %6248 = vmatprep.subr.mxu0 0.0
  %6249 = vmatpush1.msra.mxu0 0.0
  %6250 = vmatprep.subr.mxu0 0.0
  %6251 = vmatpush1.msra.mxu0 0.0
  %6252 = vmatprep.subr.mxu0 0.0
  %6253 = vmatpush1.msra.mxu0 0.0
  %6254 = vmatprep.subr.mxu0 0.0
  %6255 = vmatpush1.msra.mxu0 0.0
  %6256 = vmatprep.subr.mxu0 0.0
  %6257 = vmatpush1.msra.mxu0 0.0
  %6258 = vmatprep.subr.mxu0 0.0
  %6259 = vmatpush1.msra.mxu0 0.0
  %6260 = vmatprep.subr.mxu0 0.0
  %6261 = vmatpush1.msra.mxu0 0.0
  %6262 = vmatprep.subr.mxu0 0.0
  %6263 = vmatpush1.msra.mxu0 0.0
  %6264 = vmatprep.subr.mxu0 0.0
  %6265 = vmatpush1.msra.mxu0 0.0
  %6266 = vmatprep.subr.mxu0 0.0
  %6267 = vmatpush1.msra.mxu0 0.0
  %6268 = vmatprep.subr.mxu0 0.0
  %6269 = vmatpush1.msra.mxu0 0.0
  %6270 = vmatprep.subr.mxu0 0.0
  %6271 = vmatpush1.msra.mxu0 0.0
  %6272 = vmatprep.subr.mxu0 0.0
  %6273 = vmatpush1.msra.mxu0 0.0
  %6274 = vmatprep.subr.mxu0 0.0
  %6275 = vmatpush1.msra.mxu0 0.0
  %6276 = vmatprep.subr.mxu0 0.0
  %6277 = vmatpush1.msra.mxu0 0.0
  %6278 = vmatprep.subr.mxu0 0.0
  %6279 = vmatpush1.msra.mxu0 0.0
  %6280 = vmatprep.subr.mxu0 0.0
  %6281 = vmatpush1.msra.mxu0 0.0
  %6282 = vmatprep.subr.mxu0 0.0
  %6283 = vmatpush1.msra.mxu0 0.0
  %6284 = vmatprep.subr.mxu0 0.0
  %6285 = vmatpush1.msra.mxu0 0.0
  %6286 = vmatprep.subr.mxu0 0.0
  %6287 = vmatpush1.msra.mxu0 0.0
  %6288 = vmatprep.subr.mxu0 0.0
  %6289 = vmatpush1.msra.mxu0 0.0
  %6290 = vmatprep.subr.mxu0 0.0
  %6291 = vmatpush1.msra.mxu0 0.0
  %6292 = vmatprep.subr.mxu0 0.0
  %6293 = vmatpush1.msra.mxu0 0.0
  %6294 = vmatprep.subr.mxu0 0.0
  %6295 = vmatpush1.msra.mxu0 0.0
  %6296 = vmatprep.subr.mxu0 0.0
  %6297 = vmatpush1.msra.mxu0 0.0
  %6298 = vmatprep.subr.mxu0 0.0
  %6299 = vmatpush1.msra.mxu0 0.0
  %6300 = vmatprep.mubr.f32.mxu0 0.0
  %6301 = vmatmul.mubr.f32.gmra.mrb[0].mxu0 %v6234
  %v6302 = vpop.f32.mrb[0].mxu0
  %v6303 = vadd.f32 0.0, %v6302
  %v6304 = vpop.f32.mrb[0].mxu0
  %6305 = vdwg.mxu0
  %v6307 = vsel %vm1857, %v6226, 0
  %6309 = vmatprep.subr.mxu0 0.0
  %6310 = vmatpush1.msra.mxu0 %v5101
  %6311 = vmatprep.subr.mxu0 0.0
  %6312 = vmatpush1.msra.mxu0 0.0
  %6313 = vmatprep.subr.mxu0 0.0
  %6314 = vmatpush1.msra.mxu0 0.0
  %6315 = vmatprep.subr.mxu0 0.0
  %6316 = vmatpush1.msra.mxu0 0.0
  %6317 = vmatprep.subr.mxu0 0.0
  %6318 = vmatpush1.msra.mxu0 0.0
  %6319 = vmatprep.subr.mxu0 0.0
  %6320 = vmatpush1.msra.mxu0 0.0
  %6321 = vmatprep.subr.mxu0 0.0
  %6322 = vmatpush1.msra.mxu0 0.0
  %6323 = vmatprep.subr.mxu0 0.0
  %6324 = vmatpush1.msra.mxu0 0.0
  %6325 = vmatprep.subr.mxu0 0.0
  %6326 = vmatpush1.msra.mxu0 0.0
  %6327 = vmatprep.subr.mxu0 0.0
  %6328 = vmatpush1.msra.mxu0 0.0
  %6329 = vmatprep.subr.mxu0 0.0
  %6330 = vmatpush1.msra.mxu0 0.0
  %6331 = vmatprep.subr.mxu0 0.0
  %6332 = vmatpush1.msra.mxu0 0.0
  %6333 = vmatprep.subr.mxu0 0.0
  %6334 = vmatpush1.msra.mxu0 0.0
  %6335 = vmatprep.subr.mxu0 0.0
  %6336 = vmatpush1.msra.mxu0 0.0
  %6337 = vmatprep.subr.mxu0 0.0
  %6338 = vmatpush1.msra.mxu0 0.0
  %6339 = vmatprep.subr.mxu0 0.0
  %6340 = vmatpush1.msra.mxu0 0.0
  %6341 = vmatprep.subr.mxu0 0.0
  %6342 = vmatpush1.msra.mxu0 0.0
  %6343 = vmatprep.subr.mxu0 0.0
  %6344 = vmatpush1.msra.mxu0 0.0
  %6345 = vmatprep.subr.mxu0 0.0
  %6346 = vmatpush1.msra.mxu0 0.0
  %6347 = vmatprep.subr.mxu0 0.0
  %6348 = vmatpush1.msra.mxu0 0.0
  %6349 = vmatprep.subr.mxu0 0.0
  %6350 = vmatpush1.msra.mxu0 0.0
  %6351 = vmatprep.subr.mxu0 0.0
  %6352 = vmatpush1.msra.mxu0 0.0
  %6353 = vmatprep.subr.mxu0 0.0
  %6354 = vmatpush1.msra.mxu0 0.0
  %6355 = vmatprep.subr.mxu0 0.0
  %6356 = vmatpush1.msra.mxu0 0.0
  %6357 = vmatprep.subr.mxu0 0.0
  %6358 = vmatpush1.msra.mxu0 0.0
  %6359 = vmatprep.subr.mxu0 0.0
  %6360 = vmatpush1.msra.mxu0 0.0
  %6361 = vmatprep.subr.mxu0 0.0
  %6362 = vmatpush1.msra.mxu0 0.0
  %6363 = vmatprep.subr.mxu0 0.0
  %6364 = vmatpush1.msra.mxu0 0.0
  %6365 = vmatprep.subr.mxu0 0.0
  %6366 = vmatpush1.msra.mxu0 0.0
  %6367 = vmatprep.subr.mxu0 0.0
  %6368 = vmatpush1.msra.mxu0 0.0
  %6369 = vmatprep.subr.mxu0 0.0
  %6370 = vmatpush1.msra.mxu0 0.0
  %6371 = vmatprep.subr.mxu0 0.0
  %6372 = vmatpush1.msra.mxu0 0.0
  %6373 = vmatprep.mubr.f32.mxu0 0.0
  %6374 = vmatmul.mubr.f32.gmra.mrb[0].mxu0 %v6307
  %v6375 = vpop.f32.mrb[0].mxu0
  %v6376 = vadd.f32 0.0, %v6375
  %v6377 = vpop.f32.mrb[0].mxu0
  %6378 = vdwg.mxu0
  %v6380 = vsel %vm1857, %v6227, 0
  %6382 = vmatprep.subr.mxu0 0.0
  %6383 = vmatpush1.msra.mxu0 %v5171
  %6384 = vmatprep.subr.mxu0 0.0
  %6385 = vmatpush1.msra.mxu0 0.0
  %6386 = vmatprep.subr.mxu0 0.0
  %6387 = vmatpush1.msra.mxu0 0.0
  %6388 = vmatprep.subr.mxu0 0.0
  %6389 = vmatpush1.msra.mxu0 0.0
  %6390 = vmatprep.subr.mxu0 0.0
  %6391 = vmatpush1.msra.mxu0 0.0
  %6392 = vmatprep.subr.mxu0 0.0
  %6393 = vmatpush1.msra.mxu0 0.0
  %6394 = vmatprep.subr.mxu0 0.0
  %6395 = vmatpush1.msra.mxu0 0.0
  %6396 = vmatprep.subr.mxu0 0.0
  %6397 = vmatpush1.msra.mxu0 0.0
  %6398 = vmatprep.subr.mxu0 0.0
  %6399 = vmatpush1.msra.mxu0 0.0
  %6400 = vmatprep.subr.mxu0 0.0
  %6401 = vmatpush1.msra.mxu0 0.0
  %6402 = vmatprep.subr.mxu0 0.0
  %6403 = vmatpush1.msra.mxu0 0.0
  %6404 = vmatprep.subr.mxu0 0.0
  %6405 = vmatpush1.msra.mxu0 0.0
  %6406 = vmatprep.subr.mxu0 0.0
  %6407 = vmatpush1.msra.mxu0 0.0
  %6408 = vmatprep.subr.mxu0 0.0
  %6409 = vmatpush1.msra.mxu0 0.0
  %6410 = vmatprep.subr.mxu0 0.0
  %6411 = vmatpush1.msra.mxu0 0.0
  %6412 = vmatprep.subr.mxu0 0.0
  %6413 = vmatpush1.msra.mxu0 0.0
  %6414 = vmatprep.subr.mxu0 0.0
  %6415 = vmatpush1.msra.mxu0 0.0
  %6416 = vmatprep.subr.mxu0 0.0
  %6417 = vmatpush1.msra.mxu0 0.0
  %6418 = vmatprep.subr.mxu0 0.0
  %6419 = vmatpush1.msra.mxu0 0.0
  %6420 = vmatprep.subr.mxu0 0.0
  %6421 = vmatpush1.msra.mxu0 0.0
  %6422 = vmatprep.subr.mxu0 0.0
  %6423 = vmatpush1.msra.mxu0 0.0
  %6424 = vmatprep.subr.mxu0 0.0
  %6425 = vmatpush1.msra.mxu0 0.0
  %6426 = vmatprep.subr.mxu0 0.0
  %6427 = vmatpush1.msra.mxu0 0.0
  %6428 = vmatprep.subr.mxu0 0.0
  %6429 = vmatpush1.msra.mxu0 0.0
  %6430 = vmatprep.subr.mxu0 0.0
  %6431 = vmatpush1.msra.mxu0 0.0
  %6432 = vmatprep.subr.mxu0 0.0
  %6433 = vmatpush1.msra.mxu0 0.0
  %6434 = vmatprep.subr.mxu0 0.0
  %6435 = vmatpush1.msra.mxu0 0.0
  %6436 = vmatprep.subr.mxu0 0.0
  %6437 = vmatpush1.msra.mxu0 0.0
  %6438 = vmatprep.subr.mxu0 0.0
  %6439 = vmatpush1.msra.mxu0 0.0
  %6440 = vmatprep.subr.mxu0 0.0
  %6441 = vmatpush1.msra.mxu0 0.0
  %6442 = vmatprep.subr.mxu0 0.0
  %6443 = vmatpush1.msra.mxu0 0.0
  %6444 = vmatprep.subr.mxu0 0.0
  %6445 = vmatpush1.msra.mxu0 0.0
  %6446 = vmatprep.mubr.f32.mxu0 0.0
  %6447 = vmatmul.mubr.f32.gmra.mrb[0].mxu0 %v6380
  %v6448 = vpop.f32.mrb[0].mxu0
  %v6449 = vadd.f32 0.0, %v6448
  %v6450 = vpop.f32.mrb[0].mxu0
  %6451 = vdwg.mxu0
  %v6453 = vsel %vm1857, %v6228, 0
  %6455 = vmatprep.subr.mxu0 0.0
  %6456 = vmatpush1.msra.mxu0 %v5241
  %6457 = vmatprep.subr.mxu0 0.0
  %6458 = vmatpush1.msra.mxu0 0.0
  %6459 = vmatprep.subr.mxu0 0.0
  %6460 = vmatpush1.msra.mxu0 0.0
  %6461 = vmatprep.subr.mxu0 0.0
  %6462 = vmatpush1.msra.mxu0 0.0
  %6463 = vmatprep.subr.mxu0 0.0
  %6464 = vmatpush1.msra.mxu0 0.0
  %6465 = vmatprep.subr.mxu0 0.0
  %6466 = vmatpush1.msra.mxu0 0.0
  %6467 = vmatprep.subr.mxu0 0.0
  %6468 = vmatpush1.msra.mxu0 0.0
  %6469 = vmatprep.subr.mxu0 0.0
  %6470 = vmatpush1.msra.mxu0 0.0
  %6471 = vmatprep.subr.mxu0 0.0
  %6472 = vmatpush1.msra.mxu0 0.0
  %6473 = vmatprep.subr.mxu0 0.0
  %6474 = vmatpush1.msra.mxu0 0.0
  %6475 = vmatprep.subr.mxu0 0.0
  %6476 = vmatpush1.msra.mxu0 0.0
  %6477 = vmatprep.subr.mxu0 0.0
  %6478 = vmatpush1.msra.mxu0 0.0
  %6479 = vmatprep.subr.mxu0 0.0
  %6480 = vmatpush1.msra.mxu0 0.0
  %6481 = vmatprep.subr.mxu0 0.0
  %6482 = vmatpush1.msra.mxu0 0.0
  %6483 = vmatprep.subr.mxu0 0.0
  %6484 = vmatpush1.msra.mxu0 0.0
  %6485 = vmatprep.subr.mxu0 0.0
  %6486 = vmatpush1.msra.mxu0 0.0
  %6487 = vmatprep.subr.mxu0 0.0
  %6488 = vmatpush1.msra.mxu0 0.0
  %6489 = vmatprep.subr.mxu0 0.0
  %6490 = vmatpush1.msra.mxu0 0.0
  %6491 = vmatprep.subr.mxu0 0.0
  %6492 = vmatpush1.msra.mxu0 0.0
  %6493 = vmatprep.subr.mxu0 0.0
  %6494 = vmatpush1.msra.mxu0 0.0
  %6495 = vmatprep.subr.mxu0 0.0
  %6496 = vmatpush1.msra.mxu0 0.0
  %6497 = vmatprep.subr.mxu0 0.0
  %6498 = vmatpush1.msra.mxu0 0.0
  %6499 = vmatprep.subr.mxu0 0.0
  %6500 = vmatpush1.msra.mxu0 0.0
  %6501 = vmatprep.subr.mxu0 0.0
  %6502 = vmatpush1.msra.mxu0 0.0
  %6503 = vmatprep.subr.mxu0 0.0
  %6504 = vmatpush1.msra.mxu0 0.0
  %6505 = vmatprep.subr.mxu0 0.0
  %6506 = vmatpush1.msra.mxu0 0.0
  %6507 = vmatprep.subr.mxu0 0.0
  %6508 = vmatpush1.msra.mxu0 0.0
  %6509 = vmatprep.subr.mxu0 0.0
  %6510 = vmatpush1.msra.mxu0 0.0
  %6511 = vmatprep.subr.mxu0 0.0
  %6512 = vmatpush1.msra.mxu0 0.0
  %6513 = vmatprep.subr.mxu0 0.0
  %6514 = vmatpush1.msra.mxu0 0.0
  %6515 = vmatprep.subr.mxu0 0.0
  %6516 = vmatpush1.msra.mxu0 0.0
  %6517 = vmatprep.subr.mxu0 0.0
  %6518 = vmatpush1.msra.mxu0 0.0
  %6519 = vmatprep.mubr.f32.mxu0 0.0
  %6520 = vmatmul.mubr.f32.gmra.mrb[0].mxu0 %v6453
  %v6521 = vpop.f32.mrb[0].mxu0
  %v6522 = vadd.f32 0.0, %v6521
  %v6523 = vpop.f32.mrb[0].mxu0
  %6524 = vdwg.mxu0
  %v6526 = vsel %vm1857, %v6229, 0
  %6528 = vmatprep.subr.mxu0 0.0
  %6529 = vmatpush1.msra.mxu0 %v5311
  %6530 = vmatprep.subr.mxu0 0.0
  %6531 = vmatpush1.msra.mxu0 0.0
  %6532 = vmatprep.subr.mxu0 0.0
  %6533 = vmatpush1.msra.mxu0 0.0
  %6534 = vmatprep.subr.mxu0 0.0
  %6535 = vmatpush1.msra.mxu0 0.0
  %6536 = vmatprep.subr.mxu0 0.0
  %6537 = vmatpush1.msra.mxu0 0.0
  %6538 = vmatprep.subr.mxu0 0.0
  %6539 = vmatpush1.msra.mxu0 0.0
  %6540 = vmatprep.subr.mxu0 0.0
  %6541 = vmatpush1.msra.mxu0 0.0
  %6542 = vmatprep.subr.mxu0 0.0
  %6543 = vmatpush1.msra.mxu0 0.0
  %6544 = vmatprep.subr.mxu0 0.0
  %6545 = vmatpush1.msra.mxu0 0.0
  %6546 = vmatprep.subr.mxu0 0.0
  %6547 = vmatpush1.msra.mxu0 0.0
  %6548 = vmatprep.subr.mxu0 0.0
  %6549 = vmatpush1.msra.mxu0 0.0
  %6550 = vmatprep.subr.mxu0 0.0
  %6551 = vmatpush1.msra.mxu0 0.0
  %6552 = vmatprep.subr.mxu0 0.0
  %6553 = vmatpush1.msra.mxu0 0.0
  %6554 = vmatprep.subr.mxu0 0.0
  %6555 = vmatpush1.msra.mxu0 0.0
  %6556 = vmatprep.subr.mxu0 0.0
  %6557 = vmatpush1.msra.mxu0 0.0
  %6558 = vmatprep.subr.mxu0 0.0
  %6559 = vmatpush1.msra.mxu0 0.0
  %6560 = vmatprep.subr.mxu0 0.0
  %6561 = vmatpush1.msra.mxu0 0.0
  %6562 = vmatprep.subr.mxu0 0.0
  %6563 = vmatpush1.msra.mxu0 0.0
  %6564 = vmatprep.subr.mxu0 0.0
  %6565 = vmatpush1.msra.mxu0 0.0
  %6566 = vmatprep.subr.mxu0 0.0
  %6567 = vmatpush1.msra.mxu0 0.0
  %6568 = vmatprep.subr.mxu0 0.0
  %6569 = vmatpush1.msra.mxu0 0.0
  %6570 = vmatprep.subr.mxu0 0.0
  %6571 = vmatpush1.msra.mxu0 0.0
  %6572 = vmatprep.subr.mxu0 0.0
  %6573 = vmatpush1.msra.mxu0 0.0
  %6574 = vmatprep.subr.mxu0 0.0
  %6575 = vmatpush1.msra.mxu0 0.0
  %6576 = vmatprep.subr.mxu0 0.0
  %6577 = vmatpush1.msra.mxu0 0.0
  %6578 = vmatprep.subr.mxu0 0.0
  %6579 = vmatpush1.msra.mxu0 0.0
  %6580 = vmatprep.subr.mxu0 0.0
  %6581 = vmatpush1.msra.mxu0 0.0
  %6582 = vmatprep.subr.mxu0 0.0
  %6583 = vmatpush1.msra.mxu0 0.0
  %6584 = vmatprep.subr.mxu0 0.0
  %6585 = vmatpush1.msra.mxu0 0.0
  %6586 = vmatprep.subr.mxu0 0.0
  %6587 = vmatpush1.msra.mxu0 0.0
  %6588 = vmatprep.subr.mxu0 0.0
  %6589 = vmatpush1.msra.mxu0 0.0
  %6590 = vmatprep.subr.mxu0 0.0
  %6591 = vmatpush1.msra.mxu0 0.0
  %6592 = vmatprep.mubr.f32.mxu0 0.0
  %6593 = vmatmul.mubr.f32.gmra.mrb[0].mxu0 %v6526
  %v6594 = vpop.f32.mrb[0].mxu0
  %v6595 = vadd.f32 0.0, %v6594
  %v6596 = vpop.f32.mrb[0].mxu0
  %6597 = vdwg.mxu0
  %v6599 = vsel %vm1857, %v6230, 0
  %6601 = vmatprep.subr.mxu0 0.0
  %6602 = vmatpush1.msra.mxu0 %v5381
  %6603 = vmatprep.subr.mxu0 0.0
  %6604 = vmatpush1.msra.mxu0 0.0
  %6605 = vmatprep.subr.mxu0 0.0
  %6606 = vmatpush1.msra.mxu0 0.0
  %6607 = vmatprep.subr.mxu0 0.0
  %6608 = vmatpush1.msra.mxu0 0.0
  %6609 = vmatprep.subr.mxu0 0.0
  %6610 = vmatpush1.msra.mxu0 0.0
  %6611 = vmatprep.subr.mxu0 0.0
  %6612 = vmatpush1.msra.mxu0 0.0
  %6613 = vmatprep.subr.mxu0 0.0
  %6614 = vmatpush1.msra.mxu0 0.0
  %6615 = vmatprep.subr.mxu0 0.0
  %6616 = vmatpush1.msra.mxu0 0.0
  %6617 = vmatprep.subr.mxu0 0.0
  %6618 = vmatpush1.msra.mxu0 0.0
  %6619 = vmatprep.subr.mxu0 0.0
  %6620 = vmatpush1.msra.mxu0 0.0
  %6621 = vmatprep.subr.mxu0 0.0
  %6622 = vmatpush1.msra.mxu0 0.0
  %6623 = vmatprep.subr.mxu0 0.0
  %6624 = vmatpush1.msra.mxu0 0.0
  %6625 = vmatprep.subr.mxu0 0.0
  %6626 = vmatpush1.msra.mxu0 0.0
  %6627 = vmatprep.subr.mxu0 0.0
  %6628 = vmatpush1.msra.mxu0 0.0
  %6629 = vmatprep.subr.mxu0 0.0
  %6630 = vmatpush1.msra.mxu0 0.0
  %6631 = vmatprep.subr.mxu0 0.0
  %6632 = vmatpush1.msra.mxu0 0.0
  %6633 = vmatprep.subr.mxu0 0.0
  %6634 = vmatpush1.msra.mxu0 0.0
  %6635 = vmatprep.subr.mxu0 0.0
  %6636 = vmatpush1.msra.mxu0 0.0
  %6637 = vmatprep.subr.mxu0 0.0
  %6638 = vmatpush1.msra.mxu0 0.0
  %6639 = vmatprep.subr.mxu0 0.0
  %6640 = vmatpush1.msra.mxu0 0.0
  %6641 = vmatprep.subr.mxu0 0.0
  %6642 = vmatpush1.msra.mxu0 0.0
  %6643 = vmatprep.subr.mxu0 0.0
  %6644 = vmatpush1.msra.mxu0 0.0
  %6645 = vmatprep.subr.mxu0 0.0
  %6646 = vmatpush1.msra.mxu0 0.0
  %6647 = vmatprep.subr.mxu0 0.0
  %6648 = vmatpush1.msra.mxu0 0.0
  %6649 = vmatprep.subr.mxu0 0.0
  %6650 = vmatpush1.msra.mxu0 0.0
  %6651 = vmatprep.subr.mxu0 0.0
  %6652 = vmatpush1.msra.mxu0 0.0
  %6653 = vmatprep.subr.mxu0 0.0
  %6654 = vmatpush1.msra.mxu0 0.0
  %6655 = vmatprep.subr.mxu0 0.0
  %6656 = vmatpush1.msra.mxu0 0.0
  %6657 = vmatprep.subr.mxu0 0.0
  %6658 = vmatpush1.msra.mxu0 0.0
  %6659 = vmatprep.subr.mxu0 0.0
  %6660 = vmatpush1.msra.mxu0 0.0
  %6661 = vmatprep.subr.mxu0 0.0
  %6662 = vmatpush1.msra.mxu0 0.0
  %6663 = vmatprep.subr.mxu0 0.0
  %6664 = vmatpush1.msra.mxu0 0.0
  %6665 = vmatprep.mubr.f32.mxu0 0.0
  %6666 = vmatmul.mubr.f32.gmra.mrb[0].mxu0 %v6599
  %v6667 = vpop.f32.mrb[0].mxu0
  %v6668 = vadd.f32 0.0, %v6667
  %v6669 = vpop.f32.mrb[0].mxu0
  %6670 = vdwg.mxu0
  %v6672 = vsel %vm1857, %v6231, 0
  %6674 = vmatprep.subr.mxu0 0.0
  %6675 = vmatpush1.msra.mxu0 %v5451
  %6676 = vmatprep.subr.mxu0 0.0
  %6677 = vmatpush1.msra.mxu0 0.0
  %6678 = vmatprep.subr.mxu0 0.0
  %6679 = vmatpush1.msra.mxu0 0.0
  %6680 = vmatprep.subr.mxu0 0.0
  %6681 = vmatpush1.msra.mxu0 0.0
  %6682 = vmatprep.subr.mxu0 0.0
  %6683 = vmatpush1.msra.mxu0 0.0
  %6684 = vmatprep.subr.mxu0 0.0
  %6685 = vmatpush1.msra.mxu0 0.0
  %6686 = vmatprep.subr.mxu0 0.0
  %6687 = vmatpush1.msra.mxu0 0.0
  %6688 = vmatprep.subr.mxu0 0.0
  %6689 = vmatpush1.msra.mxu0 0.0
  %6690 = vmatprep.subr.mxu0 0.0
  %6691 = vmatpush1.msra.mxu0 0.0
  %6692 = vmatprep.subr.mxu0 0.0
  %6693 = vmatpush1.msra.mxu0 0.0
  %6694 = vmatprep.subr.mxu0 0.0
  %6695 = vmatpush1.msra.mxu0 0.0
  %6696 = vmatprep.subr.mxu0 0.0
  %6697 = vmatpush1.msra.mxu0 0.0
  %6698 = vmatprep.subr.mxu0 0.0
  %6699 = vmatpush1.msra.mxu0 0.0
  %6700 = vmatprep.subr.mxu0 0.0
  %6701 = vmatpush1.msra.mxu0 0.0
  %6702 = vmatprep.subr.mxu0 0.0
  %6703 = vmatpush1.msra.mxu0 0.0
  %6704 = vmatprep.subr.mxu0 0.0
  %6705 = vmatpush1.msra.mxu0 0.0
  %6706 = vmatprep.subr.mxu0 0.0
  %6707 = vmatpush1.msra.mxu0 0.0
  %6708 = vmatprep.subr.mxu0 0.0
  %6709 = vmatpush1.msra.mxu0 0.0
  %6710 = vmatprep.subr.mxu0 0.0
  %6711 = vmatpush1.msra.mxu0 0.0
  %6712 = vmatprep.subr.mxu0 0.0
  %6713 = vmatpush1.msra.mxu0 0.0
  %6714 = vmatprep.subr.mxu0 0.0
  %6715 = vmatpush1.msra.mxu0 0.0
  %6716 = vmatprep.subr.mxu0 0.0
  %6717 = vmatpush1.msra.mxu0 0.0
  %6718 = vmatprep.subr.mxu0 0.0
  %6719 = vmatpush1.msra.mxu0 0.0
  %6720 = vmatprep.subr.mxu0 0.0
  %6721 = vmatpush1.msra.mxu0 0.0
  %6722 = vmatprep.subr.mxu0 0.0
  %6723 = vmatpush1.msra.mxu0 0.0
  %6724 = vmatprep.subr.mxu0 0.0
  %6725 = vmatpush1.msra.mxu0 0.0
  %6726 = vmatprep.subr.mxu0 0.0
  %6727 = vmatpush1.msra.mxu0 0.0
  %6728 = vmatprep.subr.mxu0 0.0
  %6729 = vmatpush1.msra.mxu0 0.0
  %6730 = vmatprep.subr.mxu0 0.0
  %6731 = vmatpush1.msra.mxu0 0.0
  %6732 = vmatprep.subr.mxu0 0.0
  %6733 = vmatpush1.msra.mxu0 0.0
  %6734 = vmatprep.subr.mxu0 0.0
  %6735 = vmatpush1.msra.mxu0 0.0
  %6736 = vmatprep.subr.mxu0 0.0
  %6737 = vmatpush1.msra.mxu0 0.0
  %6738 = vmatprep.mubr.f32.mxu0 0.0
  %6739 = vmatmul.mubr.f32.gmra.mrb[0].mxu0 %v6672
  %v6740 = vpop.f32.mrb[0].mxu0
  %v6741 = vadd.f32 0.0, %v6740
  %v6742 = vpop.f32.mrb[0].mxu0
  %6743 = vdwg.mxu0
  %v6745 = vsel %vm1857, %v6232, 0
  %6747 = vmatprep.subr.mxu0 0.0
  %6748 = vmatpush1.msra.mxu0 %v5521
  %6749 = vmatprep.subr.mxu0 0.0
  %6750 = vmatpush1.msra.mxu0 0.0
  %6751 = vmatprep.subr.mxu0 0.0
  %6752 = vmatpush1.msra.mxu0 0.0
  %6753 = vmatprep.subr.mxu0 0.0
  %6754 = vmatpush1.msra.mxu0 0.0
  %6755 = vmatprep.subr.mxu0 0.0
  %6756 = vmatpush1.msra.mxu0 0.0
  %6757 = vmatprep.subr.mxu0 0.0
  %6758 = vmatpush1.msra.mxu0 0.0
  %6759 = vmatprep.subr.mxu0 0.0
  %6760 = vmatpush1.msra.mxu0 0.0
  %6761 = vmatprep.subr.mxu0 0.0
  %6762 = vmatpush1.msra.mxu0 0.0
  %6763 = vmatprep.subr.mxu0 0.0
  %6764 = vmatpush1.msra.mxu0 0.0
  %6765 = vmatprep.subr.mxu0 0.0
  %6766 = vmatpush1.msra.mxu0 0.0
  %6767 = vmatprep.subr.mxu0 0.0
  %6768 = vmatpush1.msra.mxu0 0.0
  %6769 = vmatprep.subr.mxu0 0.0
  %6770 = vmatpush1.msra.mxu0 0.0
  %6771 = vmatprep.subr.mxu0 0.0
  %6772 = vmatpush1.msra.mxu0 0.0
  %6773 = vmatprep.subr.mxu0 0.0
  %6774 = vmatpush1.msra.mxu0 0.0
  %6775 = vmatprep.subr.mxu0 0.0
  %6776 = vmatpush1.msra.mxu0 0.0
  %6777 = vmatprep.subr.mxu0 0.0
  %6778 = vmatpush1.msra.mxu0 0.0
  %6779 = vmatprep.subr.mxu0 0.0
  %6780 = vmatpush1.msra.mxu0 0.0
  %6781 = vmatprep.subr.mxu0 0.0
  %6782 = vmatpush1.msra.mxu0 0.0
  %6783 = vmatprep.subr.mxu0 0.0
  %6784 = vmatpush1.msra.mxu0 0.0
  %6785 = vmatprep.subr.mxu0 0.0
  %6786 = vmatpush1.msra.mxu0 0.0
  %6787 = vmatprep.subr.mxu0 0.0
  %6788 = vmatpush1.msra.mxu0 0.0
  %6789 = vmatprep.subr.mxu0 0.0
  %6790 = vmatpush1.msra.mxu0 0.0
  %6791 = vmatprep.subr.mxu0 0.0
  %6792 = vmatpush1.msra.mxu0 0.0
  %6793 = vmatprep.subr.mxu0 0.0
  %6794 = vmatpush1.msra.mxu0 0.0
  %6795 = vmatprep.subr.mxu0 0.0
  %6796 = vmatpush1.msra.mxu0 0.0
  %6797 = vmatprep.subr.mxu0 0.0
  %6798 = vmatpush1.msra.mxu0 0.0
  %6799 = vmatprep.subr.mxu0 0.0
  %6800 = vmatpush1.msra.mxu0 0.0
  %6801 = vmatprep.subr.mxu0 0.0
  %6802 = vmatpush1.msra.mxu0 0.0
  %6803 = vmatprep.subr.mxu0 0.0
  %6804 = vmatpush1.msra.mxu0 0.0
  %6805 = vmatprep.subr.mxu0 0.0
  %6806 = vmatpush1.msra.mxu0 0.0
  %6807 = vmatprep.subr.mxu0 0.0
  %6808 = vmatpush1.msra.mxu0 0.0
  %6809 = vmatprep.subr.mxu0 0.0
  %6810 = vmatpush1.msra.mxu0 0.0
  %6811 = vmatprep.mubr.f32.mxu0 0.0
  %6812 = vmatmul.mubr.f32.gmra.mrb[0].mxu0 %v6745
  %v6813 = vpop.f32.mrb[0].mxu0
  %v6814 = vadd.f32 0.0, %v6813
  %v6815 = vpop.f32.mrb[0].mxu0
  %6816 = vdwg.mxu0
  %v6818 = vsel %vm1857, %v6303, 0
  %6820 = vmatprep.subr.mxu0 0.0
  %6821 = vmatpush1.msra.mxu0 %v5524
  %6822 = vmatprep.subr.mxu0 0.0
  %6823 = vmatpush1.msra.mxu0 0.0
  %6824 = vmatprep.subr.mxu0 0.0
  %6825 = vmatpush1.msra.mxu0 0.0
  %6826 = vmatprep.subr.mxu0 0.0
  %6827 = vmatpush1.msra.mxu0 0.0
  %6828 = vmatprep.subr.mxu0 0.0
  %6829 = vmatpush1.msra.mxu0 0.0
  %6830 = vmatprep.subr.mxu0 0.0
  %6831 = vmatpush1.msra.mxu0 0.0
  %6832 = vmatprep.subr.mxu0 0.0
  %6833 = vmatpush1.msra.mxu0 0.0
  %6834 = vmatprep.subr.mxu0 0.0
  %6835 = vmatpush1.msra.mxu0 0.0
  %6836 = vmatprep.subr.mxu0 0.0
  %6837 = vmatpush1.msra.mxu0 0.0
  %6838 = vmatprep.subr.mxu0 0.0
  %6839 = vmatpush1.msra.mxu0 0.0
  %6840 = vmatprep.subr.mxu0 0.0
  %6841 = vmatpush1.msra.mxu0 0.0
  %6842 = vmatprep.subr.mxu0 0.0
  %6843 = vmatpush1.msra.mxu0 0.0
  %6844 = vmatprep.subr.mxu0 0.0
  %6845 = vmatpush1.msra.mxu0 0.0
  %6846 = vmatprep.subr.mxu0 0.0
  %6847 = vmatpush1.msra.mxu0 0.0
  %6848 = vmatprep.subr.mxu0 0.0
  %6849 = vmatpush1.msra.mxu0 0.0
  %6850 = vmatprep.subr.mxu0 0.0
  %6851 = vmatpush1.msra.mxu0 0.0
  %6852 = vmatprep.subr.mxu0 0.0
  %6853 = vmatpush1.msra.mxu0 0.0
  %6854 = vmatprep.subr.mxu0 0.0
  %6855 = vmatpush1.msra.mxu0 0.0
  %6856 = vmatprep.subr.mxu0 0.0
  %6857 = vmatpush1.msra.mxu0 0.0
  %6858 = vmatprep.subr.mxu0 0.0
  %6859 = vmatpush1.msra.mxu0 0.0
  %6860 = vmatprep.subr.mxu0 0.0
  %6861 = vmatpush1.msra.mxu0 0.0
  %6862 = vmatprep.subr.mxu0 0.0
  %6863 = vmatpush1.msra.mxu0 0.0
  %6864 = vmatprep.subr.mxu0 0.0
  %6865 = vmatpush1.msra.mxu0 0.0
  %6866 = vmatprep.subr.mxu0 0.0
  %6867 = vmatpush1.msra.mxu0 0.0
  %6868 = vmatprep.subr.mxu0 0.0
  %6869 = vmatpush1.msra.mxu0 0.0
  %6870 = vmatprep.subr.mxu0 0.0
  %6871 = vmatpush1.msra.mxu0 0.0
  %6872 = vmatprep.subr.mxu0 0.0
  %6873 = vmatpush1.msra.mxu0 0.0
  %6874 = vmatprep.subr.mxu0 0.0
  %6875 = vmatpush1.msra.mxu0 0.0
  %6876 = vmatprep.subr.mxu0 0.0
  %6877 = vmatpush1.msra.mxu0 0.0
  %6878 = vmatprep.subr.mxu0 0.0
  %6879 = vmatpush1.msra.mxu0 0.0
  %6880 = vmatprep.subr.mxu0 0.0
  %6881 = vmatpush1.msra.mxu0 0.0
  %6882 = vmatprep.subr.mxu0 0.0
  %6883 = vmatpush1.msra.mxu0 0.0
  %6884 = vmatprep.mubr.f32.mxu0 0.0
  %6885 = vmatmul.mubr.f32.gmra.mrb[0].mxu0 %v6818
  %v6886 = vpop.f32.mrb[0].mxu0
  %v6887 = vadd.f32 0.0, %v6886
  %v6888 = vpop.f32.mrb[0].mxu0
  %6889 = vdwg.mxu0
  %v6891 = vsel %vm1857, %v6376, 0
  %6893 = vmatprep.subr.mxu0 0.0
  %6894 = vmatpush1.msra.mxu0 %v5524
  %6895 = vmatprep.subr.mxu0 0.0
  %6896 = vmatpush1.msra.mxu0 0.0
  %6897 = vmatprep.subr.mxu0 0.0
  %6898 = vmatpush1.msra.mxu0 0.0
  %6899 = vmatprep.subr.mxu0 0.0
  %6900 = vmatpush1.msra.mxu0 0.0
  %6901 = vmatprep.subr.mxu0 0.0
  %6902 = vmatpush1.msra.mxu0 0.0
  %6903 = vmatprep.subr.mxu0 0.0
  %6904 = vmatpush1.msra.mxu0 0.0
  %6905 = vmatprep.subr.mxu0 0.0
  %6906 = vmatpush1.msra.mxu0 0.0
  %6907 = vmatprep.subr.mxu0 0.0
  %6908 = vmatpush1.msra.mxu0 0.0
  %6909 = vmatprep.subr.mxu0 0.0
  %6910 = vmatpush1.msra.mxu0 0.0
  %6911 = vmatprep.subr.mxu0 0.0
  %6912 = vmatpush1.msra.mxu0 0.0
  %6913 = vmatprep.subr.mxu0 0.0
  %6914 = vmatpush1.msra.mxu0 0.0
  %6915 = vmatprep.subr.mxu0 0.0
  %6916 = vmatpush1.msra.mxu0 0.0
  %6917 = vmatprep.subr.mxu0 0.0
  %6918 = vmatpush1.msra.mxu0 0.0
  %6919 = vmatprep.subr.mxu0 0.0
  %6920 = vmatpush1.msra.mxu0 0.0
  %6921 = vmatprep.subr.mxu0 0.0
  %6922 = vmatpush1.msra.mxu0 0.0
  %6923 = vmatprep.subr.mxu0 0.0
  %6924 = vmatpush1.msra.mxu0 0.0
  %6925 = vmatprep.subr.mxu0 0.0
  %6926 = vmatpush1.msra.mxu0 0.0
  %6927 = vmatprep.subr.mxu0 0.0
  %6928 = vmatpush1.msra.mxu0 0.0
  %6929 = vmatprep.subr.mxu0 0.0
  %6930 = vmatpush1.msra.mxu0 0.0
  %6931 = vmatprep.subr.mxu0 0.0
  %6932 = vmatpush1.msra.mxu0 0.0
  %6933 = vmatprep.subr.mxu0 0.0
  %6934 = vmatpush1.msra.mxu0 0.0
  %6935 = vmatprep.subr.mxu0 0.0
  %6936 = vmatpush1.msra.mxu0 0.0
  %6937 = vmatprep.subr.mxu0 0.0
  %6938 = vmatpush1.msra.mxu0 0.0
  %6939 = vmatprep.subr.mxu0 0.0
  %6940 = vmatpush1.msra.mxu0 0.0
  %6941 = vmatprep.subr.mxu0 0.0
  %6942 = vmatpush1.msra.mxu0 0.0
  %6943 = vmatprep.subr.mxu0 0.0
  %6944 = vmatpush1.msra.mxu0 0.0
  %6945 = vmatprep.subr.mxu0 0.0
  %6946 = vmatpush1.msra.mxu0 0.0
  %6947 = vmatprep.subr.mxu0 0.0
  %6948 = vmatpush1.msra.mxu0 0.0
  %6949 = vmatprep.subr.mxu0 0.0
  %6950 = vmatpush1.msra.mxu0 0.0
  %6951 = vmatprep.subr.mxu0 0.0
  %6952 = vmatpush1.msra.mxu0 0.0
  %6953 = vmatprep.subr.mxu0 0.0
  %6954 = vmatpush1.msra.mxu0 0.0
  %6955 = vmatprep.subr.mxu0 0.0
  %6956 = vmatpush1.msra.mxu0 0.0
  %6957 = vmatprep.mubr.f32.mxu0 0.0
  %6958 = vmatmul.mubr.f32.gmra.mrb[0].mxu0 %v6891
  %v6959 = vpop.f32.mrb[0].mxu0
  %v6960 = vadd.f32 0.0, %v6959
  %v6961 = vpop.f32.mrb[0].mxu0
  %6962 = vdwg.mxu0
  %v6964 = vsel %vm1857, %v6449, 0
  %6966 = vmatprep.subr.mxu0 0.0
  %6967 = vmatpush1.msra.mxu0 %v5525
  %6968 = vmatprep.subr.mxu0 0.0
  %6969 = vmatpush1.msra.mxu0 0.0
  %6970 = vmatprep.subr.mxu0 0.0
  %6971 = vmatpush1.msra.mxu0 0.0
  %6972 = vmatprep.subr.mxu0 0.0
  %6973 = vmatpush1.msra.mxu0 0.0
  %6974 = vmatprep.subr.mxu0 0.0
  %6975 = vmatpush1.msra.mxu0 0.0
  %6976 = vmatprep.subr.mxu0 0.0
  %6977 = vmatpush1.msra.mxu0 0.0
  %6978 = vmatprep.subr.mxu0 0.0
  %6979 = vmatpush1.msra.mxu0 0.0
  %6980 = vmatprep.subr.mxu0 0.0
  %6981 = vmatpush1.msra.mxu0 0.0
  %6982 = vmatprep.subr.mxu0 0.0
  %6983 = vmatpush1.msra.mxu0 0.0
  %6984 = vmatprep.subr.mxu0 0.0
  %6985 = vmatpush1.msra.mxu0 0.0
  %6986 = vmatprep.subr.mxu0 0.0
  %6987 = vmatpush1.msra.mxu0 0.0
  %6988 = vmatprep.subr.mxu0 0.0
  %6989 = vmatpush1.msra.mxu0 0.0
  %6990 = vmatprep.subr.mxu0 0.0
  %6991 = vmatpush1.msra.mxu0 0.0
  %6992 = vmatprep.subr.mxu0 0.0
  %6993 = vmatpush1.msra.mxu0 0.0
  %6994 = vmatprep.subr.mxu0 0.0
  %6995 = vmatpush1.msra.mxu0 0.0
  %6996 = vmatprep.subr.mxu0 0.0
  %6997 = vmatpush1.msra.mxu0 0.0
  %6998 = vmatprep.subr.mxu0 0.0
  %6999 = vmatpush1.msra.mxu0 0.0
  %7000 = vmatprep.subr.mxu0 0.0
  %7001 = vmatpush1.msra.mxu0 0.0
  %7002 = vmatprep.subr.mxu0 0.0
  %7003 = vmatpush1.msra.mxu0 0.0
  %7004 = vmatprep.subr.mxu0 0.0
  %7005 = vmatpush1.msra.mxu0 0.0
  %7006 = vmatprep.subr.mxu0 0.0
  %7007 = vmatpush1.msra.mxu0 0.0
  %7008 = vmatprep.subr.mxu0 0.0
  %7009 = vmatpush1.msra.mxu0 0.0
  %7010 = vmatprep.subr.mxu0 0.0
  %7011 = vmatpush1.msra.mxu0 0.0
  %7012 = vmatprep.subr.mxu0 0.0
  %7013 = vmatpush1.msra.mxu0 0.0
  %7014 = vmatprep.subr.mxu0 0.0
  %7015 = vmatpush1.msra.mxu0 0.0
  %7016 = vmatprep.subr.mxu0 0.0
  %7017 = vmatpush1.msra.mxu0 0.0
  %7018 = vmatprep.subr.mxu0 0.0
  %7019 = vmatpush1.msra.mxu0 0.0
  %7020 = vmatprep.subr.mxu0 0.0
  %7021 = vmatpush1.msra.mxu0 0.0
  %7022 = vmatprep.subr.mxu0 0.0
  %7023 = vmatpush1.msra.mxu0 0.0
  %7024 = vmatprep.subr.mxu0 0.0
  %7025 = vmatpush1.msra.mxu0 0.0
  %7026 = vmatprep.subr.mxu0 0.0
  %7027 = vmatpush1.msra.mxu0 0.0
  %7028 = vmatprep.subr.mxu0 0.0
  %7029 = vmatpush1.msra.mxu0 0.0
  %7030 = vmatprep.mubr.f32.mxu0 0.0
  %7031 = vmatmul.mubr.f32.gmra.mrb[0].mxu0 %v6964
  %v7032 = vpop.f32.mrb[0].mxu0
  %v7033 = vadd.f32 0.0, %v7032
  %v7034 = vpop.f32.mrb[0].mxu0
  %7035 = vdwg.mxu0
  %v7037 = vsel %vm1857, %v6522, 0
  %7039 = vmatprep.subr.mxu0 0.0
  %7040 = vmatpush1.msra.mxu0 %v5525
  %7041 = vmatprep.subr.mxu0 0.0
  %7042 = vmatpush1.msra.mxu0 0.0
  %7043 = vmatprep.subr.mxu0 0.0
  %7044 = vmatpush1.msra.mxu0 0.0
  %7045 = vmatprep.subr.mxu0 0.0
  %7046 = vmatpush1.msra.mxu0 0.0
  %7047 = vmatprep.subr.mxu0 0.0
  %7048 = vmatpush1.msra.mxu0 0.0
  %7049 = vmatprep.subr.mxu0 0.0
  %7050 = vmatpush1.msra.mxu0 0.0
  %7051 = vmatprep.subr.mxu0 0.0
  %7052 = vmatpush1.msra.mxu0 0.0
  %7053 = vmatprep.subr.mxu0 0.0
  %7054 = vmatpush1.msra.mxu0 0.0
  %7055 = vmatprep.subr.mxu0 0.0
  %7056 = vmatpush1.msra.mxu0 0.0
  %7057 = vmatprep.subr.mxu0 0.0
  %7058 = vmatpush1.msra.mxu0 0.0
  %7059 = vmatprep.subr.mxu0 0.0
  %7060 = vmatpush1.msra.mxu0 0.0
  %7061 = vmatprep.subr.mxu0 0.0
  %7062 = vmatpush1.msra.mxu0 0.0
  %7063 = vmatprep.subr.mxu0 0.0
  %7064 = vmatpush1.msra.mxu0 0.0
  %7065 = vmatprep.subr.mxu0 0.0
  %7066 = vmatpush1.msra.mxu0 0.0
  %7067 = vmatprep.subr.mxu0 0.0
  %7068 = vmatpush1.msra.mxu0 0.0
  %7069 = vmatprep.subr.mxu0 0.0
  %7070 = vmatpush1.msra.mxu0 0.0
  %7071 = vmatprep.subr.mxu0 0.0
  %7072 = vmatpush1.msra.mxu0 0.0
  %7073 = vmatprep.subr.mxu0 0.0
  %7074 = vmatpush1.msra.mxu0 0.0
  %7075 = vmatprep.subr.mxu0 0.0
  %7076 = vmatpush1.msra.mxu0 0.0
  %7077 = vmatprep.subr.mxu0 0.0
  %7078 = vmatpush1.msra.mxu0 0.0
  %7079 = vmatprep.subr.mxu0 0.0
  %7080 = vmatpush1.msra.mxu0 0.0
  %7081 = vmatprep.subr.mxu0 0.0
  %7082 = vmatpush1.msra.mxu0 0.0
  %7083 = vmatprep.subr.mxu0 0.0
  %7084 = vmatpush1.msra.mxu0 0.0
  %7085 = vmatprep.subr.mxu0 0.0
  %7086 = vmatpush1.msra.mxu0 0.0
  %7087 = vmatprep.subr.mxu0 0.0
  %7088 = vmatpush1.msra.mxu0 0.0
  %7089 = vmatprep.subr.mxu0 0.0
  %7090 = vmatpush1.msra.mxu0 0.0
  %7091 = vmatprep.subr.mxu0 0.0
  %7092 = vmatpush1.msra.mxu0 0.0
  %7093 = vmatprep.subr.mxu0 0.0
  %7094 = vmatpush1.msra.mxu0 0.0
  %7095 = vmatprep.subr.mxu0 0.0
  %7096 = vmatpush1.msra.mxu0 0.0
  %7097 = vmatprep.subr.mxu0 0.0
  %7098 = vmatpush1.msra.mxu0 0.0
  %7099 = vmatprep.subr.mxu0 0.0
  %7100 = vmatpush1.msra.mxu0 0.0
  %7101 = vmatprep.subr.mxu0 0.0
  %7102 = vmatpush1.msra.mxu0 0.0
  %7103 = vmatprep.mubr.f32.mxu0 0.0
  %7104 = vmatmul.mubr.f32.gmra.mrb[0].mxu0 %v7037
  %v7105 = vpop.f32.mrb[0].mxu0
  %v7106 = vadd.f32 0.0, %v7105
  %v7107 = vpop.f32.mrb[0].mxu0
  %7108 = vdwg.mxu0
  %v7110 = vsel %vm1857, %v6595, 0
  %7112 = vmatprep.subr.mxu0 0.0
  %7113 = vmatpush1.msra.mxu0 %v5526
  %7114 = vmatprep.subr.mxu0 0.0
  %7115 = vmatpush1.msra.mxu0 0.0
  %7116 = vmatprep.subr.mxu0 0.0
  %7117 = vmatpush1.msra.mxu0 0.0
  %7118 = vmatprep.subr.mxu0 0.0
  %7119 = vmatpush1.msra.mxu0 0.0
  %7120 = vmatprep.subr.mxu0 0.0
  %7121 = vmatpush1.msra.mxu0 0.0
  %7122 = vmatprep.subr.mxu0 0.0
  %7123 = vmatpush1.msra.mxu0 0.0
  %7124 = vmatprep.subr.mxu0 0.0
  %7125 = vmatpush1.msra.mxu0 0.0
  %7126 = vmatprep.subr.mxu0 0.0
  %7127 = vmatpush1.msra.mxu0 0.0
  %7128 = vmatprep.subr.mxu0 0.0
  %7129 = vmatpush1.msra.mxu0 0.0
  %7130 = vmatprep.subr.mxu0 0.0
  %7131 = vmatpush1.msra.mxu0 0.0
  %7132 = vmatprep.subr.mxu0 0.0
  %7133 = vmatpush1.msra.mxu0 0.0
  %7134 = vmatprep.subr.mxu0 0.0
  %7135 = vmatpush1.msra.mxu0 0.0
  %7136 = vmatprep.subr.mxu0 0.0
  %7137 = vmatpush1.msra.mxu0 0.0
  %7138 = vmatprep.subr.mxu0 0.0
  %7139 = vmatpush1.msra.mxu0 0.0
  %7140 = vmatprep.subr.mxu0 0.0
  %7141 = vmatpush1.msra.mxu0 0.0
  %7142 = vmatprep.subr.mxu0 0.0
  %7143 = vmatpush1.msra.mxu0 0.0
  %7144 = vmatprep.subr.mxu0 0.0
  %7145 = vmatpush1.msra.mxu0 0.0
  %7146 = vmatprep.subr.mxu0 0.0
  %7147 = vmatpush1.msra.mxu0 0.0
  %7148 = vmatprep.subr.mxu0 0.0
  %7149 = vmatpush1.msra.mxu0 0.0
  %7150 = vmatprep.subr.mxu0 0.0
  %7151 = vmatpush1.msra.mxu0 0.0
  %7152 = vmatprep.subr.mxu0 0.0
  %7153 = vmatpush1.msra.mxu0 0.0
  %7154 = vmatprep.subr.mxu0 0.0
  %7155 = vmatpush1.msra.mxu0 0.0
  %7156 = vmatprep.subr.mxu0 0.0
  %7157 = vmatpush1.msra.mxu0 0.0
  %7158 = vmatprep.subr.mxu0 0.0
  %7159 = vmatpush1.msra.mxu0 0.0
  %7160 = vmatprep.subr.mxu0 0.0
  %7161 = vmatpush1.msra.mxu0 0.0
  %7162 = vmatprep.subr.mxu0 0.0
  %7163 = vmatpush1.msra.mxu0 0.0
  %7164 = vmatprep.subr.mxu0 0.0
  %7165 = vmatpush1.msra.mxu0 0.0
  %7166 = vmatprep.subr.mxu0 0.0
  %7167 = vmatpush1.msra.mxu0 0.0
  %7168 = vmatprep.subr.mxu0 0.0
  %7169 = vmatpush1.msra.mxu0 0.0
  %7170 = vmatprep.subr.mxu0 0.0
  %7171 = vmatpush1.msra.mxu0 0.0
  %7172 = vmatprep.subr.mxu0 0.0
  %7173 = vmatpush1.msra.mxu0 0.0
  %7174 = vmatprep.subr.mxu0 0.0
  %7175 = vmatpush1.msra.mxu0 0.0
  %7176 = vmatprep.mubr.f32.mxu0 0.0
  %7177 = vmatmul.mubr.f32.gmra.mrb[0].mxu0 %v7110
  %v7178 = vpop.f32.mrb[0].mxu0
  %v7179 = vadd.f32 0.0, %v7178
  %v7180 = vpop.f32.mrb[0].mxu0
  %7181 = vdwg.mxu0
  %v7183 = vsel %vm1857, %v6668, 0
  %7185 = vmatprep.subr.mxu0 0.0
  %7186 = vmatpush1.msra.mxu0 %v5526
  %7187 = vmatprep.subr.mxu0 0.0
  %7188 = vmatpush1.msra.mxu0 0.0
  %7189 = vmatprep.subr.mxu0 0.0
  %7190 = vmatpush1.msra.mxu0 0.0
  %7191 = vmatprep.subr.mxu0 0.0
  %7192 = vmatpush1.msra.mxu0 0.0
  %7193 = vmatprep.subr.mxu0 0.0
  %7194 = vmatpush1.msra.mxu0 0.0
  %7195 = vmatprep.subr.mxu0 0.0
  %7196 = vmatpush1.msra.mxu0 0.0
  %7197 = vmatprep.subr.mxu0 0.0
  %7198 = vmatpush1.msra.mxu0 0.0
  %7199 = vmatprep.subr.mxu0 0.0
  %7200 = vmatpush1.msra.mxu0 0.0
  %7201 = vmatprep.subr.mxu0 0.0
  %7202 = vmatpush1.msra.mxu0 0.0
  %7203 = vmatprep.subr.mxu0 0.0
  %7204 = vmatpush1.msra.mxu0 0.0
  %7205 = vmatprep.subr.mxu0 0.0
  %7206 = vmatpush1.msra.mxu0 0.0
  %7207 = vmatprep.subr.mxu0 0.0
  %7208 = vmatpush1.msra.mxu0 0.0
  %7209 = vmatprep.subr.mxu0 0.0
  %7210 = vmatpush1.msra.mxu0 0.0
  %7211 = vmatprep.subr.mxu0 0.0
  %7212 = vmatpush1.msra.mxu0 0.0
  %7213 = vmatprep.subr.mxu0 0.0
  %7214 = vmatpush1.msra.mxu0 0.0
  %7215 = vmatprep.subr.mxu0 0.0
  %7216 = vmatpush1.msra.mxu0 0.0
  %7217 = vmatprep.subr.mxu0 0.0
  %7218 = vmatpush1.msra.mxu0 0.0
  %7219 = vmatprep.subr.mxu0 0.0
  %7220 = vmatpush1.msra.mxu0 0.0
  %7221 = vmatprep.subr.mxu0 0.0
  %7222 = vmatpush1.msra.mxu0 0.0
  %7223 = vmatprep.subr.mxu0 0.0
  %7224 = vmatpush1.msra.mxu0 0.0
  %7225 = vmatprep.subr.mxu0 0.0
  %7226 = vmatpush1.msra.mxu0 0.0
  %7227 = vmatprep.subr.mxu0 0.0
  %7228 = vmatpush1.msra.mxu0 0.0
  %7229 = vmatprep.subr.mxu0 0.0
  %7230 = vmatpush1.msra.mxu0 0.0
  %7231 = vmatprep.subr.mxu0 0.0
  %7232 = vmatpush1.msra.mxu0 0.0
  %7233 = vmatprep.subr.mxu0 0.0
  %7234 = vmatpush1.msra.mxu0 0.0
  %7235 = vmatprep.subr.mxu0 0.0
  %7236 = vmatpush1.msra.mxu0 0.0
  %7237 = vmatprep.subr.mxu0 0.0
  %7238 = vmatpush1.msra.mxu0 0.0
  %7239 = vmatprep.subr.mxu0 0.0
  %7240 = vmatpush1.msra.mxu0 0.0
  %7241 = vmatprep.subr.mxu0 0.0
  %7242 = vmatpush1.msra.mxu0 0.0
  %7243 = vmatprep.subr.mxu0 0.0
  %7244 = vmatpush1.msra.mxu0 0.0
  %7245 = vmatprep.subr.mxu0 0.0
  %7246 = vmatpush1.msra.mxu0 0.0
  %7247 = vmatprep.subr.mxu0 0.0
  %7248 = vmatpush1.msra.mxu0 0.0
  %7249 = vmatprep.mubr.f32.mxu0 0.0
  %7250 = vmatmul.mubr.f32.gmra.mrb[0].mxu0 %v7183
  %v7251 = vpop.f32.mrb[0].mxu0
  %v7252 = vadd.f32 0.0, %v7251
  %v7253 = vpop.f32.mrb[0].mxu0
  %7254 = vdwg.mxu0
  %v7256 = vsel %vm1857, %v6741, 0
  %7258 = vmatprep.subr.mxu0 0.0
  %7259 = vmatpush1.msra.mxu0 %v5527
  %7260 = vmatprep.subr.mxu0 0.0
  %7261 = vmatpush1.msra.mxu0 0.0
  %7262 = vmatprep.subr.mxu0 0.0
  %7263 = vmatpush1.msra.mxu0 0.0
  %7264 = vmatprep.subr.mxu0 0.0
  %7265 = vmatpush1.msra.mxu0 0.0
  %7266 = vmatprep.subr.mxu0 0.0
  %7267 = vmatpush1.msra.mxu0 0.0
  %7268 = vmatprep.subr.mxu0 0.0
  %7269 = vmatpush1.msra.mxu0 0.0
  %7270 = vmatprep.subr.mxu0 0.0
  %7271 = vmatpush1.msra.mxu0 0.0
  %7272 = vmatprep.subr.mxu0 0.0
  %7273 = vmatpush1.msra.mxu0 0.0
  %7274 = vmatprep.subr.mxu0 0.0
  %7275 = vmatpush1.msra.mxu0 0.0
  %7276 = vmatprep.subr.mxu0 0.0
  %7277 = vmatpush1.msra.mxu0 0.0
  %7278 = vmatprep.subr.mxu0 0.0
  %7279 = vmatpush1.msra.mxu0 0.0
  %7280 = vmatprep.subr.mxu0 0.0
  %7281 = vmatpush1.msra.mxu0 0.0
  %7282 = vmatprep.subr.mxu0 0.0
  %7283 = vmatpush1.msra.mxu0 0.0
  %7284 = vmatprep.subr.mxu0 0.0
  %7285 = vmatpush1.msra.mxu0 0.0
  %7286 = vmatprep.subr.mxu0 0.0
  %7287 = vmatpush1.msra.mxu0 0.0
  %7288 = vmatprep.subr.mxu0 0.0
  %7289 = vmatpush1.msra.mxu0 0.0
  %7290 = vmatprep.subr.mxu0 0.0
  %7291 = vmatpush1.msra.mxu0 0.0
  %7292 = vmatprep.subr.mxu0 0.0
  %7293 = vmatpush1.msra.mxu0 0.0
  %7294 = vmatprep.subr.mxu0 0.0
  %7295 = vmatpush1.msra.mxu0 0.0
  %7296 = vmatprep.subr.mxu0 0.0
  %7297 = vmatpush1.msra.mxu0 0.0
  %7298 = vmatprep.subr.mxu0 0.0
  %7299 = vmatpush1.msra.mxu0 0.0
  %7300 = vmatprep.subr.mxu0 0.0
  %7301 = vmatpush1.msra.mxu0 0.0
  %7302 = vmatprep.subr.mxu0 0.0
  %7303 = vmatpush1.msra.mxu0 0.0
  %7304 = vmatprep.subr.mxu0 0.0
  %7305 = vmatpush1.msra.mxu0 0.0
  %7306 = vmatprep.subr.mxu0 0.0
  %7307 = vmatpush1.msra.mxu0 0.0
  %7308 = vmatprep.subr.mxu0 0.0
  %7309 = vmatpush1.msra.mxu0 0.0
  %7310 = vmatprep.subr.mxu0 0.0
  %7311 = vmatpush1.msra.mxu0 0.0
  %7312 = vmatprep.subr.mxu0 0.0
  %7313 = vmatpush1.msra.mxu0 0.0
  %7314 = vmatprep.subr.mxu0 0.0
  %7315 = vmatpush1.msra.mxu0 0.0
  %7316 = vmatprep.subr.mxu0 0.0
  %7317 = vmatpush1.msra.mxu0 0.0
  %7318 = vmatprep.subr.mxu0 0.0
  %7319 = vmatpush1.msra.mxu0 0.0
  %7320 = vmatprep.subr.mxu0 0.0
  %7321 = vmatpush1.msra.mxu0 0.0
  %7322 = vmatprep.mubr.f32.mxu0 0.0
  %7323 = vmatmul.mubr.f32.gmra.mrb[0].mxu0 %v7256
  %v7324 = vpop.f32.mrb[0].mxu0
  %v7325 = vadd.f32 0.0, %v7324
  %v7326 = vpop.f32.mrb[0].mxu0
  %7327 = vdwg.mxu0
  %v7329 = vsel %vm1857, %v6814, 0
  %7331 = vmatprep.subr.mxu0 0.0
  %7332 = vmatpush1.msra.mxu0 %v5527
  %7333 = vmatprep.subr.mxu0 0.0
  %7334 = vmatpush1.msra.mxu0 0.0
  %7335 = vmatprep.subr.mxu0 0.0
  %7336 = vmatpush1.msra.mxu0 0.0
  %7337 = vmatprep.subr.mxu0 0.0
  %7338 = vmatpush1.msra.mxu0 0.0
  %7339 = vmatprep.subr.mxu0 0.0
  %7340 = vmatpush1.msra.mxu0 0.0
  %7341 = vmatprep.subr.mxu0 0.0
  %7342 = vmatpush1.msra.mxu0 0.0
  %7343 = vmatprep.subr.mxu0 0.0
  %7344 = vmatpush1.msra.mxu0 0.0
  %7345 = vmatprep.subr.mxu0 0.0
  %7346 = vmatpush1.msra.mxu0 0.0
  %7347 = vmatprep.subr.mxu0 0.0
  %7348 = vmatpush1.msra.mxu0 0.0
  %7349 = vmatprep.subr.mxu0 0.0
  %7350 = vmatpush1.msra.mxu0 0.0
  %7351 = vmatprep.subr.mxu0 0.0
  %7352 = vmatpush1.msra.mxu0 0.0
  %7353 = vmatprep.subr.mxu0 0.0
  %7354 = vmatpush1.msra.mxu0 0.0
  %7355 = vmatprep.subr.mxu0 0.0
  %7356 = vmatpush1.msra.mxu0 0.0
  %7357 = vmatprep.subr.mxu0 0.0
  %7358 = vmatpush1.msra.mxu0 0.0
  %7359 = vmatprep.subr.mxu0 0.0
  %7360 = vmatpush1.msra.mxu0 0.0
  %7361 = vmatprep.subr.mxu0 0.0
  %7362 = vmatpush1.msra.mxu0 0.0
  %7363 = vmatprep.subr.mxu0 0.0
  %7364 = vmatpush1.msra.mxu0 0.0
  %7365 = vmatprep.subr.mxu0 0.0
  %7366 = vmatpush1.msra.mxu0 0.0
  %7367 = vmatprep.subr.mxu0 0.0
  %7368 = vmatpush1.msra.mxu0 0.0
  %7369 = vmatprep.subr.mxu0 0.0
  %7370 = vmatpush1.msra.mxu0 0.0
  %7371 = vmatprep.subr.mxu0 0.0
  %7372 = vmatpush1.msra.mxu0 0.0
  %7373 = vmatprep.subr.mxu0 0.0
  %7374 = vmatpush1.msra.mxu0 0.0
  %7375 = vmatprep.subr.mxu0 0.0
  %7376 = vmatpush1.msra.mxu0 0.0
  %7377 = vmatprep.subr.mxu0 0.0
  %7378 = vmatpush1.msra.mxu0 0.0
  %7379 = vmatprep.subr.mxu0 0.0
  %7380 = vmatpush1.msra.mxu0 0.0
  %7381 = vmatprep.subr.mxu0 0.0
  %7382 = vmatpush1.msra.mxu0 0.0
  %7383 = vmatprep.subr.mxu0 0.0
  %7384 = vmatpush1.msra.mxu0 0.0
  %7385 = vmatprep.subr.mxu0 0.0
  %7386 = vmatpush1.msra.mxu0 0.0
  %7387 = vmatprep.subr.mxu0 0.0
  %7388 = vmatpush1.msra.mxu0 0.0
  %7389 = vmatprep.subr.mxu0 0.0
  %7390 = vmatpush1.msra.mxu0 0.0
  %7391 = vmatprep.subr.mxu0 0.0
  %7392 = vmatpush1.msra.mxu0 0.0
  %7393 = vmatprep.subr.mxu0 0.0
  %7394 = vmatpush1.msra.mxu0 0.0
  %7395 = vmatprep.mubr.f32.mxu0 0.0
  %7396 = vmatmul.mubr.f32.gmra.mrb[0].mxu0 %v7329
  %v7397 = vpop.f32.mrb[0].mxu0
  %v7398 = vadd.f32 0.0, %v7397
  %v7399 = vpop.f32.mrb[0].mxu0
  %7400 = vdwg.mxu0
  %v7401 = vadd.f32 %v6887, %v7033
  %v7402 = vadd.f32 %v6960, %v7106
  %v7403 = vadd.f32 %v7401, %v7179
  %v7404 = vadd.f32 %v7402, %v7252
  %v7405 = vadd.f32 %v7403, %v7325
  %v7406 = vadd.f32 %v7404, %v7398
  %v7408 = vlaneseq
  %v7409 = vshrl.u32 %v7408, 7
  %v7410 = vsub.s32 0, %v7409
  %v7411 = vrot.slane %v5528, %v7410
  %v7413 = vadd.f32 %v7405, %v7411
  %v7414 = vadd.f32 %v7406, %v7411
  %v7415 = vadd.f32 %v3744, %v7413
  %v7416 = vadd.f32 %v3745, %v7414
  %v7417 = vld [vmem:[%s6] sm:$0x1]
  %v7418 = vld [vmem:[%s7] sm:$0x1]
  %v7419 = vsel %vm68, %v7415, 0.0
  %7420 = vadd.xlane.f32.xlu0 %v7419
  %v7421 = vpop.xlane.xlu0 %7420
  %v7422 = vsel %vm68, %v7416, 0.0
  %7423 = vadd.xlane.f32.xlu0 %v7422
  %v7424 = vpop.xlane.xlu0 %7423
  %v7425 = vmul.f32 %v7421, %v75
  %v7426 = vmul.f32 %v7424, %v75
  %v7427 = vsub.f32 %v7415, %v7425
  %v7428 = vsub.f32 %v7416, %v7426
  %v7429 = vmul.f32 %v7427, %v7427
  %v7430 = vmul.f32 %v7428, %v7428
  %v7431 = vsel %vm68, %v7429, 0.0
  %7432 = vadd.xlane.f32.xlu0 %v7431
  %v7433 = vpop.xlane.xlu0 %7432
  %v7434 = vsel %vm68, %v7430, 0.0
  %7435 = vadd.xlane.f32.xlu0 %v7434
  %v7436 = vpop.xlane.xlu0 %7435
  %v7437 = vmul.f32 %v7433, %v75
  %v7438 = vmul.f32 %v7436, %v75
  %v7439 = vadd.f32 %v7437, 1e-05
  %v7440 = vadd.f32 %v7438, 1e-05
  %v7441 = vrsqrt.pop %v7439
  %v7442 = vrsqrt.pop %v7440
  %v7443 = vmul.f32 %v7427, %v7441
  %v7444 = vmul.f32 %v7428, %v7442
  %v7446 = vlaneseq
  %v7447 = vshrl.u32 %v7446, 7
  %v7448 = vsub.s32 0, %v7447
  %v7449 = vrot.slane %v7417, %v7448
  %v7451 = vmul.f32 %v7443, %v7449
  %v7452 = vmul.f32 %v7444, %v7449
  %v7454 = vlaneseq
  %v7455 = vshrl.u32 %v7454, 7
  %v7456 = vsub.s32 0, %v7455
  %v7457 = vrot.slane %v7418, %v7456
  %v7459 = vadd.f32 %v7451, %v7457
  %v7460 = vadd.f32 %v7452, %v7457
  %v7461 = vld [vmem:[%s15] sm:$0xff]
  %v7462 = vld [vmem:[%s15 + $0x8] sm:$0xff]
  %v7463 = vld [vmem:[%s15 + $0x10] sm:$0xff]
  %v7464 = vld [vmem:[%s15 + $0x18] sm:$0xff]
  %v7465 = vld [vmem:[%s16] sm:$0x1]
  %v7467 = vlaneseq
  %v7468 = vshrl.u32 %v7467, 7
  %v7469 = vsub.s32 0, %v7468
  %v7470 = vrot.slane %v7465, %v7469
  %v7473 = vsel %vm68, %v7459, 0
  %7475 = vmatprep.subr.mxu0 0.0
  %7476 = vmatpush1.msra.mxu0 %v7461
  %7477 = vmatprep.subr.mxu0 0.0
  %7478 = vmatpush1.msra.mxu0 %v7462
  %7479 = vmatprep.subr.mxu0 0.0
  %7480 = vmatpush1.msra.mxu0 %v7463
  %7481 = vmatprep.subr.mxu0 0.0
  %7482 = vmatpush1.msra.mxu0 %v7464
  %7483 = vmatprep.subr.mxu0 0.0
  %7484 = vmatpush1.msra.mxu0 0.0
  %7485 = vmatprep.subr.mxu0 0.0
  %7486 = vmatpush1.msra.mxu0 0.0
  %7487 = vmatprep.subr.mxu0 0.0
  %7488 = vmatpush1.msra.mxu0 0.0
  %7489 = vmatprep.subr.mxu0 0.0
  %7490 = vmatpush1.msra.mxu0 0.0
  %7491 = vmatprep.subr.mxu0 0.0
  %7492 = vmatpush1.msra.mxu0 0.0
  %7493 = vmatprep.subr.mxu0 0.0
  %7494 = vmatpush1.msra.mxu0 0.0
  %7495 = vmatprep.subr.mxu0 0.0
  %7496 = vmatpush1.msra.mxu0 0.0
  %7497 = vmatprep.subr.mxu0 0.0
  %7498 = vmatpush1.msra.mxu0 0.0
  %7499 = vmatprep.subr.mxu0 0.0
  %7500 = vmatpush1.msra.mxu0 0.0
  %7501 = vmatprep.subr.mxu0 0.0
  %7502 = vmatpush1.msra.mxu0 0.0
  %7503 = vmatprep.subr.mxu0 0.0
  %7504 = vmatpush1.msra.mxu0 0.0
  %7505 = vmatprep.subr.mxu0 0.0
  %7506 = vmatpush1.msra.mxu0 0.0
  %7507 = vmatprep.subr.mxu0 0.0
  %7508 = vmatpush1.msra.mxu0 0.0
  %7509 = vmatprep.subr.mxu0 0.0
  %7510 = vmatpush1.msra.mxu0 0.0
  %7511 = vmatprep.subr.mxu0 0.0
  %7512 = vmatpush1.msra.mxu0 0.0
  %7513 = vmatprep.subr.mxu0 0.0
  %7514 = vmatpush1.msra.mxu0 0.0
  %7515 = vmatprep.subr.mxu0 0.0
  %7516 = vmatpush1.msra.mxu0 0.0
  %7517 = vmatprep.subr.mxu0 0.0
  %7518 = vmatpush1.msra.mxu0 0.0
  %7519 = vmatprep.subr.mxu0 0.0
  %7520 = vmatpush1.msra.mxu0 0.0
  %7521 = vmatprep.subr.mxu0 0.0
  %7522 = vmatpush1.msra.mxu0 0.0
  %7523 = vmatprep.subr.mxu0 0.0
  %7524 = vmatpush1.msra.mxu0 0.0
  %7525 = vmatprep.subr.mxu0 0.0
  %7526 = vmatpush1.msra.mxu0 0.0
  %7527 = vmatprep.subr.mxu0 0.0
  %7528 = vmatpush1.msra.mxu0 0.0
  %7529 = vmatprep.subr.mxu0 0.0
  %7530 = vmatpush1.msra.mxu0 0.0
  %7531 = vmatprep.subr.mxu0 0.0
  %7532 = vmatpush1.msra.mxu0 0.0
  %7533 = vmatprep.subr.mxu0 0.0
  %7534 = vmatpush1.msra.mxu0 0.0
  %7535 = vmatprep.subr.mxu0 0.0
  %7536 = vmatpush1.msra.mxu0 0.0
  %7537 = vmatprep.subr.mxu0 0.0
  %7538 = vmatpush1.msra.mxu0 0.0
  %7539 = vmatprep.mubr.f32.mxu0 0.0
  %7540 = vmatmul.mubr.f32.gmra.mrb[0].mxu0 %v7473
  %v7541 = vpop.f32.mrb[0].mxu0
  %v7542 = vadd.f32 %v7470, %v7541
  %v7543 = vpop.f32.mrb[0].mxu0
  %7544 = vdwg.mxu0
  %v7546 = vsel %vm68, %v7460, 0
  %7548 = vmatprep.subr.mxu0 0.0
  %7549 = vmatpush1.msra.mxu0 %v7461
  %7550 = vmatprep.subr.mxu0 0.0
  %7551 = vmatpush1.msra.mxu0 %v7462
  %7552 = vmatprep.subr.mxu0 0.0
  %7553 = vmatpush1.msra.mxu0 %v7463
  %7554 = vmatprep.subr.mxu0 0.0
  %7555 = vmatpush1.msra.mxu0 %v7464
  %7556 = vmatprep.subr.mxu0 0.0
  %7557 = vmatpush1.msra.mxu0 0.0
  %7558 = vmatprep.subr.mxu0 0.0
  %7559 = vmatpush1.msra.mxu0 0.0
  %7560 = vmatprep.subr.mxu0 0.0
  %7561 = vmatpush1.msra.mxu0 0.0
  %7562 = vmatprep.subr.mxu0 0.0
  %7563 = vmatpush1.msra.mxu0 0.0
  %7564 = vmatprep.subr.mxu0 0.0
  %7565 = vmatpush1.msra.mxu0 0.0
  %7566 = vmatprep.subr.mxu0 0.0
  %7567 = vmatpush1.msra.mxu0 0.0
  %7568 = vmatprep.subr.mxu0 0.0
  %7569 = vmatpush1.msra.mxu0 0.0
  %7570 = vmatprep.subr.mxu0 0.0
  %7571 = vmatpush1.msra.mxu0 0.0
  %7572 = vmatprep.subr.mxu0 0.0
  %7573 = vmatpush1.msra.mxu0 0.0
  %7574 = vmatprep.subr.mxu0 0.0
  %7575 = vmatpush1.msra.mxu0 0.0
  %7576 = vmatprep.subr.mxu0 0.0
  %7577 = vmatpush1.msra.mxu0 0.0
  %7578 = vmatprep.subr.mxu0 0.0
  %7579 = vmatpush1.msra.mxu0 0.0
  %7580 = vmatprep.subr.mxu0 0.0
  %7581 = vmatpush1.msra.mxu0 0.0
  %7582 = vmatprep.subr.mxu0 0.0
  %7583 = vmatpush1.msra.mxu0 0.0
  %7584 = vmatprep.subr.mxu0 0.0
  %7585 = vmatpush1.msra.mxu0 0.0
  %7586 = vmatprep.subr.mxu0 0.0
  %7587 = vmatpush1.msra.mxu0 0.0
  %7588 = vmatprep.subr.mxu0 0.0
  %7589 = vmatpush1.msra.mxu0 0.0
  %7590 = vmatprep.subr.mxu0 0.0
  %7591 = vmatpush1.msra.mxu0 0.0
  %7592 = vmatprep.subr.mxu0 0.0
  %7593 = vmatpush1.msra.mxu0 0.0
  %7594 = vmatprep.subr.mxu0 0.0
  %7595 = vmatpush1.msra.mxu0 0.0
  %7596 = vmatprep.subr.mxu0 0.0
  %7597 = vmatpush1.msra.mxu0 0.0
  %7598 = vmatprep.subr.mxu0 0.0
  %7599 = vmatpush1.msra.mxu0 0.0
  %7600 = vmatprep.subr.mxu0 0.0
  %7601 = vmatpush1.msra.mxu0 0.0
  %7602 = vmatprep.subr.mxu0 0.0
  %7603 = vmatpush1.msra.mxu0 0.0
  %7604 = vmatprep.subr.mxu0 0.0
  %7605 = vmatpush1.msra.mxu0 0.0
  %7606 = vmatprep.subr.mxu0 0.0
  %7607 = vmatpush1.msra.mxu0 0.0
  %7608 = vmatprep.subr.mxu0 0.0
  %7609 = vmatpush1.msra.mxu0 0.0
  %7610 = vmatprep.subr.mxu0 0.0
  %7611 = vmatpush1.msra.mxu0 0.0
  %7612 = vmatprep.mubr.f32.mxu0 0.0
  %7613 = vmatmul.mubr.f32.gmra.mrb[0].mxu0 %v7546
  %v7614 = vpop.f32.mrb[0].mxu0
  %v7615 = vadd.f32 %v7470, %v7614
  %v7616 = vpop.f32.mrb[0].mxu0
  %7617 = vdwg.mxu0
  %v7618 = vmul.f32 %v7542, 0.5
  %v7619 = vmul.f32 %v7615, 0.5
  %v7620 = vmul.f32 %v7542, 0.70710677
  %v7621 = vmul.f32 %v7615, 0.70710677
  %v7622 = verf.f32.pop %v7620
  %v7623 = verf.f32.pop %v7621
  %v7624 = vadd.f32 %v7622, 1.0
  %v7625 = vadd.f32 %v7623, 1.0
  %v7626 = vmul.f32 %v7618, %v7624
  %v7627 = vmul.f32 %v7619, %v7625
  %v7628 = vld [vmem:[%s17] sm:$0xff]
  %v7629 = vld [vmem:[%s17 + $0x8] sm:$0xff]
  %v7630 = vld [vmem:[%s17 + $0x10] sm:$0xff]
  %v7631 = vld [vmem:[%s17 + $0x18] sm:$0xff]
  %v7632 = vld [vmem:[%s17 + $0x20] sm:$0xff]
  %v7633 = vld [vmem:[%s17 + $0x28] sm:$0xff]
  %v7634 = vld [vmem:[%s17 + $0x30] sm:$0xff]
  %v7635 = vld [vmem:[%s17 + $0x38] sm:$0xff]
  %v7636 = vld [vmem:[%s17 + $0x40] sm:$0xff]
  %v7637 = vld [vmem:[%s17 + $0x48] sm:$0xff]
  %v7638 = vld [vmem:[%s17 + $0x50] sm:$0xff]
  %v7639 = vld [vmem:[%s17 + $0x58] sm:$0xff]
  %v7640 = vld [vmem:[%s17 + $0x60] sm:$0xff]
  %v7641 = vld [vmem:[%s17 + $0x68] sm:$0xff]
  %v7642 = vld [vmem:[%s17 + $0x70] sm:$0xff]
  %v7643 = vld [vmem:[%s17 + $0x78] sm:$0xff]
  %v7644 = vld [vmem:[%s18] sm:$0x1]
  %v7646 = vlaneseq
  %v7647 = vshrl.u32 %v7646, 7
  %v7648 = vsub.s32 0, %v7647
  %v7649 = vrot.slane %v7644, %v7648
  %7651 = vmatprep.subr.mxu0 0.0
  %7652 = vmatpush1.msra.mxu0 %v7628
  %7653 = vmatprep.subr.mxu0 0.0
  %7654 = vmatpush1.msra.mxu0 %v7629
  %7655 = vmatprep.subr.mxu0 0.0
  %7656 = vmatpush1.msra.mxu0 %v7630
  %7657 = vmatprep.subr.mxu0 0.0
  %7658 = vmatpush1.msra.mxu0 %v7631
  %7659 = vmatprep.subr.mxu0 0.0
  %7660 = vmatpush1.msra.mxu0 %v7632
  %7661 = vmatprep.subr.mxu0 0.0
  %7662 = vmatpush1.msra.mxu0 %v7633
  %7663 = vmatprep.subr.mxu0 0.0
  %7664 = vmatpush1.msra.mxu0 %v7634
  %7665 = vmatprep.subr.mxu0 0.0
  %7666 = vmatpush1.msra.mxu0 %v7635
  %7667 = vmatprep.subr.mxu0 0.0
  %7668 = vmatpush1.msra.mxu0 %v7636
  %7669 = vmatprep.subr.mxu0 0.0
  %7670 = vmatpush1.msra.mxu0 %v7637
  %7671 = vmatprep.subr.mxu0 0.0
  %7672 = vmatpush1.msra.mxu0 %v7638
  %7673 = vmatprep.subr.mxu0 0.0
  %7674 = vmatpush1.msra.mxu0 %v7639
  %7675 = vmatprep.subr.mxu0 0.0
  %7676 = vmatpush1.msra.mxu0 %v7640
  %7677 = vmatprep.subr.mxu0 0.0
  %7678 = vmatpush1.msra.mxu0 %v7641
  %7679 = vmatprep.subr.mxu0 0.0
  %7680 = vmatpush1.msra.mxu0 %v7642
  %7681 = vmatprep.subr.mxu0 0.0
  %7682 = vmatpush1.msra.mxu0 %v7643
  %7683 = vmatprep.subr.mxu0 0.0
  %7684 = vmatpush1.msra.mxu0 0.0
  %7685 = vmatprep.subr.mxu0 0.0
  %7686 = vmatpush1.msra.mxu0 0.0
  %7687 = vmatprep.subr.mxu0 0.0
  %7688 = vmatpush1.msra.mxu0 0.0
  %7689 = vmatprep.subr.mxu0 0.0
  %7690 = vmatpush1.msra.mxu0 0.0
  %7691 = vmatprep.subr.mxu0 0.0
  %7692 = vmatpush1.msra.mxu0 0.0
  %7693 = vmatprep.subr.mxu0 0.0
  %7694 = vmatpush1.msra.mxu0 0.0
  %7695 = vmatprep.subr.mxu0 0.0
  %7696 = vmatpush1.msra.mxu0 0.0
  %7697 = vmatprep.subr.mxu0 0.0
  %7698 = vmatpush1.msra.mxu0 0.0
  %7699 = vmatprep.subr.mxu0 0.0
  %7700 = vmatpush1.msra.mxu0 0.0
  %7701 = vmatprep.subr.mxu0 0.0
  %7702 = vmatpush1.msra.mxu0 0.0
  %7703 = vmatprep.subr.mxu0 0.0
  %7704 = vmatpush1.msra.mxu0 0.0
  %7705 = vmatprep.subr.mxu0 0.0
  %7706 = vmatpush1.msra.mxu0 0.0
  %7707 = vmatprep.subr.mxu0 0.0
  %7708 = vmatpush1.msra.mxu0 0.0
  %7709 = vmatprep.subr.mxu0 0.0
  %7710 = vmatpush1.msra.mxu0 0.0
  %7711 = vmatprep.subr.mxu0 0.0
  %7712 = vmatpush1.msra.mxu0 0.0
  %7713 = vmatprep.subr.mxu0 0.0
  %7714 = vmatpush1.msra.mxu0 0.0
  %7715 = vmatprep.mubr.f32.mxu0 0.0
  %7716 = vmatmul.mubr.f32.gmra.mrb[0].mxu0 %v7626
  %v7717 = vpop.f32.mrb[0].mxu0
  %v7718 = vadd.f32 %v7649, %v7717
  %v7719 = vpop.f32.mrb[0].mxu0
  %7720 = vdwg.mxu0
  %7721 = vmatprep.subr.mxu0 0.0
  %7722 = vmatpush1.msra.mxu0 %v7628
  %7723 = vmatprep.subr.mxu0 0.0
  %7724 = vmatpush1.msra.mxu0 %v7629
  %7725 = vmatprep.subr.mxu0 0.0
  %7726 = vmatpush1.msra.mxu0 %v7630
  %7727 = vmatprep.subr.mxu0 0.0
  %7728 = vmatpush1.msra.mxu0 %v7631
  %7729 = vmatprep.subr.mxu0 0.0
  %7730 = vmatpush1.msra.mxu0 %v7632
  %7731 = vmatprep.subr.mxu0 0.0
  %7732 = vmatpush1.msra.mxu0 %v7633
  %7733 = vmatprep.subr.mxu0 0.0
  %7734 = vmatpush1.msra.mxu0 %v7634
  %7735 = vmatprep.subr.mxu0 0.0
  %7736 = vmatpush1.msra.mxu0 %v7635
  %7737 = vmatprep.subr.mxu0 0.0
  %7738 = vmatpush1.msra.mxu0 %v7636
  %7739 = vmatprep.subr.mxu0 0.0
  %7740 = vmatpush1.msra.mxu0 %v7637
  %7741 = vmatprep.subr.mxu0 0.0
  %7742 = vmatpush1.msra.mxu0 %v7638
  %7743 = vmatprep.subr.mxu0 0.0
  %7744 = vmatpush1.msra.mxu0 %v7639
  %7745 = vmatprep.subr.mxu0 0.0
  %7746 = vmatpush1.msra.mxu0 %v7640
  %7747 = vmatprep.subr.mxu0 0.0
  %7748 = vmatpush1.msra.mxu0 %v7641
  %7749 = vmatprep.subr.mxu0 0.0
  %7750 = vmatpush1.msra.mxu0 %v7642
  %7751 = vmatprep.subr.mxu0 0.0
  %7752 = vmatpush1.msra.mxu0 %v7643
  %7753 = vmatprep.subr.mxu0 0.0
  %7754 = vmatpush1.msra.mxu0 0.0
  %7755 = vmatprep.subr.mxu0 0.0
  %7756 = vmatpush1.msra.mxu0 0.0
  %7757 = vmatprep.subr.mxu0 0.0
  %7758 = vmatpush1.msra.mxu0 0.0
  %7759 = vmatprep.subr.mxu0 0.0
  %7760 = vmatpush1.msra.mxu0 0.0
  %7761 = vmatprep.subr.mxu0 0.0
  %7762 = vmatpush1.msra.mxu0 0.0
  %7763 = vmatprep.subr.mxu0 0.0
  %7764 = vmatpush1.msra.mxu0 0.0
  %7765 = vmatprep.subr.mxu0 0.0
  %7766 = vmatpush1.msra.mxu0 0.0
  %7767 = vmatprep.subr.mxu0 0.0
  %7768 = vmatpush1.msra.mxu0 0.0
  %7769 = vmatprep.subr.mxu0 0.0
  %7770 = vmatpush1.msra.mxu0 0.0
  %7771 = vmatprep.subr.mxu0 0.0
  %7772 = vmatpush1.msra.mxu0 0.0
  %7773 = vmatprep.subr.mxu0 0.0
  %7774 = vmatpush1.msra.mxu0 0.0
  %7775 = vmatprep.subr.mxu0 0.0
  %7776 = vmatpush1.msra.mxu0 0.0
  %7777 = vmatprep.subr.mxu0 0.0
  %7778 = vmatpush1.msra.mxu0 0.0
  %7779 = vmatprep.subr.mxu0 0.0
  %7780 = vmatpush1.msra.mxu0 0.0
  %7781 = vmatprep.subr.mxu0 0.0
  %7782 = vmatpush1.msra.mxu0 0.0
  %7783 = vmatprep.subr.mxu0 0.0
  %7784 = vmatpush1.msra.mxu0 0.0
  %7785 = vmatprep.mubr.f32.mxu0 0.0
  %7786 = vmatmul.mubr.f32.gmra.mrb[0].mxu0 %v7627
  %v7787 = vpop.f32.mrb[0].mxu0
  %v7788 = vadd.f32 %v7649, %v7787
  %v7789 = vpop.f32.mrb[0].mxu0
  %7790 = vdwg.mxu0
  %v7791 = vadd.f32 %v7415, %v7718
  %v7792 = vadd.f32 %v7416, %v7788
  %7793 = vst.msk [vmem:[%s19] sm:$0xff] %vm68, %v7791
  %7794 = vst.msk [vmem:[%s19 + $0x8] sm:$0xff] %vm68, %v7792
  // Predicated region
  $region78: #{xtransformer_forward.7} parent=0 // pred_check
    _
  $region79: #{xtransformer_forward.7} parent=0 // pred_check_branch
    %7796 = sbr.rel (0) target = $region81
  $region80: #{xtransformer_forward.7} parent=0 // pred_region
    _
  $region81: #{xtransformer_forward.7} parent=0 // pred_fallthru
    _
  // Predicated region
  $region82: #{xtransformer_forward.7} parent=0 // pred_check
    _
  $region83: #{xtransformer_forward.7} parent=0 // pred_check_branch
    %7798 = sbr.rel (0) target = $region85
  $region84: #{xtransformer_forward.7} parent=0 // pred_region
    _
  $region85: #{xtransformer_forward.7} parent=0 // pred_fallthru
    _

</llo_original>
